<compile_context>
chip_gen: v7x
topology: tpu7x:2x2x1
jax: 0.10.0
libtpu: 0.0.40
codegen_flags: <defaults>
</compile_context>

<pallas_src>
import math
import functools

import jax
import jax.numpy as jnp
from jax.experimental import pallas as pl
from jax.experimental.pallas import tpu as pltpu


# --------------------------------------------------------------------------
# Fully-fused attention block (qkv proj + SDPA + output proj) per batch elem
# --------------------------------------------------------------------------
def _fused_attention_kernel(x_ref, wqkv_ref, wo_ref, bo_ref, o_ref, *,
                            heads, dim, scale):
    x = x_ref[0]                                             # (L, D)
    # qkv projection on the MXU, f32 accumulation.
    qkv = jnp.dot(x, wqkv_ref[...],
                  preferred_element_type=jnp.float32)        # (L, 3D) f32

    dh = dim // heads
    outs = []
    for h in range(heads):                                   # static unroll
        q = qkv[:, h * dh:(h + 1) * dh] * scale
        k = qkv[:, dim + h * dh: dim + (h + 1) * dh]
        v = qkv[:, 2 * dim + h * dh: 2 * dim + (h + 1) * dh]

        # scores: contract last dims directly (no materialized k.T).
        s = jax.lax.dot_general(
            q, k, dimension_numbers=(((1,), (1,)), ((), ())),
            preferred_element_type=jnp.float32)              # (L, L) f32
        m = jnp.max(s, axis=-1, keepdims=True)
        p = jnp.exp(s - m)
        denom = jnp.sum(p, axis=-1, keepdims=True)
        o = jax.lax.dot_general(
            p, v, dimension_numbers=(((1,), (0,)), ((), ())),
            preferred_element_type=jnp.float32)              # (L, Dh)
        outs.append(o * pl.reciprocal(denom, approx=True))

    attn = jnp.concatenate(outs, axis=-1)                    # (L, D) f32

    # Output projection + bias, bias added in f32 before the final downcast.
    y = jnp.dot(attn.astype(wo_ref.dtype), wo_ref[...],
                preferred_element_type=jnp.float32)
    y = y + bo_ref[...].astype(jnp.float32)

    # Single lane-dense (L, D) store.
    o_ref[0] = y.astype(o_ref.dtype)


def fused_attention_forward(params, x, heads):
    B, L, D = x.shape
    assert D % heads == 0
    wqkv = params['to_qkv_w']                                # (D, 3D)
    wo = params['to_o_w']                                    # (D, D)
    bo = params['to_o_b'].reshape(1, D)
    scale = 1.0 / math.sqrt(D // heads)
    kernel = functools.partial(_fused_attention_kernel,
                               heads=heads, dim=D, scale=scale)
    return pl.pallas_call(
        kernel,
        out_shape=jax.ShapeDtypeStruct((B, L, D), x.dtype),
        grid_spec=pltpu.PrefetchScalarGridSpec(
            num_scalar_prefetch=0,
            grid=(B,),
            in_specs=[
                pl.BlockSpec((1, L, D), lambda b: (b, 0, 0)),
                pl.BlockSpec((D, 3 * D), lambda b: (0, 0)),   # resident weights
                pl.BlockSpec((D, D), lambda b: (0, 0)),       # resident weights
                pl.BlockSpec((1, D), lambda b: (0, 0)),
            ],
            out_specs=pl.BlockSpec((1, L, D), lambda b: (b, 0, 0)),
        ),
        compiler_params=pltpu.CompilerParams(
            dimension_semantics=("parallel",)),
    )(x, wqkv, wo, bo)


def _fused_path_fits(L, D, itemsize=4, budget_bytes=24 * 1024 * 1024):
    """Rough VMEM estimate for the fused kernel (activations + weights)."""
    acts = 2 * (L * D) + (L * 3 * D) + (L * L) + 2 * (L * D)
    weights = 2 * (D * 3 * D) + 2 * (D * D)                  # double-buffered
    return (acts + weights) * itemsize < budget_bytes


# --------------------------------------------------------------------------
# Fallback path 1/2: tiled linear  y = x @ w + b
# --------------------------------------------------------------------------
def _pick_tile(dim, cap, align):
    """Largest tile <= cap that divides dim and is a multiple of `align`.
    Falls back to the full dim (full-extent blocks are always legal)."""
    if dim <= cap:
        return dim
    start = cap - (cap % align)
    for t in range(start, 0, -align):
        if dim % t == 0:
            return t
    return dim


def _linear_kernel(x_ref, w_ref, b_ref, o_ref, acc_ref):
    k = pl.program_id(2)

    @pl.when(k == 0)
    def _init():
        acc_ref[...] = jnp.zeros_like(acc_ref)

    acc_ref[...] += jnp.dot(x_ref[...], w_ref[...],
                            preferred_element_type=jnp.float32)

    @pl.when(k == pl.num_programs(2) - 1)
    def _finalize():
        o_ref[...] = (acc_ref[...] + b_ref[...].astype(jnp.float32)
                      ).astype(o_ref.dtype)


def pallas_linear(x, w, b=None, *, tm_cap=256, tn_cap=256, tk_cap=512):
    """y = x @ w + b.  x: (..., K), w: (K, N), b: (N,) or None."""
    *lead, K = x.shape
    M = math.prod(lead) if lead else 1
    N = w.shape[1]
    x2 = x.reshape(M, K)
    bias = jnp.zeros((N,), jnp.float32) if b is None else b.astype(jnp.float32)
    b2 = bias.reshape(1, N)

    tm = _pick_tile(M, tm_cap, 8)     # sublane axis of x / output
    tn = _pick_tile(N, tn_cap, 128)   # lane axis of w / output
    tk = _pick_tile(K, tk_cap, 128)   # lane axis of x, sublane axis of w
    grid = (M // tm, N // tn, K // tk)

    out = pl.pallas_call(
        _linear_kernel,
        out_shape=jax.ShapeDtypeStruct((M, N), x.dtype),
        grid_spec=pltpu.PrefetchScalarGridSpec(
            num_scalar_prefetch=0,
            grid=grid,
            in_specs=[
                pl.BlockSpec((tm, tk), lambda i, j, k: (i, k)),
                pl.BlockSpec((tk, tn), lambda i, j, k: (k, j)),
                pl.BlockSpec((1, tn), lambda i, j, k: (0, j)),
            ],
            out_specs=pl.BlockSpec((tm, tn), lambda i, j, k: (i, j)),
            scratch_shapes=[pltpu.VMEM((tm, tn), jnp.float32)],
        ),
        compiler_params=pltpu.CompilerParams(
            dimension_semantics=("parallel", "parallel", "arbitrary")),
    )(x2, w, b2)
    return out.reshape(*lead, N)


# --------------------------------------------------------------------------
# Fallback path 2/2: multi-head SDPA on the fused (B, L, 3D) qkv slab
# --------------------------------------------------------------------------
def _attention_kernel(qkv_ref, o_ref, *, heads, dim, scale):
    qkv = qkv_ref[0]                      # (L, 3*D), lane-dense load
    dh = dim // heads
    outs = []
    for h in range(heads):                # static unroll; static lane slices
        q = qkv[:, h * dh:(h + 1) * dh] * scale
        k = qkv[:, dim + h * dh: dim + (h + 1) * dh]
        v = qkv[:, 2 * dim + h * dh: 2 * dim + (h + 1) * dh]

        s = jax.lax.dot_general(
            q, k, dimension_numbers=(((1,), (1,)), ((), ())),
            preferred_element_type=jnp.float32)          # (L, L) f32
        m = jnp.max(s, axis=-1, keepdims=True)
        p = jnp.exp(s - m)
        denom = jnp.sum(p, axis=-1, keepdims=True)
        o = jax.lax.dot_general(
            p.astype(v.dtype), v, dimension_numbers=(((1,), (0,)), ((), ())),
            preferred_element_type=jnp.float32)          # (L, Dh)
        outs.append(o * pl.reciprocal(denom, approx=True))

    # Single lane-dense (L, D) store.
    o_ref[0] = jnp.concatenate(outs, axis=-1).astype(o_ref.dtype)


def pallas_attention_qkv(qkv, heads):
    """qkv: (B, L, 3*D) fused projection output -> attention output (B, L, D)."""
    B, L, threeD = qkv.shape
    D = threeD // 3
    assert D % heads == 0
    scale = 1.0 / math.sqrt(D // heads)
    kernel = functools.partial(_attention_kernel, heads=heads, dim=D, scale=scale)
    return pl.pallas_call(
        kernel,
        out_shape=jax.ShapeDtypeStruct((B, L, D), qkv.dtype),
        grid=(B,),
        in_specs=[pl.BlockSpec((1, L, threeD), lambda b: (b, 0, 0))],
        out_specs=pl.BlockSpec((1, L, D), lambda b: (b, 0, 0)),
        compiler_params=pltpu.CompilerParams(dimension_semantics=("parallel",)),
    )(qkv)


def attention_forward_unfused(params, x, heads):
    qkv = pallas_linear(x, params['to_qkv_w'])                 # (B, L, 3D)
    o = pallas_attention_qkv(qkv, heads)                       # (B, L, D)
    return pallas_linear(o, params['to_o_w'], params['to_o_b'])


# --------------------------------------------------------------------------
# Module forward (matches PyTorch Attention.forward)
# --------------------------------------------------------------------------
def attention_forward(params, x, heads):
    B, L, D = x.shape
    if _fused_path_fits(L, D):
        return fused_attention_forward(params, x, heads)
    return attention_forward_unfused(params, x, heads)


# --------------------------------------------------------------------------
# Pure-JAX reference for a sanity check
# --------------------------------------------------------------------------
def reference_attention(params, x, heads):
    B, L, D = x.shape
    dh = D // heads
    qkv = x @ params['to_qkv_w']
    q, k, v = jnp.split(qkv, 3, axis=-1)

    def rshp(t):
        return t.reshape(B, L, heads, dh).transpose(0, 2, 1, 3)

    q, k, v = rshp(q), rshp(k), rshp(v)
    s = jnp.einsum('bhqd,bhkd->bhqk', q, k) / math.sqrt(dh)
    p = jax.nn.softmax(s, axis=-1)
    o = jnp.einsum('bhqk,bhkd->bhqd', p, v)
    o = o.transpose(0, 2, 1, 3).reshape(B, L, D)
    return o @ params['to_o_w'] + params['to_o_b']


# --------------------------------------------------------------------------
if __name__ == "__main__":
    B, L, D, heads = 2, 128, 256, 8       # small, tile-aligned shapes

    key = jax.random.PRNGKey(0)
    kx, kqkv, kow, kob = jax.random.split(key, 4)
    x = jax.random.normal(kx, (B, L, D), jnp.float32)
    params = {
        'to_qkv_w': jax.random.normal(kqkv, (D, 3 * D), jnp.float32) * 0.02,
        'to_o_w':   jax.random.normal(kow, (D, D), jnp.float32) * 0.02,
        'to_o_b':   jax.random.normal(kob, (D,), jnp.float32) * 0.02,
    }

    ref = reference_attention(params, x, heads)

    # Primary (fused) path.
    out = attention_forward(params, x, heads)
    out = jax.block_until_ready(out)
    assert out.shape == (B, L, D)
    assert bool(jnp.all(jnp.isfinite(out)))
    max_err = float(jnp.max(jnp.abs(out - ref)))
    assert max_err < 5e-2, f"fused path max abs err {max_err}"

    # Fallback (tiled) path.
    out2 = attention_forward_unfused(params, x, heads)
    out2 = jax.block_until_ready(out2)
    max_err2 = float(jnp.max(jnp.abs(out2 - ref)))
    assert max_err2 < 5e-2, f"tiled path max abs err {max_err2}"

    print("KERNEL_OK")
</pallas_src>

<mosaic_0001>
module attributes {stable_mosaic.version = 11 : i64} {
  func.func @_fused_attention_kernel(%arg0: i32, %arg1: memref<1x128x256xf32, #tpu.memory_space<vmem>>, %arg2: memref<256x768xf32, #tpu.memory_space<vmem>>, %arg3: memref<256x256xf32, #tpu.memory_space<vmem>>, %arg4: memref<1x256xf32, #tpu.memory_space<vmem>>, %arg5: memref<1x128x256xf32, #tpu.memory_space<vmem>>) attributes {dimension_semantics = [#tpu.dimension_semantics<parallel>], iteration_bounds = array<i64: 2>, scalar_prefetch = 0 : i64, scratch_operands = 0 : i64, tpu.core_type = #tpu.core_type<tc>, window_params = [{transform_indices = @transform_0, window_bounds = array<i64: 1, 128, 256>}, {pipeline_mode = #tpu.pipeline_mode<synchronous>, transform_indices = @transform_1, window_bounds = array<i64: 256, 768>}, {pipeline_mode = #tpu.pipeline_mode<synchronous>, transform_indices = @transform_2, window_bounds = array<i64: 256, 256>}, {pipeline_mode = #tpu.pipeline_mode<synchronous>, transform_indices = @transform_3, window_bounds = array<i64: 1, 256>}, {transform_indices = @transform_4, window_bounds = array<i64: 1, 128, 256>}]} {
    %c0 = arith.constant 0 : index
    %c0_0 = arith.constant 0 : index
    %c0_1 = arith.constant 0 : index
    %0 = vector.load %arg1[%c0, %c0_0, %c0_1] : memref<1x128x256xf32, #tpu.memory_space<vmem>>, vector<1x128x256xf32>
    %1 = vector.shape_cast %0 : vector<1x128x256xf32> to vector<128x256xf32>
    %c0_2 = arith.constant 0 : index
    %c0_3 = arith.constant 0 : index
    %2 = vector.load %arg2[%c0_2, %c0_3] : memref<256x768xf32, #tpu.memory_space<vmem>>, vector<256x768xf32>
    %cst = arith.constant dense<0.000000e+00> : vector<128x768xf32>
    %3 = tpu.matmul %1, %2, %cst {dimension_numbers = #tpu.dot_dimension_numbers<[1], [0], [0], [1], [0, 0, 1, 1], [], []>} : vector<128x256xf32>, vector<256x768xf32>, vector<128x768xf32> -> vector<128x768xf32>
    %4 = vector.extract_strided_slice %3 {offsets = [0, 0], sizes = [128, 32], strides = [1, 1]} : vector<128x768xf32> to vector<128x32xf32>
    %cst_4 = arith.constant 0.176776692 : f32
    %5 = vector.broadcast %cst_4 : f32 to vector<128x32xf32>
    %6 = arith.mulf %4, %5 : vector<128x32xf32>
    %7 = vector.extract_strided_slice %3 {offsets = [0, 256], sizes = [128, 32], strides = [1, 1]} : vector<128x768xf32> to vector<128x32xf32>
    %8 = vector.extract_strided_slice %3 {offsets = [0, 512], sizes = [128, 32], strides = [1, 1]} : vector<128x768xf32> to vector<128x32xf32>
    %cst_5 = arith.constant dense<0.000000e+00> : vector<128x128xf32>
    %9 = tpu.matmul %6, %7, %cst_5 {dimension_numbers = #tpu.dot_dimension_numbers<[1], [1], [0], [0], [0, 0, 1, 0], [], []>} : vector<128x32xf32>, vector<128x32xf32>, vector<128x128xf32> -> vector<128x128xf32>
    %cst_6 = arith.constant dense<0xFF800000> : vector<128xf32>
    %10 = vector.multi_reduction <maximumf>, %9, %cst_6 [1] : vector<128x128xf32> to vector<128xf32>
    %11 = vector.shape_cast %10 : vector<128xf32> to vector<128x1xf32>
    %12 = vector.broadcast %11 : vector<128x1xf32> to vector<128x128xf32>
    %13 = arith.subf %9, %12 : vector<128x128xf32>
    %14 = math.exp %13 : vector<128x128xf32>
    %cst_7 = arith.constant dense<0.000000e+00> : vector<128xf32>
    %15 = vector.multi_reduction <add>, %14, %cst_7 [1] : vector<128x128xf32> to vector<128xf32>
    %16 = vector.shape_cast %15 : vector<128xf32> to vector<128x1xf32>
    %cst_8 = arith.constant dense<0.000000e+00> : vector<128x32xf32>
    %17 = tpu.matmul %14, %8, %cst_8 {dimension_numbers = #tpu.dot_dimension_numbers<[1], [0], [0], [1], [0, 0, 1, 1], [], []>} : vector<128x128xf32>, vector<128x32xf32>, vector<128x32xf32> -> vector<128x32xf32>
    %18 = tpu.reciprocal %16 {approx = true} : vector<128x1xf32> -> vector<128x1xf32>
    %19 = vector.broadcast %18 : vector<128x1xf32> to vector<128x32xf32>
    %20 = arith.mulf %17, %19 : vector<128x32xf32>
    %21 = vector.extract_strided_slice %3 {offsets = [0, 32], sizes = [128, 32], strides = [1, 1]} : vector<128x768xf32> to vector<128x32xf32>
    %cst_9 = arith.constant 0.176776692 : f32
    %22 = vector.broadcast %cst_9 : f32 to vector<128x32xf32>
    %23 = arith.mulf %21, %22 : vector<128x32xf32>
    %24 = vector.extract_strided_slice %3 {offsets = [0, 288], sizes = [128, 32], strides = [1, 1]} : vector<128x768xf32> to vector<128x32xf32>
    %25 = vector.extract_strided_slice %3 {offsets = [0, 544], sizes = [128, 32], strides = [1, 1]} : vector<128x768xf32> to vector<128x32xf32>
    %cst_10 = arith.constant dense<0.000000e+00> : vector<128x128xf32>
    %26 = tpu.matmul %23, %24, %cst_10 {dimension_numbers = #tpu.dot_dimension_numbers<[1], [1], [0], [0], [0, 0, 1, 0], [], []>} : vector<128x32xf32>, vector<128x32xf32>, vector<128x128xf32> -> vector<128x128xf32>
    %cst_11 = arith.constant dense<0xFF800000> : vector<128xf32>
    %27 = vector.multi_reduction <maximumf>, %26, %cst_11 [1] : vector<128x128xf32> to vector<128xf32>
    %28 = vector.shape_cast %27 : vector<128xf32> to vector<128x1xf32>
    %29 = vector.broadcast %28 : vector<128x1xf32> to vector<128x128xf32>
    %30 = arith.subf %26, %29 : vector<128x128xf32>
    %31 = math.exp %30 : vector<128x128xf32>
    %cst_12 = arith.constant dense<0.000000e+00> : vector<128xf32>
    %32 = vector.multi_reduction <add>, %31, %cst_12 [1] : vector<128x128xf32> to vector<128xf32>
    %33 = vector.shape_cast %32 : vector<128xf32> to vector<128x1xf32>
    %cst_13 = arith.constant dense<0.000000e+00> : vector<128x32xf32>
    %34 = tpu.matmul %31, %25, %cst_13 {dimension_numbers = #tpu.dot_dimension_numbers<[1], [0], [0], [1], [0, 0, 1, 1], [], []>} : vector<128x128xf32>, vector<128x32xf32>, vector<128x32xf32> -> vector<128x32xf32>
    %35 = tpu.reciprocal %33 {approx = true} : vector<128x1xf32> -> vector<128x1xf32>
    %36 = vector.broadcast %35 : vector<128x1xf32> to vector<128x32xf32>
    %37 = arith.mulf %34, %36 : vector<128x32xf32>
    %38 = vector.extract_strided_slice %3 {offsets = [0, 64], sizes = [128, 32], strides = [1, 1]} : vector<128x768xf32> to vector<128x32xf32>
    %cst_14 = arith.constant 0.176776692 : f32
    %39 = vector.broadcast %cst_14 : f32 to vector<128x32xf32>
    %40 = arith.mulf %38, %39 : vector<128x32xf32>
    %41 = vector.extract_strided_slice %3 {offsets = [0, 320], sizes = [128, 32], strides = [1, 1]} : vector<128x768xf32> to vector<128x32xf32>
    %42 = vector.extract_strided_slice %3 {offsets = [0, 576], sizes = [128, 32], strides = [1, 1]} : vector<128x768xf32> to vector<128x32xf32>
    %cst_15 = arith.constant dense<0.000000e+00> : vector<128x128xf32>
    %43 = tpu.matmul %40, %41, %cst_15 {dimension_numbers = #tpu.dot_dimension_numbers<[1], [1], [0], [0], [0, 0, 1, 0], [], []>} : vector<128x32xf32>, vector<128x32xf32>, vector<128x128xf32> -> vector<128x128xf32>
    %cst_16 = arith.constant dense<0xFF800000> : vector<128xf32>
    %44 = vector.multi_reduction <maximumf>, %43, %cst_16 [1] : vector<128x128xf32> to vector<128xf32>
    %45 = vector.shape_cast %44 : vector<128xf32> to vector<128x1xf32>
    %46 = vector.broadcast %45 : vector<128x1xf32> to vector<128x128xf32>
    %47 = arith.subf %43, %46 : vector<128x128xf32>
    %48 = math.exp %47 : vector<128x128xf32>
    %cst_17 = arith.constant dense<0.000000e+00> : vector<128xf32>
    %49 = vector.multi_reduction <add>, %48, %cst_17 [1] : vector<128x128xf32> to vector<128xf32>
    %50 = vector.shape_cast %49 : vector<128xf32> to vector<128x1xf32>
    %cst_18 = arith.constant dense<0.000000e+00> : vector<128x32xf32>
    %51 = tpu.matmul %48, %42, %cst_18 {dimension_numbers = #tpu.dot_dimension_numbers<[1], [0], [0], [1], [0, 0, 1, 1], [], []>} : vector<128x128xf32>, vector<128x32xf32>, vector<128x32xf32> -> vector<128x32xf32>
    %52 = tpu.reciprocal %50 {approx = true} : vector<128x1xf32> -> vector<128x1xf32>
    %53 = vector.broadcast %52 : vector<128x1xf32> to vector<128x32xf32>
    %54 = arith.mulf %51, %53 : vector<128x32xf32>
    %55 = vector.extract_strided_slice %3 {offsets = [0, 96], sizes = [128, 32], strides = [1, 1]} : vector<128x768xf32> to vector<128x32xf32>
    %cst_19 = arith.constant 0.176776692 : f32
    %56 = vector.broadcast %cst_19 : f32 to vector<128x32xf32>
    %57 = arith.mulf %55, %56 : vector<128x32xf32>
    %58 = vector.extract_strided_slice %3 {offsets = [0, 352], sizes = [128, 32], strides = [1, 1]} : vector<128x768xf32> to vector<128x32xf32>
    %59 = vector.extract_strided_slice %3 {offsets = [0, 608], sizes = [128, 32], strides = [1, 1]} : vector<128x768xf32> to vector<128x32xf32>
    %cst_20 = arith.constant dense<0.000000e+00> : vector<128x128xf32>
    %60 = tpu.matmul %57, %58, %cst_20 {dimension_numbers = #tpu.dot_dimension_numbers<[1], [1], [0], [0], [0, 0, 1, 0], [], []>} : vector<128x32xf32>, vector<128x32xf32>, vector<128x128xf32> -> vector<128x128xf32>
    %cst_21 = arith.constant dense<0xFF800000> : vector<128xf32>
    %61 = vector.multi_reduction <maximumf>, %60, %cst_21 [1] : vector<128x128xf32> to vector<128xf32>
    %62 = vector.shape_cast %61 : vector<128xf32> to vector<128x1xf32>
    %63 = vector.broadcast %62 : vector<128x1xf32> to vector<128x128xf32>
    %64 = arith.subf %60, %63 : vector<128x128xf32>
    %65 = math.exp %64 : vector<128x128xf32>
    %cst_22 = arith.constant dense<0.000000e+00> : vector<128xf32>
    %66 = vector.multi_reduction <add>, %65, %cst_22 [1] : vector<128x128xf32> to vector<128xf32>
    %67 = vector.shape_cast %66 : vector<128xf32> to vector<128x1xf32>
    %cst_23 = arith.constant dense<0.000000e+00> : vector<128x32xf32>
    %68 = tpu.matmul %65, %59, %cst_23 {dimension_numbers = #tpu.dot_dimension_numbers<[1], [0], [0], [1], [0, 0, 1, 1], [], []>} : vector<128x128xf32>, vector<128x32xf32>, vector<128x32xf32> -> vector<128x32xf32>
    %69 = tpu.reciprocal %67 {approx = true} : vector<128x1xf32> -> vector<128x1xf32>
    %70 = vector.broadcast %69 : vector<128x1xf32> to vector<128x32xf32>
    %71 = arith.mulf %68, %70 : vector<128x32xf32>
    %72 = vector.extract_strided_slice %3 {offsets = [0, 128], sizes = [128, 32], strides = [1, 1]} : vector<128x768xf32> to vector<128x32xf32>
    %cst_24 = arith.constant 0.176776692 : f32
    %73 = vector.broadcast %cst_24 : f32 to vector<128x32xf32>
    %74 = arith.mulf %72, %73 : vector<128x32xf32>
    %75 = vector.extract_strided_slice %3 {offsets = [0, 384], sizes = [128, 32], strides = [1, 1]} : vector<128x768xf32> to vector<128x32xf32>
    %76 = vector.extract_strided_slice %3 {offsets = [0, 640], sizes = [128, 32], strides = [1, 1]} : vector<128x768xf32> to vector<128x32xf32>
    %cst_25 = arith.constant dense<0.000000e+00> : vector<128x128xf32>
    %77 = tpu.matmul %74, %75, %cst_25 {dimension_numbers = #tpu.dot_dimension_numbers<[1], [1], [0], [0], [0, 0, 1, 0], [], []>} : vector<128x32xf32>, vector<128x32xf32>, vector<128x128xf32> -> vector<128x128xf32>
    %cst_26 = arith.constant dense<0xFF800000> : vector<128xf32>
    %78 = vector.multi_reduction <maximumf>, %77, %cst_26 [1] : vector<128x128xf32> to vector<128xf32>
    %79 = vector.shape_cast %78 : vector<128xf32> to vector<128x1xf32>
    %80 = vector.broadcast %79 : vector<128x1xf32> to vector<128x128xf32>
    %81 = arith.subf %77, %80 : vector<128x128xf32>
    %82 = math.exp %81 : vector<128x128xf32>
    %cst_27 = arith.constant dense<0.000000e+00> : vector<128xf32>
    %83 = vector.multi_reduction <add>, %82, %cst_27 [1] : vector<128x128xf32> to vector<128xf32>
    %84 = vector.shape_cast %83 : vector<128xf32> to vector<128x1xf32>
    %cst_28 = arith.constant dense<0.000000e+00> : vector<128x32xf32>
    %85 = tpu.matmul %82, %76, %cst_28 {dimension_numbers = #tpu.dot_dimension_numbers<[1], [0], [0], [1], [0, 0, 1, 1], [], []>} : vector<128x128xf32>, vector<128x32xf32>, vector<128x32xf32> -> vector<128x32xf32>
    %86 = tpu.reciprocal %84 {approx = true} : vector<128x1xf32> -> vector<128x1xf32>
    %87 = vector.broadcast %86 : vector<128x1xf32> to vector<128x32xf32>
    %88 = arith.mulf %85, %87 : vector<128x32xf32>
    %89 = vector.extract_strided_slice %3 {offsets = [0, 160], sizes = [128, 32], strides = [1, 1]} : vector<128x768xf32> to vector<128x32xf32>
    %cst_29 = arith.constant 0.176776692 : f32
    %90 = vector.broadcast %cst_29 : f32 to vector<128x32xf32>
    %91 = arith.mulf %89, %90 : vector<128x32xf32>
    %92 = vector.extract_strided_slice %3 {offsets = [0, 416], sizes = [128, 32], strides = [1, 1]} : vector<128x768xf32> to vector<128x32xf32>
    %93 = vector.extract_strided_slice %3 {offsets = [0, 672], sizes = [128, 32], strides = [1, 1]} : vector<128x768xf32> to vector<128x32xf32>
    %cst_30 = arith.constant dense<0.000000e+00> : vector<128x128xf32>
    %94 = tpu.matmul %91, %92, %cst_30 {dimension_numbers = #tpu.dot_dimension_numbers<[1], [1], [0], [0], [0, 0, 1, 0], [], []>} : vector<128x32xf32>, vector<128x32xf32>, vector<128x128xf32> -> vector<128x128xf32>
    %cst_31 = arith.constant dense<0xFF800000> : vector<128xf32>
    %95 = vector.multi_reduction <maximumf>, %94, %cst_31 [1] : vector<128x128xf32> to vector<128xf32>
    %96 = vector.shape_cast %95 : vector<128xf32> to vector<128x1xf32>
    %97 = vector.broadcast %96 : vector<128x1xf32> to vector<128x128xf32>
    %98 = arith.subf %94, %97 : vector<128x128xf32>
    %99 = math.exp %98 : vector<128x128xf32>
    %cst_32 = arith.constant dense<0.000000e+00> : vector<128xf32>
    %100 = vector.multi_reduction <add>, %99, %cst_32 [1] : vector<128x128xf32> to vector<128xf32>
    %101 = vector.shape_cast %100 : vector<128xf32> to vector<128x1xf32>
    %cst_33 = arith.constant dense<0.000000e+00> : vector<128x32xf32>
    %102 = tpu.matmul %99, %93, %cst_33 {dimension_numbers = #tpu.dot_dimension_numbers<[1], [0], [0], [1], [0, 0, 1, 1], [], []>} : vector<128x128xf32>, vector<128x32xf32>, vector<128x32xf32> -> vector<128x32xf32>
    %103 = tpu.reciprocal %101 {approx = true} : vector<128x1xf32> -> vector<128x1xf32>
    %104 = vector.broadcast %103 : vector<128x1xf32> to vector<128x32xf32>
    %105 = arith.mulf %102, %104 : vector<128x32xf32>
    %106 = vector.extract_strided_slice %3 {offsets = [0, 192], sizes = [128, 32], strides = [1, 1]} : vector<128x768xf32> to vector<128x32xf32>
    %cst_34 = arith.constant 0.176776692 : f32
    %107 = vector.broadcast %cst_34 : f32 to vector<128x32xf32>
    %108 = arith.mulf %106, %107 : vector<128x32xf32>
    %109 = vector.extract_strided_slice %3 {offsets = [0, 448], sizes = [128, 32], strides = [1, 1]} : vector<128x768xf32> to vector<128x32xf32>
    %110 = vector.extract_strided_slice %3 {offsets = [0, 704], sizes = [128, 32], strides = [1, 1]} : vector<128x768xf32> to vector<128x32xf32>
    %cst_35 = arith.constant dense<0.000000e+00> : vector<128x128xf32>
    %111 = tpu.matmul %108, %109, %cst_35 {dimension_numbers = #tpu.dot_dimension_numbers<[1], [1], [0], [0], [0, 0, 1, 0], [], []>} : vector<128x32xf32>, vector<128x32xf32>, vector<128x128xf32> -> vector<128x128xf32>
    %cst_36 = arith.constant dense<0xFF800000> : vector<128xf32>
    %112 = vector.multi_reduction <maximumf>, %111, %cst_36 [1] : vector<128x128xf32> to vector<128xf32>
    %113 = vector.shape_cast %112 : vector<128xf32> to vector<128x1xf32>
    %114 = vector.broadcast %113 : vector<128x1xf32> to vector<128x128xf32>
    %115 = arith.subf %111, %114 : vector<128x128xf32>
    %116 = math.exp %115 : vector<128x128xf32>
    %cst_37 = arith.constant dense<0.000000e+00> : vector<128xf32>
    %117 = vector.multi_reduction <add>, %116, %cst_37 [1] : vector<128x128xf32> to vector<128xf32>
    %118 = vector.shape_cast %117 : vector<128xf32> to vector<128x1xf32>
    %cst_38 = arith.constant dense<0.000000e+00> : vector<128x32xf32>
    %119 = tpu.matmul %116, %110, %cst_38 {dimension_numbers = #tpu.dot_dimension_numbers<[1], [0], [0], [1], [0, 0, 1, 1], [], []>} : vector<128x128xf32>, vector<128x32xf32>, vector<128x32xf32> -> vector<128x32xf32>
    %120 = tpu.reciprocal %118 {approx = true} : vector<128x1xf32> -> vector<128x1xf32>
    %121 = vector.broadcast %120 : vector<128x1xf32> to vector<128x32xf32>
    %122 = arith.mulf %119, %121 : vector<128x32xf32>
    %123 = vector.extract_strided_slice %3 {offsets = [0, 224], sizes = [128, 32], strides = [1, 1]} : vector<128x768xf32> to vector<128x32xf32>
    %cst_39 = arith.constant 0.176776692 : f32
    %124 = vector.broadcast %cst_39 : f32 to vector<128x32xf32>
    %125 = arith.mulf %123, %124 : vector<128x32xf32>
    %126 = vector.extract_strided_slice %3 {offsets = [0, 480], sizes = [128, 32], strides = [1, 1]} : vector<128x768xf32> to vector<128x32xf32>
    %127 = vector.extract_strided_slice %3 {offsets = [0, 736], sizes = [128, 32], strides = [1, 1]} : vector<128x768xf32> to vector<128x32xf32>
    %cst_40 = arith.constant dense<0.000000e+00> : vector<128x128xf32>
    %128 = tpu.matmul %125, %126, %cst_40 {dimension_numbers = #tpu.dot_dimension_numbers<[1], [1], [0], [0], [0, 0, 1, 0], [], []>} : vector<128x32xf32>, vector<128x32xf32>, vector<128x128xf32> -> vector<128x128xf32>
    %cst_41 = arith.constant dense<0xFF800000> : vector<128xf32>
    %129 = vector.multi_reduction <maximumf>, %128, %cst_41 [1] : vector<128x128xf32> to vector<128xf32>
    %130 = vector.shape_cast %129 : vector<128xf32> to vector<128x1xf32>
    %131 = vector.broadcast %130 : vector<128x1xf32> to vector<128x128xf32>
    %132 = arith.subf %128, %131 : vector<128x128xf32>
    %133 = math.exp %132 : vector<128x128xf32>
    %cst_42 = arith.constant dense<0.000000e+00> : vector<128xf32>
    %134 = vector.multi_reduction <add>, %133, %cst_42 [1] : vector<128x128xf32> to vector<128xf32>
    %135 = vector.shape_cast %134 : vector<128xf32> to vector<128x1xf32>
    %cst_43 = arith.constant dense<0.000000e+00> : vector<128x32xf32>
    %136 = tpu.matmul %133, %127, %cst_43 {dimension_numbers = #tpu.dot_dimension_numbers<[1], [0], [0], [1], [0, 0, 1, 1], [], []>} : vector<128x128xf32>, vector<128x32xf32>, vector<128x32xf32> -> vector<128x32xf32>
    %137 = tpu.reciprocal %135 {approx = true} : vector<128x1xf32> -> vector<128x1xf32>
    %138 = vector.broadcast %137 : vector<128x1xf32> to vector<128x32xf32>
    %139 = arith.mulf %136, %138 : vector<128x32xf32>
    %140 = tpu.concatenate %20, %37, %54, %71, %88, %105, %122, %139 in 1 : vector<128x32xf32>, vector<128x32xf32>, vector<128x32xf32>, vector<128x32xf32>, vector<128x32xf32>, vector<128x32xf32>, vector<128x32xf32>, vector<128x32xf32> -> vector<128x256xf32>
    %c0_44 = arith.constant 0 : index
    %c0_45 = arith.constant 0 : index
    %141 = vector.load %arg3[%c0_44, %c0_45] : memref<256x256xf32, #tpu.memory_space<vmem>>, vector<256x256xf32>
    %cst_46 = arith.constant dense<0.000000e+00> : vector<128x256xf32>
    %142 = tpu.matmul %140, %141, %cst_46 {dimension_numbers = #tpu.dot_dimension_numbers<[1], [0], [0], [1], [0, 0, 1, 1], [], []>} : vector<128x256xf32>, vector<256x256xf32>, vector<128x256xf32> -> vector<128x256xf32>
    %c0_47 = arith.constant 0 : index
    %c0_48 = arith.constant 0 : index
    %143 = vector.load %arg4[%c0_47, %c0_48] : memref<1x256xf32, #tpu.memory_space<vmem>>, vector<1x256xf32>
    %144 = vector.broadcast %143 : vector<1x256xf32> to vector<128x256xf32>
    %145 = arith.addf %142, %144 : vector<128x256xf32>
    %c0_49 = arith.constant 0 : index
    %c0_50 = arith.constant 0 : index
    %c0_51 = arith.constant 0 : index
    %146 = vector.load %arg5[%c0_49, %c0_50, %c0_51] : memref<1x128x256xf32, #tpu.memory_space<vmem>>, vector<1x128x256xf32>
    %147 = vector.shape_cast %146 : vector<1x128x256xf32> to vector<128x256xf32>
    %148 = vector.shape_cast %145 : vector<128x256xf32> to vector<1x128x256xf32>
    tpu.vector_store %arg5[%c0_49, %c0_50, %c0_51], %148 {strides = array<i32>} : memref<1x128x256xf32, #tpu.memory_space<vmem>>, vector<1x128x256xf32>,
    return
  }
  func.func @transform_0(%arg0: i32) -> (i32, i32, i32) {
    %c0_i32 = arith.constant 0 : i32
    %c0_i32_0 = arith.constant 0 : i32
    %c0_i32_1 = arith.constant 0 : i32
    return %arg0, %c0_i32, %c0_i32_0 : i32, i32, i32
  }
  func.func @transform_1(%arg0: i32) -> (i32, i32) {
    %c0_i32 = arith.constant 0 : i32
    %c0_i32_0 = arith.constant 0 : i32
    %c0_i32_1 = arith.constant 0 : i32
    return %c0_i32, %c0_i32_0 : i32, i32
  }
  func.func @transform_2(%arg0: i32) -> (i32, i32) {
    %c0_i32 = arith.constant 0 : i32
    %c0_i32_0 = arith.constant 0 : i32
    %c0_i32_1 = arith.constant 0 : i32
    return %c0_i32, %c0_i32_0 : i32, i32
  }
  func.func @transform_3(%arg0: i32) -> (i32, i32) {
    %c0_i32 = arith.constant 0 : i32
    %c0_i32_0 = arith.constant 0 : i32
    %c0_i32_1 = arith.constant 0 : i32
    return %c0_i32, %c0_i32_0 : i32, i32
  }
  func.func @transform_4(%arg0: i32) -> (i32, i32, i32) {
    %c0_i32 = arith.constant 0 : i32
    %c0_i32_0 = arith.constant 0 : i32
    %c0_i32_1 = arith.constant 0 : i32
    return %arg0, %c0_i32, %c0_i32_0 : i32, i32, i32
  }
}

</mosaic_0001>

<llo_original>
// kernel: tpu_custom_call.1
$region0: #{tpu_custom_call.1}
  #allocation0 [shape = 'u32[]', space=smem, size = 0x4, offset = 0x4, fixed_abs, tag = 'smem constant byte address 0x4 - core index']
  #allocation1 [shape = 'u32[144,128]{1,0:T(1,128)}', space=vmem, size = 0x12000, scoped, tag = 'internal scratch']
  %s0 = inlined_call_operand.hbm [shape: f32[2,128,256], index: 0, kind: input, shape index: {}]
  %s1 = inlined_call_operand.hbm [shape: f32[256,768], index: 1, kind: input, shape index: {}]
  %s2 = inlined_call_operand.hbm [shape: f32[256,256], index: 2, kind: input, shape index: {}]
  %s3 = inlined_call_operand.vmem [shape: f32[1,256], index: 3, kind: input, shape index: {}]
  %s4 = inlined_call_operand.hbm [shape: f32[2,128,256], index: 4, kind: output, shape index: {}]
  %s5 = sld [smem:[#allocation0]]
  $region61: #{tpu_custom_call.1} parent=0
    _
  %s7 = ssub.s32 1, %s5
  %s8 = scalar_select 0, %s7, %s5
  $region1: #{tpu_custom_call.1} parent=0
    #allocation2 [shape = 'u8[262144]{0}', space=vmem, size = 0x40000, scoped, tag = 'input window, operand 0']
    #allocation3 [shape = 's32[2]{0}', space=sflag, size = 0x8, scoped, tag = 'scoped memory for tpu_custom_call.1']
    #allocation4 [shape = 's32[2]{0}', space=sflag, size = 0x8, scoped, tag = 'scoped memory for tpu_custom_call.1']
    #allocation5 [shape = 'u8[786432]{0}', space=vmem, size = 0xc0000, scoped, tag = 'input window, operand 1, single buffered']
    #allocation6 [shape = 's32[1]{0}', space=sflag, size = 0x4, scoped, tag = 'scoped memory for tpu_custom_call.1']
    #allocation7 [shape = 'u8[262144]{0}', space=vmem, size = 0x40000, scoped, tag = 'input window, operand 2, single buffered']
    #allocation8 [shape = 'u8[262144]{0}', space=vmem, size = 0x40000, scoped, tag = 'output window, operand 0']
    %9 = vsyncpa [#allocation3], 0
    %s10 = scalar_lea.sflag [#allocation3], 1
    %11 = vsyncpa %s10, 0
    %12 = vsyncpa [#allocation6], 0
    %13 = vsyncpa [#allocation4], 0
    %s14 = scalar_lea.sflag [#allocation4], 1
    %15 = vsyncpa %s14, 0
    loop: start=0, step=1, limit=4
    $region2: #{tpu_custom_call.1} parent=1 // loop_pre_header
      _
    $region3: #{tpu_custom_call.1} parent=1 // loop_header
      %s17 = sphi 0, %s21
      %p18 = scmp.ge.s32.totalorder %s17, 4
      %s27 = sphi 0, %s29
      %s30 = sphi 0, %s27
      %s31 = sphi 0, %s30
      %s47 = sphi 0, %s31
      %s51 = sphi 0, %s51
      %s53 = sphi 0, %s51
      %s54 = sphi 0, %s53
      %s68 = sphi 0, %s54
      %s72 = sphi 0, %s72
      %s74 = sphi 0, %s72
      %s75 = sphi 0, %s74
      %s89 = sphi 0, %s75
      %s93 = sphi 0, %s93
      %s95 = sphi 0, %s93
      %s96 = sphi 0, %s95
      %s110 = sphi 0, %s96
      %s116 = sphi 0, %s118
      %s119 = sphi 0, %s116
      %s120 = sphi 0, %s119
      %s136 = sphi 0, %s120
    $region4: #{tpu_custom_call.1} parent=1 // loop_header_branch
      %20 = sbr.rel (%p18) target = $region8
    $region5: #{tpu_custom_call.1} parent=1 // loop_body
      %s22 = ssub.s32 %s17, 1
      %s23 = ssub.s32 %s17, 2
      %s24 = sadd.s32 %s17, 1
      %s25 = ssub.s32 %s17, %s24
      %p26 = scmp.eq.s32.totalorder %s25, 0
      %s28 = sadd.s32 %s27, 1
      %s29 = scalar_select %p26, %s27, %s28
      %p32 = pneg %p26
      %p33 = scmp.eq.s32.totalorder %s17, 1
      %p34 = por %p32, %p33
      %p35 = scmp.ne.s32.totalorder %s27, %s30
      %p36 = scmp.eq.s32.totalorder %s17, 0
      %p37 = por %p35, %p36
      %p38 = scmp.ne.s32.totalorder %s27, %s30
      %p39 = scmp.eq.s32.totalorder %s22, 1
      %p40 = por %p38, %p39
      %p41 = scmp.ne.s32.totalorder %s30, %s31
      %p42 = scmp.eq.s32.totalorder %s22, 0
      %p43 = por %p41, %p42
      %p44 = scmp.ne.s32.totalorder %s30, %s31
      %p45 = scmp.eq.s32.totalorder %s23, 1
      %p46 = por %p44, %p45
      %p48 = scmp.ne.s32.totalorder %s31, %s47
      %p49 = scmp.eq.s32.totalorder %s23, 0
      %p50 = por %p48, %p49
      %s52 = sadd.s32 %s51, 1
      %p55 = scmp.eq.s32.totalorder %s17, 1
      %p56 = scmp.ne.s32.totalorder %s51, %s53
      %p57 = scmp.eq.s32.totalorder %s17, 0
      %p58 = por %p56, %p57
      %p59 = scmp.ne.s32.totalorder %s51, %s53
      %p60 = scmp.eq.s32.totalorder %s22, 1
      %p61 = por %p59, %p60
      %p62 = scmp.ne.s32.totalorder %s53, %s54
      %p63 = scmp.eq.s32.totalorder %s22, 0
      %p64 = por %p62, %p63
      %p65 = scmp.ne.s32.totalorder %s53, %s54
      %p66 = scmp.eq.s32.totalorder %s23, 1
      %p67 = por %p65, %p66
      %p69 = scmp.ne.s32.totalorder %s54, %s68
      %p70 = scmp.eq.s32.totalorder %s23, 0
      %p71 = por %p69, %p70
      %s73 = sadd.s32 %s72, 1
      %p76 = scmp.eq.s32.totalorder %s17, 1
      %p77 = scmp.ne.s32.totalorder %s72, %s74
      %p78 = scmp.eq.s32.totalorder %s17, 0
      %p79 = por %p77, %p78
      %p80 = scmp.ne.s32.totalorder %s72, %s74
      %p81 = scmp.eq.s32.totalorder %s22, 1
      %p82 = por %p80, %p81
      %p83 = scmp.ne.s32.totalorder %s74, %s75
      %p84 = scmp.eq.s32.totalorder %s22, 0
      %p85 = por %p83, %p84
      %p86 = scmp.ne.s32.totalorder %s74, %s75
      %p87 = scmp.eq.s32.totalorder %s23, 1
      %p88 = por %p86, %p87
      %p90 = scmp.ne.s32.totalorder %s75, %s89
      %p91 = scmp.eq.s32.totalorder %s23, 0
      %p92 = por %p90, %p91
      %s94 = sadd.s32 %s93, 1
      %p97 = scmp.eq.s32.totalorder %s17, 1
      %p98 = scmp.ne.s32.totalorder %s93, %s95
      %p99 = scmp.eq.s32.totalorder %s17, 0
      %p100 = por %p98, %p99
      %p101 = scmp.ne.s32.totalorder %s93, %s95
      %p102 = scmp.eq.s32.totalorder %s22, 1
      %p103 = por %p101, %p102
      %p104 = scmp.ne.s32.totalorder %s95, %s96
      %p105 = scmp.eq.s32.totalorder %s22, 0
      %p106 = por %p104, %p105
      %p107 = scmp.ne.s32.totalorder %s95, %s96
      %p108 = scmp.eq.s32.totalorder %s23, 1
      %p109 = por %p107, %p108
      %p111 = scmp.ne.s32.totalorder %s96, %s110
      %p112 = scmp.eq.s32.totalorder %s23, 0
      %p113 = por %p111, %p112
      %s114 = ssub.s32 %s17, %s24
      %p115 = scmp.eq.s32.totalorder %s114, 0
      %s117 = sadd.s32 %s116, 1
      %s118 = scalar_select %p115, %s116, %s117
      %p121 = pneg %p115
      %p122 = scmp.eq.s32.totalorder %s17, 1
      %p123 = por %p121, %p122
      %p124 = scmp.ne.s32.totalorder %s116, %s119
      %p125 = scmp.eq.s32.totalorder %s17, 0
      %p126 = por %p124, %p125
      %p127 = scmp.ne.s32.totalorder %s116, %s119
      %p128 = scmp.eq.s32.totalorder %s22, 1
      %p129 = por %p127, %p128
      %p130 = scmp.ne.s32.totalorder %s119, %s120
      %p131 = scmp.eq.s32.totalorder %s22, 0
      %p132 = por %p130, %p131
      %p133 = scmp.ne.s32.totalorder %s119, %s120
      %p134 = scmp.eq.s32.totalorder %s23, 1
      %p135 = por %p133, %p134
      %p137 = scmp.ne.s32.totalorder %s120, %s136
      %p138 = scmp.eq.s32.totalorder %s23, 0
      %p139 = por %p137, %p138
      %p140 = scmp.le.s32.totalorder 1, %s17
      %p141 = scmp.lt.s32.totalorder %s17, 3
      %p142 = pnand %p140, %p141
      %p143 = pneg %p142
      // Predicated region
      $region9: #{tpu_custom_call.1} parent=5 // pred_check
        _
      $region10: #{tpu_custom_call.1} parent=5 // pred_check_branch
        %145 = sbr.rel (%p142) target = $region12
      $region11: #{tpu_custom_call.1} parent=5 // pred_region
        %s146 = ssub.s32 %s17, 1
        // Predicated region
        $region13: #{tpu_custom_call.1} parent=11 // pred_check
          %p147 = pneg %p64
        $region14: #{tpu_custom_call.1} parent=11 // pred_check_branch
          %149 = sbr.rel (%p147) target = $region16
        $region15: #{tpu_custom_call.1} parent=11 // pred_region
          %s151 = ssub.s32 24576, 24576
          %152 = vsyncadd [#allocation6], %s151
          %s153 = sshll.u32 [#allocation5], 4
          %s154 = int_to_ptr.vmem [resolvable:$true] %s153
          %159 = dma.hbm_to_vmem [thread:$0]  %s1, 24576, %s154, [#allocation6], 768, 768, 48
        $region16: #{tpu_custom_call.1} parent=11 // pred_fallthru
          _
        // Predicated region
        $region17: #{tpu_custom_call.1} parent=11 // pred_check
          %p160 = pneg %p85
        $region18: #{tpu_custom_call.1} parent=11 // pred_check_branch
          %162 = sbr.rel (%p160) target = $region20
        $region19: #{tpu_custom_call.1} parent=11 // pred_region
          %s164 = ssub.s32 8192, 8192
          %165 = vsyncadd [#allocation6], %s164
          %s166 = sshll.u32 [#allocation7], 4
          %s167 = int_to_ptr.vmem [resolvable:$true] %s166
          %172 = dma.hbm_to_vmem [thread:$0]  %s2, 8192, %s167, [#allocation6], 256, 256, 16
        $region20: #{tpu_custom_call.1} parent=11 // pred_fallthru
          _
        // Predicated region
        $region21: #{tpu_custom_call.1} parent=11 // pred_check
          %p173 = pneg %p106
        $region22: #{tpu_custom_call.1} parent=11 // pred_check_branch
          %175 = sbr.rel (%p173) target = $region24
        $region23: #{tpu_custom_call.1} parent=11 // pred_region
          _
        $region24: #{tpu_custom_call.1} parent=11 // pred_fallthru
          _
      $region12: #{tpu_custom_call.1} parent=5 // pred_fallthru
        _
      %p176 = scmp.lt.s32.totalorder %s17, 2
      // Predicated region
      $region25: #{tpu_custom_call.1} parent=5 // pred_check
        %p177 = pneg %p176
      $region26: #{tpu_custom_call.1} parent=5 // pred_check_branch
        %179 = sbr.rel (%p177) target = $region28
      $region27: #{tpu_custom_call.1} parent=5 // pred_region
        // Predicated region
        $region29: #{tpu_custom_call.1} parent=27 // pred_check
          %p180 = pneg %p37
        $region30: #{tpu_custom_call.1} parent=27 // pred_check_branch
          %182 = sbr.rel (%p180) target = $region32
        $region31: #{tpu_custom_call.1} parent=27 // pred_region
          %s183 = sand.u32 %s27, 1
          %s184 = scalar_lea.sflag [#allocation3], %s183
          %s185 = sand.u32 %s27, 1
          %s186 = smul.addr %s185, 256
          %s187 = scalar_lea.vmem [#allocation2], %s186
          %s189 = ssub.s32 4096, 4096
          %190 = vsyncadd %s184, %s189
          %s191 = smul.addr %s17, 32
          %s192 = smul.addr %s191, 128
          %s193 = scalar_lea.hbm %s0, %s192
          %s194 = sshll.u32 %s187, 4
          %s195 = int_to_ptr.vmem [resolvable:$true] %s194
          %200 = dma.hbm_to_vmem [thread:$0]  %s193, 4096, %s195, %s184, 256, 256, 16
        $region32: #{tpu_custom_call.1} parent=27 // pred_fallthru
          _
      $region28: #{tpu_custom_call.1} parent=5 // pred_fallthru
        _
      %p201 = scmp.le.s32.totalorder 1, %s17
      %p202 = scmp.lt.s32.totalorder %s17, 3
      %p203 = pnand %p201, %p202
      %p204 = pneg %p203
      // Predicated region
      $region33: #{tpu_custom_call.1} parent=5 // pred_check
        _
      $region34: #{tpu_custom_call.1} parent=5 // pred_check_branch
        %206 = sbr.rel (%p203) target = $region36
      $region35: #{tpu_custom_call.1} parent=5 // pred_region
        %s207 = ssub.s32 %s17, 1
        %s208 = sand.u32 %s30, 1
        %s209 = scalar_lea.sflag [#allocation3], %s208
        %s210 = sand.u32 %s30, 1
        %s211 = smul.addr %s210, 256
        %s212 = scalar_lea.vmem [#allocation2], %s211
        // Predicated region
        $region37: #{tpu_custom_call.1} parent=35 // pred_check
          %p213 = pneg %p43
        $region38: #{tpu_custom_call.1} parent=35 // pred_check_branch
          %215 = sbr.rel (%p213) target = $region40
        $region39: #{tpu_custom_call.1} parent=35 // pred_region
          %216 = dma.done %s209, 4096
        $region40: #{tpu_custom_call.1} parent=35 // pred_fallthru
          _
        // Predicated region
        $region41: #{tpu_custom_call.1} parent=35 // pred_check
          %p217 = pneg %p64
        $region42: #{tpu_custom_call.1} parent=35 // pred_check_branch
          %219 = sbr.rel (%p217) target = $region44
        $region43: #{tpu_custom_call.1} parent=35 // pred_region
          %220 = dma.done [#allocation6], 24576
        $region44: #{tpu_custom_call.1} parent=35 // pred_fallthru
          _
        // Predicated region
        $region45: #{tpu_custom_call.1} parent=35 // pred_check
          %p221 = pneg %p85
        $region46: #{tpu_custom_call.1} parent=35 // pred_check_branch
          %223 = sbr.rel (%p221) target = $region48
        $region47: #{tpu_custom_call.1} parent=35 // pred_region
          %224 = dma.done [#allocation6], 8192
        $region48: #{tpu_custom_call.1} parent=35 // pred_fallthru
          _
        %s225 = sand.u32 %s30, 1
        %s226 = scalar_lea.sflag [#allocation3], %s225
        %s227 = sand.u32 %s30, 1
        %s228 = smul.addr %s227, 256
        %s229 = scalar_lea.vmem [#allocation2], %s228
        %p230 = pneg %p43
        %p231 = pneg %p40
        %p232 = pneg %p64
        %p233 = pneg %p61
        %p234 = pneg %p85
        %p235 = pneg %p82
        %p236 = pneg %p106
        %p237 = pneg %p103
        %p238 = pneg %p132
        %p239 = pneg %p129
        %s240 = sand.u32 %s119, 1
        %s241 = scalar_lea.sflag [#allocation4], %s240
        %s242 = sand.u32 %s119, 1
        %s243 = smul.addr %s242, 256
        %s244 = scalar_lea.vmem [#allocation8], %s243
        %v245 = vld [vmem:[%s212] sm:$0xff]
        %v246 = vld [vmem:[%s212 + $0x8] sm:$0xff]
        %v247 = vld [vmem:[%s212 + $0x10] sm:$0xff]
        %v248 = vld [vmem:[%s212 + $0x18] sm:$0xff]
        %v249 = vld [vmem:[%s212 + $0x20] sm:$0xff]
        %v250 = vld [vmem:[%s212 + $0x28] sm:$0xff]
        %v251 = vld [vmem:[%s212 + $0x30] sm:$0xff]
        %v252 = vld [vmem:[%s212 + $0x38] sm:$0xff]
        %v253 = vld [vmem:[%s212 + $0x40] sm:$0xff]
        %v254 = vld [vmem:[%s212 + $0x48] sm:$0xff]
        %v255 = vld [vmem:[%s212 + $0x50] sm:$0xff]
        %v256 = vld [vmem:[%s212 + $0x58] sm:$0xff]
        %v257 = vld [vmem:[%s212 + $0x60] sm:$0xff]
        %v258 = vld [vmem:[%s212 + $0x68] sm:$0xff]
        %v259 = vld [vmem:[%s212 + $0x70] sm:$0xff]
        %v260 = vld [vmem:[%s212 + $0x78] sm:$0xff]
        %v261 = vld [vmem:[%s212 + $0x80] sm:$0xff]
        %v262 = vld [vmem:[%s212 + $0x88] sm:$0xff]
        %v263 = vld [vmem:[%s212 + $0x90] sm:$0xff]
        %v264 = vld [vmem:[%s212 + $0x98] sm:$0xff]
        %v265 = vld [vmem:[%s212 + $0xa0] sm:$0xff]
        %v266 = vld [vmem:[%s212 + $0xa8] sm:$0xff]
        %v267 = vld [vmem:[%s212 + $0xb0] sm:$0xff]
        %v268 = vld [vmem:[%s212 + $0xb8] sm:$0xff]
        %v269 = vld [vmem:[%s212 + $0xc0] sm:$0xff]
        %v270 = vld [vmem:[%s212 + $0xc8] sm:$0xff]
        %v271 = vld [vmem:[%s212 + $0xd0] sm:$0xff]
        %v272 = vld [vmem:[%s212 + $0xd8] sm:$0xff]
        %v273 = vld [vmem:[%s212 + $0xe0] sm:$0xff]
        %v274 = vld [vmem:[%s212 + $0xe8] sm:$0xff]
        %v275 = vld [vmem:[%s212 + $0xf0] sm:$0xff]
        %v276 = vld [vmem:[%s212 + $0xf8] sm:$0xff]
        %v277 = vld [vmem:[#allocation5] sm:$0xff]
        %v278 = vld [vmem:[#allocation5 + $0x8] sm:$0xff]
        %v279 = vld [vmem:[#allocation5 + $0x10] sm:$0xff]
        %v280 = vld [vmem:[#allocation5 + $0x18] sm:$0xff]
        %v281 = vld [vmem:[#allocation5 + $0x20] sm:$0xff]
        %v282 = vld [vmem:[#allocation5 + $0x28] sm:$0xff]
        %v283 = vld [vmem:[#allocation5 + $0x30] sm:$0xff]
        %v284 = vld [vmem:[#allocation5 + $0x38] sm:$0xff]
        %v285 = vld [vmem:[#allocation5 + $0x40] sm:$0xff]
        %v286 = vld [vmem:[#allocation5 + $0x48] sm:$0xff]
        %v287 = vld [vmem:[#allocation5 + $0x50] sm:$0xff]
        %v288 = vld [vmem:[#allocation5 + $0x58] sm:$0xff]
        %v289 = vld [vmem:[#allocation5 + $0x60] sm:$0xff]
        %v290 = vld [vmem:[#allocation5 + $0x68] sm:$0xff]
        %v291 = vld [vmem:[#allocation5 + $0x70] sm:$0xff]
        %v292 = vld [vmem:[#allocation5 + $0x78] sm:$0xff]
        %v293 = vld [vmem:[#allocation5 + $0x80] sm:$0xff]
        %v294 = vld [vmem:[#allocation5 + $0x88] sm:$0xff]
        %v295 = vld [vmem:[#allocation5 + $0x90] sm:$0xff]
        %v296 = vld [vmem:[#allocation5 + $0x98] sm:$0xff]
        %v297 = vld [vmem:[#allocation5 + $0xa0] sm:$0xff]
        %v298 = vld [vmem:[#allocation5 + $0xa8] sm:$0xff]
        %v299 = vld [vmem:[#allocation5 + $0xb0] sm:$0xff]
        %v300 = vld [vmem:[#allocation5 + $0xb8] sm:$0xff]
        %v301 = vld [vmem:[#allocation5 + $0xc0] sm:$0xff]
        %v302 = vld [vmem:[#allocation5 + $0xc8] sm:$0xff]
        %v303 = vld [vmem:[#allocation5 + $0xd0] sm:$0xff]
        %v304 = vld [vmem:[#allocation5 + $0xd8] sm:$0xff]
        %v305 = vld [vmem:[#allocation5 + $0xe0] sm:$0xff]
        %v306 = vld [vmem:[#allocation5 + $0xe8] sm:$0xff]
        %v307 = vld [vmem:[#allocation5 + $0xf0] sm:$0xff]
        %v308 = vld [vmem:[#allocation5 + $0xf8] sm:$0xff]
        %v309 = vld [vmem:[#allocation5 + $0x100] sm:$0xff]
        %v310 = vld [vmem:[#allocation5 + $0x108] sm:$0xff]
        %v311 = vld [vmem:[#allocation5 + $0x110] sm:$0xff]
        %v312 = vld [vmem:[#allocation5 + $0x118] sm:$0xff]
        %v313 = vld [vmem:[#allocation5 + $0x120] sm:$0xff]
        %v314 = vld [vmem:[#allocation5 + $0x128] sm:$0xff]
        %v315 = vld [vmem:[#allocation5 + $0x130] sm:$0xff]
        %v316 = vld [vmem:[#allocation5 + $0x138] sm:$0xff]
        %v317 = vld [vmem:[#allocation5 + $0x140] sm:$0xff]
        %v318 = vld [vmem:[#allocation5 + $0x148] sm:$0xff]
        %v319 = vld [vmem:[#allocation5 + $0x150] sm:$0xff]
        %v320 = vld [vmem:[#allocation5 + $0x158] sm:$0xff]
        %v321 = vld [vmem:[#allocation5 + $0x160] sm:$0xff]
        %v322 = vld [vmem:[#allocation5 + $0x168] sm:$0xff]
        %v323 = vld [vmem:[#allocation5 + $0x170] sm:$0xff]
        %v324 = vld [vmem:[#allocation5 + $0x178] sm:$0xff]
        %v325 = vld [vmem:[#allocation5 + $0x180] sm:$0xff]
        %v326 = vld [vmem:[#allocation5 + $0x188] sm:$0xff]
        %v327 = vld [vmem:[#allocation5 + $0x190] sm:$0xff]
        %v328 = vld [vmem:[#allocation5 + $0x198] sm:$0xff]
        %v329 = vld [vmem:[#allocation5 + $0x1a0] sm:$0xff]
        %v330 = vld [vmem:[#allocation5 + $0x1a8] sm:$0xff]
        %v331 = vld [vmem:[#allocation5 + $0x1b0] sm:$0xff]
        %v332 = vld [vmem:[#allocation5 + $0x1b8] sm:$0xff]
        %v333 = vld [vmem:[#allocation5 + $0x1c0] sm:$0xff]
        %v334 = vld [vmem:[#allocation5 + $0x1c8] sm:$0xff]
        %v335 = vld [vmem:[#allocation5 + $0x1d0] sm:$0xff]
        %v336 = vld [vmem:[#allocation5 + $0x1d8] sm:$0xff]
        %v337 = vld [vmem:[#allocation5 + $0x1e0] sm:$0xff]
        %v338 = vld [vmem:[#allocation5 + $0x1e8] sm:$0xff]
        %v339 = vld [vmem:[#allocation5 + $0x1f0] sm:$0xff]
        %v340 = vld [vmem:[#allocation5 + $0x1f8] sm:$0xff]
        %v341 = vld [vmem:[#allocation5 + $0x200] sm:$0xff]
        %v342 = vld [vmem:[#allocation5 + $0x208] sm:$0xff]
        %v343 = vld [vmem:[#allocation5 + $0x210] sm:$0xff]
        %v344 = vld [vmem:[#allocation5 + $0x218] sm:$0xff]
        %v345 = vld [vmem:[#allocation5 + $0x220] sm:$0xff]
        %v346 = vld [vmem:[#allocation5 + $0x228] sm:$0xff]
        %v347 = vld [vmem:[#allocation5 + $0x230] sm:$0xff]
        %v348 = vld [vmem:[#allocation5 + $0x238] sm:$0xff]
        %v349 = vld [vmem:[#allocation5 + $0x240] sm:$0xff]
        %v350 = vld [vmem:[#allocation5 + $0x248] sm:$0xff]
        %v351 = vld [vmem:[#allocation5 + $0x250] sm:$0xff]
        %v352 = vld [vmem:[#allocation5 + $0x258] sm:$0xff]
        %v353 = vld [vmem:[#allocation5 + $0x260] sm:$0xff]
        %v354 = vld [vmem:[#allocation5 + $0x268] sm:$0xff]
        %v355 = vld [vmem:[#allocation5 + $0x270] sm:$0xff]
        %v356 = vld [vmem:[#allocation5 + $0x278] sm:$0xff]
        %v357 = vld [vmem:[#allocation5 + $0x280] sm:$0xff]
        %v358 = vld [vmem:[#allocation5 + $0x288] sm:$0xff]
        %v359 = vld [vmem:[#allocation5 + $0x290] sm:$0xff]
        %v360 = vld [vmem:[#allocation5 + $0x298] sm:$0xff]
        %v361 = vld [vmem:[#allocation5 + $0x2a0] sm:$0xff]
        %v362 = vld [vmem:[#allocation5 + $0x2a8] sm:$0xff]
        %v363 = vld [vmem:[#allocation5 + $0x2b0] sm:$0xff]
        %v364 = vld [vmem:[#allocation5 + $0x2b8] sm:$0xff]
        %v365 = vld [vmem:[#allocation5 + $0x2c0] sm:$0xff]
        %v366 = vld [vmem:[#allocation5 + $0x2c8] sm:$0xff]
        %v367 = vld [vmem:[#allocation5 + $0x2d0] sm:$0xff]
        %v368 = vld [vmem:[#allocation5 + $0x2d8] sm:$0xff]
        %v369 = vld [vmem:[#allocation5 + $0x2e0] sm:$0xff]
        %v370 = vld [vmem:[#allocation5 + $0x2e8] sm:$0xff]
        %v371 = vld [vmem:[#allocation5 + $0x2f0] sm:$0xff]
        %v372 = vld [vmem:[#allocation5 + $0x2f8] sm:$0xff]
        %v373 = vld [vmem:[#allocation5 + $0x300] sm:$0xff]
        %v374 = vld [vmem:[#allocation5 + $0x308] sm:$0xff]
        %v375 = vld [vmem:[#allocation5 + $0x310] sm:$0xff]
        %v376 = vld [vmem:[#allocation5 + $0x318] sm:$0xff]
        %v377 = vld [vmem:[#allocation5 + $0x320] sm:$0xff]
        %v378 = vld [vmem:[#allocation5 + $0x328] sm:$0xff]
        %v379 = vld [vmem:[#allocation5 + $0x330] sm:$0xff]
        %v380 = vld [vmem:[#allocation5 + $0x338] sm:$0xff]
        %v381 = vld [vmem:[#allocation5 + $0x340] sm:$0xff]
        %v382 = vld [vmem:[#allocation5 + $0x348] sm:$0xff]
        %v383 = vld [vmem:[#allocation5 + $0x350] sm:$0xff]
        %v384 = vld [vmem:[#allocation5 + $0x358] sm:$0xff]
        %v385 = vld [vmem:[#allocation5 + $0x360] sm:$0xff]
        %v386 = vld [vmem:[#allocation5 + $0x368] sm:$0xff]
        %v387 = vld [vmem:[#allocation5 + $0x370] sm:$0xff]
        %v388 = vld [vmem:[#allocation5 + $0x378] sm:$0xff]
        %v389 = vld [vmem:[#allocation5 + $0x380] sm:$0xff]
        %v390 = vld [vmem:[#allocation5 + $0x388] sm:$0xff]
        %v391 = vld [vmem:[#allocation5 + $0x390] sm:$0xff]
        %v392 = vld [vmem:[#allocation5 + $0x398] sm:$0xff]
        %v393 = vld [vmem:[#allocation5 + $0x3a0] sm:$0xff]
        %v394 = vld [vmem:[#allocation5 + $0x3a8] sm:$0xff]
        %v395 = vld [vmem:[#allocation5 + $0x3b0] sm:$0xff]
        %v396 = vld [vmem:[#allocation5 + $0x3b8] sm:$0xff]
        %v397 = vld [vmem:[#allocation5 + $0x3c0] sm:$0xff]
        %v398 = vld [vmem:[#allocation5 + $0x3c8] sm:$0xff]
        %v399 = vld [vmem:[#allocation5 + $0x3d0] sm:$0xff]
        %v400 = vld [vmem:[#allocation5 + $0x3d8] sm:$0xff]
        %v401 = vld [vmem:[#allocation5 + $0x3e0] sm:$0xff]
        %v402 = vld [vmem:[#allocation5 + $0x3e8] sm:$0xff]
        %v403 = vld [vmem:[#allocation5 + $0x3f0] sm:$0xff]
        %v404 = vld [vmem:[#allocation5 + $0x3f8] sm:$0xff]
        %v405 = vld [vmem:[#allocation5 + $0x400] sm:$0xff]
        %v406 = vld [vmem:[#allocation5 + $0x408] sm:$0xff]
        %v407 = vld [vmem:[#allocation5 + $0x410] sm:$0xff]
        %v408 = vld [vmem:[#allocation5 + $0x418] sm:$0xff]
        %v409 = vld [vmem:[#allocation5 + $0x420] sm:$0xff]
        %v410 = vld [vmem:[#allocation5 + $0x428] sm:$0xff]
        %v411 = vld [vmem:[#allocation5 + $0x430] sm:$0xff]
        %v412 = vld [vmem:[#allocation5 + $0x438] sm:$0xff]
        %v413 = vld [vmem:[#allocation5 + $0x440] sm:$0xff]
        %v414 = vld [vmem:[#allocation5 + $0x448] sm:$0xff]
        %v415 = vld [vmem:[#allocation5 + $0x450] sm:$0xff]
        %v416 = vld [vmem:[#allocation5 + $0x458] sm:$0xff]
        %v417 = vld [vmem:[#allocation5 + $0x460] sm:$0xff]
        %v418 = vld [vmem:[#allocation5 + $0x468] sm:$0xff]
        %v419 = vld [vmem:[#allocation5 + $0x470] sm:$0xff]
        %v420 = vld [vmem:[#allocation5 + $0x478] sm:$0xff]
        %v421 = vld [vmem:[#allocation5 + $0x480] sm:$0xff]
        %v422 = vld [vmem:[#allocation5 + $0x488] sm:$0xff]
        %v423 = vld [vmem:[#allocation5 + $0x490] sm:$0xff]
        %v424 = vld [vmem:[#allocation5 + $0x498] sm:$0xff]
        %v425 = vld [vmem:[#allocation5 + $0x4a0] sm:$0xff]
        %v426 = vld [vmem:[#allocation5 + $0x4a8] sm:$0xff]
        %v427 = vld [vmem:[#allocation5 + $0x4b0] sm:$0xff]
        %v428 = vld [vmem:[#allocation5 + $0x4b8] sm:$0xff]
        %v429 = vld [vmem:[#allocation5 + $0x4c0] sm:$0xff]
        %v430 = vld [vmem:[#allocation5 + $0x4c8] sm:$0xff]
        %v431 = vld [vmem:[#allocation5 + $0x4d0] sm:$0xff]
        %v432 = vld [vmem:[#allocation5 + $0x4d8] sm:$0xff]
        %v433 = vld [vmem:[#allocation5 + $0x4e0] sm:$0xff]
        %v434 = vld [vmem:[#allocation5 + $0x4e8] sm:$0xff]
        %v435 = vld [vmem:[#allocation5 + $0x4f0] sm:$0xff]
        %v436 = vld [vmem:[#allocation5 + $0x4f8] sm:$0xff]
        %v437 = vld [vmem:[#allocation5 + $0x500] sm:$0xff]
        %v438 = vld [vmem:[#allocation5 + $0x508] sm:$0xff]
        %v439 = vld [vmem:[#allocation5 + $0x510] sm:$0xff]
        %v440 = vld [vmem:[#allocation5 + $0x518] sm:$0xff]
        %v441 = vld [vmem:[#allocation5 + $0x520] sm:$0xff]
        %v442 = vld [vmem:[#allocation5 + $0x528] sm:$0xff]
        %v443 = vld [vmem:[#allocation5 + $0x530] sm:$0xff]
        %v444 = vld [vmem:[#allocation5 + $0x538] sm:$0xff]
        %v445 = vld [vmem:[#allocation5 + $0x540] sm:$0xff]
        %v446 = vld [vmem:[#allocation5 + $0x548] sm:$0xff]
        %v447 = vld [vmem:[#allocation5 + $0x550] sm:$0xff]
        %v448 = vld [vmem:[#allocation5 + $0x558] sm:$0xff]
        %v449 = vld [vmem:[#allocation5 + $0x560] sm:$0xff]
        %v450 = vld [vmem:[#allocation5 + $0x568] sm:$0xff]
        %v451 = vld [vmem:[#allocation5 + $0x570] sm:$0xff]
        %v452 = vld [vmem:[#allocation5 + $0x578] sm:$0xff]
        %v453 = vld [vmem:[#allocation5 + $0x580] sm:$0xff]
        %v454 = vld [vmem:[#allocation5 + $0x588] sm:$0xff]
        %v455 = vld [vmem:[#allocation5 + $0x590] sm:$0xff]
        %v456 = vld [vmem:[#allocation5 + $0x598] sm:$0xff]
        %v457 = vld [vmem:[#allocation5 + $0x5a0] sm:$0xff]
        %v458 = vld [vmem:[#allocation5 + $0x5a8] sm:$0xff]
        %v459 = vld [vmem:[#allocation5 + $0x5b0] sm:$0xff]
        %v460 = vld [vmem:[#allocation5 + $0x5b8] sm:$0xff]
        %v461 = vld [vmem:[#allocation5 + $0x5c0] sm:$0xff]
        %v462 = vld [vmem:[#allocation5 + $0x5c8] sm:$0xff]
        %v463 = vld [vmem:[#allocation5 + $0x5d0] sm:$0xff]
        %v464 = vld [vmem:[#allocation5 + $0x5d8] sm:$0xff]
        %v465 = vld [vmem:[#allocation5 + $0x5e0] sm:$0xff]
        %v466 = vld [vmem:[#allocation5 + $0x5e8] sm:$0xff]
        %v467 = vld [vmem:[#allocation5 + $0x5f0] sm:$0xff]
        %v468 = vld [vmem:[#allocation5 + $0x5f8] sm:$0xff]
        %469 = vmatprep.subr.mxu0 %v278
        %470 = vmatpush1.msra.mxu0 %v277
        %471 = vmatprep.subr.mxu0 %v284
        %472 = vmatpush1.msra.mxu0 %v283
        %473 = vmatprep.subr.mxu0 %v290
        %474 = vmatpush1.msra.mxu0 %v289
        %475 = vmatprep.subr.mxu0 %v296
        %476 = vmatpush1.msra.mxu0 %v295
        %477 = vmatprep.subr.mxu0 %v302
        %478 = vmatpush1.msra.mxu0 %v301
        %479 = vmatprep.subr.mxu0 %v308
        %480 = vmatpush1.msra.mxu0 %v307
        %481 = vmatprep.subr.mxu0 %v314
        %482 = vmatpush1.msra.mxu0 %v313
        %483 = vmatprep.subr.mxu0 %v320
        %484 = vmatpush1.msra.mxu0 %v319
        %485 = vmatprep.subr.mxu0 %v326
        %486 = vmatpush1.msra.mxu0 %v325
        %487 = vmatprep.subr.mxu0 %v332
        %488 = vmatpush1.msra.mxu0 %v331
        %489 = vmatprep.subr.mxu0 %v338
        %490 = vmatpush1.msra.mxu0 %v337
        %491 = vmatprep.subr.mxu0 %v344
        %492 = vmatpush1.msra.mxu0 %v343
        %493 = vmatprep.subr.mxu0 %v350
        %494 = vmatpush1.msra.mxu0 %v349
        %495 = vmatprep.subr.mxu0 %v356
        %496 = vmatpush1.msra.mxu0 %v355
        %497 = vmatprep.subr.mxu0 %v362
        %498 = vmatpush1.msra.mxu0 %v361
        %499 = vmatprep.subr.mxu0 %v368
        %500 = vmatpush1.msra.mxu0 %v367
        %501 = vmatprep.subr.mxu0 %v374
        %502 = vmatpush1.msra.mxu0 %v373
        %503 = vmatprep.subr.mxu0 %v380
        %504 = vmatpush1.msra.mxu0 %v379
        %505 = vmatprep.subr.mxu0 %v386
        %506 = vmatpush1.msra.mxu0 %v385
        %507 = vmatprep.subr.mxu0 %v392
        %508 = vmatpush1.msra.mxu0 %v391
        %509 = vmatprep.subr.mxu0 %v398
        %510 = vmatpush1.msra.mxu0 %v397
        %511 = vmatprep.subr.mxu0 %v404
        %512 = vmatpush1.msra.mxu0 %v403
        %513 = vmatprep.subr.mxu0 %v410
        %514 = vmatpush1.msra.mxu0 %v409
        %515 = vmatprep.subr.mxu0 %v416
        %516 = vmatpush1.msra.mxu0 %v415
        %517 = vmatprep.subr.mxu0 %v422
        %518 = vmatpush1.msra.mxu0 %v421
        %519 = vmatprep.subr.mxu0 %v428
        %520 = vmatpush1.msra.mxu0 %v427
        %521 = vmatprep.subr.mxu0 %v434
        %522 = vmatpush1.msra.mxu0 %v433
        %523 = vmatprep.subr.mxu0 %v440
        %524 = vmatpush1.msra.mxu0 %v439
        %525 = vmatprep.subr.mxu0 %v446
        %526 = vmatpush1.msra.mxu0 %v445
        %527 = vmatprep.subr.mxu0 %v452
        %528 = vmatpush1.msra.mxu0 %v451
        %529 = vmatprep.subr.mxu0 %v458
        %530 = vmatpush1.msra.mxu0 %v457
        %531 = vmatprep.subr.mxu0 %v464
        %532 = vmatpush1.msra.mxu0 %v463
        %533 = vmatprep.mubr.f32.mxu0 %v246
        %534 = vmatmul.mubr.f32.gmra.mrb[0].mxu0 %v245
        %v535 = vpop.f32.mrb[0].mxu0
        %v536 = vadd.f32 0.0, %v535
        %v537 = vpop.f32.mrb[0].mxu0
        %v538 = vadd.f32 0.0, %v537
        %539 = vmatprep.mubr.f32.mxu0 %v248
        %540 = vmatmul.mubr.f32.gmra.mrb[0].mxu0 %v247
        %v541 = vpop.f32.mrb[0].mxu0
        %v542 = vadd.f32 0.0, %v541
        %v543 = vpop.f32.mrb[0].mxu0
        %v544 = vadd.f32 0.0, %v543
        %545 = vmatprep.mubr.f32.mxu0 %v250
        %546 = vmatmul.mubr.f32.gmra.mrb[0].mxu0 %v249
        %v547 = vpop.f32.mrb[0].mxu0
        %v548 = vadd.f32 0.0, %v547
        %v549 = vpop.f32.mrb[0].mxu0
        %v550 = vadd.f32 0.0, %v549
        %551 = vmatprep.mubr.f32.mxu0 %v252
        %552 = vmatmul.mubr.f32.gmra.mrb[0].mxu0 %v251
        %v553 = vpop.f32.mrb[0].mxu0
        %v554 = vadd.f32 0.0, %v553
        %v555 = vpop.f32.mrb[0].mxu0
        %v556 = vadd.f32 0.0, %v555
        %557 = vmatprep.mubr.f32.mxu0 %v254
        %558 = vmatmul.mubr.f32.gmra.mrb[0].mxu0 %v253
        %v559 = vpop.f32.mrb[0].mxu0
        %v560 = vadd.f32 0.0, %v559
        %v561 = vpop.f32.mrb[0].mxu0
        %v562 = vadd.f32 0.0, %v561
        %563 = vmatprep.mubr.f32.mxu0 %v256
        %564 = vmatmul.mubr.f32.gmra.mrb[0].mxu0 %v255
        %v565 = vpop.f32.mrb[0].mxu0
        %v566 = vadd.f32 0.0, %v565
        %v567 = vpop.f32.mrb[0].mxu0
        %v568 = vadd.f32 0.0, %v567
        %569 = vmatprep.mubr.f32.mxu0 %v258
        %570 = vmatmul.mubr.f32.gmra.mrb[0].mxu0 %v257
        %v571 = vpop.f32.mrb[0].mxu0
        %v572 = vadd.f32 0.0, %v571
        %v573 = vpop.f32.mrb[0].mxu0
        %v574 = vadd.f32 0.0, %v573
        %575 = vmatprep.mubr.f32.mxu0 %v260
        %576 = vmatmul.mubr.f32.gmra.mrb[0].mxu0 %v259
        %v577 = vpop.f32.mrb[0].mxu0
        %v578 = vadd.f32 0.0, %v577
        %v579 = vpop.f32.mrb[0].mxu0
        %v580 = vadd.f32 0.0, %v579
        %581 = vmatprep.mubr.f32.mxu0 %v262
        %582 = vmatmul.mubr.f32.gmra.mrb[0].mxu0 %v261
        %v583 = vpop.f32.mrb[0].mxu0
        %v584 = vadd.f32 0.0, %v583
        %v585 = vpop.f32.mrb[0].mxu0
        %v586 = vadd.f32 0.0, %v585
        %587 = vmatprep.mubr.f32.mxu0 %v264
        %588 = vmatmul.mubr.f32.gmra.mrb[0].mxu0 %v263
        %v589 = vpop.f32.mrb[0].mxu0
        %v590 = vadd.f32 0.0, %v589
        %v591 = vpop.f32.mrb[0].mxu0
        %v592 = vadd.f32 0.0, %v591
        %593 = vmatprep.mubr.f32.mxu0 %v266
        %594 = vmatmul.mubr.f32.gmra.mrb[0].mxu0 %v265
        %v595 = vpop.f32.mrb[0].mxu0
        %v596 = vadd.f32 0.0, %v595
        %v597 = vpop.f32.mrb[0].mxu0
        %v598 = vadd.f32 0.0, %v597
        %599 = vmatprep.mubr.f32.mxu0 %v268
        %600 = vmatmul.mubr.f32.gmra.mrb[0].mxu0 %v267
        %v601 = vpop.f32.mrb[0].mxu0
        %v602 = vadd.f32 0.0, %v601
        %v603 = vpop.f32.mrb[0].mxu0
        %v604 = vadd.f32 0.0, %v603
        %605 = vmatprep.mubr.f32.mxu0 %v270
        %606 = vmatmul.mubr.f32.gmra.mrb[0].mxu0 %v269
        %v607 = vpop.f32.mrb[0].mxu0
        %v608 = vadd.f32 0.0, %v607
        %v609 = vpop.f32.mrb[0].mxu0
        %v610 = vadd.f32 0.0, %v609
        %611 = vmatprep.mubr.f32.mxu0 %v272
        %612 = vmatmul.mubr.f32.gmra.mrb[0].mxu0 %v271
        %v613 = vpop.f32.mrb[0].mxu0
        %v614 = vadd.f32 0.0, %v613
        %v615 = vpop.f32.mrb[0].mxu0
        %v616 = vadd.f32 0.0, %v615
        %617 = vmatprep.mubr.f32.mxu0 %v274
        %618 = vmatmul.mubr.f32.gmra.mrb[0].mxu0 %v273
        %v619 = vpop.f32.mrb[0].mxu0
        %v620 = vadd.f32 0.0, %v619
        %v621 = vpop.f32.mrb[0].mxu0
        %v622 = vadd.f32 0.0, %v621
        %623 = vmatprep.mubr.f32.mxu0 %v276
        %624 = vmatmul.mubr.f32.gmra.mrb[0].mxu0 %v275
        %v625 = vpop.f32.mrb[0].mxu0
        %v626 = vadd.f32 0.0, %v625
        %v627 = vpop.f32.mrb[0].mxu0
        %v628 = vadd.f32 0.0, %v627
        %629 = vdwg.mxu0
        %630 = vmatprep.subr.mxu0 %v280
        %631 = vmatpush1.msra.mxu0 %v279
        %632 = vmatprep.subr.mxu0 %v286
        %633 = vmatpush1.msra.mxu0 %v285
        %634 = vmatprep.subr.mxu0 %v292
        %635 = vmatpush1.msra.mxu0 %v291
        %636 = vmatprep.subr.mxu0 %v298
        %637 = vmatpush1.msra.mxu0 %v297
        %638 = vmatprep.subr.mxu0 %v304
        %639 = vmatpush1.msra.mxu0 %v303
        %640 = vmatprep.subr.mxu0 %v310
        %641 = vmatpush1.msra.mxu0 %v309
        %642 = vmatprep.subr.mxu0 %v316
        %643 = vmatpush1.msra.mxu0 %v315
        %644 = vmatprep.subr.mxu0 %v322
        %645 = vmatpush1.msra.mxu0 %v321
        %646 = vmatprep.subr.mxu0 %v328
        %647 = vmatpush1.msra.mxu0 %v327
        %648 = vmatprep.subr.mxu0 %v334
        %649 = vmatpush1.msra.mxu0 %v333
        %650 = vmatprep.subr.mxu0 %v340
        %651 = vmatpush1.msra.mxu0 %v339
        %652 = vmatprep.subr.mxu0 %v346
        %653 = vmatpush1.msra.mxu0 %v345
        %654 = vmatprep.subr.mxu0 %v352
        %655 = vmatpush1.msra.mxu0 %v351
        %656 = vmatprep.subr.mxu0 %v358
        %657 = vmatpush1.msra.mxu0 %v357
        %658 = vmatprep.subr.mxu0 %v364
        %659 = vmatpush1.msra.mxu0 %v363
        %660 = vmatprep.subr.mxu0 %v370
        %661 = vmatpush1.msra.mxu0 %v369
        %662 = vmatprep.subr.mxu0 %v376
        %663 = vmatpush1.msra.mxu0 %v375
        %664 = vmatprep.subr.mxu0 %v382
        %665 = vmatpush1.msra.mxu0 %v381
        %666 = vmatprep.subr.mxu0 %v388
        %667 = vmatpush1.msra.mxu0 %v387
        %668 = vmatprep.subr.mxu0 %v394
        %669 = vmatpush1.msra.mxu0 %v393
        %670 = vmatprep.subr.mxu0 %v400
        %671 = vmatpush1.msra.mxu0 %v399
        %672 = vmatprep.subr.mxu0 %v406
        %673 = vmatpush1.msra.mxu0 %v405
        %674 = vmatprep.subr.mxu0 %v412
        %675 = vmatpush1.msra.mxu0 %v411
        %676 = vmatprep.subr.mxu0 %v418
        %677 = vmatpush1.msra.mxu0 %v417
        %678 = vmatprep.subr.mxu0 %v424
        %679 = vmatpush1.msra.mxu0 %v423
        %680 = vmatprep.subr.mxu0 %v430
        %681 = vmatpush1.msra.mxu0 %v429
        %682 = vmatprep.subr.mxu0 %v436
        %683 = vmatpush1.msra.mxu0 %v435
        %684 = vmatprep.subr.mxu0 %v442
        %685 = vmatpush1.msra.mxu0 %v441
        %686 = vmatprep.subr.mxu0 %v448
        %687 = vmatpush1.msra.mxu0 %v447
        %688 = vmatprep.subr.mxu0 %v454
        %689 = vmatpush1.msra.mxu0 %v453
        %690 = vmatprep.subr.mxu0 %v460
        %691 = vmatpush1.msra.mxu0 %v459
        %692 = vmatprep.subr.mxu0 %v466
        %693 = vmatpush1.msra.mxu0 %v465
        %694 = vmatprep.mubr.f32.mxu0 %v246
        %695 = vmatmul.mubr.f32.gmra.mrb[0].mxu0 %v245
        %v696 = vpop.f32.mrb[0].mxu0
        %v697 = vadd.f32 0.0, %v696
        %v698 = vpop.f32.mrb[0].mxu0
        %v699 = vadd.f32 0.0, %v698
        %700 = vmatprep.mubr.f32.mxu0 %v248
        %701 = vmatmul.mubr.f32.gmra.mrb[0].mxu0 %v247
        %v702 = vpop.f32.mrb[0].mxu0
        %v703 = vadd.f32 0.0, %v702
        %v704 = vpop.f32.mrb[0].mxu0
        %v705 = vadd.f32 0.0, %v704
        %706 = vmatprep.mubr.f32.mxu0 %v250
        %707 = vmatmul.mubr.f32.gmra.mrb[0].mxu0 %v249
        %v708 = vpop.f32.mrb[0].mxu0
        %v709 = vadd.f32 0.0, %v708
        %v710 = vpop.f32.mrb[0].mxu0
        %v711 = vadd.f32 0.0, %v710
        %712 = vmatprep.mubr.f32.mxu0 %v252
        %713 = vmatmul.mubr.f32.gmra.mrb[0].mxu0 %v251
        %v714 = vpop.f32.mrb[0].mxu0
        %v715 = vadd.f32 0.0, %v714
        %v716 = vpop.f32.mrb[0].mxu0
        %v717 = vadd.f32 0.0, %v716
        %718 = vmatprep.mubr.f32.mxu0 %v254
        %719 = vmatmul.mubr.f32.gmra.mrb[0].mxu0 %v253
        %v720 = vpop.f32.mrb[0].mxu0
        %v721 = vadd.f32 0.0, %v720
        %v722 = vpop.f32.mrb[0].mxu0
        %v723 = vadd.f32 0.0, %v722
        %724 = vmatprep.mubr.f32.mxu0 %v256
        %725 = vmatmul.mubr.f32.gmra.mrb[0].mxu0 %v255
        %v726 = vpop.f32.mrb[0].mxu0
        %v727 = vadd.f32 0.0, %v726
        %v728 = vpop.f32.mrb[0].mxu0
        %v729 = vadd.f32 0.0, %v728
        %730 = vmatprep.mubr.f32.mxu0 %v258
        %731 = vmatmul.mubr.f32.gmra.mrb[0].mxu0 %v257
        %v732 = vpop.f32.mrb[0].mxu0
        %v733 = vadd.f32 0.0, %v732
        %v734 = vpop.f32.mrb[0].mxu0
        %v735 = vadd.f32 0.0, %v734
        %736 = vmatprep.mubr.f32.mxu0 %v260
        %737 = vmatmul.mubr.f32.gmra.mrb[0].mxu0 %v259
        %v738 = vpop.f32.mrb[0].mxu0
        %v739 = vadd.f32 0.0, %v738
        %v740 = vpop.f32.mrb[0].mxu0
        %v741 = vadd.f32 0.0, %v740
        %742 = vmatprep.mubr.f32.mxu0 %v262
        %743 = vmatmul.mubr.f32.gmra.mrb[0].mxu0 %v261
        %v744 = vpop.f32.mrb[0].mxu0
        %v745 = vadd.f32 0.0, %v744
        %v746 = vpop.f32.mrb[0].mxu0
        %v747 = vadd.f32 0.0, %v746
        %748 = vmatprep.mubr.f32.mxu0 %v264
        %749 = vmatmul.mubr.f32.gmra.mrb[0].mxu0 %v263
        %v750 = vpop.f32.mrb[0].mxu0
        %v751 = vadd.f32 0.0, %v750
        %v752 = vpop.f32.mrb[0].mxu0
        %v753 = vadd.f32 0.0, %v752
        %754 = vmatprep.mubr.f32.mxu0 %v266
        %755 = vmatmul.mubr.f32.gmra.mrb[0].mxu0 %v265
        %v756 = vpop.f32.mrb[0].mxu0
        %v757 = vadd.f32 0.0, %v756
        %v758 = vpop.f32.mrb[0].mxu0
        %v759 = vadd.f32 0.0, %v758
        %760 = vmatprep.mubr.f32.mxu0 %v268
        %761 = vmatmul.mubr.f32.gmra.mrb[0].mxu0 %v267
        %v762 = vpop.f32.mrb[0].mxu0
        %v763 = vadd.f32 0.0, %v762
        %v764 = vpop.f32.mrb[0].mxu0
        %v765 = vadd.f32 0.0, %v764
        %766 = vmatprep.mubr.f32.mxu0 %v270
        %767 = vmatmul.mubr.f32.gmra.mrb[0].mxu0 %v269
        %v768 = vpop.f32.mrb[0].mxu0
        %v769 = vadd.f32 0.0, %v768
        %v770 = vpop.f32.mrb[0].mxu0
        %v771 = vadd.f32 0.0, %v770
        %772 = vmatprep.mubr.f32.mxu0 %v272
        %773 = vmatmul.mubr.f32.gmra.mrb[0].mxu0 %v271
        %v774 = vpop.f32.mrb[0].mxu0
        %v775 = vadd.f32 0.0, %v774
        %v776 = vpop.f32.mrb[0].mxu0
        %v777 = vadd.f32 0.0, %v776
        %778 = vmatprep.mubr.f32.mxu0 %v274
        %779 = vmatmul.mubr.f32.gmra.mrb[0].mxu0 %v273
        %v780 = vpop.f32.mrb[0].mxu0
        %v781 = vadd.f32 0.0, %v780
        %v782 = vpop.f32.mrb[0].mxu0
        %v783 = vadd.f32 0.0, %v782
        %784 = vmatprep.mubr.f32.mxu0 %v276
        %785 = vmatmul.mubr.f32.gmra.mrb[0].mxu0 %v275
        %v786 = vpop.f32.mrb[0].mxu0
        %v787 = vadd.f32 0.0, %v786
        %v788 = vpop.f32.mrb[0].mxu0
        %v789 = vadd.f32 0.0, %v788
        %790 = vdwg.mxu0
        %791 = vmatprep.subr.mxu0 %v282
        %792 = vmatpush1.msra.mxu0 %v281
        %793 = vmatprep.subr.mxu0 %v288
        %794 = vmatpush1.msra.mxu0 %v287
        %795 = vmatprep.subr.mxu0 %v294
        %796 = vmatpush1.msra.mxu0 %v293
        %797 = vmatprep.subr.mxu0 %v300
        %798 = vmatpush1.msra.mxu0 %v299
        %799 = vmatprep.subr.mxu0 %v306
        %800 = vmatpush1.msra.mxu0 %v305
        %801 = vmatprep.subr.mxu0 %v312
        %802 = vmatpush1.msra.mxu0 %v311
        %803 = vmatprep.subr.mxu0 %v318
        %804 = vmatpush1.msra.mxu0 %v317
        %805 = vmatprep.subr.mxu0 %v324
        %806 = vmatpush1.msra.mxu0 %v323
        %807 = vmatprep.subr.mxu0 %v330
        %808 = vmatpush1.msra.mxu0 %v329
        %809 = vmatprep.subr.mxu0 %v336
        %810 = vmatpush1.msra.mxu0 %v335
        %811 = vmatprep.subr.mxu0 %v342
        %812 = vmatpush1.msra.mxu0 %v341
        %813 = vmatprep.subr.mxu0 %v348
        %814 = vmatpush1.msra.mxu0 %v347
        %815 = vmatprep.subr.mxu0 %v354
        %816 = vmatpush1.msra.mxu0 %v353
        %817 = vmatprep.subr.mxu0 %v360
        %818 = vmatpush1.msra.mxu0 %v359
        %819 = vmatprep.subr.mxu0 %v366
        %820 = vmatpush1.msra.mxu0 %v365
        %821 = vmatprep.subr.mxu0 %v372
        %822 = vmatpush1.msra.mxu0 %v371
        %823 = vmatprep.subr.mxu0 %v378
        %824 = vmatpush1.msra.mxu0 %v377
        %825 = vmatprep.subr.mxu0 %v384
        %826 = vmatpush1.msra.mxu0 %v383
        %827 = vmatprep.subr.mxu0 %v390
        %828 = vmatpush1.msra.mxu0 %v389
        %829 = vmatprep.subr.mxu0 %v396
        %830 = vmatpush1.msra.mxu0 %v395
        %831 = vmatprep.subr.mxu0 %v402
        %832 = vmatpush1.msra.mxu0 %v401
        %833 = vmatprep.subr.mxu0 %v408
        %834 = vmatpush1.msra.mxu0 %v407
        %835 = vmatprep.subr.mxu0 %v414
        %836 = vmatpush1.msra.mxu0 %v413
        %837 = vmatprep.subr.mxu0 %v420
        %838 = vmatpush1.msra.mxu0 %v419
        %839 = vmatprep.subr.mxu0 %v426
        %840 = vmatpush1.msra.mxu0 %v425
        %841 = vmatprep.subr.mxu0 %v432
        %842 = vmatpush1.msra.mxu0 %v431
        %843 = vmatprep.subr.mxu0 %v438
        %844 = vmatpush1.msra.mxu0 %v437
        %845 = vmatprep.subr.mxu0 %v444
        %846 = vmatpush1.msra.mxu0 %v443
        %847 = vmatprep.subr.mxu0 %v450
        %848 = vmatpush1.msra.mxu0 %v449
        %849 = vmatprep.subr.mxu0 %v456
        %850 = vmatpush1.msra.mxu0 %v455
        %851 = vmatprep.subr.mxu0 %v462
        %852 = vmatpush1.msra.mxu0 %v461
        %853 = vmatprep.subr.mxu0 %v468
        %854 = vmatpush1.msra.mxu0 %v467
        %855 = vmatprep.mubr.f32.mxu0 %v246
        %856 = vmatmul.mubr.f32.gmra.mrb[0].mxu0 %v245
        %v857 = vpop.f32.mrb[0].mxu0
        %v858 = vadd.f32 0.0, %v857
        %v859 = vpop.f32.mrb[0].mxu0
        %v860 = vadd.f32 0.0, %v859
        %861 = vmatprep.mubr.f32.mxu0 %v248
        %862 = vmatmul.mubr.f32.gmra.mrb[0].mxu0 %v247
        %v863 = vpop.f32.mrb[0].mxu0
        %v864 = vadd.f32 0.0, %v863
        %v865 = vpop.f32.mrb[0].mxu0
        %v866 = vadd.f32 0.0, %v865
        %867 = vmatprep.mubr.f32.mxu0 %v250
        %868 = vmatmul.mubr.f32.gmra.mrb[0].mxu0 %v249
        %v869 = vpop.f32.mrb[0].mxu0
        %v870 = vadd.f32 0.0, %v869
        %v871 = vpop.f32.mrb[0].mxu0
        %v872 = vadd.f32 0.0, %v871
        %873 = vmatprep.mubr.f32.mxu0 %v252
        %874 = vmatmul.mubr.f32.gmra.mrb[0].mxu0 %v251
        %v875 = vpop.f32.mrb[0].mxu0
        %v876 = vadd.f32 0.0, %v875
        %v877 = vpop.f32.mrb[0].mxu0
        %v878 = vadd.f32 0.0, %v877
        %879 = vmatprep.mubr.f32.mxu0 %v254
        %880 = vmatmul.mubr.f32.gmra.mrb[0].mxu0 %v253
        %v881 = vpop.f32.mrb[0].mxu0
        %v882 = vadd.f32 0.0, %v881
        %v883 = vpop.f32.mrb[0].mxu0
        %v884 = vadd.f32 0.0, %v883
        %885 = vmatprep.mubr.f32.mxu0 %v256
        %886 = vmatmul.mubr.f32.gmra.mrb[0].mxu0 %v255
        %v887 = vpop.f32.mrb[0].mxu0
        %v888 = vadd.f32 0.0, %v887
        %v889 = vpop.f32.mrb[0].mxu0
        %v890 = vadd.f32 0.0, %v889
        %891 = vmatprep.mubr.f32.mxu0 %v258
        %892 = vmatmul.mubr.f32.gmra.mrb[0].mxu0 %v257
        %v893 = vpop.f32.mrb[0].mxu0
        %v894 = vadd.f32 0.0, %v893
        %v895 = vpop.f32.mrb[0].mxu0
        %v896 = vadd.f32 0.0, %v895
        %897 = vmatprep.mubr.f32.mxu0 %v260
        %898 = vmatmul.mubr.f32.gmra.mrb[0].mxu0 %v259
        %v899 = vpop.f32.mrb[0].mxu0
        %v900 = vadd.f32 0.0, %v899
        %v901 = vpop.f32.mrb[0].mxu0
        %v902 = vadd.f32 0.0, %v901
        %903 = vmatprep.mubr.f32.mxu0 %v262
        %904 = vmatmul.mubr.f32.gmra.mrb[0].mxu0 %v261
        %v905 = vpop.f32.mrb[0].mxu0
        %v906 = vadd.f32 0.0, %v905
        %v907 = vpop.f32.mrb[0].mxu0
        %v908 = vadd.f32 0.0, %v907
        %909 = vmatprep.mubr.f32.mxu0 %v264
        %910 = vmatmul.mubr.f32.gmra.mrb[0].mxu0 %v263
        %v911 = vpop.f32.mrb[0].mxu0
        %v912 = vadd.f32 0.0, %v911
        %v913 = vpop.f32.mrb[0].mxu0
        %v914 = vadd.f32 0.0, %v913
        %915 = vmatprep.mubr.f32.mxu0 %v266
        %916 = vmatmul.mubr.f32.gmra.mrb[0].mxu0 %v265
        %v917 = vpop.f32.mrb[0].mxu0
        %v918 = vadd.f32 0.0, %v917
        %v919 = vpop.f32.mrb[0].mxu0
        %v920 = vadd.f32 0.0, %v919
        %921 = vmatprep.mubr.f32.mxu0 %v268
        %922 = vmatmul.mubr.f32.gmra.mrb[0].mxu0 %v267
        %v923 = vpop.f32.mrb[0].mxu0
        %v924 = vadd.f32 0.0, %v923
        %v925 = vpop.f32.mrb[0].mxu0
        %v926 = vadd.f32 0.0, %v925
        %927 = vmatprep.mubr.f32.mxu0 %v270
        %928 = vmatmul.mubr.f32.gmra.mrb[0].mxu0 %v269
        %v929 = vpop.f32.mrb[0].mxu0
        %v930 = vadd.f32 0.0, %v929
        %v931 = vpop.f32.mrb[0].mxu0
        %v932 = vadd.f32 0.0, %v931
        %933 = vmatprep.mubr.f32.mxu0 %v272
        %934 = vmatmul.mubr.f32.gmra.mrb[0].mxu0 %v271
        %v935 = vpop.f32.mrb[0].mxu0
        %v936 = vadd.f32 0.0, %v935
        %v937 = vpop.f32.mrb[0].mxu0
        %v938 = vadd.f32 0.0, %v937
        %939 = vmatprep.mubr.f32.mxu0 %v274
        %940 = vmatmul.mubr.f32.gmra.mrb[0].mxu0 %v273
        %v941 = vpop.f32.mrb[0].mxu0
        %v942 = vadd.f32 0.0, %v941
        %v943 = vpop.f32.mrb[0].mxu0
        %v944 = vadd.f32 0.0, %v943
        %945 = vmatprep.mubr.f32.mxu0 %v276
        %946 = vmatmul.mubr.f32.gmra.mrb[0].mxu0 %v275
        %v947 = vpop.f32.mrb[0].mxu0
        %v948 = vadd.f32 0.0, %v947
        %v949 = vpop.f32.mrb[0].mxu0
        %v950 = vadd.f32 0.0, %v949
        %951 = vdwg.mxu0
        %v952 = vmul.f32 %v536, 0.17677669
        %v953 = vmul.f32 %v542, 0.17677669
        %v954 = vmul.f32 %v548, 0.17677669
        %v955 = vmul.f32 %v554, 0.17677669
        %v956 = vmul.f32 %v560, 0.17677669
        %v957 = vmul.f32 %v566, 0.17677669
        %v958 = vmul.f32 %v572, 0.17677669
        %v959 = vmul.f32 %v578, 0.17677669
        %v960 = vmul.f32 %v584, 0.17677669
        %v961 = vmul.f32 %v590, 0.17677669
        %v962 = vmul.f32 %v596, 0.17677669
        %v963 = vmul.f32 %v602, 0.17677669
        %v964 = vmul.f32 %v608, 0.17677669
        %v965 = vmul.f32 %v614, 0.17677669
        %v966 = vmul.f32 %v620, 0.17677669
        %v967 = vmul.f32 %v626, 0.17677669
        %vm968 = vcmask 261120
        %v970 = vsel %vm968, %v952, 0
        %v973 = vsel %vm968, %v953, 0
        %v976 = vsel %vm968, %v954, 0
        %v979 = vsel %vm968, %v955, 0
        %v982 = vsel %vm968, %v956, 0
        %v985 = vsel %vm968, %v957, 0
        %v988 = vsel %vm968, %v958, 0
        %v991 = vsel %vm968, %v959, 0
        %v994 = vsel %vm968, %v960, 0
        %v997 = vsel %vm968, %v961, 0
        %v1000 = vsel %vm968, %v962, 0
        %v1003 = vsel %vm968, %v963, 0
        %v1006 = vsel %vm968, %v964, 0
        %v1009 = vsel %vm968, %v965, 0
        %v1012 = vsel %vm968, %v966, 0
        %v1015 = vsel %vm968, %v967, 0
        %v1018 = vsel %vm968, %v697, 0
        %v1021 = vsel %vm968, %v703, 0
        %v1024 = vsel %vm968, %v709, 0
        %v1027 = vsel %vm968, %v715, 0
        %v1030 = vsel %vm968, %v721, 0
        %v1033 = vsel %vm968, %v727, 0
        %v1036 = vsel %vm968, %v733, 0
        %v1039 = vsel %vm968, %v739, 0
        %v1042 = vsel %vm968, %v745, 0
        %v1045 = vsel %vm968, %v751, 0
        %v1048 = vsel %vm968, %v757, 0
        %v1051 = vsel %vm968, %v763, 0
        %v1054 = vsel %vm968, %v769, 0
        %v1057 = vsel %vm968, %v775, 0
        %v1060 = vsel %vm968, %v781, 0
        %v1063 = vsel %vm968, %v787, 0
        %1065 = vmatprep.subr.mxu0 0.0
        %1066 = vmatpush1.xpose.msra.mxu0 %v1018
        %1067 = vmatprep.subr.mxu0 0.0
        %1068 = vmatpush1.xpose.msra.mxu0 %v1021
        %1069 = vmatprep.subr.mxu0 0.0
        %1070 = vmatpush1.xpose.msra.mxu0 %v1024
        %1071 = vmatprep.subr.mxu0 0.0
        %1072 = vmatpush1.xpose.msra.mxu0 %v1027
        %1073 = vmatprep.subr.mxu0 0.0
        %1074 = vmatpush1.xpose.msra.mxu0 %v1030
        %1075 = vmatprep.subr.mxu0 0.0
        %1076 = vmatpush1.xpose.msra.mxu0 %v1033
        %1077 = vmatprep.subr.mxu0 0.0
        %1078 = vmatpush1.xpose.msra.mxu0 %v1036
        %1079 = vmatprep.subr.mxu0 0.0
        %1080 = vmatpush1.xpose.msra.mxu0 %v1039
        %1081 = vmatprep.subr.mxu0 0.0
        %1082 = vmatpush1.xpose.msra.mxu0 %v1042
        %1083 = vmatprep.subr.mxu0 0.0
        %1084 = vmatpush1.xpose.msra.mxu0 %v1045
        %1085 = vmatprep.subr.mxu0 0.0
        %1086 = vmatpush1.xpose.msra.mxu0 %v1048
        %1087 = vmatprep.subr.mxu0 0.0
        %1088 = vmatpush1.xpose.msra.mxu0 %v1051
        %1089 = vmatprep.subr.mxu0 0.0
        %1090 = vmatpush1.xpose.msra.mxu0 %v1054
        %1091 = vmatprep.subr.mxu0 0.0
        %1092 = vmatpush1.xpose.msra.mxu0 %v1057
        %1093 = vmatprep.subr.mxu0 0.0
        %1094 = vmatpush1.xpose.msra.mxu0 %v1060
        %1095 = vmatprep.subr.mxu0 0.0
        %1096 = vmatpush1.xpose.msra.mxu0 %v1063
        %1097 = vmatprep.subr.mxu0 0.0
        %1098 = vmatpush1.xpose.msra.mxu0 0.0
        %1099 = vmatprep.subr.mxu0 0.0
        %1100 = vmatpush1.xpose.msra.mxu0 0.0
        %1101 = vmatprep.subr.mxu0 0.0
        %1102 = vmatpush1.xpose.msra.mxu0 0.0
        %1103 = vmatprep.subr.mxu0 0.0
        %1104 = vmatpush1.xpose.msra.mxu0 0.0
        %1105 = vmatprep.subr.mxu0 0.0
        %1106 = vmatpush1.xpose.msra.mxu0 0.0
        %1107 = vmatprep.subr.mxu0 0.0
        %1108 = vmatpush1.xpose.msra.mxu0 0.0
        %1109 = vmatprep.subr.mxu0 0.0
        %1110 = vmatpush1.xpose.msra.mxu0 0.0
        %1111 = vmatprep.subr.mxu0 0.0
        %1112 = vmatpush1.xpose.msra.mxu0 0.0
        %1113 = vmatprep.subr.mxu0 0.0
        %1114 = vmatpush1.xpose.msra.mxu0 0.0
        %1115 = vmatprep.subr.mxu0 0.0
        %1116 = vmatpush1.xpose.msra.mxu0 0.0
        %1117 = vmatprep.subr.mxu0 0.0
        %1118 = vmatpush1.xpose.msra.mxu0 0.0
        %1119 = vmatprep.subr.mxu0 0.0
        %1120 = vmatpush1.xpose.msra.mxu0 0.0
        %1121 = vmatprep.subr.mxu0 0.0
        %1122 = vmatpush1.xpose.msra.mxu0 0.0
        %1123 = vmatprep.subr.mxu0 0.0
        %1124 = vmatpush1.xpose.msra.mxu0 0.0
        %1125 = vmatprep.subr.mxu0 0.0
        %1126 = vmatpush1.xpose.msra.mxu0 0.0
        %1127 = vmatprep.subr.mxu0 0.0
        %1128 = vmatpush1.xpose.msra.mxu0 0.0
        %1129 = vmatprep.mubr.f32.mxu0 0.0
        %1130 = vmatmul.mubr.f32.gmra.mrb[0].mxu0 %v970
        %v1131 = vpop.f32.mrb[0].mxu0
        %v1132 = vadd.f32 0.0, %v1131
        %v1133 = vpop.f32.mrb[0].mxu0
        %1134 = vmatprep.mubr.f32.mxu0 0.0
        %1135 = vmatmul.mubr.f32.gmra.mrb[0].mxu0 %v973
        %v1136 = vpop.f32.mrb[0].mxu0
        %v1137 = vadd.f32 0.0, %v1136
        %v1138 = vpop.f32.mrb[0].mxu0
        %1139 = vmatprep.mubr.f32.mxu0 0.0
        %1140 = vmatmul.mubr.f32.gmra.mrb[0].mxu0 %v976
        %v1141 = vpop.f32.mrb[0].mxu0
        %v1142 = vadd.f32 0.0, %v1141
        %v1143 = vpop.f32.mrb[0].mxu0
        %1144 = vmatprep.mubr.f32.mxu0 0.0
        %1145 = vmatmul.mubr.f32.gmra.mrb[0].mxu0 %v979
        %v1146 = vpop.f32.mrb[0].mxu0
        %v1147 = vadd.f32 0.0, %v1146
        %v1148 = vpop.f32.mrb[0].mxu0
        %1149 = vmatprep.mubr.f32.mxu0 0.0
        %1150 = vmatmul.mubr.f32.gmra.mrb[0].mxu0 %v982
        %v1151 = vpop.f32.mrb[0].mxu0
        %v1152 = vadd.f32 0.0, %v1151
        %v1153 = vpop.f32.mrb[0].mxu0
        %1154 = vmatprep.mubr.f32.mxu0 0.0
        %1155 = vmatmul.mubr.f32.gmra.mrb[0].mxu0 %v985
        %v1156 = vpop.f32.mrb[0].mxu0
        %v1157 = vadd.f32 0.0, %v1156
        %v1158 = vpop.f32.mrb[0].mxu0
        %1159 = vmatprep.mubr.f32.mxu0 0.0
        %1160 = vmatmul.mubr.f32.gmra.mrb[0].mxu0 %v988
        %v1161 = vpop.f32.mrb[0].mxu0
        %v1162 = vadd.f32 0.0, %v1161
        %v1163 = vpop.f32.mrb[0].mxu0
        %1164 = vmatprep.mubr.f32.mxu0 0.0
        %1165 = vmatmul.mubr.f32.gmra.mrb[0].mxu0 %v991
        %v1166 = vpop.f32.mrb[0].mxu0
        %v1167 = vadd.f32 0.0, %v1166
        %v1168 = vpop.f32.mrb[0].mxu0
        %1169 = vmatprep.mubr.f32.mxu0 0.0
        %1170 = vmatmul.mubr.f32.gmra.mrb[0].mxu0 %v994
        %v1171 = vpop.f32.mrb[0].mxu0
        %v1172 = vadd.f32 0.0, %v1171
        %v1173 = vpop.f32.mrb[0].mxu0
        %1174 = vmatprep.mubr.f32.mxu0 0.0
        %1175 = vmatmul.mubr.f32.gmra.mrb[0].mxu0 %v997
        %v1176 = vpop.f32.mrb[0].mxu0
        %v1177 = vadd.f32 0.0, %v1176
        %v1178 = vpop.f32.mrb[0].mxu0
        %1179 = vmatprep.mubr.f32.mxu0 0.0
        %1180 = vmatmul.mubr.f32.gmra.mrb[0].mxu0 %v1000
        %v1181 = vpop.f32.mrb[0].mxu0
        %v1182 = vadd.f32 0.0, %v1181
        %v1183 = vpop.f32.mrb[0].mxu0
        %1184 = vmatprep.mubr.f32.mxu0 0.0
        %1185 = vmatmul.mubr.f32.gmra.mrb[0].mxu0 %v1003
        %v1186 = vpop.f32.mrb[0].mxu0
        %v1187 = vadd.f32 0.0, %v1186
        %v1188 = vpop.f32.mrb[0].mxu0
        %1189 = vmatprep.mubr.f32.mxu0 0.0
        %1190 = vmatmul.mubr.f32.gmra.mrb[0].mxu0 %v1006
        %v1191 = vpop.f32.mrb[0].mxu0
        %v1192 = vadd.f32 0.0, %v1191
        %v1193 = vpop.f32.mrb[0].mxu0
        %1194 = vmatprep.mubr.f32.mxu0 0.0
        %1195 = vmatmul.mubr.f32.gmra.mrb[0].mxu0 %v1009
        %v1196 = vpop.f32.mrb[0].mxu0
        %v1197 = vadd.f32 0.0, %v1196
        %v1198 = vpop.f32.mrb[0].mxu0
        %1199 = vmatprep.mubr.f32.mxu0 0.0
        %1200 = vmatmul.mubr.f32.gmra.mrb[0].mxu0 %v1012
        %v1201 = vpop.f32.mrb[0].mxu0
        %v1202 = vadd.f32 0.0, %v1201
        %v1203 = vpop.f32.mrb[0].mxu0
        %1204 = vmatprep.mubr.f32.mxu0 0.0
        %1205 = vmatmul.mubr.f32.gmra.mrb[0].mxu0 %v1015
        %v1206 = vpop.f32.mrb[0].mxu0
        %v1207 = vadd.f32 0.0, %v1206
        %v1208 = vpop.f32.mrb[0].mxu0
        %1209 = vdwg.mxu0
        %1210 = vmax.xlane.f32.xlu0 %v1132
        %v1211 = vpop.xlane.xlu0 %1210
        %1212 = vmax.xlane.f32.xlu0 %v1137
        %v1213 = vpop.xlane.xlu0 %1212
        %1214 = vmax.xlane.f32.xlu0 %v1142
        %v1215 = vpop.xlane.xlu0 %1214
        %1216 = vmax.xlane.f32.xlu0 %v1147
        %v1217 = vpop.xlane.xlu0 %1216
        %1218 = vmax.xlane.f32.xlu0 %v1152
        %v1219 = vpop.xlane.xlu0 %1218
        %1220 = vmax.xlane.f32.xlu0 %v1157
        %v1221 = vpop.xlane.xlu0 %1220
        %1222 = vmax.xlane.f32.xlu0 %v1162
        %v1223 = vpop.xlane.xlu0 %1222
        %1224 = vmax.xlane.f32.xlu0 %v1167
        %v1225 = vpop.xlane.xlu0 %1224
        %1226 = vmax.xlane.f32.xlu0 %v1172
        %v1227 = vpop.xlane.xlu0 %1226
        %1228 = vmax.xlane.f32.xlu0 %v1177
        %v1229 = vpop.xlane.xlu0 %1228
        %1230 = vmax.xlane.f32.xlu0 %v1182
        %v1231 = vpop.xlane.xlu0 %1230
        %1232 = vmax.xlane.f32.xlu0 %v1187
        %v1233 = vpop.xlane.xlu0 %1232
        %1234 = vmax.xlane.f32.xlu0 %v1192
        %v1235 = vpop.xlane.xlu0 %1234
        %1236 = vmax.xlane.f32.xlu0 %v1197
        %v1237 = vpop.xlane.xlu0 %1236
        %1238 = vmax.xlane.f32.xlu0 %v1202
        %v1239 = vpop.xlane.xlu0 %1238
        %1240 = vmax.xlane.f32.xlu0 %v1207
        %v1241 = vpop.xlane.xlu0 %1240
        %v1242 = vsub.f32 %v1132, %v1211
        %v1243 = vsub.f32 %v1137, %v1213
        %v1244 = vsub.f32 %v1142, %v1215
        %v1245 = vsub.f32 %v1147, %v1217
        %v1246 = vsub.f32 %v1152, %v1219
        %v1247 = vsub.f32 %v1157, %v1221
        %v1248 = vsub.f32 %v1162, %v1223
        %v1249 = vsub.f32 %v1167, %v1225
        %v1250 = vsub.f32 %v1172, %v1227
        %v1251 = vsub.f32 %v1177, %v1229
        %v1252 = vsub.f32 %v1182, %v1231
        %v1253 = vsub.f32 %v1187, %v1233
        %v1254 = vsub.f32 %v1192, %v1235
        %v1255 = vsub.f32 %v1197, %v1237
        %v1256 = vsub.f32 %v1202, %v1239
        %v1257 = vsub.f32 %v1207, %v1241
        %v1258 = vmul.f32 %v1242, 1.442695
        %v1259 = vpow.pop %v1258
        %v1260 = vmul.f32 %v1243, 1.442695
        %v1261 = vpow.pop %v1260
        %v1262 = vmul.f32 %v1244, 1.442695
        %v1263 = vpow.pop %v1262
        %v1264 = vmul.f32 %v1245, 1.442695
        %v1265 = vpow.pop %v1264
        %v1266 = vmul.f32 %v1246, 1.442695
        %v1267 = vpow.pop %v1266
        %v1268 = vmul.f32 %v1247, 1.442695
        %v1269 = vpow.pop %v1268
        %v1270 = vmul.f32 %v1248, 1.442695
        %v1271 = vpow.pop %v1270
        %v1272 = vmul.f32 %v1249, 1.442695
        %v1273 = vpow.pop %v1272
        %v1274 = vmul.f32 %v1250, 1.442695
        %v1275 = vpow.pop %v1274
        %v1276 = vmul.f32 %v1251, 1.442695
        %v1277 = vpow.pop %v1276
        %v1278 = vmul.f32 %v1252, 1.442695
        %v1279 = vpow.pop %v1278
        %v1280 = vmul.f32 %v1253, 1.442695
        %v1281 = vpow.pop %v1280
        %v1282 = vmul.f32 %v1254, 1.442695
        %v1283 = vpow.pop %v1282
        %v1284 = vmul.f32 %v1255, 1.442695
        %v1285 = vpow.pop %v1284
        %v1286 = vmul.f32 %v1256, 1.442695
        %v1287 = vpow.pop %v1286
        %v1288 = vmul.f32 %v1257, 1.442695
        %v1289 = vpow.pop %v1288
        %1290 = vadd.xlane.f32.xlu0 %v1259
        %v1291 = vpop.xlane.xlu0 %1290
        %1292 = vadd.xlane.f32.xlu0 %v1261
        %v1293 = vpop.xlane.xlu0 %1292
        %1294 = vadd.xlane.f32.xlu0 %v1263
        %v1295 = vpop.xlane.xlu0 %1294
        %1296 = vadd.xlane.f32.xlu0 %v1265
        %v1297 = vpop.xlane.xlu0 %1296
        %1298 = vadd.xlane.f32.xlu0 %v1267
        %v1299 = vpop.xlane.xlu0 %1298
        %1300 = vadd.xlane.f32.xlu0 %v1269
        %v1301 = vpop.xlane.xlu0 %1300
        %1302 = vadd.xlane.f32.xlu0 %v1271
        %v1303 = vpop.xlane.xlu0 %1302
        %1304 = vadd.xlane.f32.xlu0 %v1273
        %v1305 = vpop.xlane.xlu0 %1304
        %1306 = vadd.xlane.f32.xlu0 %v1275
        %v1307 = vpop.xlane.xlu0 %1306
        %1308 = vadd.xlane.f32.xlu0 %v1277
        %v1309 = vpop.xlane.xlu0 %1308
        %1310 = vadd.xlane.f32.xlu0 %v1279
        %v1311 = vpop.xlane.xlu0 %1310
        %1312 = vadd.xlane.f32.xlu0 %v1281
        %v1313 = vpop.xlane.xlu0 %1312
        %1314 = vadd.xlane.f32.xlu0 %v1283
        %v1315 = vpop.xlane.xlu0 %1314
        %1316 = vadd.xlane.f32.xlu0 %v1285
        %v1317 = vpop.xlane.xlu0 %1316
        %1318 = vadd.xlane.f32.xlu0 %v1287
        %v1319 = vpop.xlane.xlu0 %1318
        %1320 = vadd.xlane.f32.xlu0 %v1289
        %v1321 = vpop.xlane.xlu0 %1320
        %1322 = vmatprep.subr.mxu0 0.0
        %1323 = vmatpush1.msra.mxu0 %v858
        %1324 = vmatprep.subr.mxu0 0.0
        %1325 = vmatpush1.msra.mxu0 %v864
        %1326 = vmatprep.subr.mxu0 0.0
        %1327 = vmatpush1.msra.mxu0 %v870
        %1328 = vmatprep.subr.mxu0 0.0
        %1329 = vmatpush1.msra.mxu0 %v876
        %1330 = vmatprep.subr.mxu0 0.0
        %1331 = vmatpush1.msra.mxu0 %v882
        %1332 = vmatprep.subr.mxu0 0.0
        %1333 = vmatpush1.msra.mxu0 %v888
        %1334 = vmatprep.subr.mxu0 0.0
        %1335 = vmatpush1.msra.mxu0 %v894
        %1336 = vmatprep.subr.mxu0 0.0
        %1337 = vmatpush1.msra.mxu0 %v900
        %1338 = vmatprep.subr.mxu0 0.0
        %1339 = vmatpush1.msra.mxu0 %v906
        %1340 = vmatprep.subr.mxu0 0.0
        %1341 = vmatpush1.msra.mxu0 %v912
        %1342 = vmatprep.subr.mxu0 0.0
        %1343 = vmatpush1.msra.mxu0 %v918
        %1344 = vmatprep.subr.mxu0 0.0
        %1345 = vmatpush1.msra.mxu0 %v924
        %1346 = vmatprep.subr.mxu0 0.0
        %1347 = vmatpush1.msra.mxu0 %v930
        %1348 = vmatprep.subr.mxu0 0.0
        %1349 = vmatpush1.msra.mxu0 %v936
        %1350 = vmatprep.subr.mxu0 0.0
        %1351 = vmatpush1.msra.mxu0 %v942
        %1352 = vmatprep.subr.mxu0 0.0
        %1353 = vmatpush1.msra.mxu0 %v948
        %1354 = vmatprep.subr.mxu0 0.0
        %1355 = vmatpush1.msra.mxu0 0.0
        %1356 = vmatprep.subr.mxu0 0.0
        %1357 = vmatpush1.msra.mxu0 0.0
        %1358 = vmatprep.subr.mxu0 0.0
        %1359 = vmatpush1.msra.mxu0 0.0
        %1360 = vmatprep.subr.mxu0 0.0
        %1361 = vmatpush1.msra.mxu0 0.0
        %1362 = vmatprep.subr.mxu0 0.0
        %1363 = vmatpush1.msra.mxu0 0.0
        %1364 = vmatprep.subr.mxu0 0.0
        %1365 = vmatpush1.msra.mxu0 0.0
        %1366 = vmatprep.subr.mxu0 0.0
        %1367 = vmatpush1.msra.mxu0 0.0
        %1368 = vmatprep.subr.mxu0 0.0
        %1369 = vmatpush1.msra.mxu0 0.0
        %1370 = vmatprep.subr.mxu0 0.0
        %1371 = vmatpush1.msra.mxu0 0.0
        %1372 = vmatprep.subr.mxu0 0.0
        %1373 = vmatpush1.msra.mxu0 0.0
        %1374 = vmatprep.subr.mxu0 0.0
        %1375 = vmatpush1.msra.mxu0 0.0
        %1376 = vmatprep.subr.mxu0 0.0
        %1377 = vmatpush1.msra.mxu0 0.0
        %1378 = vmatprep.subr.mxu0 0.0
        %1379 = vmatpush1.msra.mxu0 0.0
        %1380 = vmatprep.subr.mxu0 0.0
        %1381 = vmatpush1.msra.mxu0 0.0
        %1382 = vmatprep.subr.mxu0 0.0
        %1383 = vmatpush1.msra.mxu0 0.0
        %1384 = vmatprep.subr.mxu0 0.0
        %1385 = vmatpush1.msra.mxu0 0.0
        %1386 = vmatprep.mubr.f32.mxu0 0.0
        %1387 = vmatmul.mubr.f32.gmra.mrb[0].mxu0 %v1259
        %v1388 = vpop.f32.mrb[0].mxu0
        %v1389 = vadd.f32 0.0, %v1388
        %v1390 = vpop.f32.mrb[0].mxu0
        %1391 = vmatprep.mubr.f32.mxu0 0.0
        %1392 = vmatmul.mubr.f32.gmra.mrb[0].mxu0 %v1261
        %v1393 = vpop.f32.mrb[0].mxu0
        %v1394 = vadd.f32 0.0, %v1393
        %v1395 = vpop.f32.mrb[0].mxu0
        %1396 = vmatprep.mubr.f32.mxu0 0.0
        %1397 = vmatmul.mubr.f32.gmra.mrb[0].mxu0 %v1263
        %v1398 = vpop.f32.mrb[0].mxu0
        %v1399 = vadd.f32 0.0, %v1398
        %v1400 = vpop.f32.mrb[0].mxu0
        %1401 = vmatprep.mubr.f32.mxu0 0.0
        %1402 = vmatmul.mubr.f32.gmra.mrb[0].mxu0 %v1265
        %v1403 = vpop.f32.mrb[0].mxu0
        %v1404 = vadd.f32 0.0, %v1403
        %v1405 = vpop.f32.mrb[0].mxu0
        %1406 = vmatprep.mubr.f32.mxu0 0.0
        %1407 = vmatmul.mubr.f32.gmra.mrb[0].mxu0 %v1267
        %v1408 = vpop.f32.mrb[0].mxu0
        %v1409 = vadd.f32 0.0, %v1408
        %v1410 = vpop.f32.mrb[0].mxu0
        %1411 = vmatprep.mubr.f32.mxu0 0.0
        %1412 = vmatmul.mubr.f32.gmra.mrb[0].mxu0 %v1269
        %v1413 = vpop.f32.mrb[0].mxu0
        %v1414 = vadd.f32 0.0, %v1413
        %v1415 = vpop.f32.mrb[0].mxu0
        %1416 = vmatprep.mubr.f32.mxu0 0.0
        %1417 = vmatmul.mubr.f32.gmra.mrb[0].mxu0 %v1271
        %v1418 = vpop.f32.mrb[0].mxu0
        %v1419 = vadd.f32 0.0, %v1418
        %v1420 = vpop.f32.mrb[0].mxu0
        %1421 = vmatprep.mubr.f32.mxu0 0.0
        %1422 = vmatmul.mubr.f32.gmra.mrb[0].mxu0 %v1273
        %v1423 = vpop.f32.mrb[0].mxu0
        %v1424 = vadd.f32 0.0, %v1423
        %v1425 = vpop.f32.mrb[0].mxu0
        %1426 = vmatprep.mubr.f32.mxu0 0.0
        %1427 = vmatmul.mubr.f32.gmra.mrb[0].mxu0 %v1275
        %v1428 = vpop.f32.mrb[0].mxu0
        %v1429 = vadd.f32 0.0, %v1428
        %v1430 = vpop.f32.mrb[0].mxu0
        %1431 = vmatprep.mubr.f32.mxu0 0.0
        %1432 = vmatmul.mubr.f32.gmra.mrb[0].mxu0 %v1277
        %v1433 = vpop.f32.mrb[0].mxu0
        %v1434 = vadd.f32 0.0, %v1433
        %v1435 = vpop.f32.mrb[0].mxu0
        %1436 = vmatprep.mubr.f32.mxu0 0.0
        %1437 = vmatmul.mubr.f32.gmra.mrb[0].mxu0 %v1279
        %v1438 = vpop.f32.mrb[0].mxu0
        %v1439 = vadd.f32 0.0, %v1438
        %v1440 = vpop.f32.mrb[0].mxu0
        %1441 = vmatprep.mubr.f32.mxu0 0.0
        %1442 = vmatmul.mubr.f32.gmra.mrb[0].mxu0 %v1281
        %v1443 = vpop.f32.mrb[0].mxu0
        %v1444 = vadd.f32 0.0, %v1443
        %v1445 = vpop.f32.mrb[0].mxu0
        %1446 = vmatprep.mubr.f32.mxu0 0.0
        %1447 = vmatmul.mubr.f32.gmra.mrb[0].mxu0 %v1283
        %v1448 = vpop.f32.mrb[0].mxu0
        %v1449 = vadd.f32 0.0, %v1448
        %v1450 = vpop.f32.mrb[0].mxu0
        %1451 = vmatprep.mubr.f32.mxu0 0.0
        %1452 = vmatmul.mubr.f32.gmra.mrb[0].mxu0 %v1285
        %v1453 = vpop.f32.mrb[0].mxu0
        %v1454 = vadd.f32 0.0, %v1453
        %v1455 = vpop.f32.mrb[0].mxu0
        %1456 = vmatprep.mubr.f32.mxu0 0.0
        %1457 = vmatmul.mubr.f32.gmra.mrb[0].mxu0 %v1287
        %v1458 = vpop.f32.mrb[0].mxu0
        %v1459 = vadd.f32 0.0, %v1458
        %v1460 = vpop.f32.mrb[0].mxu0
        %1461 = vmatprep.mubr.f32.mxu0 0.0
        %1462 = vmatmul.mubr.f32.gmra.mrb[0].mxu0 %v1289
        %v1463 = vpop.f32.mrb[0].mxu0
        %v1464 = vadd.f32 0.0, %v1463
        %v1465 = vpop.f32.mrb[0].mxu0
        %1466 = vdwg.mxu0
        %v1467 = vrcp.pop %v1291
        %v1468 = vrcp.pop %v1293
        %v1469 = vrcp.pop %v1295
        %v1470 = vrcp.pop %v1297
        %v1471 = vrcp.pop %v1299
        %v1472 = vrcp.pop %v1301
        %v1473 = vrcp.pop %v1303
        %v1474 = vrcp.pop %v1305
        %v1475 = vrcp.pop %v1307
        %v1476 = vrcp.pop %v1309
        %v1477 = vrcp.pop %v1311
        %v1478 = vrcp.pop %v1313
        %v1479 = vrcp.pop %v1315
        %v1480 = vrcp.pop %v1317
        %v1481 = vrcp.pop %v1319
        %v1482 = vrcp.pop %v1321
        %v1483 = vmul.f32 %v1389, %v1467
        %v1484 = vmul.f32 %v1394, %v1468
        %v1485 = vmul.f32 %v1399, %v1469
        %v1486 = vmul.f32 %v1404, %v1470
        %v1487 = vmul.f32 %v1409, %v1471
        %v1488 = vmul.f32 %v1414, %v1472
        %v1489 = vmul.f32 %v1419, %v1473
        %v1490 = vmul.f32 %v1424, %v1474
        %v1491 = vmul.f32 %v1429, %v1475
        %v1492 = vmul.f32 %v1434, %v1476
        %v1493 = vmul.f32 %v1439, %v1477
        %v1494 = vmul.f32 %v1444, %v1478
        %v1495 = vmul.f32 %v1449, %v1479
        %v1496 = vmul.f32 %v1454, %v1480
        %v1497 = vmul.f32 %v1459, %v1481
        %v1498 = vmul.f32 %v1464, %v1482
        %1499 = vrot.lane.b32.xlu0 %v952, 96
        %v1500 = vpop.permute.xlu0 %1499
        %1501 = vrot.lane.b32.xlu0 %v953, 96
        %v1502 = vpop.permute.xlu0 %1501
        %1503 = vrot.lane.b32.xlu0 %v954, 96
        %v1504 = vpop.permute.xlu0 %1503
        %1505 = vrot.lane.b32.xlu0 %v955, 96
        %v1506 = vpop.permute.xlu0 %1505
        %1507 = vrot.lane.b32.xlu0 %v956, 96
        %v1508 = vpop.permute.xlu0 %1507
        %1509 = vrot.lane.b32.xlu0 %v957, 96
        %v1510 = vpop.permute.xlu0 %1509
        %1511 = vrot.lane.b32.xlu0 %v958, 96
        %v1512 = vpop.permute.xlu0 %1511
        %1513 = vrot.lane.b32.xlu0 %v959, 96
        %v1514 = vpop.permute.xlu0 %1513
        %1515 = vrot.lane.b32.xlu0 %v960, 96
        %v1516 = vpop.permute.xlu0 %1515
        %1517 = vrot.lane.b32.xlu0 %v961, 96
        %v1518 = vpop.permute.xlu0 %1517
        %1519 = vrot.lane.b32.xlu0 %v962, 96
        %v1520 = vpop.permute.xlu0 %1519
        %1521 = vrot.lane.b32.xlu0 %v963, 96
        %v1522 = vpop.permute.xlu0 %1521
        %1523 = vrot.lane.b32.xlu0 %v964, 96
        %v1524 = vpop.permute.xlu0 %1523
        %1525 = vrot.lane.b32.xlu0 %v965, 96
        %v1526 = vpop.permute.xlu0 %1525
        %1527 = vrot.lane.b32.xlu0 %v966, 96
        %v1528 = vpop.permute.xlu0 %1527
        %1529 = vrot.lane.b32.xlu0 %v967, 96
        %v1530 = vpop.permute.xlu0 %1529
        %1531 = vrot.lane.b32.xlu0 %v697, 96
        %v1532 = vpop.permute.xlu0 %1531
        %1533 = vrot.lane.b32.xlu0 %v703, 96
        %v1534 = vpop.permute.xlu0 %1533
        %1535 = vrot.lane.b32.xlu0 %v709, 96
        %v1536 = vpop.permute.xlu0 %1535
        %1537 = vrot.lane.b32.xlu0 %v715, 96
        %v1538 = vpop.permute.xlu0 %1537
        %1539 = vrot.lane.b32.xlu0 %v721, 96
        %v1540 = vpop.permute.xlu0 %1539
        %1541 = vrot.lane.b32.xlu0 %v727, 96
        %v1542 = vpop.permute.xlu0 %1541
        %1543 = vrot.lane.b32.xlu0 %v733, 96
        %v1544 = vpop.permute.xlu0 %1543
        %1545 = vrot.lane.b32.xlu0 %v739, 96
        %v1546 = vpop.permute.xlu0 %1545
        %1547 = vrot.lane.b32.xlu0 %v745, 96
        %v1548 = vpop.permute.xlu0 %1547
        %1549 = vrot.lane.b32.xlu0 %v751, 96
        %v1550 = vpop.permute.xlu0 %1549
        %1551 = vrot.lane.b32.xlu0 %v757, 96
        %v1552 = vpop.permute.xlu0 %1551
        %1553 = vrot.lane.b32.xlu0 %v763, 96
        %v1554 = vpop.permute.xlu0 %1553
        %1555 = vrot.lane.b32.xlu0 %v769, 96
        %v1556 = vpop.permute.xlu0 %1555
        %1557 = vrot.lane.b32.xlu0 %v775, 96
        %v1558 = vpop.permute.xlu0 %1557
        %1559 = vrot.lane.b32.xlu0 %v781, 96
        %v1560 = vpop.permute.xlu0 %1559
        %1561 = vrot.lane.b32.xlu0 %v787, 96
        %v1562 = vpop.permute.xlu0 %1561
        %v1563 = vsel %vm968, %v1500, 0
        %v1565 = vsel %vm968, %v1502, 0
        %v1567 = vsel %vm968, %v1504, 0
        %v1569 = vsel %vm968, %v1506, 0
        %v1571 = vsel %vm968, %v1508, 0
        %v1573 = vsel %vm968, %v1510, 0
        %v1575 = vsel %vm968, %v1512, 0
        %v1577 = vsel %vm968, %v1514, 0
        %v1579 = vsel %vm968, %v1516, 0
        %v1581 = vsel %vm968, %v1518, 0
        %v1583 = vsel %vm968, %v1520, 0
        %v1585 = vsel %vm968, %v1522, 0
        %v1587 = vsel %vm968, %v1524, 0
        %v1589 = vsel %vm968, %v1526, 0
        %v1591 = vsel %vm968, %v1528, 0
        %v1593 = vsel %vm968, %v1530, 0
        %v1595 = vsel %vm968, %v1532, 0
        %v1597 = vsel %vm968, %v1534, 0
        %v1599 = vsel %vm968, %v1536, 0
        %v1601 = vsel %vm968, %v1538, 0
        %v1603 = vsel %vm968, %v1540, 0
        %v1605 = vsel %vm968, %v1542, 0
        %v1607 = vsel %vm968, %v1544, 0
        %v1609 = vsel %vm968, %v1546, 0
        %v1611 = vsel %vm968, %v1548, 0
        %v1613 = vsel %vm968, %v1550, 0
        %v1615 = vsel %vm968, %v1552, 0
        %v1617 = vsel %vm968, %v1554, 0
        %v1619 = vsel %vm968, %v1556, 0
        %v1621 = vsel %vm968, %v1558, 0
        %v1623 = vsel %vm968, %v1560, 0
        %v1625 = vsel %vm968, %v1562, 0
        %1627 = vmatprep.subr.mxu0 0.0
        %1628 = vmatpush1.xpose.msra.mxu0 %v1595
        %1629 = vmatprep.subr.mxu0 0.0
        %1630 = vmatpush1.xpose.msra.mxu0 %v1597
        %1631 = vmatprep.subr.mxu0 0.0
        %1632 = vmatpush1.xpose.msra.mxu0 %v1599
        %1633 = vmatprep.subr.mxu0 0.0
        %1634 = vmatpush1.xpose.msra.mxu0 %v1601
        %1635 = vmatprep.subr.mxu0 0.0
        %1636 = vmatpush1.xpose.msra.mxu0 %v1603
        %1637 = vmatprep.subr.mxu0 0.0
        %1638 = vmatpush1.xpose.msra.mxu0 %v1605
        %1639 = vmatprep.subr.mxu0 0.0
        %1640 = vmatpush1.xpose.msra.mxu0 %v1607
        %1641 = vmatprep.subr.mxu0 0.0
        %1642 = vmatpush1.xpose.msra.mxu0 %v1609
        %1643 = vmatprep.subr.mxu0 0.0
        %1644 = vmatpush1.xpose.msra.mxu0 %v1611
        %1645 = vmatprep.subr.mxu0 0.0
        %1646 = vmatpush1.xpose.msra.mxu0 %v1613
        %1647 = vmatprep.subr.mxu0 0.0
        %1648 = vmatpush1.xpose.msra.mxu0 %v1615
        %1649 = vmatprep.subr.mxu0 0.0
        %1650 = vmatpush1.xpose.msra.mxu0 %v1617
        %1651 = vmatprep.subr.mxu0 0.0
        %1652 = vmatpush1.xpose.msra.mxu0 %v1619
        %1653 = vmatprep.subr.mxu0 0.0
        %1654 = vmatpush1.xpose.msra.mxu0 %v1621
        %1655 = vmatprep.subr.mxu0 0.0
        %1656 = vmatpush1.xpose.msra.mxu0 %v1623
        %1657 = vmatprep.subr.mxu0 0.0
        %1658 = vmatpush1.xpose.msra.mxu0 %v1625
        %1659 = vmatprep.subr.mxu0 0.0
        %1660 = vmatpush1.xpose.msra.mxu0 0.0
        %1661 = vmatprep.subr.mxu0 0.0
        %1662 = vmatpush1.xpose.msra.mxu0 0.0
        %1663 = vmatprep.subr.mxu0 0.0
        %1664 = vmatpush1.xpose.msra.mxu0 0.0
        %1665 = vmatprep.subr.mxu0 0.0
        %1666 = vmatpush1.xpose.msra.mxu0 0.0
        %1667 = vmatprep.subr.mxu0 0.0
        %1668 = vmatpush1.xpose.msra.mxu0 0.0
        %1669 = vmatprep.subr.mxu0 0.0
        %1670 = vmatpush1.xpose.msra.mxu0 0.0
        %1671 = vmatprep.subr.mxu0 0.0
        %1672 = vmatpush1.xpose.msra.mxu0 0.0
        %1673 = vmatprep.subr.mxu0 0.0
        %1674 = vmatpush1.xpose.msra.mxu0 0.0
        %1675 = vmatprep.subr.mxu0 0.0
        %1676 = vmatpush1.xpose.msra.mxu0 0.0
        %1677 = vmatprep.subr.mxu0 0.0
        %1678 = vmatpush1.xpose.msra.mxu0 0.0
        %1679 = vmatprep.subr.mxu0 0.0
        %1680 = vmatpush1.xpose.msra.mxu0 0.0
        %1681 = vmatprep.subr.mxu0 0.0
        %1682 = vmatpush1.xpose.msra.mxu0 0.0
        %1683 = vmatprep.subr.mxu0 0.0
        %1684 = vmatpush1.xpose.msra.mxu0 0.0
        %1685 = vmatprep.subr.mxu0 0.0
        %1686 = vmatpush1.xpose.msra.mxu0 0.0
        %1687 = vmatprep.subr.mxu0 0.0
        %1688 = vmatpush1.xpose.msra.mxu0 0.0
        %1689 = vmatprep.subr.mxu0 0.0
        %1690 = vmatpush1.xpose.msra.mxu0 0.0
        %1691 = vmatprep.mubr.f32.mxu0 0.0
        %1692 = vmatmul.mubr.f32.gmra.mrb[0].mxu0 %v1563
        %v1693 = vpop.f32.mrb[0].mxu0
        %v1694 = vadd.f32 0.0, %v1693
        %v1695 = vpop.f32.mrb[0].mxu0
        %1696 = vmatprep.mubr.f32.mxu0 0.0
        %1697 = vmatmul.mubr.f32.gmra.mrb[0].mxu0 %v1565
        %v1698 = vpop.f32.mrb[0].mxu0
        %v1699 = vadd.f32 0.0, %v1698
        %v1700 = vpop.f32.mrb[0].mxu0
        %1701 = vmatprep.mubr.f32.mxu0 0.0
        %1702 = vmatmul.mubr.f32.gmra.mrb[0].mxu0 %v1567
        %v1703 = vpop.f32.mrb[0].mxu0
        %v1704 = vadd.f32 0.0, %v1703
        %v1705 = vpop.f32.mrb[0].mxu0
        %1706 = vmatprep.mubr.f32.mxu0 0.0
        %1707 = vmatmul.mubr.f32.gmra.mrb[0].mxu0 %v1569
        %v1708 = vpop.f32.mrb[0].mxu0
        %v1709 = vadd.f32 0.0, %v1708
        %v1710 = vpop.f32.mrb[0].mxu0
        %1711 = vmatprep.mubr.f32.mxu0 0.0
        %1712 = vmatmul.mubr.f32.gmra.mrb[0].mxu0 %v1571
        %v1713 = vpop.f32.mrb[0].mxu0
        %v1714 = vadd.f32 0.0, %v1713
        %v1715 = vpop.f32.mrb[0].mxu0
        %1716 = vmatprep.mubr.f32.mxu0 0.0
        %1717 = vmatmul.mubr.f32.gmra.mrb[0].mxu0 %v1573
        %v1718 = vpop.f32.mrb[0].mxu0
        %v1719 = vadd.f32 0.0, %v1718
        %v1720 = vpop.f32.mrb[0].mxu0
        %1721 = vmatprep.mubr.f32.mxu0 0.0
        %1722 = vmatmul.mubr.f32.gmra.mrb[0].mxu0 %v1575
        %v1723 = vpop.f32.mrb[0].mxu0
        %v1724 = vadd.f32 0.0, %v1723
        %v1725 = vpop.f32.mrb[0].mxu0
        %1726 = vmatprep.mubr.f32.mxu0 0.0
        %1727 = vmatmul.mubr.f32.gmra.mrb[0].mxu0 %v1577
        %v1728 = vpop.f32.mrb[0].mxu0
        %v1729 = vadd.f32 0.0, %v1728
        %v1730 = vpop.f32.mrb[0].mxu0
        %1731 = vmatprep.mubr.f32.mxu0 0.0
        %1732 = vmatmul.mubr.f32.gmra.mrb[0].mxu0 %v1579
        %v1733 = vpop.f32.mrb[0].mxu0
        %v1734 = vadd.f32 0.0, %v1733
        %v1735 = vpop.f32.mrb[0].mxu0
        %1736 = vmatprep.mubr.f32.mxu0 0.0
        %1737 = vmatmul.mubr.f32.gmra.mrb[0].mxu0 %v1581
        %v1738 = vpop.f32.mrb[0].mxu0
        %v1739 = vadd.f32 0.0, %v1738
        %v1740 = vpop.f32.mrb[0].mxu0
        %1741 = vmatprep.mubr.f32.mxu0 0.0
        %1742 = vmatmul.mubr.f32.gmra.mrb[0].mxu0 %v1583
        %v1743 = vpop.f32.mrb[0].mxu0
        %v1744 = vadd.f32 0.0, %v1743
        %v1745 = vpop.f32.mrb[0].mxu0
        %1746 = vmatprep.mubr.f32.mxu0 0.0
        %1747 = vmatmul.mubr.f32.gmra.mrb[0].mxu0 %v1585
        %v1748 = vpop.f32.mrb[0].mxu0
        %v1749 = vadd.f32 0.0, %v1748
        %v1750 = vpop.f32.mrb[0].mxu0
        %1751 = vmatprep.mubr.f32.mxu0 0.0
        %1752 = vmatmul.mubr.f32.gmra.mrb[0].mxu0 %v1587
        %v1753 = vpop.f32.mrb[0].mxu0
        %v1754 = vadd.f32 0.0, %v1753
        %v1755 = vpop.f32.mrb[0].mxu0
        %1756 = vmatprep.mubr.f32.mxu0 0.0
        %1757 = vmatmul.mubr.f32.gmra.mrb[0].mxu0 %v1589
        %v1758 = vpop.f32.mrb[0].mxu0
        %v1759 = vadd.f32 0.0, %v1758
        %v1760 = vpop.f32.mrb[0].mxu0
        %1761 = vmatprep.mubr.f32.mxu0 0.0
        %1762 = vmatmul.mubr.f32.gmra.mrb[0].mxu0 %v1591
        %v1763 = vpop.f32.mrb[0].mxu0
        %v1764 = vadd.f32 0.0, %v1763
        %v1765 = vpop.f32.mrb[0].mxu0
        %1766 = vmatprep.mubr.f32.mxu0 0.0
        %1767 = vmatmul.mubr.f32.gmra.mrb[0].mxu0 %v1593
        %v1768 = vpop.f32.mrb[0].mxu0
        %v1769 = vadd.f32 0.0, %v1768
        %v1770 = vpop.f32.mrb[0].mxu0
        %1771 = vdwg.mxu0
        %1772 = vmax.xlane.f32.xlu0 %v1694
        %v1773 = vpop.xlane.xlu0 %1772
        %1774 = vmax.xlane.f32.xlu0 %v1699
        %v1775 = vpop.xlane.xlu0 %1774
        %1776 = vmax.xlane.f32.xlu0 %v1704
        %v1777 = vpop.xlane.xlu0 %1776
        %1778 = vmax.xlane.f32.xlu0 %v1709
        %v1779 = vpop.xlane.xlu0 %1778
        %1780 = vmax.xlane.f32.xlu0 %v1714
        %v1781 = vpop.xlane.xlu0 %1780
        %1782 = vmax.xlane.f32.xlu0 %v1719
        %v1783 = vpop.xlane.xlu0 %1782
        %1784 = vmax.xlane.f32.xlu0 %v1724
        %v1785 = vpop.xlane.xlu0 %1784
        %1786 = vmax.xlane.f32.xlu0 %v1729
        %v1787 = vpop.xlane.xlu0 %1786
        %1788 = vmax.xlane.f32.xlu0 %v1734
        %v1789 = vpop.xlane.xlu0 %1788
        %1790 = vmax.xlane.f32.xlu0 %v1739
        %v1791 = vpop.xlane.xlu0 %1790
        %1792 = vmax.xlane.f32.xlu0 %v1744
        %v1793 = vpop.xlane.xlu0 %1792
        %1794 = vmax.xlane.f32.xlu0 %v1749
        %v1795 = vpop.xlane.xlu0 %1794
        %1796 = vmax.xlane.f32.xlu0 %v1754
        %v1797 = vpop.xlane.xlu0 %1796
        %1798 = vmax.xlane.f32.xlu0 %v1759
        %v1799 = vpop.xlane.xlu0 %1798
        %1800 = vmax.xlane.f32.xlu0 %v1764
        %v1801 = vpop.xlane.xlu0 %1800
        %1802 = vmax.xlane.f32.xlu0 %v1769
        %v1803 = vpop.xlane.xlu0 %1802
        %v1804 = vsub.f32 %v1694, %v1773
        %v1805 = vsub.f32 %v1699, %v1775
        %v1806 = vsub.f32 %v1704, %v1777
        %v1807 = vsub.f32 %v1709, %v1779
        %v1808 = vsub.f32 %v1714, %v1781
        %v1809 = vsub.f32 %v1719, %v1783
        %v1810 = vsub.f32 %v1724, %v1785
        %v1811 = vsub.f32 %v1729, %v1787
        %v1812 = vsub.f32 %v1734, %v1789
        %v1813 = vsub.f32 %v1739, %v1791
        %v1814 = vsub.f32 %v1744, %v1793
        %v1815 = vsub.f32 %v1749, %v1795
        %v1816 = vsub.f32 %v1754, %v1797
        %v1817 = vsub.f32 %v1759, %v1799
        %v1818 = vsub.f32 %v1764, %v1801
        %v1819 = vsub.f32 %v1769, %v1803
        %v1820 = vmul.f32 %v1804, 1.442695
        %v1821 = vpow.pop %v1820
        %v1822 = vmul.f32 %v1805, 1.442695
        %v1823 = vpow.pop %v1822
        %v1824 = vmul.f32 %v1806, 1.442695
        %v1825 = vpow.pop %v1824
        %v1826 = vmul.f32 %v1807, 1.442695
        %v1827 = vpow.pop %v1826
        %v1828 = vmul.f32 %v1808, 1.442695
        %v1829 = vpow.pop %v1828
        %v1830 = vmul.f32 %v1809, 1.442695
        %v1831 = vpow.pop %v1830
        %v1832 = vmul.f32 %v1810, 1.442695
        %v1833 = vpow.pop %v1832
        %v1834 = vmul.f32 %v1811, 1.442695
        %v1835 = vpow.pop %v1834
        %v1836 = vmul.f32 %v1812, 1.442695
        %v1837 = vpow.pop %v1836
        %v1838 = vmul.f32 %v1813, 1.442695
        %v1839 = vpow.pop %v1838
        %v1840 = vmul.f32 %v1814, 1.442695
        %v1841 = vpow.pop %v1840
        %v1842 = vmul.f32 %v1815, 1.442695
        %v1843 = vpow.pop %v1842
        %v1844 = vmul.f32 %v1816, 1.442695
        %v1845 = vpow.pop %v1844
        %v1846 = vmul.f32 %v1817, 1.442695
        %v1847 = vpow.pop %v1846
        %v1848 = vmul.f32 %v1818, 1.442695
        %v1849 = vpow.pop %v1848
        %v1850 = vmul.f32 %v1819, 1.442695
        %v1851 = vpow.pop %v1850
        %1852 = vadd.xlane.f32.xlu0 %v1821
        %v1853 = vpop.xlane.xlu0 %1852
        %1854 = vadd.xlane.f32.xlu0 %v1823
        %v1855 = vpop.xlane.xlu0 %1854
        %1856 = vadd.xlane.f32.xlu0 %v1825
        %v1857 = vpop.xlane.xlu0 %1856
        %1858 = vadd.xlane.f32.xlu0 %v1827
        %v1859 = vpop.xlane.xlu0 %1858
        %1860 = vadd.xlane.f32.xlu0 %v1829
        %v1861 = vpop.xlane.xlu0 %1860
        %1862 = vadd.xlane.f32.xlu0 %v1831
        %v1863 = vpop.xlane.xlu0 %1862
        %1864 = vadd.xlane.f32.xlu0 %v1833
        %v1865 = vpop.xlane.xlu0 %1864
        %1866 = vadd.xlane.f32.xlu0 %v1835
        %v1867 = vpop.xlane.xlu0 %1866
        %1868 = vadd.xlane.f32.xlu0 %v1837
        %v1869 = vpop.xlane.xlu0 %1868
        %1870 = vadd.xlane.f32.xlu0 %v1839
        %v1871 = vpop.xlane.xlu0 %1870
        %1872 = vadd.xlane.f32.xlu0 %v1841
        %v1873 = vpop.xlane.xlu0 %1872
        %1874 = vadd.xlane.f32.xlu0 %v1843
        %v1875 = vpop.xlane.xlu0 %1874
        %1876 = vadd.xlane.f32.xlu0 %v1845
        %v1877 = vpop.xlane.xlu0 %1876
        %1878 = vadd.xlane.f32.xlu0 %v1847
        %v1879 = vpop.xlane.xlu0 %1878
        %1880 = vadd.xlane.f32.xlu0 %v1849
        %v1881 = vpop.xlane.xlu0 %1880
        %1882 = vadd.xlane.f32.xlu0 %v1851
        %v1883 = vpop.xlane.xlu0 %1882
        %1900 = vrot.lane.b32.xlu0 %v858, 96
        %v1901 = vpop.permute.xlu0 %1900
        %1902 = vrot.lane.b32.xlu0 %v864, 96
        %v1903 = vpop.permute.xlu0 %1902
        %1904 = vrot.lane.b32.xlu0 %v870, 96
        %v1905 = vpop.permute.xlu0 %1904
        %1906 = vrot.lane.b32.xlu0 %v876, 96
        %v1907 = vpop.permute.xlu0 %1906
        %1908 = vrot.lane.b32.xlu0 %v882, 96
        %v1909 = vpop.permute.xlu0 %1908
        %1910 = vrot.lane.b32.xlu0 %v888, 96
        %v1911 = vpop.permute.xlu0 %1910
        %1912 = vrot.lane.b32.xlu0 %v894, 96
        %v1913 = vpop.permute.xlu0 %1912
        %1914 = vrot.lane.b32.xlu0 %v900, 96
        %v1915 = vpop.permute.xlu0 %1914
        %1916 = vrot.lane.b32.xlu0 %v906, 96
        %v1917 = vpop.permute.xlu0 %1916
        %1918 = vrot.lane.b32.xlu0 %v912, 96
        %v1919 = vpop.permute.xlu0 %1918
        %1920 = vrot.lane.b32.xlu0 %v918, 96
        %v1921 = vpop.permute.xlu0 %1920
        %1922 = vrot.lane.b32.xlu0 %v924, 96
        %v1923 = vpop.permute.xlu0 %1922
        %1924 = vrot.lane.b32.xlu0 %v930, 96
        %v1925 = vpop.permute.xlu0 %1924
        %1926 = vrot.lane.b32.xlu0 %v936, 96
        %v1927 = vpop.permute.xlu0 %1926
        %1928 = vrot.lane.b32.xlu0 %v942, 96
        %v1929 = vpop.permute.xlu0 %1928
        %1930 = vrot.lane.b32.xlu0 %v948, 96
        %v1931 = vpop.permute.xlu0 %1930
        %1948 = vmatprep.subr.mxu0 0.0
        %1949 = vmatpush1.msra.mxu0 %v1901
        %1950 = vmatprep.subr.mxu0 0.0
        %1951 = vmatpush1.msra.mxu0 %v1903
        %1952 = vmatprep.subr.mxu0 0.0
        %1953 = vmatpush1.msra.mxu0 %v1905
        %1954 = vmatprep.subr.mxu0 0.0
        %1955 = vmatpush1.msra.mxu0 %v1907
        %1956 = vmatprep.subr.mxu0 0.0
        %1957 = vmatpush1.msra.mxu0 %v1909
        %1958 = vmatprep.subr.mxu0 0.0
        %1959 = vmatpush1.msra.mxu0 %v1911
        %1960 = vmatprep.subr.mxu0 0.0
        %1961 = vmatpush1.msra.mxu0 %v1913
        %1962 = vmatprep.subr.mxu0 0.0
        %1963 = vmatpush1.msra.mxu0 %v1915
        %1964 = vmatprep.subr.mxu0 0.0
        %1965 = vmatpush1.msra.mxu0 %v1917
        %1966 = vmatprep.subr.mxu0 0.0
        %1967 = vmatpush1.msra.mxu0 %v1919
        %1968 = vmatprep.subr.mxu0 0.0
        %1969 = vmatpush1.msra.mxu0 %v1921
        %1970 = vmatprep.subr.mxu0 0.0
        %1971 = vmatpush1.msra.mxu0 %v1923
        %1972 = vmatprep.subr.mxu0 0.0
        %1973 = vmatpush1.msra.mxu0 %v1925
        %1974 = vmatprep.subr.mxu0 0.0
        %1975 = vmatpush1.msra.mxu0 %v1927
        %1976 = vmatprep.subr.mxu0 0.0
        %1977 = vmatpush1.msra.mxu0 %v1929
        %1978 = vmatprep.subr.mxu0 0.0
        %1979 = vmatpush1.msra.mxu0 %v1931
        %1980 = vmatprep.subr.mxu0 0.0
        %1981 = vmatpush1.msra.mxu0 0.0
        %1982 = vmatprep.subr.mxu0 0.0
        %1983 = vmatpush1.msra.mxu0 0.0
        %1984 = vmatprep.subr.mxu0 0.0
        %1985 = vmatpush1.msra.mxu0 0.0
        %1986 = vmatprep.subr.mxu0 0.0
        %1987 = vmatpush1.msra.mxu0 0.0
        %1988 = vmatprep.subr.mxu0 0.0
        %1989 = vmatpush1.msra.mxu0 0.0
        %1990 = vmatprep.subr.mxu0 0.0
        %1991 = vmatpush1.msra.mxu0 0.0
        %1992 = vmatprep.subr.mxu0 0.0
        %1993 = vmatpush1.msra.mxu0 0.0
        %1994 = vmatprep.subr.mxu0 0.0
        %1995 = vmatpush1.msra.mxu0 0.0
        %1996 = vmatprep.subr.mxu0 0.0
        %1997 = vmatpush1.msra.mxu0 0.0
        %1998 = vmatprep.subr.mxu0 0.0
        %1999 = vmatpush1.msra.mxu0 0.0
        %2000 = vmatprep.subr.mxu0 0.0
        %2001 = vmatpush1.msra.mxu0 0.0
        %2002 = vmatprep.subr.mxu0 0.0
        %2003 = vmatpush1.msra.mxu0 0.0
        %2004 = vmatprep.subr.mxu0 0.0
        %2005 = vmatpush1.msra.mxu0 0.0
        %2006 = vmatprep.subr.mxu0 0.0
        %2007 = vmatpush1.msra.mxu0 0.0
        %2008 = vmatprep.subr.mxu0 0.0
        %2009 = vmatpush1.msra.mxu0 0.0
        %2010 = vmatprep.subr.mxu0 0.0
        %2011 = vmatpush1.msra.mxu0 0.0
        %2012 = vmatprep.mubr.f32.mxu0 0.0
        %2013 = vmatmul.mubr.f32.gmra.mrb[0].mxu0 %v1821
        %v2014 = vpop.f32.mrb[0].mxu0
        %v2015 = vadd.f32 0.0, %v2014
        %v2016 = vpop.f32.mrb[0].mxu0
        %2017 = vmatprep.mubr.f32.mxu0 0.0
        %2018 = vmatmul.mubr.f32.gmra.mrb[0].mxu0 %v1823
        %v2019 = vpop.f32.mrb[0].mxu0
        %v2020 = vadd.f32 0.0, %v2019
        %v2021 = vpop.f32.mrb[0].mxu0
        %2022 = vmatprep.mubr.f32.mxu0 0.0
        %2023 = vmatmul.mubr.f32.gmra.mrb[0].mxu0 %v1825
        %v2024 = vpop.f32.mrb[0].mxu0
        %v2025 = vadd.f32 0.0, %v2024
        %v2026 = vpop.f32.mrb[0].mxu0
        %2027 = vmatprep.mubr.f32.mxu0 0.0
        %2028 = vmatmul.mubr.f32.gmra.mrb[0].mxu0 %v1827
        %v2029 = vpop.f32.mrb[0].mxu0
        %v2030 = vadd.f32 0.0, %v2029
        %v2031 = vpop.f32.mrb[0].mxu0
        %2032 = vmatprep.mubr.f32.mxu0 0.0
        %2033 = vmatmul.mubr.f32.gmra.mrb[0].mxu0 %v1829
        %v2034 = vpop.f32.mrb[0].mxu0
        %v2035 = vadd.f32 0.0, %v2034
        %v2036 = vpop.f32.mrb[0].mxu0
        %2037 = vmatprep.mubr.f32.mxu0 0.0
        %2038 = vmatmul.mubr.f32.gmra.mrb[0].mxu0 %v1831
        %v2039 = vpop.f32.mrb[0].mxu0
        %v2040 = vadd.f32 0.0, %v2039
        %v2041 = vpop.f32.mrb[0].mxu0
        %2042 = vmatprep.mubr.f32.mxu0 0.0
        %2043 = vmatmul.mubr.f32.gmra.mrb[0].mxu0 %v1833
        %v2044 = vpop.f32.mrb[0].mxu0
        %v2045 = vadd.f32 0.0, %v2044
        %v2046 = vpop.f32.mrb[0].mxu0
        %2047 = vmatprep.mubr.f32.mxu0 0.0
        %2048 = vmatmul.mubr.f32.gmra.mrb[0].mxu0 %v1835
        %v2049 = vpop.f32.mrb[0].mxu0
        %v2050 = vadd.f32 0.0, %v2049
        %v2051 = vpop.f32.mrb[0].mxu0
        %2052 = vmatprep.mubr.f32.mxu0 0.0
        %2053 = vmatmul.mubr.f32.gmra.mrb[0].mxu0 %v1837
        %v2054 = vpop.f32.mrb[0].mxu0
        %v2055 = vadd.f32 0.0, %v2054
        %v2056 = vpop.f32.mrb[0].mxu0
        %2057 = vmatprep.mubr.f32.mxu0 0.0
        %2058 = vmatmul.mubr.f32.gmra.mrb[0].mxu0 %v1839
        %v2059 = vpop.f32.mrb[0].mxu0
        %v2060 = vadd.f32 0.0, %v2059
        %v2061 = vpop.f32.mrb[0].mxu0
        %2062 = vmatprep.mubr.f32.mxu0 0.0
        %2063 = vmatmul.mubr.f32.gmra.mrb[0].mxu0 %v1841
        %v2064 = vpop.f32.mrb[0].mxu0
        %v2065 = vadd.f32 0.0, %v2064
        %v2066 = vpop.f32.mrb[0].mxu0
        %2067 = vmatprep.mubr.f32.mxu0 0.0
        %2068 = vmatmul.mubr.f32.gmra.mrb[0].mxu0 %v1843
        %v2069 = vpop.f32.mrb[0].mxu0
        %v2070 = vadd.f32 0.0, %v2069
        %v2071 = vpop.f32.mrb[0].mxu0
        %2072 = vmatprep.mubr.f32.mxu0 0.0
        %2073 = vmatmul.mubr.f32.gmra.mrb[0].mxu0 %v1845
        %v2074 = vpop.f32.mrb[0].mxu0
        %v2075 = vadd.f32 0.0, %v2074
        %v2076 = vpop.f32.mrb[0].mxu0
        %2077 = vmatprep.mubr.f32.mxu0 0.0
        %2078 = vmatmul.mubr.f32.gmra.mrb[0].mxu0 %v1847
        %v2079 = vpop.f32.mrb[0].mxu0
        %v2080 = vadd.f32 0.0, %v2079
        %v2081 = vpop.f32.mrb[0].mxu0
        %2082 = vmatprep.mubr.f32.mxu0 0.0
        %2083 = vmatmul.mubr.f32.gmra.mrb[0].mxu0 %v1849
        %v2084 = vpop.f32.mrb[0].mxu0
        %v2085 = vadd.f32 0.0, %v2084
        %v2086 = vpop.f32.mrb[0].mxu0
        %2087 = vmatprep.mubr.f32.mxu0 0.0
        %2088 = vmatmul.mubr.f32.gmra.mrb[0].mxu0 %v1851
        %v2089 = vpop.f32.mrb[0].mxu0
        %v2090 = vadd.f32 0.0, %v2089
        %v2091 = vpop.f32.mrb[0].mxu0
        %2092 = vdwg.mxu0
        %v2093 = vrcp.pop %v1853
        %v2094 = vrcp.pop %v1855
        %v2095 = vrcp.pop %v1857
        %v2096 = vrcp.pop %v1859
        %v2097 = vrcp.pop %v1861
        %v2098 = vrcp.pop %v1863
        %v2099 = vrcp.pop %v1865
        %v2100 = vrcp.pop %v1867
        %v2101 = vrcp.pop %v1869
        %v2102 = vrcp.pop %v1871
        %v2103 = vrcp.pop %v1873
        %v2104 = vrcp.pop %v1875
        %v2105 = vrcp.pop %v1877
        %v2106 = vrcp.pop %v1879
        %v2107 = vrcp.pop %v1881
        %v2108 = vrcp.pop %v1883
        %v2109 = vmul.f32 %v2015, %v2093
        %v2110 = vmul.f32 %v2020, %v2094
        %v2111 = vmul.f32 %v2025, %v2095
        %v2112 = vmul.f32 %v2030, %v2096
        %v2113 = vmul.f32 %v2035, %v2097
        %v2114 = vmul.f32 %v2040, %v2098
        %v2115 = vmul.f32 %v2045, %v2099
        %v2116 = vmul.f32 %v2050, %v2100
        %v2117 = vmul.f32 %v2055, %v2101
        %v2118 = vmul.f32 %v2060, %v2102
        %v2119 = vmul.f32 %v2065, %v2103
        %v2120 = vmul.f32 %v2070, %v2104
        %v2121 = vmul.f32 %v2075, %v2105
        %v2122 = vmul.f32 %v2080, %v2106
        %v2123 = vmul.f32 %v2085, %v2107
        %v2124 = vmul.f32 %v2090, %v2108
        %2125 = vrot.lane.b32.xlu0 %v952, 64
        %v2126 = vpop.permute.xlu0 %2125
        %2127 = vrot.lane.b32.xlu0 %v953, 64
        %v2128 = vpop.permute.xlu0 %2127
        %2129 = vrot.lane.b32.xlu0 %v954, 64
        %v2130 = vpop.permute.xlu0 %2129
        %2131 = vrot.lane.b32.xlu0 %v955, 64
        %v2132 = vpop.permute.xlu0 %2131
        %2133 = vrot.lane.b32.xlu0 %v956, 64
        %v2134 = vpop.permute.xlu0 %2133
        %2135 = vrot.lane.b32.xlu0 %v957, 64
        %v2136 = vpop.permute.xlu0 %2135
        %2137 = vrot.lane.b32.xlu0 %v958, 64
        %v2138 = vpop.permute.xlu0 %2137
        %2139 = vrot.lane.b32.xlu0 %v959, 64
        %v2140 = vpop.permute.xlu0 %2139
        %2141 = vrot.lane.b32.xlu0 %v960, 64
        %v2142 = vpop.permute.xlu0 %2141
        %2143 = vrot.lane.b32.xlu0 %v961, 64
        %v2144 = vpop.permute.xlu0 %2143
        %2145 = vrot.lane.b32.xlu0 %v962, 64
        %v2146 = vpop.permute.xlu0 %2145
        %2147 = vrot.lane.b32.xlu0 %v963, 64
        %v2148 = vpop.permute.xlu0 %2147
        %2149 = vrot.lane.b32.xlu0 %v964, 64
        %v2150 = vpop.permute.xlu0 %2149
        %2151 = vrot.lane.b32.xlu0 %v965, 64
        %v2152 = vpop.permute.xlu0 %2151
        %2153 = vrot.lane.b32.xlu0 %v966, 64
        %v2154 = vpop.permute.xlu0 %2153
        %2155 = vrot.lane.b32.xlu0 %v967, 64
        %v2156 = vpop.permute.xlu0 %2155
        %2157 = vrot.lane.b32.xlu0 %v697, 64
        %v2158 = vpop.permute.xlu0 %2157
        %2159 = vrot.lane.b32.xlu0 %v703, 64
        %v2160 = vpop.permute.xlu0 %2159
        %2161 = vrot.lane.b32.xlu0 %v709, 64
        %v2162 = vpop.permute.xlu0 %2161
        %2163 = vrot.lane.b32.xlu0 %v715, 64
        %v2164 = vpop.permute.xlu0 %2163
        %2165 = vrot.lane.b32.xlu0 %v721, 64
        %v2166 = vpop.permute.xlu0 %2165
        %2167 = vrot.lane.b32.xlu0 %v727, 64
        %v2168 = vpop.permute.xlu0 %2167
        %2169 = vrot.lane.b32.xlu0 %v733, 64
        %v2170 = vpop.permute.xlu0 %2169
        %2171 = vrot.lane.b32.xlu0 %v739, 64
        %v2172 = vpop.permute.xlu0 %2171
        %2173 = vrot.lane.b32.xlu0 %v745, 64
        %v2174 = vpop.permute.xlu0 %2173
        %2175 = vrot.lane.b32.xlu0 %v751, 64
        %v2176 = vpop.permute.xlu0 %2175
        %2177 = vrot.lane.b32.xlu0 %v757, 64
        %v2178 = vpop.permute.xlu0 %2177
        %2179 = vrot.lane.b32.xlu0 %v763, 64
        %v2180 = vpop.permute.xlu0 %2179
        %2181 = vrot.lane.b32.xlu0 %v769, 64
        %v2182 = vpop.permute.xlu0 %2181
        %2183 = vrot.lane.b32.xlu0 %v775, 64
        %v2184 = vpop.permute.xlu0 %2183
        %2185 = vrot.lane.b32.xlu0 %v781, 64
        %v2186 = vpop.permute.xlu0 %2185
        %2187 = vrot.lane.b32.xlu0 %v787, 64
        %v2188 = vpop.permute.xlu0 %2187
        %v2189 = vsel %vm968, %v2126, 0
        %v2191 = vsel %vm968, %v2128, 0
        %v2193 = vsel %vm968, %v2130, 0
        %v2195 = vsel %vm968, %v2132, 0
        %v2197 = vsel %vm968, %v2134, 0
        %v2199 = vsel %vm968, %v2136, 0
        %v2201 = vsel %vm968, %v2138, 0
        %v2203 = vsel %vm968, %v2140, 0
        %v2205 = vsel %vm968, %v2142, 0
        %v2207 = vsel %vm968, %v2144, 0
        %v2209 = vsel %vm968, %v2146, 0
        %v2211 = vsel %vm968, %v2148, 0
        %v2213 = vsel %vm968, %v2150, 0
        %v2215 = vsel %vm968, %v2152, 0
        %v2217 = vsel %vm968, %v2154, 0
        %v2219 = vsel %vm968, %v2156, 0
        %v2221 = vsel %vm968, %v2158, 0
        %v2223 = vsel %vm968, %v2160, 0
        %v2225 = vsel %vm968, %v2162, 0
        %v2227 = vsel %vm968, %v2164, 0
        %v2229 = vsel %vm968, %v2166, 0
        %v2231 = vsel %vm968, %v2168, 0
        %v2233 = vsel %vm968, %v2170, 0
        %v2235 = vsel %vm968, %v2172, 0
        %v2237 = vsel %vm968, %v2174, 0
        %v2239 = vsel %vm968, %v2176, 0
        %v2241 = vsel %vm968, %v2178, 0
        %v2243 = vsel %vm968, %v2180, 0
        %v2245 = vsel %vm968, %v2182, 0
        %v2247 = vsel %vm968, %v2184, 0
        %v2249 = vsel %vm968, %v2186, 0
        %v2251 = vsel %vm968, %v2188, 0
        %2253 = vmatprep.subr.mxu0 0.0
        %2254 = vmatpush1.xpose.msra.mxu0 %v2221
        %2255 = vmatprep.subr.mxu0 0.0
        %2256 = vmatpush1.xpose.msra.mxu0 %v2223
        %2257 = vmatprep.subr.mxu0 0.0
        %2258 = vmatpush1.xpose.msra.mxu0 %v2225
        %2259 = vmatprep.subr.mxu0 0.0
        %2260 = vmatpush1.xpose.msra.mxu0 %v2227
        %2261 = vmatprep.subr.mxu0 0.0
        %2262 = vmatpush1.xpose.msra.mxu0 %v2229
        %2263 = vmatprep.subr.mxu0 0.0
        %2264 = vmatpush1.xpose.msra.mxu0 %v2231
        %2265 = vmatprep.subr.mxu0 0.0
        %2266 = vmatpush1.xpose.msra.mxu0 %v2233
        %2267 = vmatprep.subr.mxu0 0.0
        %2268 = vmatpush1.xpose.msra.mxu0 %v2235
        %2269 = vmatprep.subr.mxu0 0.0
        %2270 = vmatpush1.xpose.msra.mxu0 %v2237
        %2271 = vmatprep.subr.mxu0 0.0
        %2272 = vmatpush1.xpose.msra.mxu0 %v2239
        %2273 = vmatprep.subr.mxu0 0.0
        %2274 = vmatpush1.xpose.msra.mxu0 %v2241
        %2275 = vmatprep.subr.mxu0 0.0
        %2276 = vmatpush1.xpose.msra.mxu0 %v2243
        %2277 = vmatprep.subr.mxu0 0.0
        %2278 = vmatpush1.xpose.msra.mxu0 %v2245
        %2279 = vmatprep.subr.mxu0 0.0
        %2280 = vmatpush1.xpose.msra.mxu0 %v2247
        %2281 = vmatprep.subr.mxu0 0.0
        %2282 = vmatpush1.xpose.msra.mxu0 %v2249
        %2283 = vmatprep.subr.mxu0 0.0
        %2284 = vmatpush1.xpose.msra.mxu0 %v2251
        %2285 = vmatprep.subr.mxu0 0.0
        %2286 = vmatpush1.xpose.msra.mxu0 0.0
        %2287 = vmatprep.subr.mxu0 0.0
        %2288 = vmatpush1.xpose.msra.mxu0 0.0
        %2289 = vmatprep.subr.mxu0 0.0
        %2290 = vmatpush1.xpose.msra.mxu0 0.0
        %2291 = vmatprep.subr.mxu0 0.0
        %2292 = vmatpush1.xpose.msra.mxu0 0.0
        %2293 = vmatprep.subr.mxu0 0.0
        %2294 = vmatpush1.xpose.msra.mxu0 0.0
        %2295 = vmatprep.subr.mxu0 0.0
        %2296 = vmatpush1.xpose.msra.mxu0 0.0
        %2297 = vmatprep.subr.mxu0 0.0
        %2298 = vmatpush1.xpose.msra.mxu0 0.0
        %2299 = vmatprep.subr.mxu0 0.0
        %2300 = vmatpush1.xpose.msra.mxu0 0.0
        %2301 = vmatprep.subr.mxu0 0.0
        %2302 = vmatpush1.xpose.msra.mxu0 0.0
        %2303 = vmatprep.subr.mxu0 0.0
        %2304 = vmatpush1.xpose.msra.mxu0 0.0
        %2305 = vmatprep.subr.mxu0 0.0
        %2306 = vmatpush1.xpose.msra.mxu0 0.0
        %2307 = vmatprep.subr.mxu0 0.0
        %2308 = vmatpush1.xpose.msra.mxu0 0.0
        %2309 = vmatprep.subr.mxu0 0.0
        %2310 = vmatpush1.xpose.msra.mxu0 0.0
        %2311 = vmatprep.subr.mxu0 0.0
        %2312 = vmatpush1.xpose.msra.mxu0 0.0
        %2313 = vmatprep.subr.mxu0 0.0
        %2314 = vmatpush1.xpose.msra.mxu0 0.0
        %2315 = vmatprep.subr.mxu0 0.0
        %2316 = vmatpush1.xpose.msra.mxu0 0.0
        %2317 = vmatprep.mubr.f32.mxu0 0.0
        %2318 = vmatmul.mubr.f32.gmra.mrb[0].mxu0 %v2189
        %v2319 = vpop.f32.mrb[0].mxu0
        %v2320 = vadd.f32 0.0, %v2319
        %v2321 = vpop.f32.mrb[0].mxu0
        %2322 = vmatprep.mubr.f32.mxu0 0.0
        %2323 = vmatmul.mubr.f32.gmra.mrb[0].mxu0 %v2191
        %v2324 = vpop.f32.mrb[0].mxu0
        %v2325 = vadd.f32 0.0, %v2324
        %v2326 = vpop.f32.mrb[0].mxu0
        %2327 = vmatprep.mubr.f32.mxu0 0.0
        %2328 = vmatmul.mubr.f32.gmra.mrb[0].mxu0 %v2193
        %v2329 = vpop.f32.mrb[0].mxu0
        %v2330 = vadd.f32 0.0, %v2329
        %v2331 = vpop.f32.mrb[0].mxu0
        %2332 = vmatprep.mubr.f32.mxu0 0.0
        %2333 = vmatmul.mubr.f32.gmra.mrb[0].mxu0 %v2195
        %v2334 = vpop.f32.mrb[0].mxu0
        %v2335 = vadd.f32 0.0, %v2334
        %v2336 = vpop.f32.mrb[0].mxu0
        %2337 = vmatprep.mubr.f32.mxu0 0.0
        %2338 = vmatmul.mubr.f32.gmra.mrb[0].mxu0 %v2197
        %v2339 = vpop.f32.mrb[0].mxu0
        %v2340 = vadd.f32 0.0, %v2339
        %v2341 = vpop.f32.mrb[0].mxu0
        %2342 = vmatprep.mubr.f32.mxu0 0.0
        %2343 = vmatmul.mubr.f32.gmra.mrb[0].mxu0 %v2199
        %v2344 = vpop.f32.mrb[0].mxu0
        %v2345 = vadd.f32 0.0, %v2344
        %v2346 = vpop.f32.mrb[0].mxu0
        %2347 = vmatprep.mubr.f32.mxu0 0.0
        %2348 = vmatmul.mubr.f32.gmra.mrb[0].mxu0 %v2201
        %v2349 = vpop.f32.mrb[0].mxu0
        %v2350 = vadd.f32 0.0, %v2349
        %v2351 = vpop.f32.mrb[0].mxu0
        %2352 = vmatprep.mubr.f32.mxu0 0.0
        %2353 = vmatmul.mubr.f32.gmra.mrb[0].mxu0 %v2203
        %v2354 = vpop.f32.mrb[0].mxu0
        %v2355 = vadd.f32 0.0, %v2354
        %v2356 = vpop.f32.mrb[0].mxu0
        %2357 = vmatprep.mubr.f32.mxu0 0.0
        %2358 = vmatmul.mubr.f32.gmra.mrb[0].mxu0 %v2205
        %v2359 = vpop.f32.mrb[0].mxu0
        %v2360 = vadd.f32 0.0, %v2359
        %v2361 = vpop.f32.mrb[0].mxu0
        %2362 = vmatprep.mubr.f32.mxu0 0.0
        %2363 = vmatmul.mubr.f32.gmra.mrb[0].mxu0 %v2207
        %v2364 = vpop.f32.mrb[0].mxu0
        %v2365 = vadd.f32 0.0, %v2364
        %v2366 = vpop.f32.mrb[0].mxu0
        %2367 = vmatprep.mubr.f32.mxu0 0.0
        %2368 = vmatmul.mubr.f32.gmra.mrb[0].mxu0 %v2209
        %v2369 = vpop.f32.mrb[0].mxu0
        %v2370 = vadd.f32 0.0, %v2369
        %v2371 = vpop.f32.mrb[0].mxu0
        %2372 = vmatprep.mubr.f32.mxu0 0.0
        %2373 = vmatmul.mubr.f32.gmra.mrb[0].mxu0 %v2211
        %v2374 = vpop.f32.mrb[0].mxu0
        %v2375 = vadd.f32 0.0, %v2374
        %v2376 = vpop.f32.mrb[0].mxu0
        %2377 = vmatprep.mubr.f32.mxu0 0.0
        %2378 = vmatmul.mubr.f32.gmra.mrb[0].mxu0 %v2213
        %v2379 = vpop.f32.mrb[0].mxu0
        %v2380 = vadd.f32 0.0, %v2379
        %v2381 = vpop.f32.mrb[0].mxu0
        %2382 = vmatprep.mubr.f32.mxu0 0.0
        %2383 = vmatmul.mubr.f32.gmra.mrb[0].mxu0 %v2215
        %v2384 = vpop.f32.mrb[0].mxu0
        %v2385 = vadd.f32 0.0, %v2384
        %v2386 = vpop.f32.mrb[0].mxu0
        %2387 = vmatprep.mubr.f32.mxu0 0.0
        %2388 = vmatmul.mubr.f32.gmra.mrb[0].mxu0 %v2217
        %v2389 = vpop.f32.mrb[0].mxu0
        %v2390 = vadd.f32 0.0, %v2389
        %v2391 = vpop.f32.mrb[0].mxu0
        %2392 = vmatprep.mubr.f32.mxu0 0.0
        %2393 = vmatmul.mubr.f32.gmra.mrb[0].mxu0 %v2219
        %v2394 = vpop.f32.mrb[0].mxu0
        %v2395 = vadd.f32 0.0, %v2394
        %v2396 = vpop.f32.mrb[0].mxu0
        %2397 = vdwg.mxu0
        %2398 = vmax.xlane.f32.xlu0 %v2320
        %v2399 = vpop.xlane.xlu0 %2398
        %2400 = vmax.xlane.f32.xlu0 %v2325
        %v2401 = vpop.xlane.xlu0 %2400
        %2402 = vmax.xlane.f32.xlu0 %v2330
        %v2403 = vpop.xlane.xlu0 %2402
        %2404 = vmax.xlane.f32.xlu0 %v2335
        %v2405 = vpop.xlane.xlu0 %2404
        %2406 = vmax.xlane.f32.xlu0 %v2340
        %v2407 = vpop.xlane.xlu0 %2406
        %2408 = vmax.xlane.f32.xlu0 %v2345
        %v2409 = vpop.xlane.xlu0 %2408
        %2410 = vmax.xlane.f32.xlu0 %v2350
        %v2411 = vpop.xlane.xlu0 %2410
        %2412 = vmax.xlane.f32.xlu0 %v2355
        %v2413 = vpop.xlane.xlu0 %2412
        %2414 = vmax.xlane.f32.xlu0 %v2360
        %v2415 = vpop.xlane.xlu0 %2414
        %2416 = vmax.xlane.f32.xlu0 %v2365
        %v2417 = vpop.xlane.xlu0 %2416
        %2418 = vmax.xlane.f32.xlu0 %v2370
        %v2419 = vpop.xlane.xlu0 %2418
        %2420 = vmax.xlane.f32.xlu0 %v2375
        %v2421 = vpop.xlane.xlu0 %2420
        %2422 = vmax.xlane.f32.xlu0 %v2380
        %v2423 = vpop.xlane.xlu0 %2422
        %2424 = vmax.xlane.f32.xlu0 %v2385
        %v2425 = vpop.xlane.xlu0 %2424
        %2426 = vmax.xlane.f32.xlu0 %v2390
        %v2427 = vpop.xlane.xlu0 %2426
        %2428 = vmax.xlane.f32.xlu0 %v2395
        %v2429 = vpop.xlane.xlu0 %2428
        %v2430 = vsub.f32 %v2320, %v2399
        %v2431 = vsub.f32 %v2325, %v2401
        %v2432 = vsub.f32 %v2330, %v2403
        %v2433 = vsub.f32 %v2335, %v2405
        %v2434 = vsub.f32 %v2340, %v2407
        %v2435 = vsub.f32 %v2345, %v2409
        %v2436 = vsub.f32 %v2350, %v2411
        %v2437 = vsub.f32 %v2355, %v2413
        %v2438 = vsub.f32 %v2360, %v2415
        %v2439 = vsub.f32 %v2365, %v2417
        %v2440 = vsub.f32 %v2370, %v2419
        %v2441 = vsub.f32 %v2375, %v2421
        %v2442 = vsub.f32 %v2380, %v2423
        %v2443 = vsub.f32 %v2385, %v2425
        %v2444 = vsub.f32 %v2390, %v2427
        %v2445 = vsub.f32 %v2395, %v2429
        %v2446 = vmul.f32 %v2430, 1.442695
        %v2447 = vpow.pop %v2446
        %v2448 = vmul.f32 %v2431, 1.442695
        %v2449 = vpow.pop %v2448
        %v2450 = vmul.f32 %v2432, 1.442695
        %v2451 = vpow.pop %v2450
        %v2452 = vmul.f32 %v2433, 1.442695
        %v2453 = vpow.pop %v2452
        %v2454 = vmul.f32 %v2434, 1.442695
        %v2455 = vpow.pop %v2454
        %v2456 = vmul.f32 %v2435, 1.442695
        %v2457 = vpow.pop %v2456
        %v2458 = vmul.f32 %v2436, 1.442695
        %v2459 = vpow.pop %v2458
        %v2460 = vmul.f32 %v2437, 1.442695
        %v2461 = vpow.pop %v2460
        %v2462 = vmul.f32 %v2438, 1.442695
        %v2463 = vpow.pop %v2462
        %v2464 = vmul.f32 %v2439, 1.442695
        %v2465 = vpow.pop %v2464
        %v2466 = vmul.f32 %v2440, 1.442695
        %v2467 = vpow.pop %v2466
        %v2468 = vmul.f32 %v2441, 1.442695
        %v2469 = vpow.pop %v2468
        %v2470 = vmul.f32 %v2442, 1.442695
        %v2471 = vpow.pop %v2470
        %v2472 = vmul.f32 %v2443, 1.442695
        %v2473 = vpow.pop %v2472
        %v2474 = vmul.f32 %v2444, 1.442695
        %v2475 = vpow.pop %v2474
        %v2476 = vmul.f32 %v2445, 1.442695
        %v2477 = vpow.pop %v2476
        %2478 = vadd.xlane.f32.xlu0 %v2447
        %v2479 = vpop.xlane.xlu0 %2478
        %2480 = vadd.xlane.f32.xlu0 %v2449
        %v2481 = vpop.xlane.xlu0 %2480
        %2482 = vadd.xlane.f32.xlu0 %v2451
        %v2483 = vpop.xlane.xlu0 %2482
        %2484 = vadd.xlane.f32.xlu0 %v2453
        %v2485 = vpop.xlane.xlu0 %2484
        %2486 = vadd.xlane.f32.xlu0 %v2455
        %v2487 = vpop.xlane.xlu0 %2486
        %2488 = vadd.xlane.f32.xlu0 %v2457
        %v2489 = vpop.xlane.xlu0 %2488
        %2490 = vadd.xlane.f32.xlu0 %v2459
        %v2491 = vpop.xlane.xlu0 %2490
        %2492 = vadd.xlane.f32.xlu0 %v2461
        %v2493 = vpop.xlane.xlu0 %2492
        %2494 = vadd.xlane.f32.xlu0 %v2463
        %v2495 = vpop.xlane.xlu0 %2494
        %2496 = vadd.xlane.f32.xlu0 %v2465
        %v2497 = vpop.xlane.xlu0 %2496
        %2498 = vadd.xlane.f32.xlu0 %v2467
        %v2499 = vpop.xlane.xlu0 %2498
        %2500 = vadd.xlane.f32.xlu0 %v2469
        %v2501 = vpop.xlane.xlu0 %2500
        %2502 = vadd.xlane.f32.xlu0 %v2471
        %v2503 = vpop.xlane.xlu0 %2502
        %2504 = vadd.xlane.f32.xlu0 %v2473
        %v2505 = vpop.xlane.xlu0 %2504
        %2506 = vadd.xlane.f32.xlu0 %v2475
        %v2507 = vpop.xlane.xlu0 %2506
        %2508 = vadd.xlane.f32.xlu0 %v2477
        %v2509 = vpop.xlane.xlu0 %2508
        %2510 = vrot.lane.b32.xlu0 %v858, 64
        %v2511 = vpop.permute.xlu0 %2510
        %2512 = vrot.lane.b32.xlu0 %v864, 64
        %v2513 = vpop.permute.xlu0 %2512
        %2514 = vrot.lane.b32.xlu0 %v870, 64
        %v2515 = vpop.permute.xlu0 %2514
        %2516 = vrot.lane.b32.xlu0 %v876, 64
        %v2517 = vpop.permute.xlu0 %2516
        %2518 = vrot.lane.b32.xlu0 %v882, 64
        %v2519 = vpop.permute.xlu0 %2518
        %2520 = vrot.lane.b32.xlu0 %v888, 64
        %v2521 = vpop.permute.xlu0 %2520
        %2522 = vrot.lane.b32.xlu0 %v894, 64
        %v2523 = vpop.permute.xlu0 %2522
        %2524 = vrot.lane.b32.xlu0 %v900, 64
        %v2525 = vpop.permute.xlu0 %2524
        %2526 = vrot.lane.b32.xlu0 %v906, 64
        %v2527 = vpop.permute.xlu0 %2526
        %2528 = vrot.lane.b32.xlu0 %v912, 64
        %v2529 = vpop.permute.xlu0 %2528
        %2530 = vrot.lane.b32.xlu0 %v918, 64
        %v2531 = vpop.permute.xlu0 %2530
        %2532 = vrot.lane.b32.xlu0 %v924, 64
        %v2533 = vpop.permute.xlu0 %2532
        %2534 = vrot.lane.b32.xlu0 %v930, 64
        %v2535 = vpop.permute.xlu0 %2534
        %2536 = vrot.lane.b32.xlu0 %v936, 64
        %v2537 = vpop.permute.xlu0 %2536
        %2538 = vrot.lane.b32.xlu0 %v942, 64
        %v2539 = vpop.permute.xlu0 %2538
        %2540 = vrot.lane.b32.xlu0 %v948, 64
        %v2541 = vpop.permute.xlu0 %2540
        %2558 = vmatprep.subr.mxu0 0.0
        %2559 = vmatpush1.msra.mxu0 %v2511
        %2560 = vmatprep.subr.mxu0 0.0
        %2561 = vmatpush1.msra.mxu0 %v2513
        %2562 = vmatprep.subr.mxu0 0.0
        %2563 = vmatpush1.msra.mxu0 %v2515
        %2564 = vmatprep.subr.mxu0 0.0
        %2565 = vmatpush1.msra.mxu0 %v2517
        %2566 = vmatprep.subr.mxu0 0.0
        %2567 = vmatpush1.msra.mxu0 %v2519
        %2568 = vmatprep.subr.mxu0 0.0
        %2569 = vmatpush1.msra.mxu0 %v2521
        %2570 = vmatprep.subr.mxu0 0.0
        %2571 = vmatpush1.msra.mxu0 %v2523
        %2572 = vmatprep.subr.mxu0 0.0
        %2573 = vmatpush1.msra.mxu0 %v2525
        %2574 = vmatprep.subr.mxu0 0.0
        %2575 = vmatpush1.msra.mxu0 %v2527
        %2576 = vmatprep.subr.mxu0 0.0
        %2577 = vmatpush1.msra.mxu0 %v2529
        %2578 = vmatprep.subr.mxu0 0.0
        %2579 = vmatpush1.msra.mxu0 %v2531
        %2580 = vmatprep.subr.mxu0 0.0
        %2581 = vmatpush1.msra.mxu0 %v2533
        %2582 = vmatprep.subr.mxu0 0.0
        %2583 = vmatpush1.msra.mxu0 %v2535
        %2584 = vmatprep.subr.mxu0 0.0
        %2585 = vmatpush1.msra.mxu0 %v2537
        %2586 = vmatprep.subr.mxu0 0.0
        %2587 = vmatpush1.msra.mxu0 %v2539
        %2588 = vmatprep.subr.mxu0 0.0
        %2589 = vmatpush1.msra.mxu0 %v2541
        %2590 = vmatprep.subr.mxu0 0.0
        %2591 = vmatpush1.msra.mxu0 0.0
        %2592 = vmatprep.subr.mxu0 0.0
        %2593 = vmatpush1.msra.mxu0 0.0
        %2594 = vmatprep.subr.mxu0 0.0
        %2595 = vmatpush1.msra.mxu0 0.0
        %2596 = vmatprep.subr.mxu0 0.0
        %2597 = vmatpush1.msra.mxu0 0.0
        %2598 = vmatprep.subr.mxu0 0.0
        %2599 = vmatpush1.msra.mxu0 0.0
        %2600 = vmatprep.subr.mxu0 0.0
        %2601 = vmatpush1.msra.mxu0 0.0
        %2602 = vmatprep.subr.mxu0 0.0
        %2603 = vmatpush1.msra.mxu0 0.0
        %2604 = vmatprep.subr.mxu0 0.0
        %2605 = vmatpush1.msra.mxu0 0.0
        %2606 = vmatprep.subr.mxu0 0.0
        %2607 = vmatpush1.msra.mxu0 0.0
        %2608 = vmatprep.subr.mxu0 0.0
        %2609 = vmatpush1.msra.mxu0 0.0
        %2610 = vmatprep.subr.mxu0 0.0
        %2611 = vmatpush1.msra.mxu0 0.0
        %2612 = vmatprep.subr.mxu0 0.0
        %2613 = vmatpush1.msra.mxu0 0.0
        %2614 = vmatprep.subr.mxu0 0.0
        %2615 = vmatpush1.msra.mxu0 0.0
        %2616 = vmatprep.subr.mxu0 0.0
        %2617 = vmatpush1.msra.mxu0 0.0
        %2618 = vmatprep.subr.mxu0 0.0
        %2619 = vmatpush1.msra.mxu0 0.0
        %2620 = vmatprep.subr.mxu0 0.0
        %2621 = vmatpush1.msra.mxu0 0.0
        %2622 = vmatprep.mubr.f32.mxu0 0.0
        %2623 = vmatmul.mubr.f32.gmra.mrb[0].mxu0 %v2447
        %v2624 = vpop.f32.mrb[0].mxu0
        %v2625 = vadd.f32 0.0, %v2624
        %v2626 = vpop.f32.mrb[0].mxu0
        %2627 = vmatprep.mubr.f32.mxu0 0.0
        %2628 = vmatmul.mubr.f32.gmra.mrb[0].mxu0 %v2449
        %v2629 = vpop.f32.mrb[0].mxu0
        %v2630 = vadd.f32 0.0, %v2629
        %v2631 = vpop.f32.mrb[0].mxu0
        %2632 = vmatprep.mubr.f32.mxu0 0.0
        %2633 = vmatmul.mubr.f32.gmra.mrb[0].mxu0 %v2451
        %v2634 = vpop.f32.mrb[0].mxu0
        %v2635 = vadd.f32 0.0, %v2634
        %v2636 = vpop.f32.mrb[0].mxu0
        %2637 = vmatprep.mubr.f32.mxu0 0.0
        %2638 = vmatmul.mubr.f32.gmra.mrb[0].mxu0 %v2453
        %v2639 = vpop.f32.mrb[0].mxu0
        %v2640 = vadd.f32 0.0, %v2639
        %v2641 = vpop.f32.mrb[0].mxu0
        %2642 = vmatprep.mubr.f32.mxu0 0.0
        %2643 = vmatmul.mubr.f32.gmra.mrb[0].mxu0 %v2455
        %v2644 = vpop.f32.mrb[0].mxu0
        %v2645 = vadd.f32 0.0, %v2644
        %v2646 = vpop.f32.mrb[0].mxu0
        %2647 = vmatprep.mubr.f32.mxu0 0.0
        %2648 = vmatmul.mubr.f32.gmra.mrb[0].mxu0 %v2457
        %v2649 = vpop.f32.mrb[0].mxu0
        %v2650 = vadd.f32 0.0, %v2649
        %v2651 = vpop.f32.mrb[0].mxu0
        %2652 = vmatprep.mubr.f32.mxu0 0.0
        %2653 = vmatmul.mubr.f32.gmra.mrb[0].mxu0 %v2459
        %v2654 = vpop.f32.mrb[0].mxu0
        %v2655 = vadd.f32 0.0, %v2654
        %v2656 = vpop.f32.mrb[0].mxu0
        %2657 = vmatprep.mubr.f32.mxu0 0.0
        %2658 = vmatmul.mubr.f32.gmra.mrb[0].mxu0 %v2461
        %v2659 = vpop.f32.mrb[0].mxu0
        %v2660 = vadd.f32 0.0, %v2659
        %v2661 = vpop.f32.mrb[0].mxu0
        %2662 = vmatprep.mubr.f32.mxu0 0.0
        %2663 = vmatmul.mubr.f32.gmra.mrb[0].mxu0 %v2463
        %v2664 = vpop.f32.mrb[0].mxu0
        %v2665 = vadd.f32 0.0, %v2664
        %v2666 = vpop.f32.mrb[0].mxu0
        %2667 = vmatprep.mubr.f32.mxu0 0.0
        %2668 = vmatmul.mubr.f32.gmra.mrb[0].mxu0 %v2465
        %v2669 = vpop.f32.mrb[0].mxu0
        %v2670 = vadd.f32 0.0, %v2669
        %v2671 = vpop.f32.mrb[0].mxu0
        %2672 = vmatprep.mubr.f32.mxu0 0.0
        %2673 = vmatmul.mubr.f32.gmra.mrb[0].mxu0 %v2467
        %v2674 = vpop.f32.mrb[0].mxu0
        %v2675 = vadd.f32 0.0, %v2674
        %v2676 = vpop.f32.mrb[0].mxu0
        %2677 = vmatprep.mubr.f32.mxu0 0.0
        %2678 = vmatmul.mubr.f32.gmra.mrb[0].mxu0 %v2469
        %v2679 = vpop.f32.mrb[0].mxu0
        %v2680 = vadd.f32 0.0, %v2679
        %v2681 = vpop.f32.mrb[0].mxu0
        %2682 = vmatprep.mubr.f32.mxu0 0.0
        %2683 = vmatmul.mubr.f32.gmra.mrb[0].mxu0 %v2471
        %v2684 = vpop.f32.mrb[0].mxu0
        %v2685 = vadd.f32 0.0, %v2684
        %v2686 = vpop.f32.mrb[0].mxu0
        %2687 = vmatprep.mubr.f32.mxu0 0.0
        %2688 = vmatmul.mubr.f32.gmra.mrb[0].mxu0 %v2473
        %v2689 = vpop.f32.mrb[0].mxu0
        %v2690 = vadd.f32 0.0, %v2689
        %v2691 = vpop.f32.mrb[0].mxu0
        %2692 = vmatprep.mubr.f32.mxu0 0.0
        %2693 = vmatmul.mubr.f32.gmra.mrb[0].mxu0 %v2475
        %v2694 = vpop.f32.mrb[0].mxu0
        %v2695 = vadd.f32 0.0, %v2694
        %v2696 = vpop.f32.mrb[0].mxu0
        %2697 = vmatprep.mubr.f32.mxu0 0.0
        %2698 = vmatmul.mubr.f32.gmra.mrb[0].mxu0 %v2477
        %v2699 = vpop.f32.mrb[0].mxu0
        %v2700 = vadd.f32 0.0, %v2699
        %v2701 = vpop.f32.mrb[0].mxu0
        %2702 = vdwg.mxu0
        %v2703 = vrcp.pop %v2479
        %v2704 = vrcp.pop %v2481
        %v2705 = vrcp.pop %v2483
        %v2706 = vrcp.pop %v2485
        %v2707 = vrcp.pop %v2487
        %v2708 = vrcp.pop %v2489
        %v2709 = vrcp.pop %v2491
        %v2710 = vrcp.pop %v2493
        %v2711 = vrcp.pop %v2495
        %v2712 = vrcp.pop %v2497
        %v2713 = vrcp.pop %v2499
        %v2714 = vrcp.pop %v2501
        %v2715 = vrcp.pop %v2503
        %v2716 = vrcp.pop %v2505
        %v2717 = vrcp.pop %v2507
        %v2718 = vrcp.pop %v2509
        %v2719 = vmul.f32 %v2625, %v2703
        %v2720 = vmul.f32 %v2630, %v2704
        %v2721 = vmul.f32 %v2635, %v2705
        %v2722 = vmul.f32 %v2640, %v2706
        %v2723 = vmul.f32 %v2645, %v2707
        %v2724 = vmul.f32 %v2650, %v2708
        %v2725 = vmul.f32 %v2655, %v2709
        %v2726 = vmul.f32 %v2660, %v2710
        %v2727 = vmul.f32 %v2665, %v2711
        %v2728 = vmul.f32 %v2670, %v2712
        %v2729 = vmul.f32 %v2675, %v2713
        %v2730 = vmul.f32 %v2680, %v2714
        %v2731 = vmul.f32 %v2685, %v2715
        %v2732 = vmul.f32 %v2690, %v2716
        %v2733 = vmul.f32 %v2695, %v2717
        %v2734 = vmul.f32 %v2700, %v2718
        %2735 = vrot.lane.b32.xlu0 %v952, 32
        %v2736 = vpop.permute.xlu0 %2735
        %2737 = vrot.lane.b32.xlu0 %v953, 32
        %v2738 = vpop.permute.xlu0 %2737
        %2739 = vrot.lane.b32.xlu0 %v954, 32
        %v2740 = vpop.permute.xlu0 %2739
        %2741 = vrot.lane.b32.xlu0 %v955, 32
        %v2742 = vpop.permute.xlu0 %2741
        %2743 = vrot.lane.b32.xlu0 %v956, 32
        %v2744 = vpop.permute.xlu0 %2743
        %2745 = vrot.lane.b32.xlu0 %v957, 32
        %v2746 = vpop.permute.xlu0 %2745
        %2747 = vrot.lane.b32.xlu0 %v958, 32
        %v2748 = vpop.permute.xlu0 %2747
        %2749 = vrot.lane.b32.xlu0 %v959, 32
        %v2750 = vpop.permute.xlu0 %2749
        %2751 = vrot.lane.b32.xlu0 %v960, 32
        %v2752 = vpop.permute.xlu0 %2751
        %2753 = vrot.lane.b32.xlu0 %v961, 32
        %v2754 = vpop.permute.xlu0 %2753
        %2755 = vrot.lane.b32.xlu0 %v962, 32
        %v2756 = vpop.permute.xlu0 %2755
        %2757 = vrot.lane.b32.xlu0 %v963, 32
        %v2758 = vpop.permute.xlu0 %2757
        %2759 = vrot.lane.b32.xlu0 %v964, 32
        %v2760 = vpop.permute.xlu0 %2759
        %2761 = vrot.lane.b32.xlu0 %v965, 32
        %v2762 = vpop.permute.xlu0 %2761
        %2763 = vrot.lane.b32.xlu0 %v966, 32
        %v2764 = vpop.permute.xlu0 %2763
        %2765 = vrot.lane.b32.xlu0 %v967, 32
        %v2766 = vpop.permute.xlu0 %2765
        %2767 = vrot.lane.b32.xlu0 %v697, 32
        %v2768 = vpop.permute.xlu0 %2767
        %2769 = vrot.lane.b32.xlu0 %v703, 32
        %v2770 = vpop.permute.xlu0 %2769
        %2771 = vrot.lane.b32.xlu0 %v709, 32
        %v2772 = vpop.permute.xlu0 %2771
        %2773 = vrot.lane.b32.xlu0 %v715, 32
        %v2774 = vpop.permute.xlu0 %2773
        %2775 = vrot.lane.b32.xlu0 %v721, 32
        %v2776 = vpop.permute.xlu0 %2775
        %2777 = vrot.lane.b32.xlu0 %v727, 32
        %v2778 = vpop.permute.xlu0 %2777
        %2779 = vrot.lane.b32.xlu0 %v733, 32
        %v2780 = vpop.permute.xlu0 %2779
        %2781 = vrot.lane.b32.xlu0 %v739, 32
        %v2782 = vpop.permute.xlu0 %2781
        %2783 = vrot.lane.b32.xlu0 %v745, 32
        %v2784 = vpop.permute.xlu0 %2783
        %2785 = vrot.lane.b32.xlu0 %v751, 32
        %v2786 = vpop.permute.xlu0 %2785
        %2787 = vrot.lane.b32.xlu0 %v757, 32
        %v2788 = vpop.permute.xlu0 %2787
        %2789 = vrot.lane.b32.xlu0 %v763, 32
        %v2790 = vpop.permute.xlu0 %2789
        %2791 = vrot.lane.b32.xlu0 %v769, 32
        %v2792 = vpop.permute.xlu0 %2791
        %2793 = vrot.lane.b32.xlu0 %v775, 32
        %v2794 = vpop.permute.xlu0 %2793
        %2795 = vrot.lane.b32.xlu0 %v781, 32
        %v2796 = vpop.permute.xlu0 %2795
        %2797 = vrot.lane.b32.xlu0 %v787, 32
        %v2798 = vpop.permute.xlu0 %2797
        %v2799 = vsel %vm968, %v2736, 0
        %v2801 = vsel %vm968, %v2738, 0
        %v2803 = vsel %vm968, %v2740, 0
        %v2805 = vsel %vm968, %v2742, 0
        %v2807 = vsel %vm968, %v2744, 0
        %v2809 = vsel %vm968, %v2746, 0
        %v2811 = vsel %vm968, %v2748, 0
        %v2813 = vsel %vm968, %v2750, 0
        %v2815 = vsel %vm968, %v2752, 0
        %v2817 = vsel %vm968, %v2754, 0
        %v2819 = vsel %vm968, %v2756, 0
        %v2821 = vsel %vm968, %v2758, 0
        %v2823 = vsel %vm968, %v2760, 0
        %v2825 = vsel %vm968, %v2762, 0
        %v2827 = vsel %vm968, %v2764, 0
        %v2829 = vsel %vm968, %v2766, 0
        %v2831 = vsel %vm968, %v2768, 0
        %v2833 = vsel %vm968, %v2770, 0
        %v2835 = vsel %vm968, %v2772, 0
        %v2837 = vsel %vm968, %v2774, 0
        %v2839 = vsel %vm968, %v2776, 0
        %v2841 = vsel %vm968, %v2778, 0
        %v2843 = vsel %vm968, %v2780, 0
        %v2845 = vsel %vm968, %v2782, 0
        %v2847 = vsel %vm968, %v2784, 0
        %v2849 = vsel %vm968, %v2786, 0
        %v2851 = vsel %vm968, %v2788, 0
        %v2853 = vsel %vm968, %v2790, 0
        %v2855 = vsel %vm968, %v2792, 0
        %v2857 = vsel %vm968, %v2794, 0
        %v2859 = vsel %vm968, %v2796, 0
        %v2861 = vsel %vm968, %v2798, 0
        %2863 = vmatprep.subr.mxu0 0.0
        %2864 = vmatpush1.xpose.msra.mxu0 %v2831
        %2865 = vmatprep.subr.mxu0 0.0
        %2866 = vmatpush1.xpose.msra.mxu0 %v2833
        %2867 = vmatprep.subr.mxu0 0.0
        %2868 = vmatpush1.xpose.msra.mxu0 %v2835
        %2869 = vmatprep.subr.mxu0 0.0
        %2870 = vmatpush1.xpose.msra.mxu0 %v2837
        %2871 = vmatprep.subr.mxu0 0.0
        %2872 = vmatpush1.xpose.msra.mxu0 %v2839
        %2873 = vmatprep.subr.mxu0 0.0
        %2874 = vmatpush1.xpose.msra.mxu0 %v2841
        %2875 = vmatprep.subr.mxu0 0.0
        %2876 = vmatpush1.xpose.msra.mxu0 %v2843
        %2877 = vmatprep.subr.mxu0 0.0
        %2878 = vmatpush1.xpose.msra.mxu0 %v2845
        %2879 = vmatprep.subr.mxu0 0.0
        %2880 = vmatpush1.xpose.msra.mxu0 %v2847
        %2881 = vmatprep.subr.mxu0 0.0
        %2882 = vmatpush1.xpose.msra.mxu0 %v2849
        %2883 = vmatprep.subr.mxu0 0.0
        %2884 = vmatpush1.xpose.msra.mxu0 %v2851
        %2885 = vmatprep.subr.mxu0 0.0
        %2886 = vmatpush1.xpose.msra.mxu0 %v2853
        %2887 = vmatprep.subr.mxu0 0.0
        %2888 = vmatpush1.xpose.msra.mxu0 %v2855
        %2889 = vmatprep.subr.mxu0 0.0
        %2890 = vmatpush1.xpose.msra.mxu0 %v2857
        %2891 = vmatprep.subr.mxu0 0.0
        %2892 = vmatpush1.xpose.msra.mxu0 %v2859
        %2893 = vmatprep.subr.mxu0 0.0
        %2894 = vmatpush1.xpose.msra.mxu0 %v2861
        %2895 = vmatprep.subr.mxu0 0.0
        %2896 = vmatpush1.xpose.msra.mxu0 0.0
        %2897 = vmatprep.subr.mxu0 0.0
        %2898 = vmatpush1.xpose.msra.mxu0 0.0
        %2899 = vmatprep.subr.mxu0 0.0
        %2900 = vmatpush1.xpose.msra.mxu0 0.0
        %2901 = vmatprep.subr.mxu0 0.0
        %2902 = vmatpush1.xpose.msra.mxu0 0.0
        %2903 = vmatprep.subr.mxu0 0.0
        %2904 = vmatpush1.xpose.msra.mxu0 0.0
        %2905 = vmatprep.subr.mxu0 0.0
        %2906 = vmatpush1.xpose.msra.mxu0 0.0
        %2907 = vmatprep.subr.mxu0 0.0
        %2908 = vmatpush1.xpose.msra.mxu0 0.0
        %2909 = vmatprep.subr.mxu0 0.0
        %2910 = vmatpush1.xpose.msra.mxu0 0.0
        %2911 = vmatprep.subr.mxu0 0.0
        %2912 = vmatpush1.xpose.msra.mxu0 0.0
        %2913 = vmatprep.subr.mxu0 0.0
        %2914 = vmatpush1.xpose.msra.mxu0 0.0
        %2915 = vmatprep.subr.mxu0 0.0
        %2916 = vmatpush1.xpose.msra.mxu0 0.0
        %2917 = vmatprep.subr.mxu0 0.0
        %2918 = vmatpush1.xpose.msra.mxu0 0.0
        %2919 = vmatprep.subr.mxu0 0.0
        %2920 = vmatpush1.xpose.msra.mxu0 0.0
        %2921 = vmatprep.subr.mxu0 0.0
        %2922 = vmatpush1.xpose.msra.mxu0 0.0
        %2923 = vmatprep.subr.mxu0 0.0
        %2924 = vmatpush1.xpose.msra.mxu0 0.0
        %2925 = vmatprep.subr.mxu0 0.0
        %2926 = vmatpush1.xpose.msra.mxu0 0.0
        %2927 = vmatprep.mubr.f32.mxu0 0.0
        %2928 = vmatmul.mubr.f32.gmra.mrb[0].mxu0 %v2799
        %v2929 = vpop.f32.mrb[0].mxu0
        %v2930 = vadd.f32 0.0, %v2929
        %v2931 = vpop.f32.mrb[0].mxu0
        %2932 = vmatprep.mubr.f32.mxu0 0.0
        %2933 = vmatmul.mubr.f32.gmra.mrb[0].mxu0 %v2801
        %v2934 = vpop.f32.mrb[0].mxu0
        %v2935 = vadd.f32 0.0, %v2934
        %v2936 = vpop.f32.mrb[0].mxu0
        %2937 = vmatprep.mubr.f32.mxu0 0.0
        %2938 = vmatmul.mubr.f32.gmra.mrb[0].mxu0 %v2803
        %v2939 = vpop.f32.mrb[0].mxu0
        %v2940 = vadd.f32 0.0, %v2939
        %v2941 = vpop.f32.mrb[0].mxu0
        %2942 = vmatprep.mubr.f32.mxu0 0.0
        %2943 = vmatmul.mubr.f32.gmra.mrb[0].mxu0 %v2805
        %v2944 = vpop.f32.mrb[0].mxu0
        %v2945 = vadd.f32 0.0, %v2944
        %v2946 = vpop.f32.mrb[0].mxu0
        %2947 = vmatprep.mubr.f32.mxu0 0.0
        %2948 = vmatmul.mubr.f32.gmra.mrb[0].mxu0 %v2807
        %v2949 = vpop.f32.mrb[0].mxu0
        %v2950 = vadd.f32 0.0, %v2949
        %v2951 = vpop.f32.mrb[0].mxu0
        %2952 = vmatprep.mubr.f32.mxu0 0.0
        %2953 = vmatmul.mubr.f32.gmra.mrb[0].mxu0 %v2809
        %v2954 = vpop.f32.mrb[0].mxu0
        %v2955 = vadd.f32 0.0, %v2954
        %v2956 = vpop.f32.mrb[0].mxu0
        %2957 = vmatprep.mubr.f32.mxu0 0.0
        %2958 = vmatmul.mubr.f32.gmra.mrb[0].mxu0 %v2811
        %v2959 = vpop.f32.mrb[0].mxu0
        %v2960 = vadd.f32 0.0, %v2959
        %v2961 = vpop.f32.mrb[0].mxu0
        %2962 = vmatprep.mubr.f32.mxu0 0.0
        %2963 = vmatmul.mubr.f32.gmra.mrb[0].mxu0 %v2813
        %v2964 = vpop.f32.mrb[0].mxu0
        %v2965 = vadd.f32 0.0, %v2964
        %v2966 = vpop.f32.mrb[0].mxu0
        %2967 = vmatprep.mubr.f32.mxu0 0.0
        %2968 = vmatmul.mubr.f32.gmra.mrb[0].mxu0 %v2815
        %v2969 = vpop.f32.mrb[0].mxu0
        %v2970 = vadd.f32 0.0, %v2969
        %v2971 = vpop.f32.mrb[0].mxu0
        %2972 = vmatprep.mubr.f32.mxu0 0.0
        %2973 = vmatmul.mubr.f32.gmra.mrb[0].mxu0 %v2817
        %v2974 = vpop.f32.mrb[0].mxu0
        %v2975 = vadd.f32 0.0, %v2974
        %v2976 = vpop.f32.mrb[0].mxu0
        %2977 = vmatprep.mubr.f32.mxu0 0.0
        %2978 = vmatmul.mubr.f32.gmra.mrb[0].mxu0 %v2819
        %v2979 = vpop.f32.mrb[0].mxu0
        %v2980 = vadd.f32 0.0, %v2979
        %v2981 = vpop.f32.mrb[0].mxu0
        %2982 = vmatprep.mubr.f32.mxu0 0.0
        %2983 = vmatmul.mubr.f32.gmra.mrb[0].mxu0 %v2821
        %v2984 = vpop.f32.mrb[0].mxu0
        %v2985 = vadd.f32 0.0, %v2984
        %v2986 = vpop.f32.mrb[0].mxu0
        %2987 = vmatprep.mubr.f32.mxu0 0.0
        %2988 = vmatmul.mubr.f32.gmra.mrb[0].mxu0 %v2823
        %v2989 = vpop.f32.mrb[0].mxu0
        %v2990 = vadd.f32 0.0, %v2989
        %v2991 = vpop.f32.mrb[0].mxu0
        %2992 = vmatprep.mubr.f32.mxu0 0.0
        %2993 = vmatmul.mubr.f32.gmra.mrb[0].mxu0 %v2825
        %v2994 = vpop.f32.mrb[0].mxu0
        %v2995 = vadd.f32 0.0, %v2994
        %v2996 = vpop.f32.mrb[0].mxu0
        %2997 = vmatprep.mubr.f32.mxu0 0.0
        %2998 = vmatmul.mubr.f32.gmra.mrb[0].mxu0 %v2827
        %v2999 = vpop.f32.mrb[0].mxu0
        %v3000 = vadd.f32 0.0, %v2999
        %v3001 = vpop.f32.mrb[0].mxu0
        %3002 = vmatprep.mubr.f32.mxu0 0.0
        %3003 = vmatmul.mubr.f32.gmra.mrb[0].mxu0 %v2829
        %v3004 = vpop.f32.mrb[0].mxu0
        %v3005 = vadd.f32 0.0, %v3004
        %v3006 = vpop.f32.mrb[0].mxu0
        %3007 = vdwg.mxu0
        %3008 = vmax.xlane.f32.xlu0 %v2930
        %v3009 = vpop.xlane.xlu0 %3008
        %3010 = vmax.xlane.f32.xlu0 %v2935
        %v3011 = vpop.xlane.xlu0 %3010
        %3012 = vmax.xlane.f32.xlu0 %v2940
        %v3013 = vpop.xlane.xlu0 %3012
        %3014 = vmax.xlane.f32.xlu0 %v2945
        %v3015 = vpop.xlane.xlu0 %3014
        %3016 = vmax.xlane.f32.xlu0 %v2950
        %v3017 = vpop.xlane.xlu0 %3016
        %3018 = vmax.xlane.f32.xlu0 %v2955
        %v3019 = vpop.xlane.xlu0 %3018
        %3020 = vmax.xlane.f32.xlu0 %v2960
        %v3021 = vpop.xlane.xlu0 %3020
        %3022 = vmax.xlane.f32.xlu0 %v2965
        %v3023 = vpop.xlane.xlu0 %3022
        %3024 = vmax.xlane.f32.xlu0 %v2970
        %v3025 = vpop.xlane.xlu0 %3024
        %3026 = vmax.xlane.f32.xlu0 %v2975
        %v3027 = vpop.xlane.xlu0 %3026
        %3028 = vmax.xlane.f32.xlu0 %v2980
        %v3029 = vpop.xlane.xlu0 %3028
        %3030 = vmax.xlane.f32.xlu0 %v2985
        %v3031 = vpop.xlane.xlu0 %3030
        %3032 = vmax.xlane.f32.xlu0 %v2990
        %v3033 = vpop.xlane.xlu0 %3032
        %3034 = vmax.xlane.f32.xlu0 %v2995
        %v3035 = vpop.xlane.xlu0 %3034
        %3036 = vmax.xlane.f32.xlu0 %v3000
        %v3037 = vpop.xlane.xlu0 %3036
        %3038 = vmax.xlane.f32.xlu0 %v3005
        %v3039 = vpop.xlane.xlu0 %3038
        %v3040 = vsub.f32 %v2930, %v3009
        %v3041 = vsub.f32 %v2935, %v3011
        %v3042 = vsub.f32 %v2940, %v3013
        %v3043 = vsub.f32 %v2945, %v3015
        %v3044 = vsub.f32 %v2950, %v3017
        %v3045 = vsub.f32 %v2955, %v3019
        %v3046 = vsub.f32 %v2960, %v3021
        %v3047 = vsub.f32 %v2965, %v3023
        %v3048 = vsub.f32 %v2970, %v3025
        %v3049 = vsub.f32 %v2975, %v3027
        %v3050 = vsub.f32 %v2980, %v3029
        %v3051 = vsub.f32 %v2985, %v3031
        %v3052 = vsub.f32 %v2990, %v3033
        %v3053 = vsub.f32 %v2995, %v3035
        %v3054 = vsub.f32 %v3000, %v3037
        %v3055 = vsub.f32 %v3005, %v3039
        %v3056 = vmul.f32 %v3040, 1.442695
        %v3057 = vpow.pop %v3056
        %v3058 = vmul.f32 %v3041, 1.442695
        %v3059 = vpow.pop %v3058
        %v3060 = vmul.f32 %v3042, 1.442695
        %v3061 = vpow.pop %v3060
        %v3062 = vmul.f32 %v3043, 1.442695
        %v3063 = vpow.pop %v3062
        %v3064 = vmul.f32 %v3044, 1.442695
        %v3065 = vpow.pop %v3064
        %v3066 = vmul.f32 %v3045, 1.442695
        %v3067 = vpow.pop %v3066
        %v3068 = vmul.f32 %v3046, 1.442695
        %v3069 = vpow.pop %v3068
        %v3070 = vmul.f32 %v3047, 1.442695
        %v3071 = vpow.pop %v3070
        %v3072 = vmul.f32 %v3048, 1.442695
        %v3073 = vpow.pop %v3072
        %v3074 = vmul.f32 %v3049, 1.442695
        %v3075 = vpow.pop %v3074
        %v3076 = vmul.f32 %v3050, 1.442695
        %v3077 = vpow.pop %v3076
        %v3078 = vmul.f32 %v3051, 1.442695
        %v3079 = vpow.pop %v3078
        %v3080 = vmul.f32 %v3052, 1.442695
        %v3081 = vpow.pop %v3080
        %v3082 = vmul.f32 %v3053, 1.442695
        %v3083 = vpow.pop %v3082
        %v3084 = vmul.f32 %v3054, 1.442695
        %v3085 = vpow.pop %v3084
        %v3086 = vmul.f32 %v3055, 1.442695
        %v3087 = vpow.pop %v3086
        %3088 = vadd.xlane.f32.xlu0 %v3057
        %v3089 = vpop.xlane.xlu0 %3088
        %3090 = vadd.xlane.f32.xlu0 %v3059
        %v3091 = vpop.xlane.xlu0 %3090
        %3092 = vadd.xlane.f32.xlu0 %v3061
        %v3093 = vpop.xlane.xlu0 %3092
        %3094 = vadd.xlane.f32.xlu0 %v3063
        %v3095 = vpop.xlane.xlu0 %3094
        %3096 = vadd.xlane.f32.xlu0 %v3065
        %v3097 = vpop.xlane.xlu0 %3096
        %3098 = vadd.xlane.f32.xlu0 %v3067
        %v3099 = vpop.xlane.xlu0 %3098
        %3100 = vadd.xlane.f32.xlu0 %v3069
        %v3101 = vpop.xlane.xlu0 %3100
        %3102 = vadd.xlane.f32.xlu0 %v3071
        %v3103 = vpop.xlane.xlu0 %3102
        %3104 = vadd.xlane.f32.xlu0 %v3073
        %v3105 = vpop.xlane.xlu0 %3104
        %3106 = vadd.xlane.f32.xlu0 %v3075
        %v3107 = vpop.xlane.xlu0 %3106
        %3108 = vadd.xlane.f32.xlu0 %v3077
        %v3109 = vpop.xlane.xlu0 %3108
        %3110 = vadd.xlane.f32.xlu0 %v3079
        %v3111 = vpop.xlane.xlu0 %3110
        %3112 = vadd.xlane.f32.xlu0 %v3081
        %v3113 = vpop.xlane.xlu0 %3112
        %3114 = vadd.xlane.f32.xlu0 %v3083
        %v3115 = vpop.xlane.xlu0 %3114
        %3116 = vadd.xlane.f32.xlu0 %v3085
        %v3117 = vpop.xlane.xlu0 %3116
        %3118 = vadd.xlane.f32.xlu0 %v3087
        %v3119 = vpop.xlane.xlu0 %3118
        %3120 = vrot.lane.b32.xlu0 %v858, 32
        %v3121 = vpop.permute.xlu0 %3120
        %3122 = vrot.lane.b32.xlu0 %v864, 32
        %v3123 = vpop.permute.xlu0 %3122
        %3124 = vrot.lane.b32.xlu0 %v870, 32
        %v3125 = vpop.permute.xlu0 %3124
        %3126 = vrot.lane.b32.xlu0 %v876, 32
        %v3127 = vpop.permute.xlu0 %3126
        %3128 = vrot.lane.b32.xlu0 %v882, 32
        %v3129 = vpop.permute.xlu0 %3128
        %3130 = vrot.lane.b32.xlu0 %v888, 32
        %v3131 = vpop.permute.xlu0 %3130
        %3132 = vrot.lane.b32.xlu0 %v894, 32
        %v3133 = vpop.permute.xlu0 %3132
        %3134 = vrot.lane.b32.xlu0 %v900, 32
        %v3135 = vpop.permute.xlu0 %3134
        %3136 = vrot.lane.b32.xlu0 %v906, 32
        %v3137 = vpop.permute.xlu0 %3136
        %3138 = vrot.lane.b32.xlu0 %v912, 32
        %v3139 = vpop.permute.xlu0 %3138
        %3140 = vrot.lane.b32.xlu0 %v918, 32
        %v3141 = vpop.permute.xlu0 %3140
        %3142 = vrot.lane.b32.xlu0 %v924, 32
        %v3143 = vpop.permute.xlu0 %3142
        %3144 = vrot.lane.b32.xlu0 %v930, 32
        %v3145 = vpop.permute.xlu0 %3144
        %3146 = vrot.lane.b32.xlu0 %v936, 32
        %v3147 = vpop.permute.xlu0 %3146
        %3148 = vrot.lane.b32.xlu0 %v942, 32
        %v3149 = vpop.permute.xlu0 %3148
        %3150 = vrot.lane.b32.xlu0 %v948, 32
        %v3151 = vpop.permute.xlu0 %3150
        %3168 = vmatprep.subr.mxu0 0.0
        %3169 = vmatpush1.msra.mxu0 %v3121
        %3170 = vmatprep.subr.mxu0 0.0
        %3171 = vmatpush1.msra.mxu0 %v3123
        %3172 = vmatprep.subr.mxu0 0.0
        %3173 = vmatpush1.msra.mxu0 %v3125
        %3174 = vmatprep.subr.mxu0 0.0
        %3175 = vmatpush1.msra.mxu0 %v3127
        %3176 = vmatprep.subr.mxu0 0.0
        %3177 = vmatpush1.msra.mxu0 %v3129
        %3178 = vmatprep.subr.mxu0 0.0
        %3179 = vmatpush1.msra.mxu0 %v3131
        %3180 = vmatprep.subr.mxu0 0.0
        %3181 = vmatpush1.msra.mxu0 %v3133
        %3182 = vmatprep.subr.mxu0 0.0
        %3183 = vmatpush1.msra.mxu0 %v3135
        %3184 = vmatprep.subr.mxu0 0.0
        %3185 = vmatpush1.msra.mxu0 %v3137
        %3186 = vmatprep.subr.mxu0 0.0
        %3187 = vmatpush1.msra.mxu0 %v3139
        %3188 = vmatprep.subr.mxu0 0.0
        %3189 = vmatpush1.msra.mxu0 %v3141
        %3190 = vmatprep.subr.mxu0 0.0
        %3191 = vmatpush1.msra.mxu0 %v3143
        %3192 = vmatprep.subr.mxu0 0.0
        %3193 = vmatpush1.msra.mxu0 %v3145
        %3194 = vmatprep.subr.mxu0 0.0
        %3195 = vmatpush1.msra.mxu0 %v3147
        %3196 = vmatprep.subr.mxu0 0.0
        %3197 = vmatpush1.msra.mxu0 %v3149
        %3198 = vmatprep.subr.mxu0 0.0
        %3199 = vmatpush1.msra.mxu0 %v3151
        %3200 = vmatprep.subr.mxu0 0.0
        %3201 = vmatpush1.msra.mxu0 0.0
        %3202 = vmatprep.subr.mxu0 0.0
        %3203 = vmatpush1.msra.mxu0 0.0
        %3204 = vmatprep.subr.mxu0 0.0
        %3205 = vmatpush1.msra.mxu0 0.0
        %3206 = vmatprep.subr.mxu0 0.0
        %3207 = vmatpush1.msra.mxu0 0.0
        %3208 = vmatprep.subr.mxu0 0.0
        %3209 = vmatpush1.msra.mxu0 0.0
        %3210 = vmatprep.subr.mxu0 0.0
        %3211 = vmatpush1.msra.mxu0 0.0
        %3212 = vmatprep.subr.mxu0 0.0
        %3213 = vmatpush1.msra.mxu0 0.0
        %3214 = vmatprep.subr.mxu0 0.0
        %3215 = vmatpush1.msra.mxu0 0.0
        %3216 = vmatprep.subr.mxu0 0.0
        %3217 = vmatpush1.msra.mxu0 0.0
        %3218 = vmatprep.subr.mxu0 0.0
        %3219 = vmatpush1.msra.mxu0 0.0
        %3220 = vmatprep.subr.mxu0 0.0
        %3221 = vmatpush1.msra.mxu0 0.0
        %3222 = vmatprep.subr.mxu0 0.0
        %3223 = vmatpush1.msra.mxu0 0.0
        %3224 = vmatprep.subr.mxu0 0.0
        %3225 = vmatpush1.msra.mxu0 0.0
        %3226 = vmatprep.subr.mxu0 0.0
        %3227 = vmatpush1.msra.mxu0 0.0
        %3228 = vmatprep.subr.mxu0 0.0
        %3229 = vmatpush1.msra.mxu0 0.0
        %3230 = vmatprep.subr.mxu0 0.0
        %3231 = vmatpush1.msra.mxu0 0.0
        %3232 = vmatprep.mubr.f32.mxu0 0.0
        %3233 = vmatmul.mubr.f32.gmra.mrb[0].mxu0 %v3057
        %v3234 = vpop.f32.mrb[0].mxu0
        %v3235 = vadd.f32 0.0, %v3234
        %v3236 = vpop.f32.mrb[0].mxu0
        %3237 = vmatprep.mubr.f32.mxu0 0.0
        %3238 = vmatmul.mubr.f32.gmra.mrb[0].mxu0 %v3059
        %v3239 = vpop.f32.mrb[0].mxu0
        %v3240 = vadd.f32 0.0, %v3239
        %v3241 = vpop.f32.mrb[0].mxu0
        %3242 = vmatprep.mubr.f32.mxu0 0.0
        %3243 = vmatmul.mubr.f32.gmra.mrb[0].mxu0 %v3061
        %v3244 = vpop.f32.mrb[0].mxu0
        %v3245 = vadd.f32 0.0, %v3244
        %v3246 = vpop.f32.mrb[0].mxu0
        %3247 = vmatprep.mubr.f32.mxu0 0.0
        %3248 = vmatmul.mubr.f32.gmra.mrb[0].mxu0 %v3063
        %v3249 = vpop.f32.mrb[0].mxu0
        %v3250 = vadd.f32 0.0, %v3249
        %v3251 = vpop.f32.mrb[0].mxu0
        %3252 = vmatprep.mubr.f32.mxu0 0.0
        %3253 = vmatmul.mubr.f32.gmra.mrb[0].mxu0 %v3065
        %v3254 = vpop.f32.mrb[0].mxu0
        %v3255 = vadd.f32 0.0, %v3254
        %v3256 = vpop.f32.mrb[0].mxu0
        %3257 = vmatprep.mubr.f32.mxu0 0.0
        %3258 = vmatmul.mubr.f32.gmra.mrb[0].mxu0 %v3067
        %v3259 = vpop.f32.mrb[0].mxu0
        %v3260 = vadd.f32 0.0, %v3259
        %v3261 = vpop.f32.mrb[0].mxu0
        %3262 = vmatprep.mubr.f32.mxu0 0.0
        %3263 = vmatmul.mubr.f32.gmra.mrb[0].mxu0 %v3069
        %v3264 = vpop.f32.mrb[0].mxu0
        %v3265 = vadd.f32 0.0, %v3264
        %v3266 = vpop.f32.mrb[0].mxu0
        %3267 = vmatprep.mubr.f32.mxu0 0.0
        %3268 = vmatmul.mubr.f32.gmra.mrb[0].mxu0 %v3071
        %v3269 = vpop.f32.mrb[0].mxu0
        %v3270 = vadd.f32 0.0, %v3269
        %v3271 = vpop.f32.mrb[0].mxu0
        %3272 = vmatprep.mubr.f32.mxu0 0.0
        %3273 = vmatmul.mubr.f32.gmra.mrb[0].mxu0 %v3073
        %v3274 = vpop.f32.mrb[0].mxu0
        %v3275 = vadd.f32 0.0, %v3274
        %v3276 = vpop.f32.mrb[0].mxu0
        %3277 = vmatprep.mubr.f32.mxu0 0.0
        %3278 = vmatmul.mubr.f32.gmra.mrb[0].mxu0 %v3075
        %v3279 = vpop.f32.mrb[0].mxu0
        %v3280 = vadd.f32 0.0, %v3279
        %v3281 = vpop.f32.mrb[0].mxu0
        %3282 = vmatprep.mubr.f32.mxu0 0.0
        %3283 = vmatmul.mubr.f32.gmra.mrb[0].mxu0 %v3077
        %v3284 = vpop.f32.mrb[0].mxu0
        %v3285 = vadd.f32 0.0, %v3284
        %v3286 = vpop.f32.mrb[0].mxu0
        %3287 = vmatprep.mubr.f32.mxu0 0.0
        %3288 = vmatmul.mubr.f32.gmra.mrb[0].mxu0 %v3079
        %v3289 = vpop.f32.mrb[0].mxu0
        %v3290 = vadd.f32 0.0, %v3289
        %v3291 = vpop.f32.mrb[0].mxu0
        %3292 = vmatprep.mubr.f32.mxu0 0.0
        %3293 = vmatmul.mubr.f32.gmra.mrb[0].mxu0 %v3081
        %v3294 = vpop.f32.mrb[0].mxu0
        %v3295 = vadd.f32 0.0, %v3294
        %v3296 = vpop.f32.mrb[0].mxu0
        %3297 = vmatprep.mubr.f32.mxu0 0.0
        %3298 = vmatmul.mubr.f32.gmra.mrb[0].mxu0 %v3083
        %v3299 = vpop.f32.mrb[0].mxu0
        %v3300 = vadd.f32 0.0, %v3299
        %v3301 = vpop.f32.mrb[0].mxu0
        %3302 = vmatprep.mubr.f32.mxu0 0.0
        %3303 = vmatmul.mubr.f32.gmra.mrb[0].mxu0 %v3085
        %v3304 = vpop.f32.mrb[0].mxu0
        %v3305 = vadd.f32 0.0, %v3304
        %v3306 = vpop.f32.mrb[0].mxu0
        %3307 = vmatprep.mubr.f32.mxu0 0.0
        %3308 = vmatmul.mubr.f32.gmra.mrb[0].mxu0 %v3087
        %v3309 = vpop.f32.mrb[0].mxu0
        %v3310 = vadd.f32 0.0, %v3309
        %v3311 = vpop.f32.mrb[0].mxu0
        %3312 = vdwg.mxu0
        %v3313 = vrcp.pop %v3089
        %v3314 = vrcp.pop %v3091
        %v3315 = vrcp.pop %v3093
        %v3316 = vrcp.pop %v3095
        %v3317 = vrcp.pop %v3097
        %v3318 = vrcp.pop %v3099
        %v3319 = vrcp.pop %v3101
        %v3320 = vrcp.pop %v3103
        %v3321 = vrcp.pop %v3105
        %v3322 = vrcp.pop %v3107
        %v3323 = vrcp.pop %v3109
        %v3324 = vrcp.pop %v3111
        %v3325 = vrcp.pop %v3113
        %v3326 = vrcp.pop %v3115
        %v3327 = vrcp.pop %v3117
        %v3328 = vrcp.pop %v3119
        %v3329 = vmul.f32 %v3235, %v3313
        %v3330 = vmul.f32 %v3240, %v3314
        %v3331 = vmul.f32 %v3245, %v3315
        %v3332 = vmul.f32 %v3250, %v3316
        %v3333 = vmul.f32 %v3255, %v3317
        %v3334 = vmul.f32 %v3260, %v3318
        %v3335 = vmul.f32 %v3265, %v3319
        %v3336 = vmul.f32 %v3270, %v3320
        %v3337 = vmul.f32 %v3275, %v3321
        %v3338 = vmul.f32 %v3280, %v3322
        %v3339 = vmul.f32 %v3285, %v3323
        %v3340 = vmul.f32 %v3290, %v3324
        %v3341 = vmul.f32 %v3295, %v3325
        %v3342 = vmul.f32 %v3300, %v3326
        %v3343 = vmul.f32 %v3305, %v3327
        %v3344 = vmul.f32 %v3310, %v3328
        %v3345 = vmul.f32 %v538, 0.17677669
        %v3346 = vmul.f32 %v544, 0.17677669
        %v3347 = vmul.f32 %v550, 0.17677669
        %v3348 = vmul.f32 %v556, 0.17677669
        %v3349 = vmul.f32 %v562, 0.17677669
        %v3350 = vmul.f32 %v568, 0.17677669
        %v3351 = vmul.f32 %v574, 0.17677669
        %v3352 = vmul.f32 %v580, 0.17677669
        %v3353 = vmul.f32 %v586, 0.17677669
        %v3354 = vmul.f32 %v592, 0.17677669
        %v3355 = vmul.f32 %v598, 0.17677669
        %v3356 = vmul.f32 %v604, 0.17677669
        %v3357 = vmul.f32 %v610, 0.17677669
        %v3358 = vmul.f32 %v616, 0.17677669
        %v3359 = vmul.f32 %v622, 0.17677669
        %v3360 = vmul.f32 %v628, 0.17677669
        %v3362 = vsel %vm968, %v3345, 0
        %v3365 = vsel %vm968, %v3346, 0
        %v3368 = vsel %vm968, %v3347, 0
        %v3371 = vsel %vm968, %v3348, 0
        %v3374 = vsel %vm968, %v3349, 0
        %v3377 = vsel %vm968, %v3350, 0
        %v3380 = vsel %vm968, %v3351, 0
        %v3383 = vsel %vm968, %v3352, 0
        %v3386 = vsel %vm968, %v3353, 0
        %v3389 = vsel %vm968, %v3354, 0
        %v3392 = vsel %vm968, %v3355, 0
        %v3395 = vsel %vm968, %v3356, 0
        %v3398 = vsel %vm968, %v3357, 0
        %v3401 = vsel %vm968, %v3358, 0
        %v3404 = vsel %vm968, %v3359, 0
        %v3407 = vsel %vm968, %v3360, 0
        %v3410 = vsel %vm968, %v699, 0
        %v3413 = vsel %vm968, %v705, 0
        %v3416 = vsel %vm968, %v711, 0
        %v3419 = vsel %vm968, %v717, 0
        %v3422 = vsel %vm968, %v723, 0
        %v3425 = vsel %vm968, %v729, 0
        %v3428 = vsel %vm968, %v735, 0
        %v3431 = vsel %vm968, %v741, 0
        %v3434 = vsel %vm968, %v747, 0
        %v3437 = vsel %vm968, %v753, 0
        %v3440 = vsel %vm968, %v759, 0
        %v3443 = vsel %vm968, %v765, 0
        %v3446 = vsel %vm968, %v771, 0
        %v3449 = vsel %vm968, %v777, 0
        %v3452 = vsel %vm968, %v783, 0
        %v3455 = vsel %vm968, %v789, 0
        %3457 = vmatprep.subr.mxu0 0.0
        %3458 = vmatpush1.xpose.msra.mxu0 %v3410
        %3459 = vmatprep.subr.mxu0 0.0
        %3460 = vmatpush1.xpose.msra.mxu0 %v3413
        %3461 = vmatprep.subr.mxu0 0.0
        %3462 = vmatpush1.xpose.msra.mxu0 %v3416
        %3463 = vmatprep.subr.mxu0 0.0
        %3464 = vmatpush1.xpose.msra.mxu0 %v3419
        %3465 = vmatprep.subr.mxu0 0.0
        %3466 = vmatpush1.xpose.msra.mxu0 %v3422
        %3467 = vmatprep.subr.mxu0 0.0
        %3468 = vmatpush1.xpose.msra.mxu0 %v3425
        %3469 = vmatprep.subr.mxu0 0.0
        %3470 = vmatpush1.xpose.msra.mxu0 %v3428
        %3471 = vmatprep.subr.mxu0 0.0
        %3472 = vmatpush1.xpose.msra.mxu0 %v3431
        %3473 = vmatprep.subr.mxu0 0.0
        %3474 = vmatpush1.xpose.msra.mxu0 %v3434
        %3475 = vmatprep.subr.mxu0 0.0
        %3476 = vmatpush1.xpose.msra.mxu0 %v3437
        %3477 = vmatprep.subr.mxu0 0.0
        %3478 = vmatpush1.xpose.msra.mxu0 %v3440
        %3479 = vmatprep.subr.mxu0 0.0
        %3480 = vmatpush1.xpose.msra.mxu0 %v3443
        %3481 = vmatprep.subr.mxu0 0.0
        %3482 = vmatpush1.xpose.msra.mxu0 %v3446
        %3483 = vmatprep.subr.mxu0 0.0
        %3484 = vmatpush1.xpose.msra.mxu0 %v3449
        %3485 = vmatprep.subr.mxu0 0.0
        %3486 = vmatpush1.xpose.msra.mxu0 %v3452
        %3487 = vmatprep.subr.mxu0 0.0
        %3488 = vmatpush1.xpose.msra.mxu0 %v3455
        %3489 = vmatprep.subr.mxu0 0.0
        %3490 = vmatpush1.xpose.msra.mxu0 0.0
        %3491 = vmatprep.subr.mxu0 0.0
        %3492 = vmatpush1.xpose.msra.mxu0 0.0
        %3493 = vmatprep.subr.mxu0 0.0
        %3494 = vmatpush1.xpose.msra.mxu0 0.0
        %3495 = vmatprep.subr.mxu0 0.0
        %3496 = vmatpush1.xpose.msra.mxu0 0.0
        %3497 = vmatprep.subr.mxu0 0.0
        %3498 = vmatpush1.xpose.msra.mxu0 0.0
        %3499 = vmatprep.subr.mxu0 0.0
        %3500 = vmatpush1.xpose.msra.mxu0 0.0
        %3501 = vmatprep.subr.mxu0 0.0
        %3502 = vmatpush1.xpose.msra.mxu0 0.0
        %3503 = vmatprep.subr.mxu0 0.0
        %3504 = vmatpush1.xpose.msra.mxu0 0.0
        %3505 = vmatprep.subr.mxu0 0.0
        %3506 = vmatpush1.xpose.msra.mxu0 0.0
        %3507 = vmatprep.subr.mxu0 0.0
        %3508 = vmatpush1.xpose.msra.mxu0 0.0
        %3509 = vmatprep.subr.mxu0 0.0
        %3510 = vmatpush1.xpose.msra.mxu0 0.0
        %3511 = vmatprep.subr.mxu0 0.0
        %3512 = vmatpush1.xpose.msra.mxu0 0.0
        %3513 = vmatprep.subr.mxu0 0.0
        %3514 = vmatpush1.xpose.msra.mxu0 0.0
        %3515 = vmatprep.subr.mxu0 0.0
        %3516 = vmatpush1.xpose.msra.mxu0 0.0
        %3517 = vmatprep.subr.mxu0 0.0
        %3518 = vmatpush1.xpose.msra.mxu0 0.0
        %3519 = vmatprep.subr.mxu0 0.0
        %3520 = vmatpush1.xpose.msra.mxu0 0.0
        %3521 = vmatprep.mubr.f32.mxu0 0.0
        %3522 = vmatmul.mubr.f32.gmra.mrb[0].mxu0 %v3362
        %v3523 = vpop.f32.mrb[0].mxu0
        %v3524 = vadd.f32 0.0, %v3523
        %v3525 = vpop.f32.mrb[0].mxu0
        %3526 = vmatprep.mubr.f32.mxu0 0.0
        %3527 = vmatmul.mubr.f32.gmra.mrb[0].mxu0 %v3365
        %v3528 = vpop.f32.mrb[0].mxu0
        %v3529 = vadd.f32 0.0, %v3528
        %v3530 = vpop.f32.mrb[0].mxu0
        %3531 = vmatprep.mubr.f32.mxu0 0.0
        %3532 = vmatmul.mubr.f32.gmra.mrb[0].mxu0 %v3368
        %v3533 = vpop.f32.mrb[0].mxu0
        %v3534 = vadd.f32 0.0, %v3533
        %v3535 = vpop.f32.mrb[0].mxu0
        %3536 = vmatprep.mubr.f32.mxu0 0.0
        %3537 = vmatmul.mubr.f32.gmra.mrb[0].mxu0 %v3371
        %v3538 = vpop.f32.mrb[0].mxu0
        %v3539 = vadd.f32 0.0, %v3538
        %v3540 = vpop.f32.mrb[0].mxu0
        %3541 = vmatprep.mubr.f32.mxu0 0.0
        %3542 = vmatmul.mubr.f32.gmra.mrb[0].mxu0 %v3374
        %v3543 = vpop.f32.mrb[0].mxu0
        %v3544 = vadd.f32 0.0, %v3543
        %v3545 = vpop.f32.mrb[0].mxu0
        %3546 = vmatprep.mubr.f32.mxu0 0.0
        %3547 = vmatmul.mubr.f32.gmra.mrb[0].mxu0 %v3377
        %v3548 = vpop.f32.mrb[0].mxu0
        %v3549 = vadd.f32 0.0, %v3548
        %v3550 = vpop.f32.mrb[0].mxu0
        %3551 = vmatprep.mubr.f32.mxu0 0.0
        %3552 = vmatmul.mubr.f32.gmra.mrb[0].mxu0 %v3380
        %v3553 = vpop.f32.mrb[0].mxu0
        %v3554 = vadd.f32 0.0, %v3553
        %v3555 = vpop.f32.mrb[0].mxu0
        %3556 = vmatprep.mubr.f32.mxu0 0.0
        %3557 = vmatmul.mubr.f32.gmra.mrb[0].mxu0 %v3383
        %v3558 = vpop.f32.mrb[0].mxu0
        %v3559 = vadd.f32 0.0, %v3558
        %v3560 = vpop.f32.mrb[0].mxu0
        %3561 = vmatprep.mubr.f32.mxu0 0.0
        %3562 = vmatmul.mubr.f32.gmra.mrb[0].mxu0 %v3386
        %v3563 = vpop.f32.mrb[0].mxu0
        %v3564 = vadd.f32 0.0, %v3563
        %v3565 = vpop.f32.mrb[0].mxu0
        %3566 = vmatprep.mubr.f32.mxu0 0.0
        %3567 = vmatmul.mubr.f32.gmra.mrb[0].mxu0 %v3389
        %v3568 = vpop.f32.mrb[0].mxu0
        %v3569 = vadd.f32 0.0, %v3568
        %v3570 = vpop.f32.mrb[0].mxu0
        %3571 = vmatprep.mubr.f32.mxu0 0.0
        %3572 = vmatmul.mubr.f32.gmra.mrb[0].mxu0 %v3392
        %v3573 = vpop.f32.mrb[0].mxu0
        %v3574 = vadd.f32 0.0, %v3573
        %v3575 = vpop.f32.mrb[0].mxu0
        %3576 = vmatprep.mubr.f32.mxu0 0.0
        %3577 = vmatmul.mubr.f32.gmra.mrb[0].mxu0 %v3395
        %v3578 = vpop.f32.mrb[0].mxu0
        %v3579 = vadd.f32 0.0, %v3578
        %v3580 = vpop.f32.mrb[0].mxu0
        %3581 = vmatprep.mubr.f32.mxu0 0.0
        %3582 = vmatmul.mubr.f32.gmra.mrb[0].mxu0 %v3398
        %v3583 = vpop.f32.mrb[0].mxu0
        %v3584 = vadd.f32 0.0, %v3583
        %v3585 = vpop.f32.mrb[0].mxu0
        %3586 = vmatprep.mubr.f32.mxu0 0.0
        %3587 = vmatmul.mubr.f32.gmra.mrb[0].mxu0 %v3401
        %v3588 = vpop.f32.mrb[0].mxu0
        %v3589 = vadd.f32 0.0, %v3588
        %v3590 = vpop.f32.mrb[0].mxu0
        %3591 = vmatprep.mubr.f32.mxu0 0.0
        %3592 = vmatmul.mubr.f32.gmra.mrb[0].mxu0 %v3404
        %v3593 = vpop.f32.mrb[0].mxu0
        %v3594 = vadd.f32 0.0, %v3593
        %v3595 = vpop.f32.mrb[0].mxu0
        %3596 = vmatprep.mubr.f32.mxu0 0.0
        %3597 = vmatmul.mubr.f32.gmra.mrb[0].mxu0 %v3407
        %v3598 = vpop.f32.mrb[0].mxu0
        %v3599 = vadd.f32 0.0, %v3598
        %v3600 = vpop.f32.mrb[0].mxu0
        %3601 = vdwg.mxu0
        %3602 = vmax.xlane.f32.xlu0 %v3524
        %v3603 = vpop.xlane.xlu0 %3602
        %3604 = vmax.xlane.f32.xlu0 %v3529
        %v3605 = vpop.xlane.xlu0 %3604
        %3606 = vmax.xlane.f32.xlu0 %v3534
        %v3607 = vpop.xlane.xlu0 %3606
        %3608 = vmax.xlane.f32.xlu0 %v3539
        %v3609 = vpop.xlane.xlu0 %3608
        %3610 = vmax.xlane.f32.xlu0 %v3544
        %v3611 = vpop.xlane.xlu0 %3610
        %3612 = vmax.xlane.f32.xlu0 %v3549
        %v3613 = vpop.xlane.xlu0 %3612
        %3614 = vmax.xlane.f32.xlu0 %v3554
        %v3615 = vpop.xlane.xlu0 %3614
        %3616 = vmax.xlane.f32.xlu0 %v3559
        %v3617 = vpop.xlane.xlu0 %3616
        %3618 = vmax.xlane.f32.xlu0 %v3564
        %v3619 = vpop.xlane.xlu0 %3618
        %3620 = vmax.xlane.f32.xlu0 %v3569
        %v3621 = vpop.xlane.xlu0 %3620
        %3622 = vmax.xlane.f32.xlu0 %v3574
        %v3623 = vpop.xlane.xlu0 %3622
        %3624 = vmax.xlane.f32.xlu0 %v3579
        %v3625 = vpop.xlane.xlu0 %3624
        %3626 = vmax.xlane.f32.xlu0 %v3584
        %v3627 = vpop.xlane.xlu0 %3626
        %3628 = vmax.xlane.f32.xlu0 %v3589
        %v3629 = vpop.xlane.xlu0 %3628
        %3630 = vmax.xlane.f32.xlu0 %v3594
        %v3631 = vpop.xlane.xlu0 %3630
        %3632 = vmax.xlane.f32.xlu0 %v3599
        %v3633 = vpop.xlane.xlu0 %3632
        %v3634 = vsub.f32 %v3524, %v3603
        %v3635 = vsub.f32 %v3529, %v3605
        %v3636 = vsub.f32 %v3534, %v3607
        %v3637 = vsub.f32 %v3539, %v3609
        %v3638 = vsub.f32 %v3544, %v3611
        %v3639 = vsub.f32 %v3549, %v3613
        %v3640 = vsub.f32 %v3554, %v3615
        %v3641 = vsub.f32 %v3559, %v3617
        %v3642 = vsub.f32 %v3564, %v3619
        %v3643 = vsub.f32 %v3569, %v3621
        %v3644 = vsub.f32 %v3574, %v3623
        %v3645 = vsub.f32 %v3579, %v3625
        %v3646 = vsub.f32 %v3584, %v3627
        %v3647 = vsub.f32 %v3589, %v3629
        %v3648 = vsub.f32 %v3594, %v3631
        %v3649 = vsub.f32 %v3599, %v3633
        %v3650 = vmul.f32 %v3634, 1.442695
        %v3651 = vpow.pop %v3650
        %v3652 = vmul.f32 %v3635, 1.442695
        %v3653 = vpow.pop %v3652
        %v3654 = vmul.f32 %v3636, 1.442695
        %v3655 = vpow.pop %v3654
        %v3656 = vmul.f32 %v3637, 1.442695
        %v3657 = vpow.pop %v3656
        %v3658 = vmul.f32 %v3638, 1.442695
        %v3659 = vpow.pop %v3658
        %v3660 = vmul.f32 %v3639, 1.442695
        %v3661 = vpow.pop %v3660
        %v3662 = vmul.f32 %v3640, 1.442695
        %v3663 = vpow.pop %v3662
        %v3664 = vmul.f32 %v3641, 1.442695
        %v3665 = vpow.pop %v3664
        %v3666 = vmul.f32 %v3642, 1.442695
        %v3667 = vpow.pop %v3666
        %v3668 = vmul.f32 %v3643, 1.442695
        %v3669 = vpow.pop %v3668
        %v3670 = vmul.f32 %v3644, 1.442695
        %v3671 = vpow.pop %v3670
        %v3672 = vmul.f32 %v3645, 1.442695
        %v3673 = vpow.pop %v3672
        %v3674 = vmul.f32 %v3646, 1.442695
        %v3675 = vpow.pop %v3674
        %v3676 = vmul.f32 %v3647, 1.442695
        %v3677 = vpow.pop %v3676
        %v3678 = vmul.f32 %v3648, 1.442695
        %v3679 = vpow.pop %v3678
        %v3680 = vmul.f32 %v3649, 1.442695
        %v3681 = vpow.pop %v3680
        %3682 = vadd.xlane.f32.xlu0 %v3651
        %v3683 = vpop.xlane.xlu0 %3682
        %3684 = vadd.xlane.f32.xlu0 %v3653
        %v3685 = vpop.xlane.xlu0 %3684
        %3686 = vadd.xlane.f32.xlu0 %v3655
        %v3687 = vpop.xlane.xlu0 %3686
        %3688 = vadd.xlane.f32.xlu0 %v3657
        %v3689 = vpop.xlane.xlu0 %3688
        %3690 = vadd.xlane.f32.xlu0 %v3659
        %v3691 = vpop.xlane.xlu0 %3690
        %3692 = vadd.xlane.f32.xlu0 %v3661
        %v3693 = vpop.xlane.xlu0 %3692
        %3694 = vadd.xlane.f32.xlu0 %v3663
        %v3695 = vpop.xlane.xlu0 %3694
        %3696 = vadd.xlane.f32.xlu0 %v3665
        %v3697 = vpop.xlane.xlu0 %3696
        %3698 = vadd.xlane.f32.xlu0 %v3667
        %v3699 = vpop.xlane.xlu0 %3698
        %3700 = vadd.xlane.f32.xlu0 %v3669
        %v3701 = vpop.xlane.xlu0 %3700
        %3702 = vadd.xlane.f32.xlu0 %v3671
        %v3703 = vpop.xlane.xlu0 %3702
        %3704 = vadd.xlane.f32.xlu0 %v3673
        %v3705 = vpop.xlane.xlu0 %3704
        %3706 = vadd.xlane.f32.xlu0 %v3675
        %v3707 = vpop.xlane.xlu0 %3706
        %3708 = vadd.xlane.f32.xlu0 %v3677
        %v3709 = vpop.xlane.xlu0 %3708
        %3710 = vadd.xlane.f32.xlu0 %v3679
        %v3711 = vpop.xlane.xlu0 %3710
        %3712 = vadd.xlane.f32.xlu0 %v3681
        %v3713 = vpop.xlane.xlu0 %3712
        %3714 = vmatprep.subr.mxu0 0.0
        %3715 = vmatpush1.msra.mxu0 %v860
        %3716 = vmatprep.subr.mxu0 0.0
        %3717 = vmatpush1.msra.mxu0 %v866
        %3718 = vmatprep.subr.mxu0 0.0
        %3719 = vmatpush1.msra.mxu0 %v872
        %3720 = vmatprep.subr.mxu0 0.0
        %3721 = vmatpush1.msra.mxu0 %v878
        %3722 = vmatprep.subr.mxu0 0.0
        %3723 = vmatpush1.msra.mxu0 %v884
        %3724 = vmatprep.subr.mxu0 0.0
        %3725 = vmatpush1.msra.mxu0 %v890
        %3726 = vmatprep.subr.mxu0 0.0
        %3727 = vmatpush1.msra.mxu0 %v896
        %3728 = vmatprep.subr.mxu0 0.0
        %3729 = vmatpush1.msra.mxu0 %v902
        %3730 = vmatprep.subr.mxu0 0.0
        %3731 = vmatpush1.msra.mxu0 %v908
        %3732 = vmatprep.subr.mxu0 0.0
        %3733 = vmatpush1.msra.mxu0 %v914
        %3734 = vmatprep.subr.mxu0 0.0
        %3735 = vmatpush1.msra.mxu0 %v920
        %3736 = vmatprep.subr.mxu0 0.0
        %3737 = vmatpush1.msra.mxu0 %v926
        %3738 = vmatprep.subr.mxu0 0.0
        %3739 = vmatpush1.msra.mxu0 %v932
        %3740 = vmatprep.subr.mxu0 0.0
        %3741 = vmatpush1.msra.mxu0 %v938
        %3742 = vmatprep.subr.mxu0 0.0
        %3743 = vmatpush1.msra.mxu0 %v944
        %3744 = vmatprep.subr.mxu0 0.0
        %3745 = vmatpush1.msra.mxu0 %v950
        %3746 = vmatprep.subr.mxu0 0.0
        %3747 = vmatpush1.msra.mxu0 0.0
        %3748 = vmatprep.subr.mxu0 0.0
        %3749 = vmatpush1.msra.mxu0 0.0
        %3750 = vmatprep.subr.mxu0 0.0
        %3751 = vmatpush1.msra.mxu0 0.0
        %3752 = vmatprep.subr.mxu0 0.0
        %3753 = vmatpush1.msra.mxu0 0.0
        %3754 = vmatprep.subr.mxu0 0.0
        %3755 = vmatpush1.msra.mxu0 0.0
        %3756 = vmatprep.subr.mxu0 0.0
        %3757 = vmatpush1.msra.mxu0 0.0
        %3758 = vmatprep.subr.mxu0 0.0
        %3759 = vmatpush1.msra.mxu0 0.0
        %3760 = vmatprep.subr.mxu0 0.0
        %3761 = vmatpush1.msra.mxu0 0.0
        %3762 = vmatprep.subr.mxu0 0.0
        %3763 = vmatpush1.msra.mxu0 0.0
        %3764 = vmatprep.subr.mxu0 0.0
        %3765 = vmatpush1.msra.mxu0 0.0
        %3766 = vmatprep.subr.mxu0 0.0
        %3767 = vmatpush1.msra.mxu0 0.0
        %3768 = vmatprep.subr.mxu0 0.0
        %3769 = vmatpush1.msra.mxu0 0.0
        %3770 = vmatprep.subr.mxu0 0.0
        %3771 = vmatpush1.msra.mxu0 0.0
        %3772 = vmatprep.subr.mxu0 0.0
        %3773 = vmatpush1.msra.mxu0 0.0
        %3774 = vmatprep.subr.mxu0 0.0
        %3775 = vmatpush1.msra.mxu0 0.0
        %3776 = vmatprep.subr.mxu0 0.0
        %3777 = vmatpush1.msra.mxu0 0.0
        %3778 = vmatprep.mubr.f32.mxu0 0.0
        %3779 = vmatmul.mubr.f32.gmra.mrb[0].mxu0 %v3651
        %v3780 = vpop.f32.mrb[0].mxu0
        %v3781 = vadd.f32 0.0, %v3780
        %v3782 = vpop.f32.mrb[0].mxu0
        %3783 = vmatprep.mubr.f32.mxu0 0.0
        %3784 = vmatmul.mubr.f32.gmra.mrb[0].mxu0 %v3653
        %v3785 = vpop.f32.mrb[0].mxu0
        %v3786 = vadd.f32 0.0, %v3785
        %v3787 = vpop.f32.mrb[0].mxu0
        %3788 = vmatprep.mubr.f32.mxu0 0.0
        %3789 = vmatmul.mubr.f32.gmra.mrb[0].mxu0 %v3655
        %v3790 = vpop.f32.mrb[0].mxu0
        %v3791 = vadd.f32 0.0, %v3790
        %v3792 = vpop.f32.mrb[0].mxu0
        %3793 = vmatprep.mubr.f32.mxu0 0.0
        %3794 = vmatmul.mubr.f32.gmra.mrb[0].mxu0 %v3657
        %v3795 = vpop.f32.mrb[0].mxu0
        %v3796 = vadd.f32 0.0, %v3795
        %v3797 = vpop.f32.mrb[0].mxu0
        %3798 = vmatprep.mubr.f32.mxu0 0.0
        %3799 = vmatmul.mubr.f32.gmra.mrb[0].mxu0 %v3659
        %v3800 = vpop.f32.mrb[0].mxu0
        %v3801 = vadd.f32 0.0, %v3800
        %v3802 = vpop.f32.mrb[0].mxu0
        %3803 = vmatprep.mubr.f32.mxu0 0.0
        %3804 = vmatmul.mubr.f32.gmra.mrb[0].mxu0 %v3661
        %v3805 = vpop.f32.mrb[0].mxu0
        %v3806 = vadd.f32 0.0, %v3805
        %v3807 = vpop.f32.mrb[0].mxu0
        %3808 = vmatprep.mubr.f32.mxu0 0.0
        %3809 = vmatmul.mubr.f32.gmra.mrb[0].mxu0 %v3663
        %v3810 = vpop.f32.mrb[0].mxu0
        %v3811 = vadd.f32 0.0, %v3810
        %v3812 = vpop.f32.mrb[0].mxu0
        %3813 = vmatprep.mubr.f32.mxu0 0.0
        %3814 = vmatmul.mubr.f32.gmra.mrb[0].mxu0 %v3665
        %v3815 = vpop.f32.mrb[0].mxu0
        %v3816 = vadd.f32 0.0, %v3815
        %v3817 = vpop.f32.mrb[0].mxu0
        %3818 = vmatprep.mubr.f32.mxu0 0.0
        %3819 = vmatmul.mubr.f32.gmra.mrb[0].mxu0 %v3667
        %v3820 = vpop.f32.mrb[0].mxu0
        %v3821 = vadd.f32 0.0, %v3820
        %v3822 = vpop.f32.mrb[0].mxu0
        %3823 = vmatprep.mubr.f32.mxu0 0.0
        %3824 = vmatmul.mubr.f32.gmra.mrb[0].mxu0 %v3669
        %v3825 = vpop.f32.mrb[0].mxu0
        %v3826 = vadd.f32 0.0, %v3825
        %v3827 = vpop.f32.mrb[0].mxu0
        %3828 = vmatprep.mubr.f32.mxu0 0.0
        %3829 = vmatmul.mubr.f32.gmra.mrb[0].mxu0 %v3671
        %v3830 = vpop.f32.mrb[0].mxu0
        %v3831 = vadd.f32 0.0, %v3830
        %v3832 = vpop.f32.mrb[0].mxu0
        %3833 = vmatprep.mubr.f32.mxu0 0.0
        %3834 = vmatmul.mubr.f32.gmra.mrb[0].mxu0 %v3673
        %v3835 = vpop.f32.mrb[0].mxu0
        %v3836 = vadd.f32 0.0, %v3835
        %v3837 = vpop.f32.mrb[0].mxu0
        %3838 = vmatprep.mubr.f32.mxu0 0.0
        %3839 = vmatmul.mubr.f32.gmra.mrb[0].mxu0 %v3675
        %v3840 = vpop.f32.mrb[0].mxu0
        %v3841 = vadd.f32 0.0, %v3840
        %v3842 = vpop.f32.mrb[0].mxu0
        %3843 = vmatprep.mubr.f32.mxu0 0.0
        %3844 = vmatmul.mubr.f32.gmra.mrb[0].mxu0 %v3677
        %v3845 = vpop.f32.mrb[0].mxu0
        %v3846 = vadd.f32 0.0, %v3845
        %v3847 = vpop.f32.mrb[0].mxu0
        %3848 = vmatprep.mubr.f32.mxu0 0.0
        %3849 = vmatmul.mubr.f32.gmra.mrb[0].mxu0 %v3679
        %v3850 = vpop.f32.mrb[0].mxu0
        %v3851 = vadd.f32 0.0, %v3850
        %v3852 = vpop.f32.mrb[0].mxu0
        %3853 = vmatprep.mubr.f32.mxu0 0.0
        %3854 = vmatmul.mubr.f32.gmra.mrb[0].mxu0 %v3681
        %v3855 = vpop.f32.mrb[0].mxu0
        %v3856 = vadd.f32 0.0, %v3855
        %v3857 = vpop.f32.mrb[0].mxu0
        %3858 = vdwg.mxu0
        %v3859 = vrcp.pop %v3683
        %v3860 = vrcp.pop %v3685
        %v3861 = vrcp.pop %v3687
        %v3862 = vrcp.pop %v3689
        %v3863 = vrcp.pop %v3691
        %v3864 = vrcp.pop %v3693
        %v3865 = vrcp.pop %v3695
        %v3866 = vrcp.pop %v3697
        %v3867 = vrcp.pop %v3699
        %v3868 = vrcp.pop %v3701
        %v3869 = vrcp.pop %v3703
        %v3870 = vrcp.pop %v3705
        %v3871 = vrcp.pop %v3707
        %v3872 = vrcp.pop %v3709
        %v3873 = vrcp.pop %v3711
        %v3874 = vrcp.pop %v3713
        %v3875 = vmul.f32 %v3781, %v3859
        %v3876 = vmul.f32 %v3786, %v3860
        %v3877 = vmul.f32 %v3791, %v3861
        %v3878 = vmul.f32 %v3796, %v3862
        %v3879 = vmul.f32 %v3801, %v3863
        %v3880 = vmul.f32 %v3806, %v3864
        %v3881 = vmul.f32 %v3811, %v3865
        %v3882 = vmul.f32 %v3816, %v3866
        %v3883 = vmul.f32 %v3821, %v3867
        %v3884 = vmul.f32 %v3826, %v3868
        %v3885 = vmul.f32 %v3831, %v3869
        %v3886 = vmul.f32 %v3836, %v3870
        %v3887 = vmul.f32 %v3841, %v3871
        %v3888 = vmul.f32 %v3846, %v3872
        %v3889 = vmul.f32 %v3851, %v3873
        %v3890 = vmul.f32 %v3856, %v3874
        %3891 = vrot.lane.b32.xlu0 %v3345, 96
        %v3892 = vpop.permute.xlu0 %3891
        %3893 = vrot.lane.b32.xlu0 %v3346, 96
        %v3894 = vpop.permute.xlu0 %3893
        %3895 = vrot.lane.b32.xlu0 %v3347, 96
        %v3896 = vpop.permute.xlu0 %3895
        %3897 = vrot.lane.b32.xlu0 %v3348, 96
        %v3898 = vpop.permute.xlu0 %3897
        %3899 = vrot.lane.b32.xlu0 %v3349, 96
        %v3900 = vpop.permute.xlu0 %3899
        %3901 = vrot.lane.b32.xlu0 %v3350, 96
        %v3902 = vpop.permute.xlu0 %3901
        %3903 = vrot.lane.b32.xlu0 %v3351, 96
        %v3904 = vpop.permute.xlu0 %3903
        %3905 = vrot.lane.b32.xlu0 %v3352, 96
        %v3906 = vpop.permute.xlu0 %3905
        %3907 = vrot.lane.b32.xlu0 %v3353, 96
        %v3908 = vpop.permute.xlu0 %3907
        %3909 = vrot.lane.b32.xlu0 %v3354, 96
        %v3910 = vpop.permute.xlu0 %3909
        %3911 = vrot.lane.b32.xlu0 %v3355, 96
        %v3912 = vpop.permute.xlu0 %3911
        %3913 = vrot.lane.b32.xlu0 %v3356, 96
        %v3914 = vpop.permute.xlu0 %3913
        %3915 = vrot.lane.b32.xlu0 %v3357, 96
        %v3916 = vpop.permute.xlu0 %3915
        %3917 = vrot.lane.b32.xlu0 %v3358, 96
        %v3918 = vpop.permute.xlu0 %3917
        %3919 = vrot.lane.b32.xlu0 %v3359, 96
        %v3920 = vpop.permute.xlu0 %3919
        %3921 = vrot.lane.b32.xlu0 %v3360, 96
        %v3922 = vpop.permute.xlu0 %3921
        %3923 = vrot.lane.b32.xlu0 %v699, 96
        %v3924 = vpop.permute.xlu0 %3923
        %3925 = vrot.lane.b32.xlu0 %v705, 96
        %v3926 = vpop.permute.xlu0 %3925
        %3927 = vrot.lane.b32.xlu0 %v711, 96
        %v3928 = vpop.permute.xlu0 %3927
        %3929 = vrot.lane.b32.xlu0 %v717, 96
        %v3930 = vpop.permute.xlu0 %3929
        %3931 = vrot.lane.b32.xlu0 %v723, 96
        %v3932 = vpop.permute.xlu0 %3931
        %3933 = vrot.lane.b32.xlu0 %v729, 96
        %v3934 = vpop.permute.xlu0 %3933
        %3935 = vrot.lane.b32.xlu0 %v735, 96
        %v3936 = vpop.permute.xlu0 %3935
        %3937 = vrot.lane.b32.xlu0 %v741, 96
        %v3938 = vpop.permute.xlu0 %3937
        %3939 = vrot.lane.b32.xlu0 %v747, 96
        %v3940 = vpop.permute.xlu0 %3939
        %3941 = vrot.lane.b32.xlu0 %v753, 96
        %v3942 = vpop.permute.xlu0 %3941
        %3943 = vrot.lane.b32.xlu0 %v759, 96
        %v3944 = vpop.permute.xlu0 %3943
        %3945 = vrot.lane.b32.xlu0 %v765, 96
        %v3946 = vpop.permute.xlu0 %3945
        %3947 = vrot.lane.b32.xlu0 %v771, 96
        %v3948 = vpop.permute.xlu0 %3947
        %3949 = vrot.lane.b32.xlu0 %v777, 96
        %v3950 = vpop.permute.xlu0 %3949
        %3951 = vrot.lane.b32.xlu0 %v783, 96
        %v3952 = vpop.permute.xlu0 %3951
        %3953 = vrot.lane.b32.xlu0 %v789, 96
        %v3954 = vpop.permute.xlu0 %3953
        %v3955 = vsel %vm968, %v3892, 0
        %v3957 = vsel %vm968, %v3894, 0
        %v3959 = vsel %vm968, %v3896, 0
        %v3961 = vsel %vm968, %v3898, 0
        %v3963 = vsel %vm968, %v3900, 0
        %v3965 = vsel %vm968, %v3902, 0
        %v3967 = vsel %vm968, %v3904, 0
        %v3969 = vsel %vm968, %v3906, 0
        %v3971 = vsel %vm968, %v3908, 0
        %v3973 = vsel %vm968, %v3910, 0
        %v3975 = vsel %vm968, %v3912, 0
        %v3977 = vsel %vm968, %v3914, 0
        %v3979 = vsel %vm968, %v3916, 0
        %v3981 = vsel %vm968, %v3918, 0
        %v3983 = vsel %vm968, %v3920, 0
        %v3985 = vsel %vm968, %v3922, 0
        %v3987 = vsel %vm968, %v3924, 0
        %v3989 = vsel %vm968, %v3926, 0
        %v3991 = vsel %vm968, %v3928, 0
        %v3993 = vsel %vm968, %v3930, 0
        %v3995 = vsel %vm968, %v3932, 0
        %v3997 = vsel %vm968, %v3934, 0
        %v3999 = vsel %vm968, %v3936, 0
        %v4001 = vsel %vm968, %v3938, 0
        %v4003 = vsel %vm968, %v3940, 0
        %v4005 = vsel %vm968, %v3942, 0
        %v4007 = vsel %vm968, %v3944, 0
        %v4009 = vsel %vm968, %v3946, 0
        %v4011 = vsel %vm968, %v3948, 0
        %v4013 = vsel %vm968, %v3950, 0
        %v4015 = vsel %vm968, %v3952, 0
        %v4017 = vsel %vm968, %v3954, 0
        %4019 = vmatprep.subr.mxu0 0.0
        %4020 = vmatpush1.xpose.msra.mxu0 %v3987
        %4021 = vmatprep.subr.mxu0 0.0
        %4022 = vmatpush1.xpose.msra.mxu0 %v3989
        %4023 = vmatprep.subr.mxu0 0.0
        %4024 = vmatpush1.xpose.msra.mxu0 %v3991
        %4025 = vmatprep.subr.mxu0 0.0
        %4026 = vmatpush1.xpose.msra.mxu0 %v3993
        %4027 = vmatprep.subr.mxu0 0.0
        %4028 = vmatpush1.xpose.msra.mxu0 %v3995
        %4029 = vmatprep.subr.mxu0 0.0
        %4030 = vmatpush1.xpose.msra.mxu0 %v3997
        %4031 = vmatprep.subr.mxu0 0.0
        %4032 = vmatpush1.xpose.msra.mxu0 %v3999
        %4033 = vmatprep.subr.mxu0 0.0
        %4034 = vmatpush1.xpose.msra.mxu0 %v4001
        %4035 = vmatprep.subr.mxu0 0.0
        %4036 = vmatpush1.xpose.msra.mxu0 %v4003
        %4037 = vmatprep.subr.mxu0 0.0
        %4038 = vmatpush1.xpose.msra.mxu0 %v4005
        %4039 = vmatprep.subr.mxu0 0.0
        %4040 = vmatpush1.xpose.msra.mxu0 %v4007
        %4041 = vmatprep.subr.mxu0 0.0
        %4042 = vmatpush1.xpose.msra.mxu0 %v4009
        %4043 = vmatprep.subr.mxu0 0.0
        %4044 = vmatpush1.xpose.msra.mxu0 %v4011
        %4045 = vmatprep.subr.mxu0 0.0
        %4046 = vmatpush1.xpose.msra.mxu0 %v4013
        %4047 = vmatprep.subr.mxu0 0.0
        %4048 = vmatpush1.xpose.msra.mxu0 %v4015
        %4049 = vmatprep.subr.mxu0 0.0
        %4050 = vmatpush1.xpose.msra.mxu0 %v4017
        %4051 = vmatprep.subr.mxu0 0.0
        %4052 = vmatpush1.xpose.msra.mxu0 0.0
        %4053 = vmatprep.subr.mxu0 0.0
        %4054 = vmatpush1.xpose.msra.mxu0 0.0
        %4055 = vmatprep.subr.mxu0 0.0
        %4056 = vmatpush1.xpose.msra.mxu0 0.0
        %4057 = vmatprep.subr.mxu0 0.0
        %4058 = vmatpush1.xpose.msra.mxu0 0.0
        %4059 = vmatprep.subr.mxu0 0.0
        %4060 = vmatpush1.xpose.msra.mxu0 0.0
        %4061 = vmatprep.subr.mxu0 0.0
        %4062 = vmatpush1.xpose.msra.mxu0 0.0
        %4063 = vmatprep.subr.mxu0 0.0
        %4064 = vmatpush1.xpose.msra.mxu0 0.0
        %4065 = vmatprep.subr.mxu0 0.0
        %4066 = vmatpush1.xpose.msra.mxu0 0.0
        %4067 = vmatprep.subr.mxu0 0.0
        %4068 = vmatpush1.xpose.msra.mxu0 0.0
        %4069 = vmatprep.subr.mxu0 0.0
        %4070 = vmatpush1.xpose.msra.mxu0 0.0
        %4071 = vmatprep.subr.mxu0 0.0
        %4072 = vmatpush1.xpose.msra.mxu0 0.0
        %4073 = vmatprep.subr.mxu0 0.0
        %4074 = vmatpush1.xpose.msra.mxu0 0.0
        %4075 = vmatprep.subr.mxu0 0.0
        %4076 = vmatpush1.xpose.msra.mxu0 0.0
        %4077 = vmatprep.subr.mxu0 0.0
        %4078 = vmatpush1.xpose.msra.mxu0 0.0
        %4079 = vmatprep.subr.mxu0 0.0
        %4080 = vmatpush1.xpose.msra.mxu0 0.0
        %4081 = vmatprep.subr.mxu0 0.0
        %4082 = vmatpush1.xpose.msra.mxu0 0.0
        %4083 = vmatprep.mubr.f32.mxu0 0.0
        %4084 = vmatmul.mubr.f32.gmra.mrb[0].mxu0 %v3955
        %v4085 = vpop.f32.mrb[0].mxu0
        %v4086 = vadd.f32 0.0, %v4085
        %v4087 = vpop.f32.mrb[0].mxu0
        %4088 = vmatprep.mubr.f32.mxu0 0.0
        %4089 = vmatmul.mubr.f32.gmra.mrb[0].mxu0 %v3957
        %v4090 = vpop.f32.mrb[0].mxu0
        %v4091 = vadd.f32 0.0, %v4090
        %v4092 = vpop.f32.mrb[0].mxu0
        %4093 = vmatprep.mubr.f32.mxu0 0.0
        %4094 = vmatmul.mubr.f32.gmra.mrb[0].mxu0 %v3959
        %v4095 = vpop.f32.mrb[0].mxu0
        %v4096 = vadd.f32 0.0, %v4095
        %v4097 = vpop.f32.mrb[0].mxu0
        %4098 = vmatprep.mubr.f32.mxu0 0.0
        %4099 = vmatmul.mubr.f32.gmra.mrb[0].mxu0 %v3961
        %v4100 = vpop.f32.mrb[0].mxu0
        %v4101 = vadd.f32 0.0, %v4100
        %v4102 = vpop.f32.mrb[0].mxu0
        %4103 = vmatprep.mubr.f32.mxu0 0.0
        %4104 = vmatmul.mubr.f32.gmra.mrb[0].mxu0 %v3963
        %v4105 = vpop.f32.mrb[0].mxu0
        %v4106 = vadd.f32 0.0, %v4105
        %v4107 = vpop.f32.mrb[0].mxu0
        %4108 = vmatprep.mubr.f32.mxu0 0.0
        %4109 = vmatmul.mubr.f32.gmra.mrb[0].mxu0 %v3965
        %v4110 = vpop.f32.mrb[0].mxu0
        %v4111 = vadd.f32 0.0, %v4110
        %v4112 = vpop.f32.mrb[0].mxu0
        %4113 = vmatprep.mubr.f32.mxu0 0.0
        %4114 = vmatmul.mubr.f32.gmra.mrb[0].mxu0 %v3967
        %v4115 = vpop.f32.mrb[0].mxu0
        %v4116 = vadd.f32 0.0, %v4115
        %v4117 = vpop.f32.mrb[0].mxu0
        %4118 = vmatprep.mubr.f32.mxu0 0.0
        %4119 = vmatmul.mubr.f32.gmra.mrb[0].mxu0 %v3969
        %v4120 = vpop.f32.mrb[0].mxu0
        %v4121 = vadd.f32 0.0, %v4120
        %v4122 = vpop.f32.mrb[0].mxu0
        %4123 = vmatprep.mubr.f32.mxu0 0.0
        %4124 = vmatmul.mubr.f32.gmra.mrb[0].mxu0 %v3971
        %v4125 = vpop.f32.mrb[0].mxu0
        %v4126 = vadd.f32 0.0, %v4125
        %v4127 = vpop.f32.mrb[0].mxu0
        %4128 = vmatprep.mubr.f32.mxu0 0.0
        %4129 = vmatmul.mubr.f32.gmra.mrb[0].mxu0 %v3973
        %v4130 = vpop.f32.mrb[0].mxu0
        %v4131 = vadd.f32 0.0, %v4130
        %v4132 = vpop.f32.mrb[0].mxu0
        %4133 = vmatprep.mubr.f32.mxu0 0.0
        %4134 = vmatmul.mubr.f32.gmra.mrb[0].mxu0 %v3975
        %v4135 = vpop.f32.mrb[0].mxu0
        %v4136 = vadd.f32 0.0, %v4135
        %v4137 = vpop.f32.mrb[0].mxu0
        %4138 = vmatprep.mubr.f32.mxu0 0.0
        %4139 = vmatmul.mubr.f32.gmra.mrb[0].mxu0 %v3977
        %v4140 = vpop.f32.mrb[0].mxu0
        %v4141 = vadd.f32 0.0, %v4140
        %v4142 = vpop.f32.mrb[0].mxu0
        %4143 = vmatprep.mubr.f32.mxu0 0.0
        %4144 = vmatmul.mubr.f32.gmra.mrb[0].mxu0 %v3979
        %v4145 = vpop.f32.mrb[0].mxu0
        %v4146 = vadd.f32 0.0, %v4145
        %v4147 = vpop.f32.mrb[0].mxu0
        %4148 = vmatprep.mubr.f32.mxu0 0.0
        %4149 = vmatmul.mubr.f32.gmra.mrb[0].mxu0 %v3981
        %v4150 = vpop.f32.mrb[0].mxu0
        %v4151 = vadd.f32 0.0, %v4150
        %v4152 = vpop.f32.mrb[0].mxu0
        %4153 = vmatprep.mubr.f32.mxu0 0.0
        %4154 = vmatmul.mubr.f32.gmra.mrb[0].mxu0 %v3983
        %v4155 = vpop.f32.mrb[0].mxu0
        %v4156 = vadd.f32 0.0, %v4155
        %v4157 = vpop.f32.mrb[0].mxu0
        %4158 = vmatprep.mubr.f32.mxu0 0.0
        %4159 = vmatmul.mubr.f32.gmra.mrb[0].mxu0 %v3985
        %v4160 = vpop.f32.mrb[0].mxu0
        %v4161 = vadd.f32 0.0, %v4160
        %v4162 = vpop.f32.mrb[0].mxu0
        %4163 = vdwg.mxu0
        %4164 = vmax.xlane.f32.xlu0 %v4086
        %v4165 = vpop.xlane.xlu0 %4164
        %4166 = vmax.xlane.f32.xlu0 %v4091
        %v4167 = vpop.xlane.xlu0 %4166
        %4168 = vmax.xlane.f32.xlu0 %v4096
        %v4169 = vpop.xlane.xlu0 %4168
        %4170 = vmax.xlane.f32.xlu0 %v4101
        %v4171 = vpop.xlane.xlu0 %4170
        %4172 = vmax.xlane.f32.xlu0 %v4106
        %v4173 = vpop.xlane.xlu0 %4172
        %4174 = vmax.xlane.f32.xlu0 %v4111
        %v4175 = vpop.xlane.xlu0 %4174
        %4176 = vmax.xlane.f32.xlu0 %v4116
        %v4177 = vpop.xlane.xlu0 %4176
        %4178 = vmax.xlane.f32.xlu0 %v4121
        %v4179 = vpop.xlane.xlu0 %4178
        %4180 = vmax.xlane.f32.xlu0 %v4126
        %v4181 = vpop.xlane.xlu0 %4180
        %4182 = vmax.xlane.f32.xlu0 %v4131
        %v4183 = vpop.xlane.xlu0 %4182
        %4184 = vmax.xlane.f32.xlu0 %v4136
        %v4185 = vpop.xlane.xlu0 %4184
        %4186 = vmax.xlane.f32.xlu0 %v4141
        %v4187 = vpop.xlane.xlu0 %4186
        %4188 = vmax.xlane.f32.xlu0 %v4146
        %v4189 = vpop.xlane.xlu0 %4188
        %4190 = vmax.xlane.f32.xlu0 %v4151
        %v4191 = vpop.xlane.xlu0 %4190
        %4192 = vmax.xlane.f32.xlu0 %v4156
        %v4193 = vpop.xlane.xlu0 %4192
        %4194 = vmax.xlane.f32.xlu0 %v4161
        %v4195 = vpop.xlane.xlu0 %4194
        %v4196 = vsub.f32 %v4086, %v4165
        %v4197 = vsub.f32 %v4091, %v4167
        %v4198 = vsub.f32 %v4096, %v4169
        %v4199 = vsub.f32 %v4101, %v4171
        %v4200 = vsub.f32 %v4106, %v4173
        %v4201 = vsub.f32 %v4111, %v4175
        %v4202 = vsub.f32 %v4116, %v4177
        %v4203 = vsub.f32 %v4121, %v4179
        %v4204 = vsub.f32 %v4126, %v4181
        %v4205 = vsub.f32 %v4131, %v4183
        %v4206 = vsub.f32 %v4136, %v4185
        %v4207 = vsub.f32 %v4141, %v4187
        %v4208 = vsub.f32 %v4146, %v4189
        %v4209 = vsub.f32 %v4151, %v4191
        %v4210 = vsub.f32 %v4156, %v4193
        %v4211 = vsub.f32 %v4161, %v4195
        %v4212 = vmul.f32 %v4196, 1.442695
        %v4213 = vpow.pop %v4212
        %v4214 = vmul.f32 %v4197, 1.442695
        %v4215 = vpow.pop %v4214
        %v4216 = vmul.f32 %v4198, 1.442695
        %v4217 = vpow.pop %v4216
        %v4218 = vmul.f32 %v4199, 1.442695
        %v4219 = vpow.pop %v4218
        %v4220 = vmul.f32 %v4200, 1.442695
        %v4221 = vpow.pop %v4220
        %v4222 = vmul.f32 %v4201, 1.442695
        %v4223 = vpow.pop %v4222
        %v4224 = vmul.f32 %v4202, 1.442695
        %v4225 = vpow.pop %v4224
        %v4226 = vmul.f32 %v4203, 1.442695
        %v4227 = vpow.pop %v4226
        %v4228 = vmul.f32 %v4204, 1.442695
        %v4229 = vpow.pop %v4228
        %v4230 = vmul.f32 %v4205, 1.442695
        %v4231 = vpow.pop %v4230
        %v4232 = vmul.f32 %v4206, 1.442695
        %v4233 = vpow.pop %v4232
        %v4234 = vmul.f32 %v4207, 1.442695
        %v4235 = vpow.pop %v4234
        %v4236 = vmul.f32 %v4208, 1.442695
        %v4237 = vpow.pop %v4236
        %v4238 = vmul.f32 %v4209, 1.442695
        %v4239 = vpow.pop %v4238
        %v4240 = vmul.f32 %v4210, 1.442695
        %v4241 = vpow.pop %v4240
        %v4242 = vmul.f32 %v4211, 1.442695
        %v4243 = vpow.pop %v4242
        %4244 = vadd.xlane.f32.xlu0 %v4213
        %v4245 = vpop.xlane.xlu0 %4244
        %4246 = vadd.xlane.f32.xlu0 %v4215
        %v4247 = vpop.xlane.xlu0 %4246
        %4248 = vadd.xlane.f32.xlu0 %v4217
        %v4249 = vpop.xlane.xlu0 %4248
        %4250 = vadd.xlane.f32.xlu0 %v4219
        %v4251 = vpop.xlane.xlu0 %4250
        %4252 = vadd.xlane.f32.xlu0 %v4221
        %v4253 = vpop.xlane.xlu0 %4252
        %4254 = vadd.xlane.f32.xlu0 %v4223
        %v4255 = vpop.xlane.xlu0 %4254
        %4256 = vadd.xlane.f32.xlu0 %v4225
        %v4257 = vpop.xlane.xlu0 %4256
        %4258 = vadd.xlane.f32.xlu0 %v4227
        %v4259 = vpop.xlane.xlu0 %4258
        %4260 = vadd.xlane.f32.xlu0 %v4229
        %v4261 = vpop.xlane.xlu0 %4260
        %4262 = vadd.xlane.f32.xlu0 %v4231
        %v4263 = vpop.xlane.xlu0 %4262
        %4264 = vadd.xlane.f32.xlu0 %v4233
        %v4265 = vpop.xlane.xlu0 %4264
        %4266 = vadd.xlane.f32.xlu0 %v4235
        %v4267 = vpop.xlane.xlu0 %4266
        %4268 = vadd.xlane.f32.xlu0 %v4237
        %v4269 = vpop.xlane.xlu0 %4268
        %4270 = vadd.xlane.f32.xlu0 %v4239
        %v4271 = vpop.xlane.xlu0 %4270
        %4272 = vadd.xlane.f32.xlu0 %v4241
        %v4273 = vpop.xlane.xlu0 %4272
        %4274 = vadd.xlane.f32.xlu0 %v4243
        %v4275 = vpop.xlane.xlu0 %4274
        %4292 = vrot.lane.b32.xlu0 %v860, 96
        %v4293 = vpop.permute.xlu0 %4292
        %4294 = vrot.lane.b32.xlu0 %v866, 96
        %v4295 = vpop.permute.xlu0 %4294
        %4296 = vrot.lane.b32.xlu0 %v872, 96
        %v4297 = vpop.permute.xlu0 %4296
        %4298 = vrot.lane.b32.xlu0 %v878, 96
        %v4299 = vpop.permute.xlu0 %4298
        %4300 = vrot.lane.b32.xlu0 %v884, 96
        %v4301 = vpop.permute.xlu0 %4300
        %4302 = vrot.lane.b32.xlu0 %v890, 96
        %v4303 = vpop.permute.xlu0 %4302
        %4304 = vrot.lane.b32.xlu0 %v896, 96
        %v4305 = vpop.permute.xlu0 %4304
        %4306 = vrot.lane.b32.xlu0 %v902, 96
        %v4307 = vpop.permute.xlu0 %4306
        %4308 = vrot.lane.b32.xlu0 %v908, 96
        %v4309 = vpop.permute.xlu0 %4308
        %4310 = vrot.lane.b32.xlu0 %v914, 96
        %v4311 = vpop.permute.xlu0 %4310
        %4312 = vrot.lane.b32.xlu0 %v920, 96
        %v4313 = vpop.permute.xlu0 %4312
        %4314 = vrot.lane.b32.xlu0 %v926, 96
        %v4315 = vpop.permute.xlu0 %4314
        %4316 = vrot.lane.b32.xlu0 %v932, 96
        %v4317 = vpop.permute.xlu0 %4316
        %4318 = vrot.lane.b32.xlu0 %v938, 96
        %v4319 = vpop.permute.xlu0 %4318
        %4320 = vrot.lane.b32.xlu0 %v944, 96
        %v4321 = vpop.permute.xlu0 %4320
        %4322 = vrot.lane.b32.xlu0 %v950, 96
        %v4323 = vpop.permute.xlu0 %4322
        %4340 = vmatprep.subr.mxu0 0.0
        %4341 = vmatpush1.msra.mxu0 %v4293
        %4342 = vmatprep.subr.mxu0 0.0
        %4343 = vmatpush1.msra.mxu0 %v4295
        %4344 = vmatprep.subr.mxu0 0.0
        %4345 = vmatpush1.msra.mxu0 %v4297
        %4346 = vmatprep.subr.mxu0 0.0
        %4347 = vmatpush1.msra.mxu0 %v4299
        %4348 = vmatprep.subr.mxu0 0.0
        %4349 = vmatpush1.msra.mxu0 %v4301
        %4350 = vmatprep.subr.mxu0 0.0
        %4351 = vmatpush1.msra.mxu0 %v4303
        %4352 = vmatprep.subr.mxu0 0.0
        %4353 = vmatpush1.msra.mxu0 %v4305
        %4354 = vmatprep.subr.mxu0 0.0
        %4355 = vmatpush1.msra.mxu0 %v4307
        %4356 = vmatprep.subr.mxu0 0.0
        %4357 = vmatpush1.msra.mxu0 %v4309
        %4358 = vmatprep.subr.mxu0 0.0
        %4359 = vmatpush1.msra.mxu0 %v4311
        %4360 = vmatprep.subr.mxu0 0.0
        %4361 = vmatpush1.msra.mxu0 %v4313
        %4362 = vmatprep.subr.mxu0 0.0
        %4363 = vmatpush1.msra.mxu0 %v4315
        %4364 = vmatprep.subr.mxu0 0.0
        %4365 = vmatpush1.msra.mxu0 %v4317
        %4366 = vmatprep.subr.mxu0 0.0
        %4367 = vmatpush1.msra.mxu0 %v4319
        %4368 = vmatprep.subr.mxu0 0.0
        %4369 = vmatpush1.msra.mxu0 %v4321
        %4370 = vmatprep.subr.mxu0 0.0
        %4371 = vmatpush1.msra.mxu0 %v4323
        %4372 = vmatprep.subr.mxu0 0.0
        %4373 = vmatpush1.msra.mxu0 0.0
        %4374 = vmatprep.subr.mxu0 0.0
        %4375 = vmatpush1.msra.mxu0 0.0
        %4376 = vmatprep.subr.mxu0 0.0
        %4377 = vmatpush1.msra.mxu0 0.0
        %4378 = vmatprep.subr.mxu0 0.0
        %4379 = vmatpush1.msra.mxu0 0.0
        %4380 = vmatprep.subr.mxu0 0.0
        %4381 = vmatpush1.msra.mxu0 0.0
        %4382 = vmatprep.subr.mxu0 0.0
        %4383 = vmatpush1.msra.mxu0 0.0
        %4384 = vmatprep.subr.mxu0 0.0
        %4385 = vmatpush1.msra.mxu0 0.0
        %4386 = vmatprep.subr.mxu0 0.0
        %4387 = vmatpush1.msra.mxu0 0.0
        %4388 = vmatprep.subr.mxu0 0.0
        %4389 = vmatpush1.msra.mxu0 0.0
        %4390 = vmatprep.subr.mxu0 0.0
        %4391 = vmatpush1.msra.mxu0 0.0
        %4392 = vmatprep.subr.mxu0 0.0
        %4393 = vmatpush1.msra.mxu0 0.0
        %4394 = vmatprep.subr.mxu0 0.0
        %4395 = vmatpush1.msra.mxu0 0.0
        %4396 = vmatprep.subr.mxu0 0.0
        %4397 = vmatpush1.msra.mxu0 0.0
        %4398 = vmatprep.subr.mxu0 0.0
        %4399 = vmatpush1.msra.mxu0 0.0
        %4400 = vmatprep.subr.mxu0 0.0
        %4401 = vmatpush1.msra.mxu0 0.0
        %4402 = vmatprep.subr.mxu0 0.0
        %4403 = vmatpush1.msra.mxu0 0.0
        %4404 = vmatprep.mubr.f32.mxu0 0.0
        %4405 = vmatmul.mubr.f32.gmra.mrb[0].mxu0 %v4213
        %v4406 = vpop.f32.mrb[0].mxu0
        %v4407 = vadd.f32 0.0, %v4406
        %v4408 = vpop.f32.mrb[0].mxu0
        %4409 = vmatprep.mubr.f32.mxu0 0.0
        %4410 = vmatmul.mubr.f32.gmra.mrb[0].mxu0 %v4215
        %v4411 = vpop.f32.mrb[0].mxu0
        %v4412 = vadd.f32 0.0, %v4411
        %v4413 = vpop.f32.mrb[0].mxu0
        %4414 = vmatprep.mubr.f32.mxu0 0.0
        %4415 = vmatmul.mubr.f32.gmra.mrb[0].mxu0 %v4217
        %v4416 = vpop.f32.mrb[0].mxu0
        %v4417 = vadd.f32 0.0, %v4416
        %v4418 = vpop.f32.mrb[0].mxu0
        %4419 = vmatprep.mubr.f32.mxu0 0.0
        %4420 = vmatmul.mubr.f32.gmra.mrb[0].mxu0 %v4219
        %v4421 = vpop.f32.mrb[0].mxu0
        %v4422 = vadd.f32 0.0, %v4421
        %v4423 = vpop.f32.mrb[0].mxu0
        %4424 = vmatprep.mubr.f32.mxu0 0.0
        %4425 = vmatmul.mubr.f32.gmra.mrb[0].mxu0 %v4221
        %v4426 = vpop.f32.mrb[0].mxu0
        %v4427 = vadd.f32 0.0, %v4426
        %v4428 = vpop.f32.mrb[0].mxu0
        %4429 = vmatprep.mubr.f32.mxu0 0.0
        %4430 = vmatmul.mubr.f32.gmra.mrb[0].mxu0 %v4223
        %v4431 = vpop.f32.mrb[0].mxu0
        %v4432 = vadd.f32 0.0, %v4431
        %v4433 = vpop.f32.mrb[0].mxu0
        %4434 = vmatprep.mubr.f32.mxu0 0.0
        %4435 = vmatmul.mubr.f32.gmra.mrb[0].mxu0 %v4225
        %v4436 = vpop.f32.mrb[0].mxu0
        %v4437 = vadd.f32 0.0, %v4436
        %v4438 = vpop.f32.mrb[0].mxu0
        %4439 = vmatprep.mubr.f32.mxu0 0.0
        %4440 = vmatmul.mubr.f32.gmra.mrb[0].mxu0 %v4227
        %v4441 = vpop.f32.mrb[0].mxu0
        %v4442 = vadd.f32 0.0, %v4441
        %v4443 = vpop.f32.mrb[0].mxu0
        %4444 = vmatprep.mubr.f32.mxu0 0.0
        %4445 = vmatmul.mubr.f32.gmra.mrb[0].mxu0 %v4229
        %v4446 = vpop.f32.mrb[0].mxu0
        %v4447 = vadd.f32 0.0, %v4446
        %v4448 = vpop.f32.mrb[0].mxu0
        %4449 = vmatprep.mubr.f32.mxu0 0.0
        %4450 = vmatmul.mubr.f32.gmra.mrb[0].mxu0 %v4231
        %v4451 = vpop.f32.mrb[0].mxu0
        %v4452 = vadd.f32 0.0, %v4451
        %v4453 = vpop.f32.mrb[0].mxu0
        %4454 = vmatprep.mubr.f32.mxu0 0.0
        %4455 = vmatmul.mubr.f32.gmra.mrb[0].mxu0 %v4233
        %v4456 = vpop.f32.mrb[0].mxu0
        %v4457 = vadd.f32 0.0, %v4456
        %v4458 = vpop.f32.mrb[0].mxu0
        %4459 = vmatprep.mubr.f32.mxu0 0.0
        %4460 = vmatmul.mubr.f32.gmra.mrb[0].mxu0 %v4235
        %v4461 = vpop.f32.mrb[0].mxu0
        %v4462 = vadd.f32 0.0, %v4461
        %v4463 = vpop.f32.mrb[0].mxu0
        %4464 = vmatprep.mubr.f32.mxu0 0.0
        %4465 = vmatmul.mubr.f32.gmra.mrb[0].mxu0 %v4237
        %v4466 = vpop.f32.mrb[0].mxu0
        %v4467 = vadd.f32 0.0, %v4466
        %v4468 = vpop.f32.mrb[0].mxu0
        %4469 = vmatprep.mubr.f32.mxu0 0.0
        %4470 = vmatmul.mubr.f32.gmra.mrb[0].mxu0 %v4239
        %v4471 = vpop.f32.mrb[0].mxu0
        %v4472 = vadd.f32 0.0, %v4471
        %v4473 = vpop.f32.mrb[0].mxu0
        %4474 = vmatprep.mubr.f32.mxu0 0.0
        %4475 = vmatmul.mubr.f32.gmra.mrb[0].mxu0 %v4241
        %v4476 = vpop.f32.mrb[0].mxu0
        %v4477 = vadd.f32 0.0, %v4476
        %v4478 = vpop.f32.mrb[0].mxu0
        %4479 = vmatprep.mubr.f32.mxu0 0.0
        %4480 = vmatmul.mubr.f32.gmra.mrb[0].mxu0 %v4243
        %v4481 = vpop.f32.mrb[0].mxu0
        %v4482 = vadd.f32 0.0, %v4481
        %v4483 = vpop.f32.mrb[0].mxu0
        %4484 = vdwg.mxu0
        %v4485 = vrcp.pop %v4245
        %v4486 = vrcp.pop %v4247
        %v4487 = vrcp.pop %v4249
        %v4488 = vrcp.pop %v4251
        %v4489 = vrcp.pop %v4253
        %v4490 = vrcp.pop %v4255
        %v4491 = vrcp.pop %v4257
        %v4492 = vrcp.pop %v4259
        %v4493 = vrcp.pop %v4261
        %v4494 = vrcp.pop %v4263
        %v4495 = vrcp.pop %v4265
        %v4496 = vrcp.pop %v4267
        %v4497 = vrcp.pop %v4269
        %v4498 = vrcp.pop %v4271
        %v4499 = vrcp.pop %v4273
        %v4500 = vrcp.pop %v4275
        %v4501 = vmul.f32 %v4407, %v4485
        %v4502 = vmul.f32 %v4412, %v4486
        %v4503 = vmul.f32 %v4417, %v4487
        %v4504 = vmul.f32 %v4422, %v4488
        %v4505 = vmul.f32 %v4427, %v4489
        %v4506 = vmul.f32 %v4432, %v4490
        %v4507 = vmul.f32 %v4437, %v4491
        %v4508 = vmul.f32 %v4442, %v4492
        %v4509 = vmul.f32 %v4447, %v4493
        %v4510 = vmul.f32 %v4452, %v4494
        %v4511 = vmul.f32 %v4457, %v4495
        %v4512 = vmul.f32 %v4462, %v4496
        %v4513 = vmul.f32 %v4467, %v4497
        %v4514 = vmul.f32 %v4472, %v4498
        %v4515 = vmul.f32 %v4477, %v4499
        %v4516 = vmul.f32 %v4482, %v4500
        %4517 = vrot.lane.b32.xlu0 %v3345, 64
        %v4518 = vpop.permute.xlu0 %4517
        %4519 = vrot.lane.b32.xlu0 %v3346, 64
        %v4520 = vpop.permute.xlu0 %4519
        %4521 = vrot.lane.b32.xlu0 %v3347, 64
        %v4522 = vpop.permute.xlu0 %4521
        %4523 = vrot.lane.b32.xlu0 %v3348, 64
        %v4524 = vpop.permute.xlu0 %4523
        %4525 = vrot.lane.b32.xlu0 %v3349, 64
        %v4526 = vpop.permute.xlu0 %4525
        %4527 = vrot.lane.b32.xlu0 %v3350, 64
        %v4528 = vpop.permute.xlu0 %4527
        %4529 = vrot.lane.b32.xlu0 %v3351, 64
        %v4530 = vpop.permute.xlu0 %4529
        %4531 = vrot.lane.b32.xlu0 %v3352, 64
        %v4532 = vpop.permute.xlu0 %4531
        %4533 = vrot.lane.b32.xlu0 %v3353, 64
        %v4534 = vpop.permute.xlu0 %4533
        %4535 = vrot.lane.b32.xlu0 %v3354, 64
        %v4536 = vpop.permute.xlu0 %4535
        %4537 = vrot.lane.b32.xlu0 %v3355, 64
        %v4538 = vpop.permute.xlu0 %4537
        %4539 = vrot.lane.b32.xlu0 %v3356, 64
        %v4540 = vpop.permute.xlu0 %4539
        %4541 = vrot.lane.b32.xlu0 %v3357, 64
        %v4542 = vpop.permute.xlu0 %4541
        %4543 = vrot.lane.b32.xlu0 %v3358, 64
        %v4544 = vpop.permute.xlu0 %4543
        %4545 = vrot.lane.b32.xlu0 %v3359, 64
        %v4546 = vpop.permute.xlu0 %4545
        %4547 = vrot.lane.b32.xlu0 %v3360, 64
        %v4548 = vpop.permute.xlu0 %4547
        %4549 = vrot.lane.b32.xlu0 %v699, 64
        %v4550 = vpop.permute.xlu0 %4549
        %4551 = vrot.lane.b32.xlu0 %v705, 64
        %v4552 = vpop.permute.xlu0 %4551
        %4553 = vrot.lane.b32.xlu0 %v711, 64
        %v4554 = vpop.permute.xlu0 %4553
        %4555 = vrot.lane.b32.xlu0 %v717, 64
        %v4556 = vpop.permute.xlu0 %4555
        %4557 = vrot.lane.b32.xlu0 %v723, 64
        %v4558 = vpop.permute.xlu0 %4557
        %4559 = vrot.lane.b32.xlu0 %v729, 64
        %v4560 = vpop.permute.xlu0 %4559
        %4561 = vrot.lane.b32.xlu0 %v735, 64
        %v4562 = vpop.permute.xlu0 %4561
        %4563 = vrot.lane.b32.xlu0 %v741, 64
        %v4564 = vpop.permute.xlu0 %4563
        %4565 = vrot.lane.b32.xlu0 %v747, 64
        %v4566 = vpop.permute.xlu0 %4565
        %4567 = vrot.lane.b32.xlu0 %v753, 64
        %v4568 = vpop.permute.xlu0 %4567
        %4569 = vrot.lane.b32.xlu0 %v759, 64
        %v4570 = vpop.permute.xlu0 %4569
        %4571 = vrot.lane.b32.xlu0 %v765, 64
        %v4572 = vpop.permute.xlu0 %4571
        %4573 = vrot.lane.b32.xlu0 %v771, 64
        %v4574 = vpop.permute.xlu0 %4573
        %4575 = vrot.lane.b32.xlu0 %v777, 64
        %v4576 = vpop.permute.xlu0 %4575
        %4577 = vrot.lane.b32.xlu0 %v783, 64
        %v4578 = vpop.permute.xlu0 %4577
        %4579 = vrot.lane.b32.xlu0 %v789, 64
        %v4580 = vpop.permute.xlu0 %4579
        %v4581 = vsel %vm968, %v4518, 0
        %v4583 = vsel %vm968, %v4520, 0
        %v4585 = vsel %vm968, %v4522, 0
        %v4587 = vsel %vm968, %v4524, 0
        %v4589 = vsel %vm968, %v4526, 0
        %v4591 = vsel %vm968, %v4528, 0
        %v4593 = vsel %vm968, %v4530, 0
        %v4595 = vsel %vm968, %v4532, 0
        %v4597 = vsel %vm968, %v4534, 0
        %v4599 = vsel %vm968, %v4536, 0
        %v4601 = vsel %vm968, %v4538, 0
        %v4603 = vsel %vm968, %v4540, 0
        %v4605 = vsel %vm968, %v4542, 0
        %v4607 = vsel %vm968, %v4544, 0
        %v4609 = vsel %vm968, %v4546, 0
        %v4611 = vsel %vm968, %v4548, 0
        %v4613 = vsel %vm968, %v4550, 0
        %v4615 = vsel %vm968, %v4552, 0
        %v4617 = vsel %vm968, %v4554, 0
        %v4619 = vsel %vm968, %v4556, 0
        %v4621 = vsel %vm968, %v4558, 0
        %v4623 = vsel %vm968, %v4560, 0
        %v4625 = vsel %vm968, %v4562, 0
        %v4627 = vsel %vm968, %v4564, 0
        %v4629 = vsel %vm968, %v4566, 0
        %v4631 = vsel %vm968, %v4568, 0
        %v4633 = vsel %vm968, %v4570, 0
        %v4635 = vsel %vm968, %v4572, 0
        %v4637 = vsel %vm968, %v4574, 0
        %v4639 = vsel %vm968, %v4576, 0
        %v4641 = vsel %vm968, %v4578, 0
        %v4643 = vsel %vm968, %v4580, 0
        %4645 = vmatprep.subr.mxu0 0.0
        %4646 = vmatpush1.xpose.msra.mxu0 %v4613
        %4647 = vmatprep.subr.mxu0 0.0
        %4648 = vmatpush1.xpose.msra.mxu0 %v4615
        %4649 = vmatprep.subr.mxu0 0.0
        %4650 = vmatpush1.xpose.msra.mxu0 %v4617
        %4651 = vmatprep.subr.mxu0 0.0
        %4652 = vmatpush1.xpose.msra.mxu0 %v4619
        %4653 = vmatprep.subr.mxu0 0.0
        %4654 = vmatpush1.xpose.msra.mxu0 %v4621
        %4655 = vmatprep.subr.mxu0 0.0
        %4656 = vmatpush1.xpose.msra.mxu0 %v4623
        %4657 = vmatprep.subr.mxu0 0.0
        %4658 = vmatpush1.xpose.msra.mxu0 %v4625
        %4659 = vmatprep.subr.mxu0 0.0
        %4660 = vmatpush1.xpose.msra.mxu0 %v4627
        %4661 = vmatprep.subr.mxu0 0.0
        %4662 = vmatpush1.xpose.msra.mxu0 %v4629
        %4663 = vmatprep.subr.mxu0 0.0
        %4664 = vmatpush1.xpose.msra.mxu0 %v4631
        %4665 = vmatprep.subr.mxu0 0.0
        %4666 = vmatpush1.xpose.msra.mxu0 %v4633
        %4667 = vmatprep.subr.mxu0 0.0
        %4668 = vmatpush1.xpose.msra.mxu0 %v4635
        %4669 = vmatprep.subr.mxu0 0.0
        %4670 = vmatpush1.xpose.msra.mxu0 %v4637
        %4671 = vmatprep.subr.mxu0 0.0
        %4672 = vmatpush1.xpose.msra.mxu0 %v4639
        %4673 = vmatprep.subr.mxu0 0.0
        %4674 = vmatpush1.xpose.msra.mxu0 %v4641
        %4675 = vmatprep.subr.mxu0 0.0
        %4676 = vmatpush1.xpose.msra.mxu0 %v4643
        %4677 = vmatprep.subr.mxu0 0.0
        %4678 = vmatpush1.xpose.msra.mxu0 0.0
        %4679 = vmatprep.subr.mxu0 0.0
        %4680 = vmatpush1.xpose.msra.mxu0 0.0
        %4681 = vmatprep.subr.mxu0 0.0
        %4682 = vmatpush1.xpose.msra.mxu0 0.0
        %4683 = vmatprep.subr.mxu0 0.0
        %4684 = vmatpush1.xpose.msra.mxu0 0.0
        %4685 = vmatprep.subr.mxu0 0.0
        %4686 = vmatpush1.xpose.msra.mxu0 0.0
        %4687 = vmatprep.subr.mxu0 0.0
        %4688 = vmatpush1.xpose.msra.mxu0 0.0
        %4689 = vmatprep.subr.mxu0 0.0
        %4690 = vmatpush1.xpose.msra.mxu0 0.0
        %4691 = vmatprep.subr.mxu0 0.0
        %4692 = vmatpush1.xpose.msra.mxu0 0.0
        %4693 = vmatprep.subr.mxu0 0.0
        %4694 = vmatpush1.xpose.msra.mxu0 0.0
        %4695 = vmatprep.subr.mxu0 0.0
        %4696 = vmatpush1.xpose.msra.mxu0 0.0
        %4697 = vmatprep.subr.mxu0 0.0
        %4698 = vmatpush1.xpose.msra.mxu0 0.0
        %4699 = vmatprep.subr.mxu0 0.0
        %4700 = vmatpush1.xpose.msra.mxu0 0.0
        %4701 = vmatprep.subr.mxu0 0.0
        %4702 = vmatpush1.xpose.msra.mxu0 0.0
        %4703 = vmatprep.subr.mxu0 0.0
        %4704 = vmatpush1.xpose.msra.mxu0 0.0
        %4705 = vmatprep.subr.mxu0 0.0
        %4706 = vmatpush1.xpose.msra.mxu0 0.0
        %4707 = vmatprep.subr.mxu0 0.0
        %4708 = vmatpush1.xpose.msra.mxu0 0.0
        %4709 = vmatprep.mubr.f32.mxu0 0.0
        %4710 = vmatmul.mubr.f32.gmra.mrb[0].mxu0 %v4581
        %v4711 = vpop.f32.mrb[0].mxu0
        %v4712 = vadd.f32 0.0, %v4711
        %v4713 = vpop.f32.mrb[0].mxu0
        %4714 = vmatprep.mubr.f32.mxu0 0.0
        %4715 = vmatmul.mubr.f32.gmra.mrb[0].mxu0 %v4583
        %v4716 = vpop.f32.mrb[0].mxu0
        %v4717 = vadd.f32 0.0, %v4716
        %v4718 = vpop.f32.mrb[0].mxu0
        %4719 = vmatprep.mubr.f32.mxu0 0.0
        %4720 = vmatmul.mubr.f32.gmra.mrb[0].mxu0 %v4585
        %v4721 = vpop.f32.mrb[0].mxu0
        %v4722 = vadd.f32 0.0, %v4721
        %v4723 = vpop.f32.mrb[0].mxu0
        %4724 = vmatprep.mubr.f32.mxu0 0.0
        %4725 = vmatmul.mubr.f32.gmra.mrb[0].mxu0 %v4587
        %v4726 = vpop.f32.mrb[0].mxu0
        %v4727 = vadd.f32 0.0, %v4726
        %v4728 = vpop.f32.mrb[0].mxu0
        %4729 = vmatprep.mubr.f32.mxu0 0.0
        %4730 = vmatmul.mubr.f32.gmra.mrb[0].mxu0 %v4589
        %v4731 = vpop.f32.mrb[0].mxu0
        %v4732 = vadd.f32 0.0, %v4731
        %v4733 = vpop.f32.mrb[0].mxu0
        %4734 = vmatprep.mubr.f32.mxu0 0.0
        %4735 = vmatmul.mubr.f32.gmra.mrb[0].mxu0 %v4591
        %v4736 = vpop.f32.mrb[0].mxu0
        %v4737 = vadd.f32 0.0, %v4736
        %v4738 = vpop.f32.mrb[0].mxu0
        %4739 = vmatprep.mubr.f32.mxu0 0.0
        %4740 = vmatmul.mubr.f32.gmra.mrb[0].mxu0 %v4593
        %v4741 = vpop.f32.mrb[0].mxu0
        %v4742 = vadd.f32 0.0, %v4741
        %v4743 = vpop.f32.mrb[0].mxu0
        %4744 = vmatprep.mubr.f32.mxu0 0.0
        %4745 = vmatmul.mubr.f32.gmra.mrb[0].mxu0 %v4595
        %v4746 = vpop.f32.mrb[0].mxu0
        %v4747 = vadd.f32 0.0, %v4746
        %v4748 = vpop.f32.mrb[0].mxu0
        %4749 = vmatprep.mubr.f32.mxu0 0.0
        %4750 = vmatmul.mubr.f32.gmra.mrb[0].mxu0 %v4597
        %v4751 = vpop.f32.mrb[0].mxu0
        %v4752 = vadd.f32 0.0, %v4751
        %v4753 = vpop.f32.mrb[0].mxu0
        %4754 = vmatprep.mubr.f32.mxu0 0.0
        %4755 = vmatmul.mubr.f32.gmra.mrb[0].mxu0 %v4599
        %v4756 = vpop.f32.mrb[0].mxu0
        %v4757 = vadd.f32 0.0, %v4756
        %v4758 = vpop.f32.mrb[0].mxu0
        %4759 = vmatprep.mubr.f32.mxu0 0.0
        %4760 = vmatmul.mubr.f32.gmra.mrb[0].mxu0 %v4601
        %v4761 = vpop.f32.mrb[0].mxu0
        %v4762 = vadd.f32 0.0, %v4761
        %v4763 = vpop.f32.mrb[0].mxu0
        %4764 = vmatprep.mubr.f32.mxu0 0.0
        %4765 = vmatmul.mubr.f32.gmra.mrb[0].mxu0 %v4603
        %v4766 = vpop.f32.mrb[0].mxu0
        %v4767 = vadd.f32 0.0, %v4766
        %v4768 = vpop.f32.mrb[0].mxu0
        %4769 = vmatprep.mubr.f32.mxu0 0.0
        %4770 = vmatmul.mubr.f32.gmra.mrb[0].mxu0 %v4605
        %v4771 = vpop.f32.mrb[0].mxu0
        %v4772 = vadd.f32 0.0, %v4771
        %v4773 = vpop.f32.mrb[0].mxu0
        %4774 = vmatprep.mubr.f32.mxu0 0.0
        %4775 = vmatmul.mubr.f32.gmra.mrb[0].mxu0 %v4607
        %v4776 = vpop.f32.mrb[0].mxu0
        %v4777 = vadd.f32 0.0, %v4776
        %v4778 = vpop.f32.mrb[0].mxu0
        %4779 = vmatprep.mubr.f32.mxu0 0.0
        %4780 = vmatmul.mubr.f32.gmra.mrb[0].mxu0 %v4609
        %v4781 = vpop.f32.mrb[0].mxu0
        %v4782 = vadd.f32 0.0, %v4781
        %v4783 = vpop.f32.mrb[0].mxu0
        %4784 = vmatprep.mubr.f32.mxu0 0.0
        %4785 = vmatmul.mubr.f32.gmra.mrb[0].mxu0 %v4611
        %v4786 = vpop.f32.mrb[0].mxu0
        %v4787 = vadd.f32 0.0, %v4786
        %v4788 = vpop.f32.mrb[0].mxu0
        %4789 = vdwg.mxu0
        %4790 = vmax.xlane.f32.xlu0 %v4712
        %v4791 = vpop.xlane.xlu0 %4790
        %4792 = vmax.xlane.f32.xlu0 %v4717
        %v4793 = vpop.xlane.xlu0 %4792
        %4794 = vmax.xlane.f32.xlu0 %v4722
        %v4795 = vpop.xlane.xlu0 %4794
        %4796 = vmax.xlane.f32.xlu0 %v4727
        %v4797 = vpop.xlane.xlu0 %4796
        %4798 = vmax.xlane.f32.xlu0 %v4732
        %v4799 = vpop.xlane.xlu0 %4798
        %4800 = vmax.xlane.f32.xlu0 %v4737
        %v4801 = vpop.xlane.xlu0 %4800
        %4802 = vmax.xlane.f32.xlu0 %v4742
        %v4803 = vpop.xlane.xlu0 %4802
        %4804 = vmax.xlane.f32.xlu0 %v4747
        %v4805 = vpop.xlane.xlu0 %4804
        %4806 = vmax.xlane.f32.xlu0 %v4752
        %v4807 = vpop.xlane.xlu0 %4806
        %4808 = vmax.xlane.f32.xlu0 %v4757
        %v4809 = vpop.xlane.xlu0 %4808
        %4810 = vmax.xlane.f32.xlu0 %v4762
        %v4811 = vpop.xlane.xlu0 %4810
        %4812 = vmax.xlane.f32.xlu0 %v4767
        %v4813 = vpop.xlane.xlu0 %4812
        %4814 = vmax.xlane.f32.xlu0 %v4772
        %v4815 = vpop.xlane.xlu0 %4814
        %4816 = vmax.xlane.f32.xlu0 %v4777
        %v4817 = vpop.xlane.xlu0 %4816
        %4818 = vmax.xlane.f32.xlu0 %v4782
        %v4819 = vpop.xlane.xlu0 %4818
        %4820 = vmax.xlane.f32.xlu0 %v4787
        %v4821 = vpop.xlane.xlu0 %4820
        %v4822 = vsub.f32 %v4712, %v4791
        %v4823 = vsub.f32 %v4717, %v4793
        %v4824 = vsub.f32 %v4722, %v4795
        %v4825 = vsub.f32 %v4727, %v4797
        %v4826 = vsub.f32 %v4732, %v4799
        %v4827 = vsub.f32 %v4737, %v4801
        %v4828 = vsub.f32 %v4742, %v4803
        %v4829 = vsub.f32 %v4747, %v4805
        %v4830 = vsub.f32 %v4752, %v4807
        %v4831 = vsub.f32 %v4757, %v4809
        %v4832 = vsub.f32 %v4762, %v4811
        %v4833 = vsub.f32 %v4767, %v4813
        %v4834 = vsub.f32 %v4772, %v4815
        %v4835 = vsub.f32 %v4777, %v4817
        %v4836 = vsub.f32 %v4782, %v4819
        %v4837 = vsub.f32 %v4787, %v4821
        %v4838 = vmul.f32 %v4822, 1.442695
        %v4839 = vpow.pop %v4838
        %v4840 = vmul.f32 %v4823, 1.442695
        %v4841 = vpow.pop %v4840
        %v4842 = vmul.f32 %v4824, 1.442695
        %v4843 = vpow.pop %v4842
        %v4844 = vmul.f32 %v4825, 1.442695
        %v4845 = vpow.pop %v4844
        %v4846 = vmul.f32 %v4826, 1.442695
        %v4847 = vpow.pop %v4846
        %v4848 = vmul.f32 %v4827, 1.442695
        %v4849 = vpow.pop %v4848
        %v4850 = vmul.f32 %v4828, 1.442695
        %v4851 = vpow.pop %v4850
        %v4852 = vmul.f32 %v4829, 1.442695
        %v4853 = vpow.pop %v4852
        %v4854 = vmul.f32 %v4830, 1.442695
        %v4855 = vpow.pop %v4854
        %v4856 = vmul.f32 %v4831, 1.442695
        %v4857 = vpow.pop %v4856
        %v4858 = vmul.f32 %v4832, 1.442695
        %v4859 = vpow.pop %v4858
        %v4860 = vmul.f32 %v4833, 1.442695
        %v4861 = vpow.pop %v4860
        %v4862 = vmul.f32 %v4834, 1.442695
        %v4863 = vpow.pop %v4862
        %v4864 = vmul.f32 %v4835, 1.442695
        %v4865 = vpow.pop %v4864
        %v4866 = vmul.f32 %v4836, 1.442695
        %v4867 = vpow.pop %v4866
        %v4868 = vmul.f32 %v4837, 1.442695
        %v4869 = vpow.pop %v4868
        %4870 = vadd.xlane.f32.xlu0 %v4839
        %v4871 = vpop.xlane.xlu0 %4870
        %4872 = vadd.xlane.f32.xlu0 %v4841
        %v4873 = vpop.xlane.xlu0 %4872
        %4874 = vadd.xlane.f32.xlu0 %v4843
        %v4875 = vpop.xlane.xlu0 %4874
        %4876 = vadd.xlane.f32.xlu0 %v4845
        %v4877 = vpop.xlane.xlu0 %4876
        %4878 = vadd.xlane.f32.xlu0 %v4847
        %v4879 = vpop.xlane.xlu0 %4878
        %4880 = vadd.xlane.f32.xlu0 %v4849
        %v4881 = vpop.xlane.xlu0 %4880
        %4882 = vadd.xlane.f32.xlu0 %v4851
        %v4883 = vpop.xlane.xlu0 %4882
        %4884 = vadd.xlane.f32.xlu0 %v4853
        %v4885 = vpop.xlane.xlu0 %4884
        %4886 = vadd.xlane.f32.xlu0 %v4855
        %v4887 = vpop.xlane.xlu0 %4886
        %4888 = vadd.xlane.f32.xlu0 %v4857
        %v4889 = vpop.xlane.xlu0 %4888
        %4890 = vadd.xlane.f32.xlu0 %v4859
        %v4891 = vpop.xlane.xlu0 %4890
        %4892 = vadd.xlane.f32.xlu0 %v4861
        %v4893 = vpop.xlane.xlu0 %4892
        %4894 = vadd.xlane.f32.xlu0 %v4863
        %v4895 = vpop.xlane.xlu0 %4894
        %4896 = vadd.xlane.f32.xlu0 %v4865
        %v4897 = vpop.xlane.xlu0 %4896
        %4898 = vadd.xlane.f32.xlu0 %v4867
        %v4899 = vpop.xlane.xlu0 %4898
        %4900 = vadd.xlane.f32.xlu0 %v4869
        %v4901 = vpop.xlane.xlu0 %4900
        %4902 = vrot.lane.b32.xlu0 %v860, 64
        %v4903 = vpop.permute.xlu0 %4902
        %4904 = vrot.lane.b32.xlu0 %v866, 64
        %v4905 = vpop.permute.xlu0 %4904
        %4906 = vrot.lane.b32.xlu0 %v872, 64
        %v4907 = vpop.permute.xlu0 %4906
        %4908 = vrot.lane.b32.xlu0 %v878, 64
        %v4909 = vpop.permute.xlu0 %4908
        %4910 = vrot.lane.b32.xlu0 %v884, 64
        %v4911 = vpop.permute.xlu0 %4910
        %4912 = vrot.lane.b32.xlu0 %v890, 64
        %v4913 = vpop.permute.xlu0 %4912
        %4914 = vrot.lane.b32.xlu0 %v896, 64
        %v4915 = vpop.permute.xlu0 %4914
        %4916 = vrot.lane.b32.xlu0 %v902, 64
        %v4917 = vpop.permute.xlu0 %4916
        %4918 = vrot.lane.b32.xlu0 %v908, 64
        %v4919 = vpop.permute.xlu0 %4918
        %4920 = vrot.lane.b32.xlu0 %v914, 64
        %v4921 = vpop.permute.xlu0 %4920
        %4922 = vrot.lane.b32.xlu0 %v920, 64
        %v4923 = vpop.permute.xlu0 %4922
        %4924 = vrot.lane.b32.xlu0 %v926, 64
        %v4925 = vpop.permute.xlu0 %4924
        %4926 = vrot.lane.b32.xlu0 %v932, 64
        %v4927 = vpop.permute.xlu0 %4926
        %4928 = vrot.lane.b32.xlu0 %v938, 64
        %v4929 = vpop.permute.xlu0 %4928
        %4930 = vrot.lane.b32.xlu0 %v944, 64
        %v4931 = vpop.permute.xlu0 %4930
        %4932 = vrot.lane.b32.xlu0 %v950, 64
        %v4933 = vpop.permute.xlu0 %4932
        %4950 = vmatprep.subr.mxu0 0.0
        %4951 = vmatpush1.msra.mxu0 %v4903
        %4952 = vmatprep.subr.mxu0 0.0
        %4953 = vmatpush1.msra.mxu0 %v4905
        %4954 = vmatprep.subr.mxu0 0.0
        %4955 = vmatpush1.msra.mxu0 %v4907
        %4956 = vmatprep.subr.mxu0 0.0
        %4957 = vmatpush1.msra.mxu0 %v4909
        %4958 = vmatprep.subr.mxu0 0.0
        %4959 = vmatpush1.msra.mxu0 %v4911
        %4960 = vmatprep.subr.mxu0 0.0
        %4961 = vmatpush1.msra.mxu0 %v4913
        %4962 = vmatprep.subr.mxu0 0.0
        %4963 = vmatpush1.msra.mxu0 %v4915
        %4964 = vmatprep.subr.mxu0 0.0
        %4965 = vmatpush1.msra.mxu0 %v4917
        %4966 = vmatprep.subr.mxu0 0.0
        %4967 = vmatpush1.msra.mxu0 %v4919
        %4968 = vmatprep.subr.mxu0 0.0
        %4969 = vmatpush1.msra.mxu0 %v4921
        %4970 = vmatprep.subr.mxu0 0.0
        %4971 = vmatpush1.msra.mxu0 %v4923
        %4972 = vmatprep.subr.mxu0 0.0
        %4973 = vmatpush1.msra.mxu0 %v4925
        %4974 = vmatprep.subr.mxu0 0.0
        %4975 = vmatpush1.msra.mxu0 %v4927
        %4976 = vmatprep.subr.mxu0 0.0
        %4977 = vmatpush1.msra.mxu0 %v4929
        %4978 = vmatprep.subr.mxu0 0.0
        %4979 = vmatpush1.msra.mxu0 %v4931
        %4980 = vmatprep.subr.mxu0 0.0
        %4981 = vmatpush1.msra.mxu0 %v4933
        %4982 = vmatprep.subr.mxu0 0.0
        %4983 = vmatpush1.msra.mxu0 0.0
        %4984 = vmatprep.subr.mxu0 0.0
        %4985 = vmatpush1.msra.mxu0 0.0
        %4986 = vmatprep.subr.mxu0 0.0
        %4987 = vmatpush1.msra.mxu0 0.0
        %4988 = vmatprep.subr.mxu0 0.0
        %4989 = vmatpush1.msra.mxu0 0.0
        %4990 = vmatprep.subr.mxu0 0.0
        %4991 = vmatpush1.msra.mxu0 0.0
        %4992 = vmatprep.subr.mxu0 0.0
        %4993 = vmatpush1.msra.mxu0 0.0
        %4994 = vmatprep.subr.mxu0 0.0
        %4995 = vmatpush1.msra.mxu0 0.0
        %4996 = vmatprep.subr.mxu0 0.0
        %4997 = vmatpush1.msra.mxu0 0.0
        %4998 = vmatprep.subr.mxu0 0.0
        %4999 = vmatpush1.msra.mxu0 0.0
        %5000 = vmatprep.subr.mxu0 0.0
        %5001 = vmatpush1.msra.mxu0 0.0
        %5002 = vmatprep.subr.mxu0 0.0
        %5003 = vmatpush1.msra.mxu0 0.0
        %5004 = vmatprep.subr.mxu0 0.0
        %5005 = vmatpush1.msra.mxu0 0.0
        %5006 = vmatprep.subr.mxu0 0.0
        %5007 = vmatpush1.msra.mxu0 0.0
        %5008 = vmatprep.subr.mxu0 0.0
        %5009 = vmatpush1.msra.mxu0 0.0
        %5010 = vmatprep.subr.mxu0 0.0
        %5011 = vmatpush1.msra.mxu0 0.0
        %5012 = vmatprep.subr.mxu0 0.0
        %5013 = vmatpush1.msra.mxu0 0.0
        %5014 = vmatprep.mubr.f32.mxu0 0.0
        %5015 = vmatmul.mubr.f32.gmra.mrb[0].mxu0 %v4839
        %v5016 = vpop.f32.mrb[0].mxu0
        %v5017 = vadd.f32 0.0, %v5016
        %v5018 = vpop.f32.mrb[0].mxu0
        %5019 = vmatprep.mubr.f32.mxu0 0.0
        %5020 = vmatmul.mubr.f32.gmra.mrb[0].mxu0 %v4841
        %v5021 = vpop.f32.mrb[0].mxu0
        %v5022 = vadd.f32 0.0, %v5021
        %v5023 = vpop.f32.mrb[0].mxu0
        %5024 = vmatprep.mubr.f32.mxu0 0.0
        %5025 = vmatmul.mubr.f32.gmra.mrb[0].mxu0 %v4843
        %v5026 = vpop.f32.mrb[0].mxu0
        %v5027 = vadd.f32 0.0, %v5026
        %v5028 = vpop.f32.mrb[0].mxu0
        %5029 = vmatprep.mubr.f32.mxu0 0.0
        %5030 = vmatmul.mubr.f32.gmra.mrb[0].mxu0 %v4845
        %v5031 = vpop.f32.mrb[0].mxu0
        %v5032 = vadd.f32 0.0, %v5031
        %v5033 = vpop.f32.mrb[0].mxu0
        %5034 = vmatprep.mubr.f32.mxu0 0.0
        %5035 = vmatmul.mubr.f32.gmra.mrb[0].mxu0 %v4847
        %v5036 = vpop.f32.mrb[0].mxu0
        %v5037 = vadd.f32 0.0, %v5036
        %v5038 = vpop.f32.mrb[0].mxu0
        %5039 = vmatprep.mubr.f32.mxu0 0.0
        %5040 = vmatmul.mubr.f32.gmra.mrb[0].mxu0 %v4849
        %v5041 = vpop.f32.mrb[0].mxu0
        %v5042 = vadd.f32 0.0, %v5041
        %v5043 = vpop.f32.mrb[0].mxu0
        %5044 = vmatprep.mubr.f32.mxu0 0.0
        %5045 = vmatmul.mubr.f32.gmra.mrb[0].mxu0 %v4851
        %v5046 = vpop.f32.mrb[0].mxu0
        %v5047 = vadd.f32 0.0, %v5046
        %v5048 = vpop.f32.mrb[0].mxu0
        %5049 = vmatprep.mubr.f32.mxu0 0.0
        %5050 = vmatmul.mubr.f32.gmra.mrb[0].mxu0 %v4853
        %v5051 = vpop.f32.mrb[0].mxu0
        %v5052 = vadd.f32 0.0, %v5051
        %v5053 = vpop.f32.mrb[0].mxu0
        %5054 = vmatprep.mubr.f32.mxu0 0.0
        %5055 = vmatmul.mubr.f32.gmra.mrb[0].mxu0 %v4855
        %v5056 = vpop.f32.mrb[0].mxu0
        %v5057 = vadd.f32 0.0, %v5056
        %v5058 = vpop.f32.mrb[0].mxu0
        %5059 = vmatprep.mubr.f32.mxu0 0.0
        %5060 = vmatmul.mubr.f32.gmra.mrb[0].mxu0 %v4857
        %v5061 = vpop.f32.mrb[0].mxu0
        %v5062 = vadd.f32 0.0, %v5061
        %v5063 = vpop.f32.mrb[0].mxu0
        %5064 = vmatprep.mubr.f32.mxu0 0.0
        %5065 = vmatmul.mubr.f32.gmra.mrb[0].mxu0 %v4859
        %v5066 = vpop.f32.mrb[0].mxu0
        %v5067 = vadd.f32 0.0, %v5066
        %v5068 = vpop.f32.mrb[0].mxu0
        %5069 = vmatprep.mubr.f32.mxu0 0.0
        %5070 = vmatmul.mubr.f32.gmra.mrb[0].mxu0 %v4861
        %v5071 = vpop.f32.mrb[0].mxu0
        %v5072 = vadd.f32 0.0, %v5071
        %v5073 = vpop.f32.mrb[0].mxu0
        %5074 = vmatprep.mubr.f32.mxu0 0.0
        %5075 = vmatmul.mubr.f32.gmra.mrb[0].mxu0 %v4863
        %v5076 = vpop.f32.mrb[0].mxu0
        %v5077 = vadd.f32 0.0, %v5076
        %v5078 = vpop.f32.mrb[0].mxu0
        %5079 = vmatprep.mubr.f32.mxu0 0.0
        %5080 = vmatmul.mubr.f32.gmra.mrb[0].mxu0 %v4865
        %v5081 = vpop.f32.mrb[0].mxu0
        %v5082 = vadd.f32 0.0, %v5081
        %v5083 = vpop.f32.mrb[0].mxu0
        %5084 = vmatprep.mubr.f32.mxu0 0.0
        %5085 = vmatmul.mubr.f32.gmra.mrb[0].mxu0 %v4867
        %v5086 = vpop.f32.mrb[0].mxu0
        %v5087 = vadd.f32 0.0, %v5086
        %v5088 = vpop.f32.mrb[0].mxu0
        %5089 = vmatprep.mubr.f32.mxu0 0.0
        %5090 = vmatmul.mubr.f32.gmra.mrb[0].mxu0 %v4869
        %v5091 = vpop.f32.mrb[0].mxu0
        %v5092 = vadd.f32 0.0, %v5091
        %v5093 = vpop.f32.mrb[0].mxu0
        %5094 = vdwg.mxu0
        %v5095 = vrcp.pop %v4871
        %v5096 = vrcp.pop %v4873
        %v5097 = vrcp.pop %v4875
        %v5098 = vrcp.pop %v4877
        %v5099 = vrcp.pop %v4879
        %v5100 = vrcp.pop %v4881
        %v5101 = vrcp.pop %v4883
        %v5102 = vrcp.pop %v4885
        %v5103 = vrcp.pop %v4887
        %v5104 = vrcp.pop %v4889
        %v5105 = vrcp.pop %v4891
        %v5106 = vrcp.pop %v4893
        %v5107 = vrcp.pop %v4895
        %v5108 = vrcp.pop %v4897
        %v5109 = vrcp.pop %v4899
        %v5110 = vrcp.pop %v4901
        %v5111 = vmul.f32 %v5017, %v5095
        %v5112 = vmul.f32 %v5022, %v5096
        %v5113 = vmul.f32 %v5027, %v5097
        %v5114 = vmul.f32 %v5032, %v5098
        %v5115 = vmul.f32 %v5037, %v5099
        %v5116 = vmul.f32 %v5042, %v5100
        %v5117 = vmul.f32 %v5047, %v5101
        %v5118 = vmul.f32 %v5052, %v5102
        %v5119 = vmul.f32 %v5057, %v5103
        %v5120 = vmul.f32 %v5062, %v5104
        %v5121 = vmul.f32 %v5067, %v5105
        %v5122 = vmul.f32 %v5072, %v5106
        %v5123 = vmul.f32 %v5077, %v5107
        %v5124 = vmul.f32 %v5082, %v5108
        %v5125 = vmul.f32 %v5087, %v5109
        %v5126 = vmul.f32 %v5092, %v5110
        %5127 = vrot.lane.b32.xlu0 %v3345, 32
        %v5128 = vpop.permute.xlu0 %5127
        %5129 = vrot.lane.b32.xlu0 %v3346, 32
        %v5130 = vpop.permute.xlu0 %5129
        %5131 = vrot.lane.b32.xlu0 %v3347, 32
        %v5132 = vpop.permute.xlu0 %5131
        %5133 = vrot.lane.b32.xlu0 %v3348, 32
        %v5134 = vpop.permute.xlu0 %5133
        %5135 = vrot.lane.b32.xlu0 %v3349, 32
        %v5136 = vpop.permute.xlu0 %5135
        %5137 = vrot.lane.b32.xlu0 %v3350, 32
        %v5138 = vpop.permute.xlu0 %5137
        %5139 = vrot.lane.b32.xlu0 %v3351, 32
        %v5140 = vpop.permute.xlu0 %5139
        %5141 = vrot.lane.b32.xlu0 %v3352, 32
        %v5142 = vpop.permute.xlu0 %5141
        %5143 = vrot.lane.b32.xlu0 %v3353, 32
        %v5144 = vpop.permute.xlu0 %5143
        %5145 = vrot.lane.b32.xlu0 %v3354, 32
        %v5146 = vpop.permute.xlu0 %5145
        %5147 = vrot.lane.b32.xlu0 %v3355, 32
        %v5148 = vpop.permute.xlu0 %5147
        %5149 = vrot.lane.b32.xlu0 %v3356, 32
        %v5150 = vpop.permute.xlu0 %5149
        %5151 = vrot.lane.b32.xlu0 %v3357, 32
        %v5152 = vpop.permute.xlu0 %5151
        %5153 = vrot.lane.b32.xlu0 %v3358, 32
        %v5154 = vpop.permute.xlu0 %5153
        %5155 = vrot.lane.b32.xlu0 %v3359, 32
        %v5156 = vpop.permute.xlu0 %5155
        %5157 = vrot.lane.b32.xlu0 %v3360, 32
        %v5158 = vpop.permute.xlu0 %5157
        %5159 = vrot.lane.b32.xlu0 %v699, 32
        %v5160 = vpop.permute.xlu0 %5159
        %5161 = vrot.lane.b32.xlu0 %v705, 32
        %v5162 = vpop.permute.xlu0 %5161
        %5163 = vrot.lane.b32.xlu0 %v711, 32
        %v5164 = vpop.permute.xlu0 %5163
        %5165 = vrot.lane.b32.xlu0 %v717, 32
        %v5166 = vpop.permute.xlu0 %5165
        %5167 = vrot.lane.b32.xlu0 %v723, 32
        %v5168 = vpop.permute.xlu0 %5167
        %5169 = vrot.lane.b32.xlu0 %v729, 32
        %v5170 = vpop.permute.xlu0 %5169
        %5171 = vrot.lane.b32.xlu0 %v735, 32
        %v5172 = vpop.permute.xlu0 %5171
        %5173 = vrot.lane.b32.xlu0 %v741, 32
        %v5174 = vpop.permute.xlu0 %5173
        %5175 = vrot.lane.b32.xlu0 %v747, 32
        %v5176 = vpop.permute.xlu0 %5175
        %5177 = vrot.lane.b32.xlu0 %v753, 32
        %v5178 = vpop.permute.xlu0 %5177
        %5179 = vrot.lane.b32.xlu0 %v759, 32
        %v5180 = vpop.permute.xlu0 %5179
        %5181 = vrot.lane.b32.xlu0 %v765, 32
        %v5182 = vpop.permute.xlu0 %5181
        %5183 = vrot.lane.b32.xlu0 %v771, 32
        %v5184 = vpop.permute.xlu0 %5183
        %5185 = vrot.lane.b32.xlu0 %v777, 32
        %v5186 = vpop.permute.xlu0 %5185
        %5187 = vrot.lane.b32.xlu0 %v783, 32
        %v5188 = vpop.permute.xlu0 %5187
        %5189 = vrot.lane.b32.xlu0 %v789, 32
        %v5190 = vpop.permute.xlu0 %5189
        %v5191 = vsel %vm968, %v5128, 0
        %v5193 = vsel %vm968, %v5130, 0
        %v5195 = vsel %vm968, %v5132, 0
        %v5197 = vsel %vm968, %v5134, 0
        %v5199 = vsel %vm968, %v5136, 0
        %v5201 = vsel %vm968, %v5138, 0
        %v5203 = vsel %vm968, %v5140, 0
        %v5205 = vsel %vm968, %v5142, 0
        %v5207 = vsel %vm968, %v5144, 0
        %v5209 = vsel %vm968, %v5146, 0
        %v5211 = vsel %vm968, %v5148, 0
        %v5213 = vsel %vm968, %v5150, 0
        %v5215 = vsel %vm968, %v5152, 0
        %v5217 = vsel %vm968, %v5154, 0
        %v5219 = vsel %vm968, %v5156, 0
        %v5221 = vsel %vm968, %v5158, 0
        %v5223 = vsel %vm968, %v5160, 0
        %v5225 = vsel %vm968, %v5162, 0
        %v5227 = vsel %vm968, %v5164, 0
        %v5229 = vsel %vm968, %v5166, 0
        %v5231 = vsel %vm968, %v5168, 0
        %v5233 = vsel %vm968, %v5170, 0
        %v5235 = vsel %vm968, %v5172, 0
        %v5237 = vsel %vm968, %v5174, 0
        %v5239 = vsel %vm968, %v5176, 0
        %v5241 = vsel %vm968, %v5178, 0
        %v5243 = vsel %vm968, %v5180, 0
        %v5245 = vsel %vm968, %v5182, 0
        %v5247 = vsel %vm968, %v5184, 0
        %v5249 = vsel %vm968, %v5186, 0
        %v5251 = vsel %vm968, %v5188, 0
        %v5253 = vsel %vm968, %v5190, 0
        %5255 = vmatprep.subr.mxu0 0.0
        %5256 = vmatpush1.xpose.msra.mxu0 %v5223
        %5257 = vmatprep.subr.mxu0 0.0
        %5258 = vmatpush1.xpose.msra.mxu0 %v5225
        %5259 = vmatprep.subr.mxu0 0.0
        %5260 = vmatpush1.xpose.msra.mxu0 %v5227
        %5261 = vmatprep.subr.mxu0 0.0
        %5262 = vmatpush1.xpose.msra.mxu0 %v5229
        %5263 = vmatprep.subr.mxu0 0.0
        %5264 = vmatpush1.xpose.msra.mxu0 %v5231
        %5265 = vmatprep.subr.mxu0 0.0
        %5266 = vmatpush1.xpose.msra.mxu0 %v5233
        %5267 = vmatprep.subr.mxu0 0.0
        %5268 = vmatpush1.xpose.msra.mxu0 %v5235
        %5269 = vmatprep.subr.mxu0 0.0
        %5270 = vmatpush1.xpose.msra.mxu0 %v5237
        %5271 = vmatprep.subr.mxu0 0.0
        %5272 = vmatpush1.xpose.msra.mxu0 %v5239
        %5273 = vmatprep.subr.mxu0 0.0
        %5274 = vmatpush1.xpose.msra.mxu0 %v5241
        %5275 = vmatprep.subr.mxu0 0.0
        %5276 = vmatpush1.xpose.msra.mxu0 %v5243
        %5277 = vmatprep.subr.mxu0 0.0
        %5278 = vmatpush1.xpose.msra.mxu0 %v5245
        %5279 = vmatprep.subr.mxu0 0.0
        %5280 = vmatpush1.xpose.msra.mxu0 %v5247
        %5281 = vmatprep.subr.mxu0 0.0
        %5282 = vmatpush1.xpose.msra.mxu0 %v5249
        %5283 = vmatprep.subr.mxu0 0.0
        %5284 = vmatpush1.xpose.msra.mxu0 %v5251
        %5285 = vmatprep.subr.mxu0 0.0
        %5286 = vmatpush1.xpose.msra.mxu0 %v5253
        %5287 = vmatprep.subr.mxu0 0.0
        %5288 = vmatpush1.xpose.msra.mxu0 0.0
        %5289 = vmatprep.subr.mxu0 0.0
        %5290 = vmatpush1.xpose.msra.mxu0 0.0
        %5291 = vmatprep.subr.mxu0 0.0
        %5292 = vmatpush1.xpose.msra.mxu0 0.0
        %5293 = vmatprep.subr.mxu0 0.0
        %5294 = vmatpush1.xpose.msra.mxu0 0.0
        %5295 = vmatprep.subr.mxu0 0.0
        %5296 = vmatpush1.xpose.msra.mxu0 0.0
        %5297 = vmatprep.subr.mxu0 0.0
        %5298 = vmatpush1.xpose.msra.mxu0 0.0
        %5299 = vmatprep.subr.mxu0 0.0
        %5300 = vmatpush1.xpose.msra.mxu0 0.0
        %5301 = vmatprep.subr.mxu0 0.0
        %5302 = vmatpush1.xpose.msra.mxu0 0.0
        %5303 = vmatprep.subr.mxu0 0.0
        %5304 = vmatpush1.xpose.msra.mxu0 0.0
        %5305 = vmatprep.subr.mxu0 0.0
        %5306 = vmatpush1.xpose.msra.mxu0 0.0
        %5307 = vmatprep.subr.mxu0 0.0
        %5308 = vmatpush1.xpose.msra.mxu0 0.0
        %5309 = vmatprep.subr.mxu0 0.0
        %5310 = vmatpush1.xpose.msra.mxu0 0.0
        %5311 = vmatprep.subr.mxu0 0.0
        %5312 = vmatpush1.xpose.msra.mxu0 0.0
        %5313 = vmatprep.subr.mxu0 0.0
        %5314 = vmatpush1.xpose.msra.mxu0 0.0
        %5315 = vmatprep.subr.mxu0 0.0
        %5316 = vmatpush1.xpose.msra.mxu0 0.0
        %5317 = vmatprep.subr.mxu0 0.0
        %5318 = vmatpush1.xpose.msra.mxu0 0.0
        %5319 = vmatprep.mubr.f32.mxu0 0.0
        %5320 = vmatmul.mubr.f32.gmra.mrb[0].mxu0 %v5191
        %v5321 = vpop.f32.mrb[0].mxu0
        %v5322 = vadd.f32 0.0, %v5321
        %v5323 = vpop.f32.mrb[0].mxu0
        %5324 = vmatprep.mubr.f32.mxu0 0.0
        %5325 = vmatmul.mubr.f32.gmra.mrb[0].mxu0 %v5193
        %v5326 = vpop.f32.mrb[0].mxu0
        %v5327 = vadd.f32 0.0, %v5326
        %v5328 = vpop.f32.mrb[0].mxu0
        %5329 = vmatprep.mubr.f32.mxu0 0.0
        %5330 = vmatmul.mubr.f32.gmra.mrb[0].mxu0 %v5195
        %v5331 = vpop.f32.mrb[0].mxu0
        %v5332 = vadd.f32 0.0, %v5331
        %v5333 = vpop.f32.mrb[0].mxu0
        %5334 = vmatprep.mubr.f32.mxu0 0.0
        %5335 = vmatmul.mubr.f32.gmra.mrb[0].mxu0 %v5197
        %v5336 = vpop.f32.mrb[0].mxu0
        %v5337 = vadd.f32 0.0, %v5336
        %v5338 = vpop.f32.mrb[0].mxu0
        %5339 = vmatprep.mubr.f32.mxu0 0.0
        %5340 = vmatmul.mubr.f32.gmra.mrb[0].mxu0 %v5199
        %v5341 = vpop.f32.mrb[0].mxu0
        %v5342 = vadd.f32 0.0, %v5341
        %v5343 = vpop.f32.mrb[0].mxu0
        %5344 = vmatprep.mubr.f32.mxu0 0.0
        %5345 = vmatmul.mubr.f32.gmra.mrb[0].mxu0 %v5201
        %v5346 = vpop.f32.mrb[0].mxu0
        %v5347 = vadd.f32 0.0, %v5346
        %v5348 = vpop.f32.mrb[0].mxu0
        %5349 = vmatprep.mubr.f32.mxu0 0.0
        %5350 = vmatmul.mubr.f32.gmra.mrb[0].mxu0 %v5203
        %v5351 = vpop.f32.mrb[0].mxu0
        %v5352 = vadd.f32 0.0, %v5351
        %v5353 = vpop.f32.mrb[0].mxu0
        %5354 = vmatprep.mubr.f32.mxu0 0.0
        %5355 = vmatmul.mubr.f32.gmra.mrb[0].mxu0 %v5205
        %v5356 = vpop.f32.mrb[0].mxu0
        %v5357 = vadd.f32 0.0, %v5356
        %v5358 = vpop.f32.mrb[0].mxu0
        %5359 = vmatprep.mubr.f32.mxu0 0.0
        %5360 = vmatmul.mubr.f32.gmra.mrb[0].mxu0 %v5207
        %v5361 = vpop.f32.mrb[0].mxu0
        %v5362 = vadd.f32 0.0, %v5361
        %v5363 = vpop.f32.mrb[0].mxu0
        %5364 = vmatprep.mubr.f32.mxu0 0.0
        %5365 = vmatmul.mubr.f32.gmra.mrb[0].mxu0 %v5209
        %v5366 = vpop.f32.mrb[0].mxu0
        %v5367 = vadd.f32 0.0, %v5366
        %v5368 = vpop.f32.mrb[0].mxu0
        %5369 = vmatprep.mubr.f32.mxu0 0.0
        %5370 = vmatmul.mubr.f32.gmra.mrb[0].mxu0 %v5211
        %v5371 = vpop.f32.mrb[0].mxu0
        %v5372 = vadd.f32 0.0, %v5371
        %v5373 = vpop.f32.mrb[0].mxu0
        %5374 = vmatprep.mubr.f32.mxu0 0.0
        %5375 = vmatmul.mubr.f32.gmra.mrb[0].mxu0 %v5213
        %v5376 = vpop.f32.mrb[0].mxu0
        %v5377 = vadd.f32 0.0, %v5376
        %v5378 = vpop.f32.mrb[0].mxu0
        %5379 = vmatprep.mubr.f32.mxu0 0.0
        %5380 = vmatmul.mubr.f32.gmra.mrb[0].mxu0 %v5215
        %v5381 = vpop.f32.mrb[0].mxu0
        %v5382 = vadd.f32 0.0, %v5381
        %v5383 = vpop.f32.mrb[0].mxu0
        %5384 = vmatprep.mubr.f32.mxu0 0.0
        %5385 = vmatmul.mubr.f32.gmra.mrb[0].mxu0 %v5217
        %v5386 = vpop.f32.mrb[0].mxu0
        %v5387 = vadd.f32 0.0, %v5386
        %v5388 = vpop.f32.mrb[0].mxu0
        %5389 = vmatprep.mubr.f32.mxu0 0.0
        %5390 = vmatmul.mubr.f32.gmra.mrb[0].mxu0 %v5219
        %v5391 = vpop.f32.mrb[0].mxu0
        %v5392 = vadd.f32 0.0, %v5391
        %v5393 = vpop.f32.mrb[0].mxu0
        %5394 = vmatprep.mubr.f32.mxu0 0.0
        %5395 = vmatmul.mubr.f32.gmra.mrb[0].mxu0 %v5221
        %v5396 = vpop.f32.mrb[0].mxu0
        %v5397 = vadd.f32 0.0, %v5396
        %v5398 = vpop.f32.mrb[0].mxu0
        %5399 = vdwg.mxu0
        %5400 = vmax.xlane.f32.xlu0 %v5322
        %v5401 = vpop.xlane.xlu0 %5400
        %5402 = vmax.xlane.f32.xlu0 %v5327
        %v5403 = vpop.xlane.xlu0 %5402
        %5404 = vmax.xlane.f32.xlu0 %v5332
        %v5405 = vpop.xlane.xlu0 %5404
        %5406 = vmax.xlane.f32.xlu0 %v5337
        %v5407 = vpop.xlane.xlu0 %5406
        %5408 = vmax.xlane.f32.xlu0 %v5342
        %v5409 = vpop.xlane.xlu0 %5408
        %5410 = vmax.xlane.f32.xlu0 %v5347
        %v5411 = vpop.xlane.xlu0 %5410
        %5412 = vmax.xlane.f32.xlu0 %v5352
        %v5413 = vpop.xlane.xlu0 %5412
        %5414 = vmax.xlane.f32.xlu0 %v5357
        %v5415 = vpop.xlane.xlu0 %5414
        %5416 = vmax.xlane.f32.xlu0 %v5362
        %v5417 = vpop.xlane.xlu0 %5416
        %5418 = vmax.xlane.f32.xlu0 %v5367
        %v5419 = vpop.xlane.xlu0 %5418
        %5420 = vmax.xlane.f32.xlu0 %v5372
        %v5421 = vpop.xlane.xlu0 %5420
        %5422 = vmax.xlane.f32.xlu0 %v5377
        %v5423 = vpop.xlane.xlu0 %5422
        %5424 = vmax.xlane.f32.xlu0 %v5382
        %v5425 = vpop.xlane.xlu0 %5424
        %5426 = vmax.xlane.f32.xlu0 %v5387
        %v5427 = vpop.xlane.xlu0 %5426
        %5428 = vmax.xlane.f32.xlu0 %v5392
        %v5429 = vpop.xlane.xlu0 %5428
        %5430 = vmax.xlane.f32.xlu0 %v5397
        %v5431 = vpop.xlane.xlu0 %5430
        %v5432 = vsub.f32 %v5322, %v5401
        %v5433 = vsub.f32 %v5327, %v5403
        %v5434 = vsub.f32 %v5332, %v5405
        %v5435 = vsub.f32 %v5337, %v5407
        %v5436 = vsub.f32 %v5342, %v5409
        %v5437 = vsub.f32 %v5347, %v5411
        %v5438 = vsub.f32 %v5352, %v5413
        %v5439 = vsub.f32 %v5357, %v5415
        %v5440 = vsub.f32 %v5362, %v5417
        %v5441 = vsub.f32 %v5367, %v5419
        %v5442 = vsub.f32 %v5372, %v5421
        %v5443 = vsub.f32 %v5377, %v5423
        %v5444 = vsub.f32 %v5382, %v5425
        %v5445 = vsub.f32 %v5387, %v5427
        %v5446 = vsub.f32 %v5392, %v5429
        %v5447 = vsub.f32 %v5397, %v5431
        %v5448 = vmul.f32 %v5432, 1.442695
        %v5449 = vpow.pop %v5448
        %v5450 = vmul.f32 %v5433, 1.442695
        %v5451 = vpow.pop %v5450
        %v5452 = vmul.f32 %v5434, 1.442695
        %v5453 = vpow.pop %v5452
        %v5454 = vmul.f32 %v5435, 1.442695
        %v5455 = vpow.pop %v5454
        %v5456 = vmul.f32 %v5436, 1.442695
        %v5457 = vpow.pop %v5456
        %v5458 = vmul.f32 %v5437, 1.442695
        %v5459 = vpow.pop %v5458
        %v5460 = vmul.f32 %v5438, 1.442695
        %v5461 = vpow.pop %v5460
        %v5462 = vmul.f32 %v5439, 1.442695
        %v5463 = vpow.pop %v5462
        %v5464 = vmul.f32 %v5440, 1.442695
        %v5465 = vpow.pop %v5464
        %v5466 = vmul.f32 %v5441, 1.442695
        %v5467 = vpow.pop %v5466
        %v5468 = vmul.f32 %v5442, 1.442695
        %v5469 = vpow.pop %v5468
        %v5470 = vmul.f32 %v5443, 1.442695
        %v5471 = vpow.pop %v5470
        %v5472 = vmul.f32 %v5444, 1.442695
        %v5473 = vpow.pop %v5472
        %v5474 = vmul.f32 %v5445, 1.442695
        %v5475 = vpow.pop %v5474
        %v5476 = vmul.f32 %v5446, 1.442695
        %v5477 = vpow.pop %v5476
        %v5478 = vmul.f32 %v5447, 1.442695
        %v5479 = vpow.pop %v5478
        %5480 = vadd.xlane.f32.xlu0 %v5449
        %v5481 = vpop.xlane.xlu0 %5480
        %5482 = vadd.xlane.f32.xlu0 %v5451
        %v5483 = vpop.xlane.xlu0 %5482
        %5484 = vadd.xlane.f32.xlu0 %v5453
        %v5485 = vpop.xlane.xlu0 %5484
        %5486 = vadd.xlane.f32.xlu0 %v5455
        %v5487 = vpop.xlane.xlu0 %5486
        %5488 = vadd.xlane.f32.xlu0 %v5457
        %v5489 = vpop.xlane.xlu0 %5488
        %5490 = vadd.xlane.f32.xlu0 %v5459
        %v5491 = vpop.xlane.xlu0 %5490
        %5492 = vadd.xlane.f32.xlu0 %v5461
        %v5493 = vpop.xlane.xlu0 %5492
        %5494 = vadd.xlane.f32.xlu0 %v5463
        %v5495 = vpop.xlane.xlu0 %5494
        %5496 = vadd.xlane.f32.xlu0 %v5465
        %v5497 = vpop.xlane.xlu0 %5496
        %5498 = vadd.xlane.f32.xlu0 %v5467
        %v5499 = vpop.xlane.xlu0 %5498
        %5500 = vadd.xlane.f32.xlu0 %v5469
        %v5501 = vpop.xlane.xlu0 %5500
        %5502 = vadd.xlane.f32.xlu0 %v5471
        %v5503 = vpop.xlane.xlu0 %5502
        %5504 = vadd.xlane.f32.xlu0 %v5473
        %v5505 = vpop.xlane.xlu0 %5504
        %5506 = vadd.xlane.f32.xlu0 %v5475
        %v5507 = vpop.xlane.xlu0 %5506
        %5508 = vadd.xlane.f32.xlu0 %v5477
        %v5509 = vpop.xlane.xlu0 %5508
        %5510 = vadd.xlane.f32.xlu0 %v5479
        %v5511 = vpop.xlane.xlu0 %5510
        %5512 = vrot.lane.b32.xlu0 %v860, 32
        %v5513 = vpop.permute.xlu0 %5512
        %5514 = vrot.lane.b32.xlu0 %v866, 32
        %v5515 = vpop.permute.xlu0 %5514
        %5516 = vrot.lane.b32.xlu0 %v872, 32
        %v5517 = vpop.permute.xlu0 %5516
        %5518 = vrot.lane.b32.xlu0 %v878, 32
        %v5519 = vpop.permute.xlu0 %5518
        %5520 = vrot.lane.b32.xlu0 %v884, 32
        %v5521 = vpop.permute.xlu0 %5520
        %5522 = vrot.lane.b32.xlu0 %v890, 32
        %v5523 = vpop.permute.xlu0 %5522
        %5524 = vrot.lane.b32.xlu0 %v896, 32
        %v5525 = vpop.permute.xlu0 %5524
        %5526 = vrot.lane.b32.xlu0 %v902, 32
        %v5527 = vpop.permute.xlu0 %5526
        %5528 = vrot.lane.b32.xlu0 %v908, 32
        %v5529 = vpop.permute.xlu0 %5528
        %5530 = vrot.lane.b32.xlu0 %v914, 32
        %v5531 = vpop.permute.xlu0 %5530
        %5532 = vrot.lane.b32.xlu0 %v920, 32
        %v5533 = vpop.permute.xlu0 %5532
        %5534 = vrot.lane.b32.xlu0 %v926, 32
        %v5535 = vpop.permute.xlu0 %5534
        %5536 = vrot.lane.b32.xlu0 %v932, 32
        %v5537 = vpop.permute.xlu0 %5536
        %5538 = vrot.lane.b32.xlu0 %v938, 32
        %v5539 = vpop.permute.xlu0 %5538
        %5540 = vrot.lane.b32.xlu0 %v944, 32
        %v5541 = vpop.permute.xlu0 %5540
        %5542 = vrot.lane.b32.xlu0 %v950, 32
        %v5543 = vpop.permute.xlu0 %5542
        %5560 = vmatprep.subr.mxu0 0.0
        %5561 = vmatpush1.msra.mxu0 %v5513
        %5562 = vmatprep.subr.mxu0 0.0
        %5563 = vmatpush1.msra.mxu0 %v5515
        %5564 = vmatprep.subr.mxu0 0.0
        %5565 = vmatpush1.msra.mxu0 %v5517
        %5566 = vmatprep.subr.mxu0 0.0
        %5567 = vmatpush1.msra.mxu0 %v5519
        %5568 = vmatprep.subr.mxu0 0.0
        %5569 = vmatpush1.msra.mxu0 %v5521
        %5570 = vmatprep.subr.mxu0 0.0
        %5571 = vmatpush1.msra.mxu0 %v5523
        %5572 = vmatprep.subr.mxu0 0.0
        %5573 = vmatpush1.msra.mxu0 %v5525
        %5574 = vmatprep.subr.mxu0 0.0
        %5575 = vmatpush1.msra.mxu0 %v5527
        %5576 = vmatprep.subr.mxu0 0.0
        %5577 = vmatpush1.msra.mxu0 %v5529
        %5578 = vmatprep.subr.mxu0 0.0
        %5579 = vmatpush1.msra.mxu0 %v5531
        %5580 = vmatprep.subr.mxu0 0.0
        %5581 = vmatpush1.msra.mxu0 %v5533
        %5582 = vmatprep.subr.mxu0 0.0
        %5583 = vmatpush1.msra.mxu0 %v5535
        %5584 = vmatprep.subr.mxu0 0.0
        %5585 = vmatpush1.msra.mxu0 %v5537
        %5586 = vmatprep.subr.mxu0 0.0
        %5587 = vmatpush1.msra.mxu0 %v5539
        %5588 = vmatprep.subr.mxu0 0.0
        %5589 = vmatpush1.msra.mxu0 %v5541
        %5590 = vmatprep.subr.mxu0 0.0
        %5591 = vmatpush1.msra.mxu0 %v5543
        %5592 = vmatprep.subr.mxu0 0.0
        %5593 = vmatpush1.msra.mxu0 0.0
        %5594 = vmatprep.subr.mxu0 0.0
        %5595 = vmatpush1.msra.mxu0 0.0
        %5596 = vmatprep.subr.mxu0 0.0
        %5597 = vmatpush1.msra.mxu0 0.0
        %5598 = vmatprep.subr.mxu0 0.0
        %5599 = vmatpush1.msra.mxu0 0.0
        %5600 = vmatprep.subr.mxu0 0.0
        %5601 = vmatpush1.msra.mxu0 0.0
        %5602 = vmatprep.subr.mxu0 0.0
        %5603 = vmatpush1.msra.mxu0 0.0
        %5604 = vmatprep.subr.mxu0 0.0
        %5605 = vmatpush1.msra.mxu0 0.0
        %5606 = vmatprep.subr.mxu0 0.0
        %5607 = vmatpush1.msra.mxu0 0.0
        %5608 = vmatprep.subr.mxu0 0.0
        %5609 = vmatpush1.msra.mxu0 0.0
        %5610 = vmatprep.subr.mxu0 0.0
        %5611 = vmatpush1.msra.mxu0 0.0
        %5612 = vmatprep.subr.mxu0 0.0
        %5613 = vmatpush1.msra.mxu0 0.0
        %5614 = vmatprep.subr.mxu0 0.0
        %5615 = vmatpush1.msra.mxu0 0.0
        %5616 = vmatprep.subr.mxu0 0.0
        %5617 = vmatpush1.msra.mxu0 0.0
        %5618 = vmatprep.subr.mxu0 0.0
        %5619 = vmatpush1.msra.mxu0 0.0
        %5620 = vmatprep.subr.mxu0 0.0
        %5621 = vmatpush1.msra.mxu0 0.0
        %5622 = vmatprep.subr.mxu0 0.0
        %5623 = vmatpush1.msra.mxu0 0.0
        %5624 = vmatprep.mubr.f32.mxu0 0.0
        %5625 = vmatmul.mubr.f32.gmra.mrb[0].mxu0 %v5449
        %v5626 = vpop.f32.mrb[0].mxu0
        %v5627 = vadd.f32 0.0, %v5626
        %v5628 = vpop.f32.mrb[0].mxu0
        %5629 = vmatprep.mubr.f32.mxu0 0.0
        %5630 = vmatmul.mubr.f32.gmra.mrb[0].mxu0 %v5451
        %v5631 = vpop.f32.mrb[0].mxu0
        %v5632 = vadd.f32 0.0, %v5631
        %v5633 = vpop.f32.mrb[0].mxu0
        %5634 = vmatprep.mubr.f32.mxu0 0.0
        %5635 = vmatmul.mubr.f32.gmra.mrb[0].mxu0 %v5453
        %v5636 = vpop.f32.mrb[0].mxu0
        %v5637 = vadd.f32 0.0, %v5636
        %v5638 = vpop.f32.mrb[0].mxu0
        %5639 = vmatprep.mubr.f32.mxu0 0.0
        %5640 = vmatmul.mubr.f32.gmra.mrb[0].mxu0 %v5455
        %v5641 = vpop.f32.mrb[0].mxu0
        %v5642 = vadd.f32 0.0, %v5641
        %v5643 = vpop.f32.mrb[0].mxu0
        %5644 = vmatprep.mubr.f32.mxu0 0.0
        %5645 = vmatmul.mubr.f32.gmra.mrb[0].mxu0 %v5457
        %v5646 = vpop.f32.mrb[0].mxu0
        %v5647 = vadd.f32 0.0, %v5646
        %v5648 = vpop.f32.mrb[0].mxu0
        %5649 = vmatprep.mubr.f32.mxu0 0.0
        %5650 = vmatmul.mubr.f32.gmra.mrb[0].mxu0 %v5459
        %v5651 = vpop.f32.mrb[0].mxu0
        %v5652 = vadd.f32 0.0, %v5651
        %v5653 = vpop.f32.mrb[0].mxu0
        %5654 = vmatprep.mubr.f32.mxu0 0.0
        %5655 = vmatmul.mubr.f32.gmra.mrb[0].mxu0 %v5461
        %v5656 = vpop.f32.mrb[0].mxu0
        %v5657 = vadd.f32 0.0, %v5656
        %v5658 = vpop.f32.mrb[0].mxu0
        %5659 = vmatprep.mubr.f32.mxu0 0.0
        %5660 = vmatmul.mubr.f32.gmra.mrb[0].mxu0 %v5463
        %v5661 = vpop.f32.mrb[0].mxu0
        %v5662 = vadd.f32 0.0, %v5661
        %v5663 = vpop.f32.mrb[0].mxu0
        %5664 = vmatprep.mubr.f32.mxu0 0.0
        %5665 = vmatmul.mubr.f32.gmra.mrb[0].mxu0 %v5465
        %v5666 = vpop.f32.mrb[0].mxu0
        %v5667 = vadd.f32 0.0, %v5666
        %v5668 = vpop.f32.mrb[0].mxu0
        %5669 = vmatprep.mubr.f32.mxu0 0.0
        %5670 = vmatmul.mubr.f32.gmra.mrb[0].mxu0 %v5467
        %v5671 = vpop.f32.mrb[0].mxu0
        %v5672 = vadd.f32 0.0, %v5671
        %v5673 = vpop.f32.mrb[0].mxu0
        %5674 = vmatprep.mubr.f32.mxu0 0.0
        %5675 = vmatmul.mubr.f32.gmra.mrb[0].mxu0 %v5469
        %v5676 = vpop.f32.mrb[0].mxu0
        %v5677 = vadd.f32 0.0, %v5676
        %v5678 = vpop.f32.mrb[0].mxu0
        %5679 = vmatprep.mubr.f32.mxu0 0.0
        %5680 = vmatmul.mubr.f32.gmra.mrb[0].mxu0 %v5471
        %v5681 = vpop.f32.mrb[0].mxu0
        %v5682 = vadd.f32 0.0, %v5681
        %v5683 = vpop.f32.mrb[0].mxu0
        %5684 = vmatprep.mubr.f32.mxu0 0.0
        %5685 = vmatmul.mubr.f32.gmra.mrb[0].mxu0 %v5473
        %v5686 = vpop.f32.mrb[0].mxu0
        %v5687 = vadd.f32 0.0, %v5686
        %v5688 = vpop.f32.mrb[0].mxu0
        %5689 = vmatprep.mubr.f32.mxu0 0.0
        %5690 = vmatmul.mubr.f32.gmra.mrb[0].mxu0 %v5475
        %v5691 = vpop.f32.mrb[0].mxu0
        %v5692 = vadd.f32 0.0, %v5691
        %v5693 = vpop.f32.mrb[0].mxu0
        %5694 = vmatprep.mubr.f32.mxu0 0.0
        %5695 = vmatmul.mubr.f32.gmra.mrb[0].mxu0 %v5477
        %v5696 = vpop.f32.mrb[0].mxu0
        %v5697 = vadd.f32 0.0, %v5696
        %v5698 = vpop.f32.mrb[0].mxu0
        %5699 = vmatprep.mubr.f32.mxu0 0.0
        %5700 = vmatmul.mubr.f32.gmra.mrb[0].mxu0 %v5479
        %v5701 = vpop.f32.mrb[0].mxu0
        %v5702 = vadd.f32 0.0, %v5701
        %v5703 = vpop.f32.mrb[0].mxu0
        %5704 = vdwg.mxu0
        %v5705 = vrcp.pop %v5481
        %v5706 = vrcp.pop %v5483
        %v5707 = vrcp.pop %v5485
        %v5708 = vrcp.pop %v5487
        %v5709 = vrcp.pop %v5489
        %v5710 = vrcp.pop %v5491
        %v5711 = vrcp.pop %v5493
        %v5712 = vrcp.pop %v5495
        %v5713 = vrcp.pop %v5497
        %v5714 = vrcp.pop %v5499
        %v5715 = vrcp.pop %v5501
        %v5716 = vrcp.pop %v5503
        %v5717 = vrcp.pop %v5505
        %v5718 = vrcp.pop %v5507
        %v5719 = vrcp.pop %v5509
        %v5720 = vrcp.pop %v5511
        %v5721 = vmul.f32 %v5627, %v5705
        %v5722 = vmul.f32 %v5632, %v5706
        %v5723 = vmul.f32 %v5637, %v5707
        %v5724 = vmul.f32 %v5642, %v5708
        %v5725 = vmul.f32 %v5647, %v5709
        %v5726 = vmul.f32 %v5652, %v5710
        %v5727 = vmul.f32 %v5657, %v5711
        %v5728 = vmul.f32 %v5662, %v5712
        %v5729 = vmul.f32 %v5667, %v5713
        %v5730 = vmul.f32 %v5672, %v5714
        %v5731 = vmul.f32 %v5677, %v5715
        %v5732 = vmul.f32 %v5682, %v5716
        %v5733 = vmul.f32 %v5687, %v5717
        %v5734 = vmul.f32 %v5692, %v5718
        %v5735 = vmul.f32 %v5697, %v5719
        %v5736 = vmul.f32 %v5702, %v5720
        %5753 = vrot.lane.b32.xlu0 %v2109, 32
        %v5754 = vpop.permute.xlu0 %5753
        %5755 = vrot.lane.b32.xlu0 %v2110, 32
        %v5756 = vpop.permute.xlu0 %5755
        %5757 = vrot.lane.b32.xlu0 %v2111, 32
        %v5758 = vpop.permute.xlu0 %5757
        %5759 = vrot.lane.b32.xlu0 %v2112, 32
        %v5760 = vpop.permute.xlu0 %5759
        %5761 = vrot.lane.b32.xlu0 %v2113, 32
        %v5762 = vpop.permute.xlu0 %5761
        %5763 = vrot.lane.b32.xlu0 %v2114, 32
        %v5764 = vpop.permute.xlu0 %5763
        %5765 = vrot.lane.b32.xlu0 %v2115, 32
        %v5766 = vpop.permute.xlu0 %5765
        %5767 = vrot.lane.b32.xlu0 %v2116, 32
        %v5768 = vpop.permute.xlu0 %5767
        %5769 = vrot.lane.b32.xlu0 %v2117, 32
        %v5770 = vpop.permute.xlu0 %5769
        %5771 = vrot.lane.b32.xlu0 %v2118, 32
        %v5772 = vpop.permute.xlu0 %5771
        %5773 = vrot.lane.b32.xlu0 %v2119, 32
        %v5774 = vpop.permute.xlu0 %5773
        %5775 = vrot.lane.b32.xlu0 %v2120, 32
        %v5776 = vpop.permute.xlu0 %5775
        %5777 = vrot.lane.b32.xlu0 %v2121, 32
        %v5778 = vpop.permute.xlu0 %5777
        %5779 = vrot.lane.b32.xlu0 %v2122, 32
        %v5780 = vpop.permute.xlu0 %5779
        %5781 = vrot.lane.b32.xlu0 %v2123, 32
        %v5782 = vpop.permute.xlu0 %5781
        %5783 = vrot.lane.b32.xlu0 %v2124, 32
        %v5784 = vpop.permute.xlu0 %5783
        %5817 = vrot.lane.b32.xlu0 %v2719, 64
        %v5818 = vpop.permute.xlu0 %5817
        %5819 = vrot.lane.b32.xlu0 %v2720, 64
        %v5820 = vpop.permute.xlu0 %5819
        %5821 = vrot.lane.b32.xlu0 %v2721, 64
        %v5822 = vpop.permute.xlu0 %5821
        %5823 = vrot.lane.b32.xlu0 %v2722, 64
        %v5824 = vpop.permute.xlu0 %5823
        %5825 = vrot.lane.b32.xlu0 %v2723, 64
        %v5826 = vpop.permute.xlu0 %5825
        %5827 = vrot.lane.b32.xlu0 %v2724, 64
        %v5828 = vpop.permute.xlu0 %5827
        %5829 = vrot.lane.b32.xlu0 %v2725, 64
        %v5830 = vpop.permute.xlu0 %5829
        %5831 = vrot.lane.b32.xlu0 %v2726, 64
        %v5832 = vpop.permute.xlu0 %5831
        %5833 = vrot.lane.b32.xlu0 %v2727, 64
        %v5834 = vpop.permute.xlu0 %5833
        %5835 = vrot.lane.b32.xlu0 %v2728, 64
        %v5836 = vpop.permute.xlu0 %5835
        %5837 = vrot.lane.b32.xlu0 %v2729, 64
        %v5838 = vpop.permute.xlu0 %5837
        %5839 = vrot.lane.b32.xlu0 %v2730, 64
        %v5840 = vpop.permute.xlu0 %5839
        %5841 = vrot.lane.b32.xlu0 %v2731, 64
        %v5842 = vpop.permute.xlu0 %5841
        %5843 = vrot.lane.b32.xlu0 %v2732, 64
        %v5844 = vpop.permute.xlu0 %5843
        %5845 = vrot.lane.b32.xlu0 %v2733, 64
        %v5846 = vpop.permute.xlu0 %5845
        %5847 = vrot.lane.b32.xlu0 %v2734, 64
        %v5848 = vpop.permute.xlu0 %5847
        %5881 = vrot.lane.b32.xlu0 %v3329, 96
        %v5882 = vpop.permute.xlu0 %5881
        %5883 = vrot.lane.b32.xlu0 %v3330, 96
        %v5884 = vpop.permute.xlu0 %5883
        %5885 = vrot.lane.b32.xlu0 %v3331, 96
        %v5886 = vpop.permute.xlu0 %5885
        %5887 = vrot.lane.b32.xlu0 %v3332, 96
        %v5888 = vpop.permute.xlu0 %5887
        %5889 = vrot.lane.b32.xlu0 %v3333, 96
        %v5890 = vpop.permute.xlu0 %5889
        %5891 = vrot.lane.b32.xlu0 %v3334, 96
        %v5892 = vpop.permute.xlu0 %5891
        %5893 = vrot.lane.b32.xlu0 %v3335, 96
        %v5894 = vpop.permute.xlu0 %5893
        %5895 = vrot.lane.b32.xlu0 %v3336, 96
        %v5896 = vpop.permute.xlu0 %5895
        %5897 = vrot.lane.b32.xlu0 %v3337, 96
        %v5898 = vpop.permute.xlu0 %5897
        %5899 = vrot.lane.b32.xlu0 %v3338, 96
        %v5900 = vpop.permute.xlu0 %5899
        %5901 = vrot.lane.b32.xlu0 %v3339, 96
        %v5902 = vpop.permute.xlu0 %5901
        %5903 = vrot.lane.b32.xlu0 %v3340, 96
        %v5904 = vpop.permute.xlu0 %5903
        %5905 = vrot.lane.b32.xlu0 %v3341, 96
        %v5906 = vpop.permute.xlu0 %5905
        %5907 = vrot.lane.b32.xlu0 %v3342, 96
        %v5908 = vpop.permute.xlu0 %5907
        %5909 = vrot.lane.b32.xlu0 %v3343, 96
        %v5910 = vpop.permute.xlu0 %5909
        %5911 = vrot.lane.b32.xlu0 %v3344, 96
        %v5912 = vpop.permute.xlu0 %5911
        %5945 = vrot.lane.b32.xlu0 %v4501, 32
        %v5946 = vpop.permute.xlu0 %5945
        %5947 = vrot.lane.b32.xlu0 %v4502, 32
        %v5948 = vpop.permute.xlu0 %5947
        %5949 = vrot.lane.b32.xlu0 %v4503, 32
        %v5950 = vpop.permute.xlu0 %5949
        %5951 = vrot.lane.b32.xlu0 %v4504, 32
        %v5952 = vpop.permute.xlu0 %5951
        %5953 = vrot.lane.b32.xlu0 %v4505, 32
        %v5954 = vpop.permute.xlu0 %5953
        %5955 = vrot.lane.b32.xlu0 %v4506, 32
        %v5956 = vpop.permute.xlu0 %5955
        %5957 = vrot.lane.b32.xlu0 %v4507, 32
        %v5958 = vpop.permute.xlu0 %5957
        %5959 = vrot.lane.b32.xlu0 %v4508, 32
        %v5960 = vpop.permute.xlu0 %5959
        %5961 = vrot.lane.b32.xlu0 %v4509, 32
        %v5962 = vpop.permute.xlu0 %5961
        %5963 = vrot.lane.b32.xlu0 %v4510, 32
        %v5964 = vpop.permute.xlu0 %5963
        %5965 = vrot.lane.b32.xlu0 %v4511, 32
        %v5966 = vpop.permute.xlu0 %5965
        %5967 = vrot.lane.b32.xlu0 %v4512, 32
        %v5968 = vpop.permute.xlu0 %5967
        %5969 = vrot.lane.b32.xlu0 %v4513, 32
        %v5970 = vpop.permute.xlu0 %5969
        %5971 = vrot.lane.b32.xlu0 %v4514, 32
        %v5972 = vpop.permute.xlu0 %5971
        %5973 = vrot.lane.b32.xlu0 %v4515, 32
        %v5974 = vpop.permute.xlu0 %5973
        %5975 = vrot.lane.b32.xlu0 %v4516, 32
        %v5976 = vpop.permute.xlu0 %5975
        %6009 = vrot.lane.b32.xlu0 %v5111, 64
        %v6010 = vpop.permute.xlu0 %6009
        %6011 = vrot.lane.b32.xlu0 %v5112, 64
        %v6012 = vpop.permute.xlu0 %6011
        %6013 = vrot.lane.b32.xlu0 %v5113, 64
        %v6014 = vpop.permute.xlu0 %6013
        %6015 = vrot.lane.b32.xlu0 %v5114, 64
        %v6016 = vpop.permute.xlu0 %6015
        %6017 = vrot.lane.b32.xlu0 %v5115, 64
        %v6018 = vpop.permute.xlu0 %6017
        %6019 = vrot.lane.b32.xlu0 %v5116, 64
        %v6020 = vpop.permute.xlu0 %6019
        %6021 = vrot.lane.b32.xlu0 %v5117, 64
        %v6022 = vpop.permute.xlu0 %6021
        %6023 = vrot.lane.b32.xlu0 %v5118, 64
        %v6024 = vpop.permute.xlu0 %6023
        %6025 = vrot.lane.b32.xlu0 %v5119, 64
        %v6026 = vpop.permute.xlu0 %6025
        %6027 = vrot.lane.b32.xlu0 %v5120, 64
        %v6028 = vpop.permute.xlu0 %6027
        %6029 = vrot.lane.b32.xlu0 %v5121, 64
        %v6030 = vpop.permute.xlu0 %6029
        %6031 = vrot.lane.b32.xlu0 %v5122, 64
        %v6032 = vpop.permute.xlu0 %6031
        %6033 = vrot.lane.b32.xlu0 %v5123, 64
        %v6034 = vpop.permute.xlu0 %6033
        %6035 = vrot.lane.b32.xlu0 %v5124, 64
        %v6036 = vpop.permute.xlu0 %6035
        %6037 = vrot.lane.b32.xlu0 %v5125, 64
        %v6038 = vpop.permute.xlu0 %6037
        %6039 = vrot.lane.b32.xlu0 %v5126, 64
        %v6040 = vpop.permute.xlu0 %6039
        %6073 = vrot.lane.b32.xlu0 %v5721, 96
        %v6074 = vpop.permute.xlu0 %6073
        %6075 = vrot.lane.b32.xlu0 %v5722, 96
        %v6076 = vpop.permute.xlu0 %6075
        %6077 = vrot.lane.b32.xlu0 %v5723, 96
        %v6078 = vpop.permute.xlu0 %6077
        %6079 = vrot.lane.b32.xlu0 %v5724, 96
        %v6080 = vpop.permute.xlu0 %6079
        %6081 = vrot.lane.b32.xlu0 %v5725, 96
        %v6082 = vpop.permute.xlu0 %6081
        %6083 = vrot.lane.b32.xlu0 %v5726, 96
        %v6084 = vpop.permute.xlu0 %6083
        %6085 = vrot.lane.b32.xlu0 %v5727, 96
        %v6086 = vpop.permute.xlu0 %6085
        %6087 = vrot.lane.b32.xlu0 %v5728, 96
        %v6088 = vpop.permute.xlu0 %6087
        %6089 = vrot.lane.b32.xlu0 %v5729, 96
        %v6090 = vpop.permute.xlu0 %6089
        %6091 = vrot.lane.b32.xlu0 %v5730, 96
        %v6092 = vpop.permute.xlu0 %6091
        %6093 = vrot.lane.b32.xlu0 %v5731, 96
        %v6094 = vpop.permute.xlu0 %6093
        %6095 = vrot.lane.b32.xlu0 %v5732, 96
        %v6096 = vpop.permute.xlu0 %6095
        %6097 = vrot.lane.b32.xlu0 %v5733, 96
        %v6098 = vpop.permute.xlu0 %6097
        %6099 = vrot.lane.b32.xlu0 %v5734, 96
        %v6100 = vpop.permute.xlu0 %6099
        %6101 = vrot.lane.b32.xlu0 %v5735, 96
        %v6102 = vpop.permute.xlu0 %6101
        %6103 = vrot.lane.b32.xlu0 %v5736, 96
        %v6104 = vpop.permute.xlu0 %6103
        %v6121 = vsel %vm968, %v1483, %v5754
        %v6122 = vsel %vm968, %v1484, %v5756
        %v6123 = vsel %vm968, %v1485, %v5758
        %v6124 = vsel %vm968, %v1486, %v5760
        %v6125 = vsel %vm968, %v1487, %v5762
        %v6126 = vsel %vm968, %v1488, %v5764
        %v6127 = vsel %vm968, %v1489, %v5766
        %v6128 = vsel %vm968, %v1490, %v5768
        %v6129 = vsel %vm968, %v1491, %v5770
        %v6130 = vsel %vm968, %v1492, %v5772
        %v6131 = vsel %vm968, %v1493, %v5774
        %v6132 = vsel %vm968, %v1494, %v5776
        %v6133 = vsel %vm968, %v1495, %v5778
        %v6134 = vsel %vm968, %v1496, %v5780
        %v6135 = vsel %vm968, %v1497, %v5782
        %v6136 = vsel %vm968, %v1498, %v5784
        %vm6137 = vcmask 523264
        %v6138 = vsel %vm6137, %v6121, %v5818
        %v6139 = vsel %vm6137, %v6122, %v5820
        %v6140 = vsel %vm6137, %v6123, %v5822
        %v6141 = vsel %vm6137, %v6124, %v5824
        %v6142 = vsel %vm6137, %v6125, %v5826
        %v6143 = vsel %vm6137, %v6126, %v5828
        %v6144 = vsel %vm6137, %v6127, %v5830
        %v6145 = vsel %vm6137, %v6128, %v5832
        %v6146 = vsel %vm6137, %v6129, %v5834
        %v6147 = vsel %vm6137, %v6130, %v5836
        %v6148 = vsel %vm6137, %v6131, %v5838
        %v6149 = vsel %vm6137, %v6132, %v5840
        %v6150 = vsel %vm6137, %v6133, %v5842
        %v6151 = vsel %vm6137, %v6134, %v5844
        %v6152 = vsel %vm6137, %v6135, %v5846
        %v6153 = vsel %vm6137, %v6136, %v5848
        %vm6154 = vcmask 785408
        %v6155 = vsel %vm6154, %v6138, %v5882
        %v6156 = vsel %vm6154, %v6139, %v5884
        %v6157 = vsel %vm6154, %v6140, %v5886
        %v6158 = vsel %vm6154, %v6141, %v5888
        %v6159 = vsel %vm6154, %v6142, %v5890
        %v6160 = vsel %vm6154, %v6143, %v5892
        %v6161 = vsel %vm6154, %v6144, %v5894
        %v6162 = vsel %vm6154, %v6145, %v5896
        %v6163 = vsel %vm6154, %v6146, %v5898
        %v6164 = vsel %vm6154, %v6147, %v5900
        %v6165 = vsel %vm6154, %v6148, %v5902
        %v6166 = vsel %vm6154, %v6149, %v5904
        %v6167 = vsel %vm6154, %v6150, %v5906
        %v6168 = vsel %vm6154, %v6151, %v5908
        %v6169 = vsel %vm6154, %v6152, %v5910
        %v6170 = vsel %vm6154, %v6153, %v5912
        %v6171 = vsel %vm968, %v3875, %v5946
        %v6172 = vsel %vm968, %v3876, %v5948
        %v6173 = vsel %vm968, %v3877, %v5950
        %v6174 = vsel %vm968, %v3878, %v5952
        %v6175 = vsel %vm968, %v3879, %v5954
        %v6176 = vsel %vm968, %v3880, %v5956
        %v6177 = vsel %vm968, %v3881, %v5958
        %v6178 = vsel %vm968, %v3882, %v5960
        %v6179 = vsel %vm968, %v3883, %v5962
        %v6180 = vsel %vm968, %v3884, %v5964
        %v6181 = vsel %vm968, %v3885, %v5966
        %v6182 = vsel %vm968, %v3886, %v5968
        %v6183 = vsel %vm968, %v3887, %v5970
        %v6184 = vsel %vm968, %v3888, %v5972
        %v6185 = vsel %vm968, %v3889, %v5974
        %v6186 = vsel %vm968, %v3890, %v5976
        %v6187 = vsel %vm6137, %v6171, %v6010
        %v6188 = vsel %vm6137, %v6172, %v6012
        %v6189 = vsel %vm6137, %v6173, %v6014
        %v6190 = vsel %vm6137, %v6174, %v6016
        %v6191 = vsel %vm6137, %v6175, %v6018
        %v6192 = vsel %vm6137, %v6176, %v6020
        %v6193 = vsel %vm6137, %v6177, %v6022
        %v6194 = vsel %vm6137, %v6178, %v6024
        %v6195 = vsel %vm6137, %v6179, %v6026
        %v6196 = vsel %vm6137, %v6180, %v6028
        %v6197 = vsel %vm6137, %v6181, %v6030
        %v6198 = vsel %vm6137, %v6182, %v6032
        %v6199 = vsel %vm6137, %v6183, %v6034
        %v6200 = vsel %vm6137, %v6184, %v6036
        %v6201 = vsel %vm6137, %v6185, %v6038
        %v6202 = vsel %vm6137, %v6186, %v6040
        %v6203 = vsel %vm6154, %v6187, %v6074
        %v6204 = vsel %vm6154, %v6188, %v6076
        %v6205 = vsel %vm6154, %v6189, %v6078
        %v6206 = vsel %vm6154, %v6190, %v6080
        %v6207 = vsel %vm6154, %v6191, %v6082
        %v6208 = vsel %vm6154, %v6192, %v6084
        %v6209 = vsel %vm6154, %v6193, %v6086
        %v6210 = vsel %vm6154, %v6194, %v6088
        %v6211 = vsel %vm6154, %v6195, %v6090
        %v6212 = vsel %vm6154, %v6196, %v6092
        %v6213 = vsel %vm6154, %v6197, %v6094
        %v6214 = vsel %vm6154, %v6198, %v6096
        %v6215 = vsel %vm6154, %v6199, %v6098
        %v6216 = vsel %vm6154, %v6200, %v6100
        %v6217 = vsel %vm6154, %v6201, %v6102
        %v6218 = vsel %vm6154, %v6202, %v6104
        %v6219 = vld [vmem:[#allocation7] sm:$0xff]
        %v6220 = vld [vmem:[#allocation7 + $0x8] sm:$0xff]
        %v6221 = vld [vmem:[#allocation7 + $0x10] sm:$0xff]
        %v6222 = vld [vmem:[#allocation7 + $0x18] sm:$0xff]
        %v6223 = vld [vmem:[#allocation7 + $0x20] sm:$0xff]
        %v6224 = vld [vmem:[#allocation7 + $0x28] sm:$0xff]
        %v6225 = vld [vmem:[#allocation7 + $0x30] sm:$0xff]
        %v6226 = vld [vmem:[#allocation7 + $0x38] sm:$0xff]
        %v6227 = vld [vmem:[#allocation7 + $0x40] sm:$0xff]
        %v6228 = vld [vmem:[#allocation7 + $0x48] sm:$0xff]
        %v6229 = vld [vmem:[#allocation7 + $0x50] sm:$0xff]
        %v6230 = vld [vmem:[#allocation7 + $0x58] sm:$0xff]
        %v6231 = vld [vmem:[#allocation7 + $0x60] sm:$0xff]
        %v6232 = vld [vmem:[#allocation7 + $0x68] sm:$0xff]
        %v6233 = vld [vmem:[#allocation7 + $0x70] sm:$0xff]
        %v6234 = vld [vmem:[#allocation7 + $0x78] sm:$0xff]
        %v6235 = vld [vmem:[#allocation7 + $0x80] sm:$0xff]
        %v6236 = vld [vmem:[#allocation7 + $0x88] sm:$0xff]
        %v6237 = vld [vmem:[#allocation7 + $0x90] sm:$0xff]
        %v6238 = vld [vmem:[#allocation7 + $0x98] sm:$0xff]
        %v6239 = vld [vmem:[#allocation7 + $0xa0] sm:$0xff]
        %v6240 = vld [vmem:[#allocation7 + $0xa8] sm:$0xff]
        %v6241 = vld [vmem:[#allocation7 + $0xb0] sm:$0xff]
        %v6242 = vld [vmem:[#allocation7 + $0xb8] sm:$0xff]
        %v6243 = vld [vmem:[#allocation7 + $0xc0] sm:$0xff]
        %v6244 = vld [vmem:[#allocation7 + $0xc8] sm:$0xff]
        %v6245 = vld [vmem:[#allocation7 + $0xd0] sm:$0xff]
        %v6246 = vld [vmem:[#allocation7 + $0xd8] sm:$0xff]
        %v6247 = vld [vmem:[#allocation7 + $0xe0] sm:$0xff]
        %v6248 = vld [vmem:[#allocation7 + $0xe8] sm:$0xff]
        %v6249 = vld [vmem:[#allocation7 + $0xf0] sm:$0xff]
        %v6250 = vld [vmem:[#allocation7 + $0xf8] sm:$0xff]
        %v6251 = vld [vmem:[#allocation7 + $0x100] sm:$0xff]
        %v6252 = vld [vmem:[#allocation7 + $0x108] sm:$0xff]
        %v6253 = vld [vmem:[#allocation7 + $0x110] sm:$0xff]
        %v6254 = vld [vmem:[#allocation7 + $0x118] sm:$0xff]
        %v6255 = vld [vmem:[#allocation7 + $0x120] sm:$0xff]
        %v6256 = vld [vmem:[#allocation7 + $0x128] sm:$0xff]
        %v6257 = vld [vmem:[#allocation7 + $0x130] sm:$0xff]
        %v6258 = vld [vmem:[#allocation7 + $0x138] sm:$0xff]
        %v6259 = vld [vmem:[#allocation7 + $0x140] sm:$0xff]
        %v6260 = vld [vmem:[#allocation7 + $0x148] sm:$0xff]
        %v6261 = vld [vmem:[#allocation7 + $0x150] sm:$0xff]
        %v6262 = vld [vmem:[#allocation7 + $0x158] sm:$0xff]
        %v6263 = vld [vmem:[#allocation7 + $0x160] sm:$0xff]
        %v6264 = vld [vmem:[#allocation7 + $0x168] sm:$0xff]
        %v6265 = vld [vmem:[#allocation7 + $0x170] sm:$0xff]
        %v6266 = vld [vmem:[#allocation7 + $0x178] sm:$0xff]
        %v6267 = vld [vmem:[#allocation7 + $0x180] sm:$0xff]
        %v6268 = vld [vmem:[#allocation7 + $0x188] sm:$0xff]
        %v6269 = vld [vmem:[#allocation7 + $0x190] sm:$0xff]
        %v6270 = vld [vmem:[#allocation7 + $0x198] sm:$0xff]
        %v6271 = vld [vmem:[#allocation7 + $0x1a0] sm:$0xff]
        %v6272 = vld [vmem:[#allocation7 + $0x1a8] sm:$0xff]
        %v6273 = vld [vmem:[#allocation7 + $0x1b0] sm:$0xff]
        %v6274 = vld [vmem:[#allocation7 + $0x1b8] sm:$0xff]
        %v6275 = vld [vmem:[#allocation7 + $0x1c0] sm:$0xff]
        %v6276 = vld [vmem:[#allocation7 + $0x1c8] sm:$0xff]
        %v6277 = vld [vmem:[#allocation7 + $0x1d0] sm:$0xff]
        %v6278 = vld [vmem:[#allocation7 + $0x1d8] sm:$0xff]
        %v6279 = vld [vmem:[#allocation7 + $0x1e0] sm:$0xff]
        %v6280 = vld [vmem:[#allocation7 + $0x1e8] sm:$0xff]
        %v6281 = vld [vmem:[#allocation7 + $0x1f0] sm:$0xff]
        %v6282 = vld [vmem:[#allocation7 + $0x1f8] sm:$0xff]
        %v6283 = vld [vmem:[%s3] sm:$0x3]
        %v6285 = vlaneseq
        %v6286 = vshrl.u32 %v6285, 7
        %v6287 = vsub.s32 0, %v6286
        %v6288 = vrot.slane %v6283, %v6287
        %v6289 = vlaneseq
        %v6290 = vshrl.u32 %v6289, 7
        %v6291 = vsub.s32 1, %v6290
        %v6292 = vrot.slane %v6283, %v6291
        %6295 = vmatprep.subr.mxu0 %v6220
        %6296 = vmatpush1.msra.mxu0 %v6219
        %6297 = vmatprep.subr.mxu0 %v6222
        %6298 = vmatpush1.msra.mxu0 %v6221
        %6299 = vmatprep.subr.mxu0 %v6224
        %6300 = vmatpush1.msra.mxu0 %v6223
        %6301 = vmatprep.subr.mxu0 %v6226
        %6302 = vmatpush1.msra.mxu0 %v6225
        %6303 = vmatprep.subr.mxu0 %v6228
        %6304 = vmatpush1.msra.mxu0 %v6227
        %6305 = vmatprep.subr.mxu0 %v6230
        %6306 = vmatpush1.msra.mxu0 %v6229
        %6307 = vmatprep.subr.mxu0 %v6232
        %6308 = vmatpush1.msra.mxu0 %v6231
        %6309 = vmatprep.subr.mxu0 %v6234
        %6310 = vmatpush1.msra.mxu0 %v6233
        %6311 = vmatprep.subr.mxu0 %v6236
        %6312 = vmatpush1.msra.mxu0 %v6235
        %6313 = vmatprep.subr.mxu0 %v6238
        %6314 = vmatpush1.msra.mxu0 %v6237
        %6315 = vmatprep.subr.mxu0 %v6240
        %6316 = vmatpush1.msra.mxu0 %v6239
        %6317 = vmatprep.subr.mxu0 %v6242
        %6318 = vmatpush1.msra.mxu0 %v6241
        %6319 = vmatprep.subr.mxu0 %v6244
        %6320 = vmatpush1.msra.mxu0 %v6243
        %6321 = vmatprep.subr.mxu0 %v6246
        %6322 = vmatpush1.msra.mxu0 %v6245
        %6323 = vmatprep.subr.mxu0 %v6248
        %6324 = vmatpush1.msra.mxu0 %v6247
        %6325 = vmatprep.subr.mxu0 %v6250
        %6326 = vmatpush1.msra.mxu0 %v6249
        %6327 = vmatprep.subr.mxu0 %v6252
        %6328 = vmatpush1.msra.mxu0 %v6251
        %6329 = vmatprep.subr.mxu0 %v6254
        %6330 = vmatpush1.msra.mxu0 %v6253
        %6331 = vmatprep.subr.mxu0 %v6256
        %6332 = vmatpush1.msra.mxu0 %v6255
        %6333 = vmatprep.subr.mxu0 %v6258
        %6334 = vmatpush1.msra.mxu0 %v6257
        %6335 = vmatprep.subr.mxu0 %v6260
        %6336 = vmatpush1.msra.mxu0 %v6259
        %6337 = vmatprep.subr.mxu0 %v6262
        %6338 = vmatpush1.msra.mxu0 %v6261
        %6339 = vmatprep.subr.mxu0 %v6264
        %6340 = vmatpush1.msra.mxu0 %v6263
        %6341 = vmatprep.subr.mxu0 %v6266
        %6342 = vmatpush1.msra.mxu0 %v6265
        %6343 = vmatprep.subr.mxu0 %v6268
        %6344 = vmatpush1.msra.mxu0 %v6267
        %6345 = vmatprep.subr.mxu0 %v6270
        %6346 = vmatpush1.msra.mxu0 %v6269
        %6347 = vmatprep.subr.mxu0 %v6272
        %6348 = vmatpush1.msra.mxu0 %v6271
        %6349 = vmatprep.subr.mxu0 %v6274
        %6350 = vmatpush1.msra.mxu0 %v6273
        %6351 = vmatprep.subr.mxu0 %v6276
        %6352 = vmatpush1.msra.mxu0 %v6275
        %6353 = vmatprep.subr.mxu0 %v6278
        %6354 = vmatpush1.msra.mxu0 %v6277
        %6355 = vmatprep.subr.mxu0 %v6280
        %6356 = vmatpush1.msra.mxu0 %v6279
        %6357 = vmatprep.subr.mxu0 %v6282
        %6358 = vmatpush1.msra.mxu0 %v6281
        %6359 = vmatprep.mubr.f32.mxu0 %v6203
        %6360 = vmatmul.mubr.f32.gmra.mrb[0].mxu0 %v6155
        %v6361 = vpop.f32.mrb[0].mxu0
        %v6362 = vadd.f32 %v6288, %v6361
        %v6363 = vpop.f32.mrb[0].mxu0
        %v6364 = vadd.f32 %v6292, %v6363
        %6365 = vmatprep.mubr.f32.mxu0 %v6204
        %6366 = vmatmul.mubr.f32.gmra.mrb[0].mxu0 %v6156
        %v6367 = vpop.f32.mrb[0].mxu0
        %v6368 = vadd.f32 %v6288, %v6367
        %v6369 = vpop.f32.mrb[0].mxu0
        %v6370 = vadd.f32 %v6292, %v6369
        %6371 = vmatprep.mubr.f32.mxu0 %v6205
        %6372 = vmatmul.mubr.f32.gmra.mrb[0].mxu0 %v6157
        %v6373 = vpop.f32.mrb[0].mxu0
        %v6374 = vadd.f32 %v6288, %v6373
        %v6375 = vpop.f32.mrb[0].mxu0
        %v6376 = vadd.f32 %v6292, %v6375
        %6377 = vmatprep.mubr.f32.mxu0 %v6206
        %6378 = vmatmul.mubr.f32.gmra.mrb[0].mxu0 %v6158
        %v6379 = vpop.f32.mrb[0].mxu0
        %v6380 = vadd.f32 %v6288, %v6379
        %v6381 = vpop.f32.mrb[0].mxu0
        %v6382 = vadd.f32 %v6292, %v6381
        %6383 = vmatprep.mubr.f32.mxu0 %v6207
        %6384 = vmatmul.mubr.f32.gmra.mrb[0].mxu0 %v6159
        %v6385 = vpop.f32.mrb[0].mxu0
        %v6386 = vadd.f32 %v6288, %v6385
        %v6387 = vpop.f32.mrb[0].mxu0
        %v6388 = vadd.f32 %v6292, %v6387
        %6389 = vmatprep.mubr.f32.mxu0 %v6208
        %6390 = vmatmul.mubr.f32.gmra.mrb[0].mxu0 %v6160
        %v6391 = vpop.f32.mrb[0].mxu0
        %v6392 = vadd.f32 %v6288, %v6391
        %v6393 = vpop.f32.mrb[0].mxu0
        %v6394 = vadd.f32 %v6292, %v6393
        %6395 = vmatprep.mubr.f32.mxu0 %v6209
        %6396 = vmatmul.mubr.f32.gmra.mrb[0].mxu0 %v6161
        %v6397 = vpop.f32.mrb[0].mxu0
        %v6398 = vadd.f32 %v6288, %v6397
        %v6399 = vpop.f32.mrb[0].mxu0
        %v6400 = vadd.f32 %v6292, %v6399
        %6401 = vmatprep.mubr.f32.mxu0 %v6210
        %6402 = vmatmul.mubr.f32.gmra.mrb[0].mxu0 %v6162
        %v6403 = vpop.f32.mrb[0].mxu0
        %v6404 = vadd.f32 %v6288, %v6403
        %v6405 = vpop.f32.mrb[0].mxu0
        %v6406 = vadd.f32 %v6292, %v6405
        %6407 = vmatprep.mubr.f32.mxu0 %v6211
        %6408 = vmatmul.mubr.f32.gmra.mrb[0].mxu0 %v6163
        %v6409 = vpop.f32.mrb[0].mxu0
        %v6410 = vadd.f32 %v6288, %v6409
        %v6411 = vpop.f32.mrb[0].mxu0
        %v6412 = vadd.f32 %v6292, %v6411
        %6413 = vmatprep.mubr.f32.mxu0 %v6212
        %6414 = vmatmul.mubr.f32.gmra.mrb[0].mxu0 %v6164
        %v6415 = vpop.f32.mrb[0].mxu0
        %v6416 = vadd.f32 %v6288, %v6415
        %v6417 = vpop.f32.mrb[0].mxu0
        %v6418 = vadd.f32 %v6292, %v6417
        %6419 = vmatprep.mubr.f32.mxu0 %v6213
        %6420 = vmatmul.mubr.f32.gmra.mrb[0].mxu0 %v6165
        %v6421 = vpop.f32.mrb[0].mxu0
        %v6422 = vadd.f32 %v6288, %v6421
        %v6423 = vpop.f32.mrb[0].mxu0
        %v6424 = vadd.f32 %v6292, %v6423
        %6425 = vmatprep.mubr.f32.mxu0 %v6214
        %6426 = vmatmul.mubr.f32.gmra.mrb[0].mxu0 %v6166
        %v6427 = vpop.f32.mrb[0].mxu0
        %v6428 = vadd.f32 %v6288, %v6427
        %v6429 = vpop.f32.mrb[0].mxu0
        %v6430 = vadd.f32 %v6292, %v6429
        %6431 = vmatprep.mubr.f32.mxu0 %v6215
        %6432 = vmatmul.mubr.f32.gmra.mrb[0].mxu0 %v6167
        %v6433 = vpop.f32.mrb[0].mxu0
        %v6434 = vadd.f32 %v6288, %v6433
        %v6435 = vpop.f32.mrb[0].mxu0
        %v6436 = vadd.f32 %v6292, %v6435
        %6437 = vmatprep.mubr.f32.mxu0 %v6216
        %6438 = vmatmul.mubr.f32.gmra.mrb[0].mxu0 %v6168
        %v6439 = vpop.f32.mrb[0].mxu0
        %v6440 = vadd.f32 %v6288, %v6439
        %v6441 = vpop.f32.mrb[0].mxu0
        %v6442 = vadd.f32 %v6292, %v6441
        %6443 = vmatprep.mubr.f32.mxu0 %v6217
        %6444 = vmatmul.mubr.f32.gmra.mrb[0].mxu0 %v6169
        %v6445 = vpop.f32.mrb[0].mxu0
        %v6446 = vadd.f32 %v6288, %v6445
        %v6447 = vpop.f32.mrb[0].mxu0
        %v6448 = vadd.f32 %v6292, %v6447
        %6449 = vmatprep.mubr.f32.mxu0 %v6218
        %6450 = vmatmul.mubr.f32.gmra.mrb[0].mxu0 %v6170
        %v6451 = vpop.f32.mrb[0].mxu0
        %v6452 = vadd.f32 %v6288, %v6451
        %v6453 = vpop.f32.mrb[0].mxu0
        %v6454 = vadd.f32 %v6292, %v6453
        %6455 = vdwg.mxu0
        %6456 = vst [vmem:[%s244] sm:$0xff] %v6362
        %6457 = vst [vmem:[%s244 + $0x8] sm:$0xff] %v6364
        %6458 = vst [vmem:[%s244 + $0x10] sm:$0xff] %v6368
        %6459 = vst [vmem:[%s244 + $0x18] sm:$0xff] %v6370
        %6460 = vst [vmem:[%s244 + $0x20] sm:$0xff] %v6374
        %6461 = vst [vmem:[%s244 + $0x28] sm:$0xff] %v6376
        %6462 = vst [vmem:[%s244 + $0x30] sm:$0xff] %v6380
        %6463 = vst [vmem:[%s244 + $0x38] sm:$0xff] %v6382
        %6464 = vst [vmem:[%s244 + $0x40] sm:$0xff] %v6386
        %6465 = vst [vmem:[%s244 + $0x48] sm:$0xff] %v6388
        %6466 = vst [vmem:[%s244 + $0x50] sm:$0xff] %v6392
        %6467 = vst [vmem:[%s244 + $0x58] sm:$0xff] %v6394
        %6468 = vst [vmem:[%s244 + $0x60] sm:$0xff] %v6398
        %6469 = vst [vmem:[%s244 + $0x68] sm:$0xff] %v6400
        %6470 = vst [vmem:[%s244 + $0x70] sm:$0xff] %v6404
        %6471 = vst [vmem:[%s244 + $0x78] sm:$0xff] %v6406
        %6472 = vst [vmem:[%s244 + $0x80] sm:$0xff] %v6410
        %6473 = vst [vmem:[%s244 + $0x88] sm:$0xff] %v6412
        %6474 = vst [vmem:[%s244 + $0x90] sm:$0xff] %v6416
        %6475 = vst [vmem:[%s244 + $0x98] sm:$0xff] %v6418
        %6476 = vst [vmem:[%s244 + $0xa0] sm:$0xff] %v6422
        %6477 = vst [vmem:[%s244 + $0xa8] sm:$0xff] %v6424
        %6478 = vst [vmem:[%s244 + $0xb0] sm:$0xff] %v6428
        %6479 = vst [vmem:[%s244 + $0xb8] sm:$0xff] %v6430
        %6480 = vst [vmem:[%s244 + $0xc0] sm:$0xff] %v6434
        %6481 = vst [vmem:[%s244 + $0xc8] sm:$0xff] %v6436
        %6482 = vst [vmem:[%s244 + $0xd0] sm:$0xff] %v6440
        %6483 = vst [vmem:[%s244 + $0xd8] sm:$0xff] %v6442
        %6484 = vst [vmem:[%s244 + $0xe0] sm:$0xff] %v6446
        %6485 = vst [vmem:[%s244 + $0xe8] sm:$0xff] %v6448
        %6486 = vst [vmem:[%s244 + $0xf0] sm:$0xff] %v6452
        %6487 = vst [vmem:[%s244 + $0xf8] sm:$0xff] %v6454
        %s6488 = sand.u32 %s119, 1
        %s6489 = scalar_lea.sflag [#allocation4], %s6488
        %s6490 = sand.u32 %s119, 1
        %s6491 = smul.addr %s6490, 256
        %s6492 = scalar_lea.vmem [#allocation8], %s6491
        // Predicated region
        $region49: #{tpu_custom_call.1} parent=35 // pred_check
          %p6493 = pneg %p129
        $region50: #{tpu_custom_call.1} parent=35 // pred_check_branch
          %6495 = sbr.rel (%p6493) target = $region52
        $region51: #{tpu_custom_call.1} parent=35 // pred_region
          %s6497 = ssub.s32 4096, 4096
          %6498 = vsyncadd %s6489, %s6497
          %s6499 = smul.addr %s22, 32
          %s6500 = smul.addr %s6499, 128
          %s6501 = scalar_lea.hbm %s4, %s6500
          %s6502 = sshll.u32 %s6492, 4
          %s6503 = int_to_ptr.vmem [resolvable:$true] %s6502
          %6508 = dma.vmem_to_hbm [thread:$0]  %s6503, 4096, %s6501, %s6489, 256, 256, 16
        $region52: #{tpu_custom_call.1} parent=35 // pred_fallthru
          _
      $region36: #{tpu_custom_call.1} parent=5 // pred_fallthru
        _
      %p6509 = scmp.le.s32.totalorder 2, %s17
      // Predicated region
      $region53: #{tpu_custom_call.1} parent=5 // pred_check
        %p6510 = pneg %p6509
      $region54: #{tpu_custom_call.1} parent=5 // pred_check_branch
        %6512 = sbr.rel (%p6510) target = $region56
      $region55: #{tpu_custom_call.1} parent=5 // pred_region
        %s6513 = ssub.s32 %s17, 2
        // Predicated region
        $region57: #{tpu_custom_call.1} parent=55 // pred_check
          %p6514 = pneg %p135
        $region58: #{tpu_custom_call.1} parent=55 // pred_check_branch
          %6516 = sbr.rel (%p6514) target = $region60
        $region59: #{tpu_custom_call.1} parent=55 // pred_region
          %s6517 = sand.u32 %s120, 1
          %s6518 = scalar_lea.sflag [#allocation4], %s6517
          %s6519 = sand.u32 %s120, 1
          %s6520 = smul.addr %s6519, 256
          %s6521 = scalar_lea.vmem [#allocation8], %s6520
          %6522 = dma.done %s6518, 4096
        $region60: #{tpu_custom_call.1} parent=55 // pred_fallthru
          _
      $region56: #{tpu_custom_call.1} parent=5 // pred_fallthru
        _
    $region6: #{tpu_custom_call.1} parent=1 // loop_footer
      %s21 = sadd.s32 1, %s17
    $region7: #{tpu_custom_call.1} parent=1 // loop_footer_branch
      %16 = sbr.rel target = $region3
    $region8: #{tpu_custom_call.1} parent=1 // loop_exit
      _
    %6523 = vsyncpa [#allocation3], 1
    %s6524 = scalar_lea.sflag [#allocation3], 1
    %6525 = vsyncpa %s6524, 1
    %6526 = vsyncpa [#allocation6], 1
    %6527 = vsyncpa [#allocation4], 1
    %s6528 = scalar_lea.sflag [#allocation4], 1
    %6529 = vsyncpa %s6528, 1

</llo_original>
